<compile_context>
chip_gen: v6e
topology: v6e:2x2x1
jax: 0.10.0
libtpu: 0.0.40
codegen_flags: <defaults>
</compile_context>

<pallas_src>
import numpy as np
import jax
import jax.numpy as jnp
from jax import lax
from jax.experimental import pallas as pl
from jax.experimental.pallas import tpu as pltpu


# ----------------------------------------------------------------------------
# Fused kernel: conv(1->32,3x3,p=1) + maxpool(2,2) + bias + ReLU + fc1 + ReLU + fc2
# (bias/ReLU commute with max-pool, so they are applied after pooling)
# ----------------------------------------------------------------------------
def cnn_fused_kernel(x3_ref, a_ref, bias_ref, w1_ref, b1_ref, w2_ref, b2_ref,
                     out_ref):
    # x3_ref  : (1, 32*TB, 96) bf16   row = j*TB + b ; j<14: even conv row 2j,
    #                                  j=14,15: zero pad, 16<=j<30: odd row 2(j-16)+1
    # a_ref   : (96, 1024)    bf16    banded conv weights, lane = (w%2)*512+(w//2)*32+c
    # bias_ref: (1, 512)      f32     conv bias per lane (lane%32)
    # w1_ref  : (14, 512, 128) bf16   fc1 weights, [h2, w2*32+c, n] (lanes>=448 zero)
    # b1_ref  : (1, 128)      f32
    # w2_ref  : (128, 128)    bf16    fc2 weights padded 10 -> 128 output features
    # b2_ref  : (1, 128)      f32
    # out_ref : (TB, 128)     f32
    tb = out_ref.shape[0]

    # One batched MXU matmul computes all conv outputs for the whole block.
    x3 = x3_ref[0]                                                   # (32*TB, 96) bf16
    y = jnp.dot(x3, a_ref[...], preferred_element_type=jnp.float32)  # (32*TB,1024) f32

    # H-pool: rows j*TB+b and (j+16)*TB+b are conv rows 2j and 2j+1 (aligned slices).
    z = jnp.maximum(y[0:16 * tb, :], y[16 * tb:32 * tb, :])          # (16*TB, 1024)
    # W-pool: lanes [0:512) hold even w, [512:1024) odd w (128-aligned slices).
    z = jnp.maximum(z[:, 0:512], z[:, 512:1024])                     # (16*TB, 512)
    # Bias + ReLU after pooling (max(a+b,c+b)=max(a,c)+b, relu∘max=max∘relu), f32 VPU.
    h = jnp.maximum(z + bias_ref[...], 0.0)
    hb = h.astype(jnp.bfloat16)

    # fc1: contract over (h2, w2, c) as 14 sublane-aligned (TB,512)x(512,128) matmuls.
    acc = jnp.zeros((tb, 128), jnp.float32)
    for h2 in range(14):
        acc = acc + jnp.dot(hb[h2 * tb:(h2 + 1) * tb, :], w1_ref[h2],
                            preferred_element_type=jnp.float32)
    hidden = jnp.maximum(acc + b1_ref[...], 0.0)                     # (TB,128) f32

    # fc2 (output features padded to 128 for lane-dense stores).
    o = jnp.dot(hidden.astype(jnp.bfloat16), w2_ref[...],
                preferred_element_type=jnp.float32)                  # (TB,128) f32
    out_ref[...] = o + b2_ref[...]


def cnn_fused(x3, a_mat, bias512, w1p, b1, w2, b2, tb):
    nb = x3.shape[0]
    return pl.pallas_call(
        cnn_fused_kernel,
        out_shape=jax.ShapeDtypeStruct((nb * tb, 128), jnp.float32),
        grid_spec=pltpu.PrefetchScalarGridSpec(
            num_scalar_prefetch=0,
            grid=(nb,),
            in_specs=[
                pl.BlockSpec((1, 32 * tb, 96), lambda i: (i, 0, 0)),
                pl.BlockSpec((96, 1024), lambda i: (0, 0)),          # resident conv A
                pl.BlockSpec((1, 512), lambda i: (0, 0)),            # resident conv bias
                pl.BlockSpec((14, 512, 128), lambda i: (0, 0, 0)),   # resident fc1 W
                pl.BlockSpec((1, 128), lambda i: (0, 0)),            # resident fc1 b
                pl.BlockSpec((128, 128), lambda i: (0, 0)),          # resident fc2 W
                pl.BlockSpec((1, 128), lambda i: (0, 0)),            # resident fc2 b
            ],
            out_specs=pl.BlockSpec((tb, 128), lambda i: (i, 0)),
        ),
        compiler_params=pltpu.CompilerParams(
            dimension_semantics=("parallel",),
            vmem_limit_bytes=32 * 1024 * 1024,
        ),
    )(x3, a_mat, bias512, w1p, b1, w2, b2)


# ----------------------------------------------------------------------------
# Wrapper glue (pure XLA, tiny): banded conv matrix, im2row-lite input slabs in
# (h2, batch) row order, fc-weight preprocessing, batch padding.
# ----------------------------------------------------------------------------
def _build_conv_matrix(conv_w):
    """conv_w (32,1,3,3) OIHW -> banded A (96, 1024); A[kh*32+u, lane] = W[kh,u-w,c]
    for lane = (w%2)*512 + (w//2)*32 + c and 0 <= u-w <= 2, else 0."""
    w_hwc = jnp.transpose(conv_w[:, 0, :, :], (1, 2, 0))          # (3,3,32): [kh,kw,c]
    a = jnp.zeros((3, 32, 1024), jnp.float32)
    j = jnp.arange(14)
    cols = (32 * j)[:, None] + jnp.arange(32)[None, :]            # (14,32)
    for kh in range(3):
        for kw in range(3):
            for p in range(2):                                    # w parity
                rows = (p + kw + 2 * j)[:, None]                  # u = w + kw <= 29
                vals = jnp.broadcast_to(w_hwc[kh, kw, :], (14, 32))
                a = a.at[kh, rows, p * 512 + cols].set(vals)
    return a.reshape(96, 1024)


def cnn_forward(x_nchw, params):
    conv_w, conv_b, fc1_w, fc1_b, fc2_w, fc2_b = params
    batch = x_nchw.shape[0]

    tb = 32                                                       # batch block
    bp = ((batch + tb - 1) // tb) * tb                            # single rounding
    nb = bp // tb

    x = x_nchw[:, 0, :, :]                                        # (B,28,28)
    x = jnp.pad(x, ((0, bp - batch), (0, 0), (0, 0)))             # batch pad
    x_pad = jnp.pad(x, ((0, 0), (1, 1), (1, 1)))                  # conv padding=1 -> (Bp,30,30)

    # im2row-lite: 3 vertically shifted slabs (width 30 -> 32 each) -> (Bp,28,96),
    # then rows re-ordered as (h2, batch) with even/odd conv rows split so that
    # both pool steps are aligned slices inside the kernel.
    slabs = jnp.concatenate(
        [jnp.pad(x_pad[:, kh:kh + 28, :], ((0, 0), (0, 0), (0, 2))) for kh in range(3)],
        axis=-1)                                                  # (Bp,28,96)
    slabs = slabs.reshape(nb, tb, 28, 96)
    even = slabs[:, :, 0::2, :].transpose(0, 2, 1, 3)             # (nb,14,TB,96) conv rows 2j
    odd = slabs[:, :, 1::2, :].transpose(0, 2, 1, 3)              # (nb,14,TB,96) conv rows 2j+1
    zer = jnp.zeros((nb, 2, tb, 96), slabs.dtype)
    x3 = jnp.concatenate([even, zer, odd, zer], axis=1)           # (nb,32,TB,96)
    x3 = x3.reshape(nb, 32 * tb, 96).astype(jnp.bfloat16)         # free trailing merge

    a_mat = _build_conv_matrix(conv_w).astype(jnp.bfloat16)       # (96,1024) bf16
    bias512 = jnp.tile(conv_b, 16).reshape(1, 512)                # bias per lane = b[lane%32]

    # fc1: permute columns from torch (c,h2,w2) flatten order to (h2, w2*32+c),
    # pad the lane axis 448 -> 512 with zeros (matches the 512-wide pooled slab).
    w1p = (fc1_w.reshape(128, 32, 14, 14).transpose(2, 3, 1, 0).reshape(14, 448, 128))
    w1p = jnp.pad(w1p, ((0, 0), (0, 64), (0, 0))).astype(jnp.bfloat16)   # (14,512,128)
    b1 = fc1_b.reshape(1, 128).astype(jnp.float32)
    # fc2: pad output features 10 -> 128 for lane-dense stores.
    w2 = jnp.zeros((128, 128), jnp.float32).at[:, :10].set(fc2_w.T).astype(jnp.bfloat16)
    b2 = jnp.zeros((1, 128), jnp.float32).at[:, :10].set(fc2_b)

    out = cnn_fused(x3, a_mat, bias512, w1p, b1, w2, b2, tb)      # (Bp,128) f32
    return out[:batch, :10]


# Pure-JAX reference (torch conventions) for the correctness check.
def cnn_reference(x_nchw, params):
    conv_w, conv_b, fc1_w, fc1_b, fc2_w, fc2_b = params
    y = lax.conv_general_dilated(
        x_nchw, conv_w, (1, 1), ((1, 1), (1, 1)),
        dimension_numbers=("NCHW", "OIHW", "NCHW"))
    y = jnp.maximum(y + conv_b.reshape(1, 32, 1, 1), 0.0)
    y = lax.reduce_window(y, -jnp.inf, lax.max, (1, 1, 2, 2), (1, 1, 2, 2), "VALID")
    y = y.reshape(x_nchw.shape[0], -1)
    y = jnp.maximum(y @ fc1_w.T + fc1_b, 0.0)
    return y @ fc2_w.T + fc2_b


if __name__ == "__main__":
    key = jax.random.PRNGKey(0)
    kx, k1, k2, k3, k4, k5, k6 = jax.random.split(key, 7)

    B = 2
    # fc1 expects 14*14*32 features -> spatial input must be 28x28, 1 channel.
    x = jax.random.normal(kx, (B, 1, 28, 28), dtype=jnp.float32)

    conv_w = 0.1 * jax.random.normal(k1, (32, 1, 3, 3), dtype=jnp.float32)
    conv_b = 0.1 * jax.random.normal(k2, (32,), dtype=jnp.float32)
    fc1_w = 0.01 * jax.random.normal(k3, (128, 32 * 14 * 14), dtype=jnp.float32)
    fc1_b = 0.01 * jax.random.normal(k4, (128,), dtype=jnp.float32)
    fc2_w = 0.1 * jax.random.normal(k5, (10, 128), dtype=jnp.float32)
    fc2_b = 0.1 * jax.random.normal(k6, (10,), dtype=jnp.float32)
    params = (conv_w, conv_b, fc1_w, fc1_b, fc2_w, fc2_b)

    out = jax.block_until_ready(jax.jit(cnn_forward)(x, params))
    ref = jax.block_until_ready(cnn_reference(x, params))

    assert out.shape == (B, 10) and out.dtype == jnp.float32
    if not np.allclose(np.asarray(out), np.asarray(ref), rtol=2e-2, atol=2e-2):
        raise AssertionError("Pallas CNN output mismatch vs JAX reference")

    print("KERNEL_OK")
</pallas_src>

<mosaic_0001>
module attributes {stable_mosaic.version = 11 : i64} {
  func.func @cnn_fused_kernel(%arg0: i32, %arg1: memref<1x1024x96xbf16, #tpu.memory_space<vmem>>, %arg2: memref<96x1024xbf16, #tpu.memory_space<vmem>>, %arg3: memref<1x512xf32, #tpu.memory_space<vmem>>, %arg4: memref<14x512x128xbf16, #tpu.memory_space<vmem>>, %arg5: memref<1x128xf32, #tpu.memory_space<vmem>>, %arg6: memref<128x128xbf16, #tpu.memory_space<vmem>>, %arg7: memref<1x128xf32, #tpu.memory_space<vmem>>, %arg8: memref<32x128xf32, #tpu.memory_space<vmem>>) attributes {dimension_semantics = [#tpu.dimension_semantics<parallel>], iteration_bounds = array<i64: 1>, scalar_prefetch = 0 : i64, scratch_operands = 0 : i64, tpu.core_type = #tpu.core_type<tc>, window_params = [{transform_indices = @transform_0, window_bounds = array<i64: 1, 1024, 96>}, {pipeline_mode = #tpu.pipeline_mode<synchronous>, transform_indices = @transform_1, window_bounds = array<i64: 96, 1024>}, {pipeline_mode = #tpu.pipeline_mode<synchronous>, transform_indices = @transform_2, window_bounds = array<i64: 1, 512>}, {pipeline_mode = #tpu.pipeline_mode<synchronous>, transform_indices = @transform_3, window_bounds = array<i64: 14, 512, 128>}, {pipeline_mode = #tpu.pipeline_mode<synchronous>, transform_indices = @transform_4, window_bounds = array<i64: 1, 128>}, {pipeline_mode = #tpu.pipeline_mode<synchronous>, transform_indices = @transform_5, window_bounds = array<i64: 128, 128>}, {pipeline_mode = #tpu.pipeline_mode<synchronous>, transform_indices = @transform_6, window_bounds = array<i64: 1, 128>}, {transform_indices = @transform_7, window_bounds = array<i64: 32, 128>}]} {
    %c0 = arith.constant 0 : index
    %c0_0 = arith.constant 0 : index
    %c0_1 = arith.constant 0 : index
    %0 = vector.load %arg1[%c0, %c0_0, %c0_1] : memref<1x1024x96xbf16, #tpu.memory_space<vmem>>, vector<1x1024x96xbf16>
    %1 = vector.shape_cast %0 : vector<1x1024x96xbf16> to vector<1024x96xbf16>
    %c0_2 = arith.constant 0 : index
    %c0_3 = arith.constant 0 : index
    %2 = vector.load %arg2[%c0_2, %c0_3] : memref<96x1024xbf16, #tpu.memory_space<vmem>>, vector<96x1024xbf16>
    %cst = arith.constant dense<0.000000e+00> : vector<1024x1024xf32>
    %3 = tpu.matmul %1, %2, %cst {dimension_numbers = #tpu.dot_dimension_numbers<[1], [0], [0], [1], [0, 0, 1, 1], [], []>} : vector<1024x96xbf16>, vector<96x1024xbf16>, vector<1024x1024xf32> -> vector<1024x1024xf32>
    %4 = vector.extract_strided_slice %3 {offsets = [0, 0], sizes = [512, 1024], strides = [1, 1]} : vector<1024x1024xf32> to vector<512x1024xf32>
    %5 = vector.extract_strided_slice %3 {offsets = [512, 0], sizes = [512, 1024], strides = [1, 1]} : vector<1024x1024xf32> to vector<512x1024xf32>
    %6 = arith.maximumf %4, %5 : vector<512x1024xf32>
    %7 = vector.extract_strided_slice %6 {offsets = [0, 0], sizes = [512, 512], strides = [1, 1]} : vector<512x1024xf32> to vector<512x512xf32>
    %8 = vector.extract_strided_slice %6 {offsets = [0, 512], sizes = [512, 512], strides = [1, 1]} : vector<512x1024xf32> to vector<512x512xf32>
    %9 = arith.maximumf %7, %8 : vector<512x512xf32>
    %c0_4 = arith.constant 0 : index
    %c0_5 = arith.constant 0 : index
    %10 = vector.load %arg3[%c0_4, %c0_5] : memref<1x512xf32, #tpu.memory_space<vmem>>, vector<1x512xf32>
    %11 = vector.broadcast %10 : vector<1x512xf32> to vector<512x512xf32>
    %12 = arith.addf %9, %11 : vector<512x512xf32>
    %cst_6 = arith.constant 0.000000e+00 : f32
    %13 = vector.broadcast %cst_6 : f32 to vector<512x512xf32>
    %14 = arith.maximumf %12, %13 : vector<512x512xf32>
    %15 = arith.truncf %14 : vector<512x512xf32> to vector<512x512xbf16>
    %cst_7 = arith.constant 0.000000e+00 : f32
    %16 = vector.broadcast %cst_7 : f32 to vector<32x128xf32>
    %17 = vector.extract_strided_slice %15 {offsets = [0, 0], sizes = [32, 512], strides = [1, 1]} : vector<512x512xbf16> to vector<32x512xbf16>
    %c0_8 = arith.constant 0 : index
    %c0_9 = arith.constant 0 : index
    %c0_10 = arith.constant 0 : index
    %18 = vector.load %arg4[%c0_8, %c0_9, %c0_10] : memref<14x512x128xbf16, #tpu.memory_space<vmem>>, vector<1x512x128xbf16>
    %19 = vector.shape_cast %18 : vector<1x512x128xbf16> to vector<512x128xbf16>
    %cst_11 = arith.constant dense<0.000000e+00> : vector<32x128xf32>
    %20 = tpu.matmul %17, %19, %cst_11 {dimension_numbers = #tpu.dot_dimension_numbers<[1], [0], [0], [1], [0, 0, 1, 1], [], []>} : vector<32x512xbf16>, vector<512x128xbf16>, vector<32x128xf32> -> vector<32x128xf32>
    %21 = arith.addf %16, %20 : vector<32x128xf32>
    %22 = vector.extract_strided_slice %15 {offsets = [32, 0], sizes = [32, 512], strides = [1, 1]} : vector<512x512xbf16> to vector<32x512xbf16>
    %c1 = arith.constant 1 : index
    %c0_12 = arith.constant 0 : index
    %c0_13 = arith.constant 0 : index
    %23 = vector.load %arg4[%c1, %c0_12, %c0_13] : memref<14x512x128xbf16, #tpu.memory_space<vmem>>, vector<1x512x128xbf16>
    %24 = vector.shape_cast %23 : vector<1x512x128xbf16> to vector<512x128xbf16>
    %cst_14 = arith.constant dense<0.000000e+00> : vector<32x128xf32>
    %25 = tpu.matmul %22, %24, %cst_14 {dimension_numbers = #tpu.dot_dimension_numbers<[1], [0], [0], [1], [0, 0, 1, 1], [], []>} : vector<32x512xbf16>, vector<512x128xbf16>, vector<32x128xf32> -> vector<32x128xf32>
    %26 = arith.addf %21, %25 : vector<32x128xf32>
    %27 = vector.extract_strided_slice %15 {offsets = [64, 0], sizes = [32, 512], strides = [1, 1]} : vector<512x512xbf16> to vector<32x512xbf16>
    %c2 = arith.constant 2 : index
    %c0_15 = arith.constant 0 : index
    %c0_16 = arith.constant 0 : index
    %28 = vector.load %arg4[%c2, %c0_15, %c0_16] : memref<14x512x128xbf16, #tpu.memory_space<vmem>>, vector<1x512x128xbf16>
    %29 = vector.shape_cast %28 : vector<1x512x128xbf16> to vector<512x128xbf16>
    %cst_17 = arith.constant dense<0.000000e+00> : vector<32x128xf32>
    %30 = tpu.matmul %27, %29, %cst_17 {dimension_numbers = #tpu.dot_dimension_numbers<[1], [0], [0], [1], [0, 0, 1, 1], [], []>} : vector<32x512xbf16>, vector<512x128xbf16>, vector<32x128xf32> -> vector<32x128xf32>
    %31 = arith.addf %26, %30 : vector<32x128xf32>
    %32 = vector.extract_strided_slice %15 {offsets = [96, 0], sizes = [32, 512], strides = [1, 1]} : vector<512x512xbf16> to vector<32x512xbf16>
    %c3 = arith.constant 3 : index
    %c0_18 = arith.constant 0 : index
    %c0_19 = arith.constant 0 : index
    %33 = vector.load %arg4[%c3, %c0_18, %c0_19] : memref<14x512x128xbf16, #tpu.memory_space<vmem>>, vector<1x512x128xbf16>
    %34 = vector.shape_cast %33 : vector<1x512x128xbf16> to vector<512x128xbf16>
    %cst_20 = arith.constant dense<0.000000e+00> : vector<32x128xf32>
    %35 = tpu.matmul %32, %34, %cst_20 {dimension_numbers = #tpu.dot_dimension_numbers<[1], [0], [0], [1], [0, 0, 1, 1], [], []>} : vector<32x512xbf16>, vector<512x128xbf16>, vector<32x128xf32> -> vector<32x128xf32>
    %36 = arith.addf %31, %35 : vector<32x128xf32>
    %37 = vector.extract_strided_slice %15 {offsets = [128, 0], sizes = [32, 512], strides = [1, 1]} : vector<512x512xbf16> to vector<32x512xbf16>
    %c4 = arith.constant 4 : index
    %c0_21 = arith.constant 0 : index
    %c0_22 = arith.constant 0 : index
    %38 = vector.load %arg4[%c4, %c0_21, %c0_22] : memref<14x512x128xbf16, #tpu.memory_space<vmem>>, vector<1x512x128xbf16>
    %39 = vector.shape_cast %38 : vector<1x512x128xbf16> to vector<512x128xbf16>
    %cst_23 = arith.constant dense<0.000000e+00> : vector<32x128xf32>
    %40 = tpu.matmul %37, %39, %cst_23 {dimension_numbers = #tpu.dot_dimension_numbers<[1], [0], [0], [1], [0, 0, 1, 1], [], []>} : vector<32x512xbf16>, vector<512x128xbf16>, vector<32x128xf32> -> vector<32x128xf32>
    %41 = arith.addf %36, %40 : vector<32x128xf32>
    %42 = vector.extract_strided_slice %15 {offsets = [160, 0], sizes = [32, 512], strides = [1, 1]} : vector<512x512xbf16> to vector<32x512xbf16>
    %c5 = arith.constant 5 : index
    %c0_24 = arith.constant 0 : index
    %c0_25 = arith.constant 0 : index
    %43 = vector.load %arg4[%c5, %c0_24, %c0_25] : memref<14x512x128xbf16, #tpu.memory_space<vmem>>, vector<1x512x128xbf16>
    %44 = vector.shape_cast %43 : vector<1x512x128xbf16> to vector<512x128xbf16>
    %cst_26 = arith.constant dense<0.000000e+00> : vector<32x128xf32>
    %45 = tpu.matmul %42, %44, %cst_26 {dimension_numbers = #tpu.dot_dimension_numbers<[1], [0], [0], [1], [0, 0, 1, 1], [], []>} : vector<32x512xbf16>, vector<512x128xbf16>, vector<32x128xf32> -> vector<32x128xf32>
    %46 = arith.addf %41, %45 : vector<32x128xf32>
    %47 = vector.extract_strided_slice %15 {offsets = [192, 0], sizes = [32, 512], strides = [1, 1]} : vector<512x512xbf16> to vector<32x512xbf16>
    %c6 = arith.constant 6 : index
    %c0_27 = arith.constant 0 : index
    %c0_28 = arith.constant 0 : index
    %48 = vector.load %arg4[%c6, %c0_27, %c0_28] : memref<14x512x128xbf16, #tpu.memory_space<vmem>>, vector<1x512x128xbf16>
    %49 = vector.shape_cast %48 : vector<1x512x128xbf16> to vector<512x128xbf16>
    %cst_29 = arith.constant dense<0.000000e+00> : vector<32x128xf32>
    %50 = tpu.matmul %47, %49, %cst_29 {dimension_numbers = #tpu.dot_dimension_numbers<[1], [0], [0], [1], [0, 0, 1, 1], [], []>} : vector<32x512xbf16>, vector<512x128xbf16>, vector<32x128xf32> -> vector<32x128xf32>
    %51 = arith.addf %46, %50 : vector<32x128xf32>
    %52 = vector.extract_strided_slice %15 {offsets = [224, 0], sizes = [32, 512], strides = [1, 1]} : vector<512x512xbf16> to vector<32x512xbf16>
    %c7 = arith.constant 7 : index
    %c0_30 = arith.constant 0 : index
    %c0_31 = arith.constant 0 : index
    %53 = vector.load %arg4[%c7, %c0_30, %c0_31] : memref<14x512x128xbf16, #tpu.memory_space<vmem>>, vector<1x512x128xbf16>
    %54 = vector.shape_cast %53 : vector<1x512x128xbf16> to vector<512x128xbf16>
    %cst_32 = arith.constant dense<0.000000e+00> : vector<32x128xf32>
    %55 = tpu.matmul %52, %54, %cst_32 {dimension_numbers = #tpu.dot_dimension_numbers<[1], [0], [0], [1], [0, 0, 1, 1], [], []>} : vector<32x512xbf16>, vector<512x128xbf16>, vector<32x128xf32> -> vector<32x128xf32>
    %56 = arith.addf %51, %55 : vector<32x128xf32>
    %57 = vector.extract_strided_slice %15 {offsets = [256, 0], sizes = [32, 512], strides = [1, 1]} : vector<512x512xbf16> to vector<32x512xbf16>
    %c8 = arith.constant 8 : index
    %c0_33 = arith.constant 0 : index
    %c0_34 = arith.constant 0 : index
    %58 = vector.load %arg4[%c8, %c0_33, %c0_34] : memref<14x512x128xbf16, #tpu.memory_space<vmem>>, vector<1x512x128xbf16>
    %59 = vector.shape_cast %58 : vector<1x512x128xbf16> to vector<512x128xbf16>
    %cst_35 = arith.constant dense<0.000000e+00> : vector<32x128xf32>
    %60 = tpu.matmul %57, %59, %cst_35 {dimension_numbers = #tpu.dot_dimension_numbers<[1], [0], [0], [1], [0, 0, 1, 1], [], []>} : vector<32x512xbf16>, vector<512x128xbf16>, vector<32x128xf32> -> vector<32x128xf32>
    %61 = arith.addf %56, %60 : vector<32x128xf32>
    %62 = vector.extract_strided_slice %15 {offsets = [288, 0], sizes = [32, 512], strides = [1, 1]} : vector<512x512xbf16> to vector<32x512xbf16>
    %c9 = arith.constant 9 : index
    %c0_36 = arith.constant 0 : index
    %c0_37 = arith.constant 0 : index
    %63 = vector.load %arg4[%c9, %c0_36, %c0_37] : memref<14x512x128xbf16, #tpu.memory_space<vmem>>, vector<1x512x128xbf16>
    %64 = vector.shape_cast %63 : vector<1x512x128xbf16> to vector<512x128xbf16>
    %cst_38 = arith.constant dense<0.000000e+00> : vector<32x128xf32>
    %65 = tpu.matmul %62, %64, %cst_38 {dimension_numbers = #tpu.dot_dimension_numbers<[1], [0], [0], [1], [0, 0, 1, 1], [], []>} : vector<32x512xbf16>, vector<512x128xbf16>, vector<32x128xf32> -> vector<32x128xf32>
    %66 = arith.addf %61, %65 : vector<32x128xf32>
    %67 = vector.extract_strided_slice %15 {offsets = [320, 0], sizes = [32, 512], strides = [1, 1]} : vector<512x512xbf16> to vector<32x512xbf16>
    %c10 = arith.constant 10 : index
    %c0_39 = arith.constant 0 : index
    %c0_40 = arith.constant 0 : index
    %68 = vector.load %arg4[%c10, %c0_39, %c0_40] : memref<14x512x128xbf16, #tpu.memory_space<vmem>>, vector<1x512x128xbf16>
    %69 = vector.shape_cast %68 : vector<1x512x128xbf16> to vector<512x128xbf16>
    %cst_41 = arith.constant dense<0.000000e+00> : vector<32x128xf32>
    %70 = tpu.matmul %67, %69, %cst_41 {dimension_numbers = #tpu.dot_dimension_numbers<[1], [0], [0], [1], [0, 0, 1, 1], [], []>} : vector<32x512xbf16>, vector<512x128xbf16>, vector<32x128xf32> -> vector<32x128xf32>
    %71 = arith.addf %66, %70 : vector<32x128xf32>
    %72 = vector.extract_strided_slice %15 {offsets = [352, 0], sizes = [32, 512], strides = [1, 1]} : vector<512x512xbf16> to vector<32x512xbf16>
    %c11 = arith.constant 11 : index
    %c0_42 = arith.constant 0 : index
    %c0_43 = arith.constant 0 : index
    %73 = vector.load %arg4[%c11, %c0_42, %c0_43] : memref<14x512x128xbf16, #tpu.memory_space<vmem>>, vector<1x512x128xbf16>
    %74 = vector.shape_cast %73 : vector<1x512x128xbf16> to vector<512x128xbf16>
    %cst_44 = arith.constant dense<0.000000e+00> : vector<32x128xf32>
    %75 = tpu.matmul %72, %74, %cst_44 {dimension_numbers = #tpu.dot_dimension_numbers<[1], [0], [0], [1], [0, 0, 1, 1], [], []>} : vector<32x512xbf16>, vector<512x128xbf16>, vector<32x128xf32> -> vector<32x128xf32>
    %76 = arith.addf %71, %75 : vector<32x128xf32>
    %77 = vector.extract_strided_slice %15 {offsets = [384, 0], sizes = [32, 512], strides = [1, 1]} : vector<512x512xbf16> to vector<32x512xbf16>
    %c12 = arith.constant 12 : index
    %c0_45 = arith.constant 0 : index
    %c0_46 = arith.constant 0 : index
    %78 = vector.load %arg4[%c12, %c0_45, %c0_46] : memref<14x512x128xbf16, #tpu.memory_space<vmem>>, vector<1x512x128xbf16>
    %79 = vector.shape_cast %78 : vector<1x512x128xbf16> to vector<512x128xbf16>
    %cst_47 = arith.constant dense<0.000000e+00> : vector<32x128xf32>
    %80 = tpu.matmul %77, %79, %cst_47 {dimension_numbers = #tpu.dot_dimension_numbers<[1], [0], [0], [1], [0, 0, 1, 1], [], []>} : vector<32x512xbf16>, vector<512x128xbf16>, vector<32x128xf32> -> vector<32x128xf32>
    %81 = arith.addf %76, %80 : vector<32x128xf32>
    %82 = vector.extract_strided_slice %15 {offsets = [416, 0], sizes = [32, 512], strides = [1, 1]} : vector<512x512xbf16> to vector<32x512xbf16>
    %c13 = arith.constant 13 : index
    %c0_48 = arith.constant 0 : index
    %c0_49 = arith.constant 0 : index
    %83 = vector.load %arg4[%c13, %c0_48, %c0_49] : memref<14x512x128xbf16, #tpu.memory_space<vmem>>, vector<1x512x128xbf16>
    %84 = vector.shape_cast %83 : vector<1x512x128xbf16> to vector<512x128xbf16>
    %cst_50 = arith.constant dense<0.000000e+00> : vector<32x128xf32>
    %85 = tpu.matmul %82, %84, %cst_50 {dimension_numbers = #tpu.dot_dimension_numbers<[1], [0], [0], [1], [0, 0, 1, 1], [], []>} : vector<32x512xbf16>, vector<512x128xbf16>, vector<32x128xf32> -> vector<32x128xf32>
    %86 = arith.addf %81, %85 : vector<32x128xf32>
    %c0_51 = arith.constant 0 : index
    %c0_52 = arith.constant 0 : index
    %87 = vector.load %arg5[%c0_51, %c0_52] : memref<1x128xf32, #tpu.memory_space<vmem>>, vector<1x128xf32>
    %88 = vector.broadcast %87 : vector<1x128xf32> to vector<32x128xf32>
    %89 = arith.addf %86, %88 : vector<32x128xf32>
    %cst_53 = arith.constant 0.000000e+00 : f32
    %90 = vector.broadcast %cst_53 : f32 to vector<32x128xf32>
    %91 = arith.maximumf %89, %90 : vector<32x128xf32>
    %92 = arith.truncf %91 : vector<32x128xf32> to vector<32x128xbf16>
    %c0_54 = arith.constant 0 : index
    %c0_55 = arith.constant 0 : index
    %93 = vector.load %arg6[%c0_54, %c0_55] : memref<128x128xbf16, #tpu.memory_space<vmem>>, vector<128x128xbf16>
    %cst_56 = arith.constant dense<0.000000e+00> : vector<32x128xf32>
    %94 = tpu.matmul %92, %93, %cst_56 {dimension_numbers = #tpu.dot_dimension_numbers<[1], [0], [0], [1], [0, 0, 1, 1], [], []>} : vector<32x128xbf16>, vector<128x128xbf16>, vector<32x128xf32> -> vector<32x128xf32>
    %c0_57 = arith.constant 0 : index
    %c0_58 = arith.constant 0 : index
    %95 = vector.load %arg7[%c0_57, %c0_58] : memref<1x128xf32, #tpu.memory_space<vmem>>, vector<1x128xf32>
    %96 = vector.broadcast %95 : vector<1x128xf32> to vector<32x128xf32>
    %97 = arith.addf %94, %96 : vector<32x128xf32>
    %c0_59 = arith.constant 0 : index
    %c0_60 = arith.constant 0 : index
    %98 = vector.load %arg8[%c0_59, %c0_60] : memref<32x128xf32, #tpu.memory_space<vmem>>, vector<32x128xf32>
    tpu.vector_store %arg8[%c0_59, %c0_60], %97 {strides = array<i32>} : memref<32x128xf32, #tpu.memory_space<vmem>>, vector<32x128xf32>,
    return
  }
  func.func @transform_0(%arg0: i32) -> (i32, i32, i32) {
    %c0_i32 = arith.constant 0 : i32
    %c0_i32_0 = arith.constant 0 : i32
    %c0_i32_1 = arith.constant 0 : i32
    return %arg0, %c0_i32, %c0_i32_0 : i32, i32, i32
  }
  func.func @transform_1(%arg0: i32) -> (i32, i32) {
    %c0_i32 = arith.constant 0 : i32
    %c0_i32_0 = arith.constant 0 : i32
    %c0_i32_1 = arith.constant 0 : i32
    return %c0_i32, %c0_i32_0 : i32, i32
  }
  func.func @transform_2(%arg0: i32) -> (i32, i32) {
    %c0_i32 = arith.constant 0 : i32
    %c0_i32_0 = arith.constant 0 : i32
    %c0_i32_1 = arith.constant 0 : i32
    return %c0_i32, %c0_i32_0 : i32, i32
  }
  func.func @transform_3(%arg0: i32) -> (i32, i32, i32) {
    %c0_i32 = arith.constant 0 : i32
    %c0_i32_0 = arith.constant 0 : i32
    %c0_i32_1 = arith.constant 0 : i32
    %c0_i32_2 = arith.constant 0 : i32
    return %c0_i32, %c0_i32_0, %c0_i32_1 : i32, i32, i32
  }
  func.func @transform_4(%arg0: i32) -> (i32, i32) {
    %c0_i32 = arith.constant 0 : i32
    %c0_i32_0 = arith.constant 0 : i32
    %c0_i32_1 = arith.constant 0 : i32
    return %c0_i32, %c0_i32_0 : i32, i32
  }
  func.func @transform_5(%arg0: i32) -> (i32, i32) {
    %c0_i32 = arith.constant 0 : i32
    %c0_i32_0 = arith.constant 0 : i32
    %c0_i32_1 = arith.constant 0 : i32
    return %c0_i32, %c0_i32_0 : i32, i32
  }
  func.func @transform_6(%arg0: i32) -> (i32, i32) {
    %c0_i32 = arith.constant 0 : i32
    %c0_i32_0 = arith.constant 0 : i32
    %c0_i32_1 = arith.constant 0 : i32
    return %c0_i32, %c0_i32_0 : i32, i32
  }
  func.func @transform_7(%arg0: i32) -> (i32, i32) {
    %c0_i32 = arith.constant 0 : i32
    %c0_i32_0 = arith.constant 0 : i32
    return %arg0, %c0_i32 : i32, i32
  }
}

</mosaic_0001>

<llo_original>
// kernel: tile.8
$region0: #{tile.8}
  #allocation0 [shape = 's32[1]{0}', space=sflag, size = 0x4, scoped, tag = 'scoped memory for tile.8']
  %s0 = inlined_call_operand.vmem [shape: f32[32], index: 0, kind: input, shape index: {}]
  %s1 = inlined_call_operand.vmem [shape: f32[16,32], index: 1, kind: output, shape index: {}]
  // Predicated region
  $region2: #{tile.8} parent=0 // pred_check
    _
  $region3: #{tile.8} parent=0 // pred_check_branch
    %3 = sbr.rel (0) target = $region5
  $region4: #{tile.8} parent=0 // pred_region
    _
  $region5: #{tile.8} parent=0 // pred_fallthru
    _
  %v4 = vld [vmem:[%s0] ss:$0 sm:$0xff]
  %5 = vst [vmem:[%s1] sm:$0xff] %v4
  %s6 = scalar_lea.vmem %s1, 8
  %7 = vst [vmem:[%s6] sm:$0xff] %v4

// kernel: tile.9
$region0: #{tile.9}
  %s0 = inlined_call_operand.vmem [shape: f32[16,32], index: 0, kind: input, shape index: {}]
  %s1 = inlined_call_operand.vmem [shape: f32[1,512], index: 1, kind: output, shape index: {}]
  $region1: #{tile.9} parent=0
    #allocation0 [shape = 'u8[16384]{0}', space=vmem, size = 0x4000, scoped, tag = 'scoped mem for output reshape']
    %v2 = vld [vmem:[%s0] ss:$4 sm:$0xf]
    %vm3 = vcmask 261120
    %4 = vst.msk [vmem:[#allocation0] ss:$8 sm:$0xf] %vm3, %v2
    %s5 = scalar_lea.vmem %s0, 3
    %v6 = vld [vmem:[%s5] ss:$4 sm:$0xf]
    %7 = vrot.lane.b32.xlu0 %v6, 96
    %v8 = vpop.permute.xlu0 %7
    %vm9 = vcmask 1048320
    %10 = vst.msk [vmem:[#allocation0] ss:$8 sm:$0xf] %vm9, %v8
    %s11 = scalar_lea.vmem %s0, 2
    %v12 = vld [vmem:[%s11] ss:$4 sm:$0xf]
    %13 = vrot.lane.b32.xlu0 %v12, 64
    %v14 = vpop.permute.xlu0 %13
    %vm15 = vcmask 785920
    %16 = vst.msk [vmem:[#allocation0] ss:$8 sm:$0xf] %vm15, %v14
    %s17 = scalar_lea.vmem %s0, 1
    %v18 = vld [vmem:[%s17] ss:$4 sm:$0xf]
    %19 = vrot.lane.b32.xlu0 %v18, 32
    %v20 = vpop.permute.xlu0 %19
    %vm21 = vcmask 523520
    %22 = vst.msk [vmem:[#allocation0] ss:$8 sm:$0xf] %vm21, %v20
    %s24 = sshll.u32 1, 1
    %s25 = ssub.s32 %s24, 1
    %v27 = vld [vmem:[#allocation0] sm:%s25]
    %s28 = sshll.u32 1, 1
    %s29 = ssub.s32 %s28, 1
    %30 = vst [vmem:[%s1] sm:%s29] %v27
    %s31 = scalar_lea.vmem [#allocation0], 8
    %v32 = vld [vmem:[%s31] sm:%s25]
    %s33 = sshll.u32 1, 1
    %s34 = ssub.s32 %s33, 1
    %s35 = scalar_lea.vmem %s1, 1
    %36 = vst [vmem:[%s35] sm:%s34] %v32
    %s37 = scalar_lea.vmem [#allocation0], 16
    %v38 = vld [vmem:[%s37] sm:%s25]
    %s39 = sshll.u32 1, 1
    %s40 = ssub.s32 %s39, 1
    %s41 = smul.addr 1, 2
    %s42 = scalar_lea.vmem %s1, %s41
    %43 = vst [vmem:[%s42] sm:%s40] %v38
    %s44 = scalar_lea.vmem [#allocation0], 24
    %v45 = vld [vmem:[%s44] sm:%s25]
    %s46 = sshll.u32 1, 1
    %s47 = ssub.s32 %s46, 1
    %s48 = smul.addr 1, 3
    %s49 = scalar_lea.vmem %s1, %s48
    %50 = vst [vmem:[%s49] sm:%s47] %v45

// kernel: cnn_forward.1
$region0: #{cnn_forward.1}
  #allocation0 [shape = 'u32[]', space=smem, size = 0x4, offset = 0x4, fixed_abs, tag = 'smem constant byte address 0x4 - core index']
  #allocation1 [shape = 'u32[144,128]{1,0:T(1,128)}', space=vmem, size = 0x12000, scoped, tag = 'internal scratch']
  %s0 = inlined_call_operand.vmem [shape: bf16[1,1024,96], index: 0, kind: input, shape index: {}]
  %s1 = inlined_call_operand.vmem [shape: bf16[96,1024], index: 1, kind: input, shape index: {}]
  %s2 = inlined_call_operand.vmem [shape: f32[1,512], index: 2, kind: input, shape index: {}]
  %s3 = inlined_call_operand.vmem [shape: bf16[14,512,128], index: 3, kind: input, shape index: {}]
  %s4 = inlined_call_operand.vmem [shape: f32[1,128], index: 4, kind: input, shape index: {}]
  %s5 = inlined_call_operand.vmem [shape: bf16[128,128], index: 5, kind: input, shape index: {}]
  %s6 = inlined_call_operand.vmem [shape: f32[1,128], index: 6, kind: input, shape index: {}]
  %s7 = inlined_call_operand.vmem [shape: f32[32,128], index: 7, kind: output, shape index: {}]
  %s8 = sld [smem:[#allocation0]]
  $region38: #{cnn_forward.1} parent=0
    _
  %s10 = ssub.s32 1, %s8
  %s11 = scalar_select 0, %s10, %s8
  // Predicated region
  $region2: #{cnn_forward.1} parent=0 // pred_check
    _
  $region3: #{cnn_forward.1} parent=0 // pred_check_branch
    %13 = sbr.rel (0) target = $region5
  $region4: #{cnn_forward.1} parent=0 // pred_region
    _
  $region5: #{cnn_forward.1} parent=0 // pred_fallthru
    _
  // Predicated region
  $region6: #{cnn_forward.1} parent=0 // pred_check
    _
  $region7: #{cnn_forward.1} parent=0 // pred_check_branch
    %15 = sbr.rel (0) target = $region9
  $region8: #{cnn_forward.1} parent=0 // pred_region
    _
  $region9: #{cnn_forward.1} parent=0 // pred_fallthru
    _
  // Predicated region
  $region10: #{cnn_forward.1} parent=0 // pred_check
    _
  $region11: #{cnn_forward.1} parent=0 // pred_check_branch
    %17 = sbr.rel (0) target = $region13
  $region12: #{cnn_forward.1} parent=0 // pred_region
    _
  $region13: #{cnn_forward.1} parent=0 // pred_fallthru
    _
  // Predicated region
  $region14: #{cnn_forward.1} parent=0 // pred_check
    _
  $region15: #{cnn_forward.1} parent=0 // pred_check_branch
    %19 = sbr.rel (0) target = $region17
  $region16: #{cnn_forward.1} parent=0 // pred_region
    _
  $region17: #{cnn_forward.1} parent=0 // pred_fallthru
    _
  // Predicated region
  $region18: #{cnn_forward.1} parent=0 // pred_check
    _
  $region19: #{cnn_forward.1} parent=0 // pred_check_branch
    %21 = sbr.rel (0) target = $region21
  $region20: #{cnn_forward.1} parent=0 // pred_region
    _
  $region21: #{cnn_forward.1} parent=0 // pred_fallthru
    _
  // Predicated region
  $region22: #{cnn_forward.1} parent=0 // pred_check
    _
  $region23: #{cnn_forward.1} parent=0 // pred_check_branch
    %23 = sbr.rel (0) target = $region25
  $region24: #{cnn_forward.1} parent=0 // pred_region
    _
  $region25: #{cnn_forward.1} parent=0 // pred_fallthru
    _
  // Predicated region
  $region26: #{cnn_forward.1} parent=0 // pred_check
    _
  $region27: #{cnn_forward.1} parent=0 // pred_check_branch
    %25 = sbr.rel (0) target = $region29
  $region28: #{cnn_forward.1} parent=0 // pred_region
    _
  $region29: #{cnn_forward.1} parent=0 // pred_fallthru
    _
  %v27 = vld [vmem:[%s0] sm:$0xf]
  %v28 = vld [vmem:[%s0 + $0x4] sm:$0xf]
  %v29 = vld [vmem:[%s0 + $0x8] sm:$0xf]
  %v30 = vld [vmem:[%s0 + $0xc] sm:$0xf]
  %v31 = vld [vmem:[%s0 + $0x10] sm:$0xf]
  %v32 = vld [vmem:[%s0 + $0x14] sm:$0xf]
  %v33 = vld [vmem:[%s0 + $0x18] sm:$0xf]
  %v34 = vld [vmem:[%s0 + $0x1c] sm:$0xf]
  %v35 = vld [vmem:[%s0 + $0x20] sm:$0xf]
  %v36 = vld [vmem:[%s0 + $0x24] sm:$0xf]
  %v37 = vld [vmem:[%s0 + $0x28] sm:$0xf]
  %v38 = vld [vmem:[%s0 + $0x2c] sm:$0xf]
  %v39 = vld [vmem:[%s0 + $0x30] sm:$0xf]
  %v40 = vld [vmem:[%s0 + $0x34] sm:$0xf]
  %v41 = vld [vmem:[%s0 + $0x38] sm:$0xf]
  %v42 = vld [vmem:[%s0 + $0x3c] sm:$0xf]
  %v43 = vld [vmem:[%s0 + $0x40] sm:$0xf]
  %v44 = vld [vmem:[%s0 + $0x44] sm:$0xf]
  %v45 = vld [vmem:[%s0 + $0x48] sm:$0xf]
  %v46 = vld [vmem:[%s0 + $0x4c] sm:$0xf]
  %v47 = vld [vmem:[%s0 + $0x50] sm:$0xf]
  %v48 = vld [vmem:[%s0 + $0x54] sm:$0xf]
  %v49 = vld [vmem:[%s0 + $0x58] sm:$0xf]
  %v50 = vld [vmem:[%s0 + $0x5c] sm:$0xf]
  %v51 = vld [vmem:[%s0 + $0x60] sm:$0xf]
  %v52 = vld [vmem:[%s0 + $0x64] sm:$0xf]
  %v53 = vld [vmem:[%s0 + $0x68] sm:$0xf]
  %v54 = vld [vmem:[%s0 + $0x6c] sm:$0xf]
  %v55 = vld [vmem:[%s0 + $0x70] sm:$0xf]
  %v56 = vld [vmem:[%s0 + $0x74] sm:$0xf]
  %v57 = vld [vmem:[%s0 + $0x78] sm:$0xf]
  %v58 = vld [vmem:[%s0 + $0x7c] sm:$0xf]
  %v59 = vld [vmem:[%s0 + $0x80] sm:$0xf]
  %v60 = vld [vmem:[%s0 + $0x84] sm:$0xf]
  %v61 = vld [vmem:[%s0 + $0x88] sm:$0xf]
  %v62 = vld [vmem:[%s0 + $0x8c] sm:$0xf]
  %v63 = vld [vmem:[%s0 + $0x90] sm:$0xf]
  %v64 = vld [vmem:[%s0 + $0x94] sm:$0xf]
  %v65 = vld [vmem:[%s0 + $0x98] sm:$0xf]
  %v66 = vld [vmem:[%s0 + $0x9c] sm:$0xf]
  %v67 = vld [vmem:[%s0 + $0xa0] sm:$0xf]
  %v68 = vld [vmem:[%s0 + $0xa4] sm:$0xf]
  %v69 = vld [vmem:[%s0 + $0xa8] sm:$0xf]
  %v70 = vld [vmem:[%s0 + $0xac] sm:$0xf]
  %v71 = vld [vmem:[%s0 + $0xb0] sm:$0xf]
  %v72 = vld [vmem:[%s0 + $0xb4] sm:$0xf]
  %v73 = vld [vmem:[%s0 + $0xb8] sm:$0xf]
  %v74 = vld [vmem:[%s0 + $0xbc] sm:$0xf]
  %v75 = vld [vmem:[%s0 + $0xc0] sm:$0xf]
  %v76 = vld [vmem:[%s0 + $0xc4] sm:$0xf]
  %v77 = vld [vmem:[%s0 + $0xc8] sm:$0xf]
  %v78 = vld [vmem:[%s0 + $0xcc] sm:$0xf]
  %v79 = vld [vmem:[%s0 + $0xd0] sm:$0xf]
  %v80 = vld [vmem:[%s0 + $0xd4] sm:$0xf]
  %v81 = vld [vmem:[%s0 + $0xd8] sm:$0xf]
  %v82 = vld [vmem:[%s0 + $0xdc] sm:$0xf]
  %v83 = vld [vmem:[%s0 + $0xe0] sm:$0xf]
  %v84 = vld [vmem:[%s0 + $0xe4] sm:$0xf]
  %v85 = vld [vmem:[%s0 + $0xe8] sm:$0xf]
  %v86 = vld [vmem:[%s0 + $0xec] sm:$0xf]
  %v87 = vld [vmem:[%s0 + $0xf0] sm:$0xf]
  %v88 = vld [vmem:[%s0 + $0xf4] sm:$0xf]
  %v89 = vld [vmem:[%s0 + $0xf8] sm:$0xf]
  %v90 = vld [vmem:[%s0 + $0xfc] sm:$0xf]
  %v91 = vld [vmem:[%s0 + $0x100] sm:$0xf]
  %v92 = vld [vmem:[%s0 + $0x104] sm:$0xf]
  %v93 = vld [vmem:[%s0 + $0x108] sm:$0xf]
  %v94 = vld [vmem:[%s0 + $0x10c] sm:$0xf]
  %v95 = vld [vmem:[%s0 + $0x110] sm:$0xf]
  %v96 = vld [vmem:[%s0 + $0x114] sm:$0xf]
  %v97 = vld [vmem:[%s0 + $0x118] sm:$0xf]
  %v98 = vld [vmem:[%s0 + $0x11c] sm:$0xf]
  %v99 = vld [vmem:[%s0 + $0x120] sm:$0xf]
  %v100 = vld [vmem:[%s0 + $0x124] sm:$0xf]
  %v101 = vld [vmem:[%s0 + $0x128] sm:$0xf]
  %v102 = vld [vmem:[%s0 + $0x12c] sm:$0xf]
  %v103 = vld [vmem:[%s0 + $0x130] sm:$0xf]
  %v104 = vld [vmem:[%s0 + $0x134] sm:$0xf]
  %v105 = vld [vmem:[%s0 + $0x138] sm:$0xf]
  %v106 = vld [vmem:[%s0 + $0x13c] sm:$0xf]
  %v107 = vld [vmem:[%s0 + $0x140] sm:$0xf]
  %v108 = vld [vmem:[%s0 + $0x144] sm:$0xf]
  %v109 = vld [vmem:[%s0 + $0x148] sm:$0xf]
  %v110 = vld [vmem:[%s0 + $0x14c] sm:$0xf]
  %v111 = vld [vmem:[%s0 + $0x150] sm:$0xf]
  %v112 = vld [vmem:[%s0 + $0x154] sm:$0xf]
  %v113 = vld [vmem:[%s0 + $0x158] sm:$0xf]
  %v114 = vld [vmem:[%s0 + $0x15c] sm:$0xf]
  %v115 = vld [vmem:[%s0 + $0x160] sm:$0xf]
  %v116 = vld [vmem:[%s0 + $0x164] sm:$0xf]
  %v117 = vld [vmem:[%s0 + $0x168] sm:$0xf]
  %v118 = vld [vmem:[%s0 + $0x16c] sm:$0xf]
  %v119 = vld [vmem:[%s0 + $0x170] sm:$0xf]
  %v120 = vld [vmem:[%s0 + $0x174] sm:$0xf]
  %v121 = vld [vmem:[%s0 + $0x178] sm:$0xf]
  %v122 = vld [vmem:[%s0 + $0x17c] sm:$0xf]
  %v123 = vld [vmem:[%s0 + $0x180] sm:$0xf]
  %v124 = vld [vmem:[%s0 + $0x184] sm:$0xf]
  %v125 = vld [vmem:[%s0 + $0x188] sm:$0xf]
  %v126 = vld [vmem:[%s0 + $0x18c] sm:$0xf]
  %v127 = vld [vmem:[%s0 + $0x190] sm:$0xf]
  %v128 = vld [vmem:[%s0 + $0x194] sm:$0xf]
  %v129 = vld [vmem:[%s0 + $0x198] sm:$0xf]
  %v130 = vld [vmem:[%s0 + $0x19c] sm:$0xf]
  %v131 = vld [vmem:[%s0 + $0x1a0] sm:$0xf]
  %v132 = vld [vmem:[%s0 + $0x1a4] sm:$0xf]
  %v133 = vld [vmem:[%s0 + $0x1a8] sm:$0xf]
  %v134 = vld [vmem:[%s0 + $0x1ac] sm:$0xf]
  %v135 = vld [vmem:[%s0 + $0x1b0] sm:$0xf]
  %v136 = vld [vmem:[%s0 + $0x1b4] sm:$0xf]
  %v137 = vld [vmem:[%s0 + $0x1b8] sm:$0xf]
  %v138 = vld [vmem:[%s0 + $0x1bc] sm:$0xf]
  %v139 = vld [vmem:[%s0 + $0x1c0] sm:$0xf]
  %v140 = vld [vmem:[%s0 + $0x1c4] sm:$0xf]
  %v141 = vld [vmem:[%s0 + $0x1c8] sm:$0xf]
  %v142 = vld [vmem:[%s0 + $0x1cc] sm:$0xf]
  %v143 = vld [vmem:[%s0 + $0x1d0] sm:$0xf]
  %v144 = vld [vmem:[%s0 + $0x1d4] sm:$0xf]
  %v145 = vld [vmem:[%s0 + $0x1d8] sm:$0xf]
  %v146 = vld [vmem:[%s0 + $0x1dc] sm:$0xf]
  %v147 = vld [vmem:[%s0 + $0x1e0] sm:$0xf]
  %v148 = vld [vmem:[%s0 + $0x1e4] sm:$0xf]
  %v149 = vld [vmem:[%s0 + $0x1e8] sm:$0xf]
  %v150 = vld [vmem:[%s0 + $0x1ec] sm:$0xf]
  %v151 = vld [vmem:[%s0 + $0x1f0] sm:$0xf]
  %v152 = vld [vmem:[%s0 + $0x1f4] sm:$0xf]
  %v153 = vld [vmem:[%s0 + $0x1f8] sm:$0xf]
  %v154 = vld [vmem:[%s0 + $0x1fc] sm:$0xf]
  %v155 = vld [vmem:[%s1] sm:$0xff]
  %v156 = vld [vmem:[%s1 + $0x8] sm:$0xff]
  %v157 = vld [vmem:[%s1 + $0x10] sm:$0xff]
  %v158 = vld [vmem:[%s1 + $0x18] sm:$0xff]
  %v159 = vld [vmem:[%s1 + $0x20] sm:$0xff]
  %v160 = vld [vmem:[%s1 + $0x28] sm:$0xff]
  %v161 = vld [vmem:[%s1 + $0x30] sm:$0xff]
  %v162 = vld [vmem:[%s1 + $0x38] sm:$0xff]
  %v163 = vld [vmem:[%s1 + $0x40] sm:$0xff]
  %v164 = vld [vmem:[%s1 + $0x48] sm:$0xff]
  %v165 = vld [vmem:[%s1 + $0x50] sm:$0xff]
  %v166 = vld [vmem:[%s1 + $0x58] sm:$0xff]
  %v167 = vld [vmem:[%s1 + $0x60] sm:$0xff]
  %v168 = vld [vmem:[%s1 + $0x68] sm:$0xff]
  %v169 = vld [vmem:[%s1 + $0x70] sm:$0xff]
  %v170 = vld [vmem:[%s1 + $0x78] sm:$0xff]
  %v171 = vld [vmem:[%s1 + $0x80] sm:$0xff]
  %v172 = vld [vmem:[%s1 + $0x88] sm:$0xff]
  %v173 = vld [vmem:[%s1 + $0x90] sm:$0xff]
  %v174 = vld [vmem:[%s1 + $0x98] sm:$0xff]
  %v175 = vld [vmem:[%s1 + $0xa0] sm:$0xff]
  %v176 = vld [vmem:[%s1 + $0xa8] sm:$0xff]
  %v177 = vld [vmem:[%s1 + $0xb0] sm:$0xff]
  %v178 = vld [vmem:[%s1 + $0xb8] sm:$0xff]
  %v179 = vld [vmem:[%s1 + $0xc0] sm:$0xff]
  %v180 = vld [vmem:[%s1 + $0xc8] sm:$0xff]
  %v181 = vld [vmem:[%s1 + $0xd0] sm:$0xff]
  %v182 = vld [vmem:[%s1 + $0xd8] sm:$0xff]
  %v183 = vld [vmem:[%s1 + $0xe0] sm:$0xff]
  %v184 = vld [vmem:[%s1 + $0xe8] sm:$0xff]
  %v185 = vld [vmem:[%s1 + $0xf0] sm:$0xff]
  %v186 = vld [vmem:[%s1 + $0xf8] sm:$0xff]
  %v187 = vld [vmem:[%s1 + $0x100] sm:$0xff]
  %v188 = vld [vmem:[%s1 + $0x108] sm:$0xff]
  %v189 = vld [vmem:[%s1 + $0x110] sm:$0xff]
  %v190 = vld [vmem:[%s1 + $0x118] sm:$0xff]
  %v191 = vld [vmem:[%s1 + $0x120] sm:$0xff]
  %v192 = vld [vmem:[%s1 + $0x128] sm:$0xff]
  %v193 = vld [vmem:[%s1 + $0x130] sm:$0xff]
  %v194 = vld [vmem:[%s1 + $0x138] sm:$0xff]
  %v195 = vld [vmem:[%s1 + $0x140] sm:$0xff]
  %v196 = vld [vmem:[%s1 + $0x148] sm:$0xff]
  %v197 = vld [vmem:[%s1 + $0x150] sm:$0xff]
  %v198 = vld [vmem:[%s1 + $0x158] sm:$0xff]
  %v199 = vld [vmem:[%s1 + $0x160] sm:$0xff]
  %v200 = vld [vmem:[%s1 + $0x168] sm:$0xff]
  %v201 = vld [vmem:[%s1 + $0x170] sm:$0xff]
  %v202 = vld [vmem:[%s1 + $0x178] sm:$0xff]
  %v331 = vunpack.c.l.b16 %v27
  %v332 = vunpack.c.l.b16 %v28
  %v333 = vunpack.c.l.b16 %v29
  %v334 = vunpack.c.l.b16 %v30
  %v335 = vunpack.c.l.b16 %v31
  %v336 = vunpack.c.l.b16 %v32
  %v337 = vunpack.c.l.b16 %v33
  %v338 = vunpack.c.l.b16 %v34
  %v339 = vunpack.c.l.b16 %v35
  %v340 = vunpack.c.l.b16 %v36
  %v341 = vunpack.c.l.b16 %v37
  %v342 = vunpack.c.l.b16 %v38
  %v343 = vunpack.c.l.b16 %v39
  %v344 = vunpack.c.l.b16 %v40
  %v345 = vunpack.c.l.b16 %v41
  %v346 = vunpack.c.l.b16 %v42
  %v347 = vunpack.c.l.b16 %v43
  %v348 = vunpack.c.l.b16 %v44
  %v349 = vunpack.c.l.b16 %v45
  %v350 = vunpack.c.l.b16 %v46
  %v351 = vunpack.c.l.b16 %v47
  %v352 = vunpack.c.l.b16 %v48
  %v353 = vunpack.c.l.b16 %v49
  %v354 = vunpack.c.l.b16 %v50
  %v355 = vunpack.c.l.b16 %v51
  %v356 = vunpack.c.l.b16 %v52
  %v357 = vunpack.c.l.b16 %v53
  %v358 = vunpack.c.l.b16 %v54
  %v359 = vunpack.c.l.b16 %v55
  %v360 = vunpack.c.l.b16 %v56
  %v361 = vunpack.c.l.b16 %v57
  %v362 = vunpack.c.l.b16 %v58
  %v363 = vunpack.c.l.b16 %v59
  %v364 = vunpack.c.l.b16 %v60
  %v365 = vunpack.c.l.b16 %v61
  %v366 = vunpack.c.l.b16 %v62
  %v367 = vunpack.c.l.b16 %v63
  %v368 = vunpack.c.l.b16 %v64
  %v369 = vunpack.c.l.b16 %v65
  %v370 = vunpack.c.l.b16 %v66
  %v371 = vunpack.c.l.b16 %v67
  %v372 = vunpack.c.l.b16 %v68
  %v373 = vunpack.c.l.b16 %v69
  %v374 = vunpack.c.l.b16 %v70
  %v375 = vunpack.c.l.b16 %v71
  %v376 = vunpack.c.l.b16 %v72
  %v377 = vunpack.c.l.b16 %v73
  %v378 = vunpack.c.l.b16 %v74
  %v379 = vunpack.c.l.b16 %v75
  %v380 = vunpack.c.l.b16 %v76
  %v381 = vunpack.c.l.b16 %v77
  %v382 = vunpack.c.l.b16 %v78
  %v383 = vunpack.c.l.b16 %v79
  %v384 = vunpack.c.l.b16 %v80
  %v385 = vunpack.c.l.b16 %v81
  %v386 = vunpack.c.l.b16 %v82
  %v387 = vunpack.c.l.b16 %v83
  %v388 = vunpack.c.l.b16 %v84
  %v389 = vunpack.c.l.b16 %v85
  %v390 = vunpack.c.l.b16 %v86
  %v391 = vunpack.c.l.b16 %v87
  %v392 = vunpack.c.l.b16 %v88
  %v393 = vunpack.c.l.b16 %v89
  %v394 = vunpack.c.l.b16 %v90
  %v395 = vunpack.c.l.b16 %v91
  %v396 = vunpack.c.l.b16 %v92
  %v397 = vunpack.c.l.b16 %v93
  %v398 = vunpack.c.l.b16 %v94
  %v399 = vunpack.c.l.b16 %v95
  %v400 = vunpack.c.l.b16 %v96
  %v401 = vunpack.c.l.b16 %v97
  %v402 = vunpack.c.l.b16 %v98
  %v403 = vunpack.c.l.b16 %v99
  %v404 = vunpack.c.l.b16 %v100
  %v405 = vunpack.c.l.b16 %v101
  %v406 = vunpack.c.l.b16 %v102
  %v407 = vunpack.c.l.b16 %v103
  %v408 = vunpack.c.l.b16 %v104
  %v409 = vunpack.c.l.b16 %v105
  %v410 = vunpack.c.l.b16 %v106
  %v411 = vunpack.c.l.b16 %v107
  %v412 = vunpack.c.l.b16 %v108
  %v413 = vunpack.c.l.b16 %v109
  %v414 = vunpack.c.l.b16 %v110
  %v415 = vunpack.c.l.b16 %v111
  %v416 = vunpack.c.l.b16 %v112
  %v417 = vunpack.c.l.b16 %v113
  %v418 = vunpack.c.l.b16 %v114
  %v419 = vunpack.c.l.b16 %v115
  %v420 = vunpack.c.l.b16 %v116
  %v421 = vunpack.c.l.b16 %v117
  %v422 = vunpack.c.l.b16 %v118
  %v423 = vunpack.c.l.b16 %v119
  %v424 = vunpack.c.l.b16 %v120
  %v425 = vunpack.c.l.b16 %v121
  %v426 = vunpack.c.l.b16 %v122
  %v427 = vunpack.c.l.b16 %v123
  %v428 = vunpack.c.l.b16 %v124
  %v429 = vunpack.c.l.b16 %v125
  %v430 = vunpack.c.l.b16 %v126
  %v431 = vunpack.c.l.b16 %v127
  %v432 = vunpack.c.l.b16 %v128
  %v433 = vunpack.c.l.b16 %v129
  %v434 = vunpack.c.l.b16 %v130
  %v435 = vunpack.c.l.b16 %v131
  %v436 = vunpack.c.l.b16 %v132
  %v437 = vunpack.c.l.b16 %v133
  %v438 = vunpack.c.l.b16 %v134
  %v439 = vunpack.c.l.b16 %v135
  %v440 = vunpack.c.l.b16 %v136
  %v441 = vunpack.c.l.b16 %v137
  %v442 = vunpack.c.l.b16 %v138
  %v443 = vunpack.c.l.b16 %v139
  %v444 = vunpack.c.l.b16 %v140
  %v445 = vunpack.c.l.b16 %v141
  %v446 = vunpack.c.l.b16 %v142
  %v447 = vunpack.c.l.b16 %v143
  %v448 = vunpack.c.l.b16 %v144
  %v449 = vunpack.c.l.b16 %v145
  %v450 = vunpack.c.l.b16 %v146
  %v451 = vunpack.c.l.b16 %v147
  %v452 = vunpack.c.l.b16 %v148
  %v453 = vunpack.c.l.b16 %v149
  %v454 = vunpack.c.l.b16 %v150
  %v455 = vunpack.c.l.b16 %v151
  %v456 = vunpack.c.l.b16 %v152
  %v457 = vunpack.c.l.b16 %v153
  %v458 = vunpack.c.l.b16 %v154
  %v459 = vpack.c.b16 %v332, %v331
  %v460 = vpack.c.b16 %v334, %v333
  %v461 = vpack.c.b16 %v336, %v335
  %v462 = vpack.c.b16 %v338, %v337
  %v463 = vpack.c.b16 %v340, %v339
  %v464 = vpack.c.b16 %v342, %v341
  %v465 = vpack.c.b16 %v344, %v343
  %v466 = vpack.c.b16 %v346, %v345
  %v467 = vpack.c.b16 %v348, %v347
  %v468 = vpack.c.b16 %v350, %v349
  %v469 = vpack.c.b16 %v352, %v351
  %v470 = vpack.c.b16 %v354, %v353
  %v471 = vpack.c.b16 %v356, %v355
  %v472 = vpack.c.b16 %v358, %v357
  %v473 = vpack.c.b16 %v360, %v359
  %v474 = vpack.c.b16 %v362, %v361
  %v475 = vpack.c.b16 %v364, %v363
  %v476 = vpack.c.b16 %v366, %v365
  %v477 = vpack.c.b16 %v368, %v367
  %v478 = vpack.c.b16 %v370, %v369
  %v479 = vpack.c.b16 %v372, %v371
  %v480 = vpack.c.b16 %v374, %v373
  %v481 = vpack.c.b16 %v376, %v375
  %v482 = vpack.c.b16 %v378, %v377
  %v483 = vpack.c.b16 %v380, %v379
  %v484 = vpack.c.b16 %v382, %v381
  %v485 = vpack.c.b16 %v384, %v383
  %v486 = vpack.c.b16 %v386, %v385
  %v487 = vpack.c.b16 %v388, %v387
  %v488 = vpack.c.b16 %v390, %v389
  %v489 = vpack.c.b16 %v392, %v391
  %v490 = vpack.c.b16 %v394, %v393
  %v491 = vpack.c.b16 %v396, %v395
  %v492 = vpack.c.b16 %v398, %v397
  %v493 = vpack.c.b16 %v400, %v399
  %v494 = vpack.c.b16 %v402, %v401
  %v495 = vpack.c.b16 %v404, %v403
  %v496 = vpack.c.b16 %v406, %v405
  %v497 = vpack.c.b16 %v408, %v407
  %v498 = vpack.c.b16 %v410, %v409
  %v499 = vpack.c.b16 %v412, %v411
  %v500 = vpack.c.b16 %v414, %v413
  %v501 = vpack.c.b16 %v416, %v415
  %v502 = vpack.c.b16 %v418, %v417
  %v503 = vpack.c.b16 %v420, %v419
  %v504 = vpack.c.b16 %v422, %v421
  %v505 = vpack.c.b16 %v424, %v423
  %v506 = vpack.c.b16 %v426, %v425
  %v507 = vpack.c.b16 %v428, %v427
  %v508 = vpack.c.b16 %v430, %v429
  %v509 = vpack.c.b16 %v432, %v431
  %v510 = vpack.c.b16 %v434, %v433
  %v511 = vpack.c.b16 %v436, %v435
  %v512 = vpack.c.b16 %v438, %v437
  %v513 = vpack.c.b16 %v440, %v439
  %v514 = vpack.c.b16 %v442, %v441
  %v515 = vpack.c.b16 %v444, %v443
  %v516 = vpack.c.b16 %v446, %v445
  %v517 = vpack.c.b16 %v448, %v447
  %v518 = vpack.c.b16 %v450, %v449
  %v519 = vpack.c.b16 %v452, %v451
  %v520 = vpack.c.b16 %v454, %v453
  %v521 = vpack.c.b16 %v456, %v455
  %v522 = vpack.c.b16 %v458, %v457
  %v571 = vunpack.c.l.b16 %v155
  %v572 = vunpack.c.h.b16 %v155
  %v573 = vunpack.c.l.b16 %v156
  %v574 = vunpack.c.h.b16 %v156
  %v575 = vunpack.c.l.b16 %v157
  %v576 = vunpack.c.h.b16 %v157
  %v577 = vunpack.c.l.b16 %v158
  %v578 = vunpack.c.h.b16 %v158
  %v579 = vunpack.c.l.b16 %v159
  %v580 = vunpack.c.h.b16 %v159
  %v581 = vunpack.c.l.b16 %v160
  %v582 = vunpack.c.h.b16 %v160
  %v583 = vunpack.c.l.b16 %v161
  %v584 = vunpack.c.h.b16 %v161
  %v585 = vunpack.c.l.b16 %v162
  %v586 = vunpack.c.h.b16 %v162
  %v587 = vunpack.c.l.b16 %v163
  %v588 = vunpack.c.h.b16 %v163
  %v589 = vunpack.c.l.b16 %v164
  %v590 = vunpack.c.h.b16 %v164
  %v591 = vunpack.c.l.b16 %v165
  %v592 = vunpack.c.h.b16 %v165
  %v593 = vunpack.c.l.b16 %v166
  %v594 = vunpack.c.h.b16 %v166
  %v595 = vunpack.c.l.b16 %v167
  %v596 = vunpack.c.h.b16 %v167
  %v597 = vunpack.c.l.b16 %v168
  %v598 = vunpack.c.h.b16 %v168
  %v599 = vunpack.c.l.b16 %v169
  %v600 = vunpack.c.h.b16 %v169
  %v601 = vunpack.c.l.b16 %v170
  %v602 = vunpack.c.h.b16 %v170
  %v603 = vunpack.c.l.b16 %v171
  %v604 = vunpack.c.h.b16 %v171
  %v605 = vunpack.c.l.b16 %v172
  %v606 = vunpack.c.h.b16 %v172
  %v607 = vunpack.c.l.b16 %v173
  %v608 = vunpack.c.h.b16 %v173
  %v609 = vunpack.c.l.b16 %v174
  %v610 = vunpack.c.h.b16 %v174
  %v611 = vunpack.c.l.b16 %v175
  %v612 = vunpack.c.h.b16 %v175
  %v613 = vunpack.c.l.b16 %v176
  %v614 = vunpack.c.h.b16 %v176
  %v615 = vunpack.c.l.b16 %v177
  %v616 = vunpack.c.h.b16 %v177
  %v617 = vunpack.c.l.b16 %v178
  %v618 = vunpack.c.h.b16 %v178
  %v619 = vunpack.c.l.b16 %v179
  %v620 = vunpack.c.h.b16 %v179
  %v621 = vunpack.c.l.b16 %v180
  %v622 = vunpack.c.h.b16 %v180
  %v623 = vunpack.c.l.b16 %v181
  %v624 = vunpack.c.h.b16 %v181
  %v625 = vunpack.c.l.b16 %v182
  %v626 = vunpack.c.h.b16 %v182
  %v627 = vunpack.c.l.b16 %v183
  %v628 = vunpack.c.h.b16 %v183
  %v629 = vunpack.c.l.b16 %v184
  %v630 = vunpack.c.h.b16 %v184
  %v631 = vunpack.c.l.b16 %v185
  %v632 = vunpack.c.h.b16 %v185
  %v633 = vunpack.c.l.b16 %v186
  %v634 = vunpack.c.h.b16 %v186
  %v635 = vunpack.c.l.b16 %v187
  %v636 = vunpack.c.h.b16 %v187
  %v637 = vunpack.c.l.b16 %v188
  %v638 = vunpack.c.h.b16 %v188
  %v639 = vunpack.c.l.b16 %v189
  %v640 = vunpack.c.h.b16 %v189
  %v641 = vunpack.c.l.b16 %v190
  %v642 = vunpack.c.h.b16 %v190
  %v643 = vunpack.c.l.b16 %v191
  %v644 = vunpack.c.h.b16 %v191
  %v645 = vunpack.c.l.b16 %v192
  %v646 = vunpack.c.h.b16 %v192
  %v647 = vunpack.c.l.b16 %v193
  %v648 = vunpack.c.h.b16 %v193
  %v649 = vunpack.c.l.b16 %v194
  %v650 = vunpack.c.h.b16 %v194
  %v651 = vunpack.c.l.b16 %v195
  %v652 = vunpack.c.h.b16 %v195
  %v653 = vunpack.c.l.b16 %v196
  %v654 = vunpack.c.h.b16 %v196
  %v655 = vunpack.c.l.b16 %v197
  %v656 = vunpack.c.h.b16 %v197
  %v657 = vunpack.c.l.b16 %v198
  %v658 = vunpack.c.h.b16 %v198
  %v659 = vunpack.c.l.b16 %v199
  %v660 = vunpack.c.h.b16 %v199
  %v661 = vunpack.c.l.b16 %v200
  %v662 = vunpack.c.h.b16 %v200
  %v663 = vunpack.c.l.b16 %v201
  %v664 = vunpack.c.h.b16 %v201
  %v665 = vunpack.c.l.b16 %v202
  %v666 = vunpack.c.h.b16 %v202
  %v667 = vpack.c.b16 %v579, %v571
  %v668 = vpack.c.b16 %v580, %v572
  %v669 = vpack.c.b16 %v581, %v573
  %v670 = vpack.c.b16 %v582, %v574
  %v671 = vpack.c.b16 %v583, %v575
  %v672 = vpack.c.b16 %v584, %v576
  %v673 = vpack.c.b16 %v585, %v577
  %v674 = vpack.c.b16 %v586, %v578
  %v675 = vpack.c.b16 %v595, %v587
  %v676 = vpack.c.b16 %v596, %v588
  %v677 = vpack.c.b16 %v597, %v589
  %v678 = vpack.c.b16 %v598, %v590
  %v679 = vpack.c.b16 %v599, %v591
  %v680 = vpack.c.b16 %v600, %v592
  %v681 = vpack.c.b16 %v601, %v593
  %v682 = vpack.c.b16 %v602, %v594
  %v683 = vpack.c.b16 %v611, %v603
  %v684 = vpack.c.b16 %v612, %v604
  %v685 = vpack.c.b16 %v613, %v605
  %v686 = vpack.c.b16 %v614, %v606
  %v687 = vpack.c.b16 %v615, %v607
  %v688 = vpack.c.b16 %v616, %v608
  %v689 = vpack.c.b16 %v617, %v609
  %v690 = vpack.c.b16 %v618, %v610
  %v691 = vpack.c.b16 %v627, %v619
  %v692 = vpack.c.b16 %v628, %v620
  %v693 = vpack.c.b16 %v629, %v621
  %v694 = vpack.c.b16 %v630, %v622
  %v695 = vpack.c.b16 %v631, %v623
  %v696 = vpack.c.b16 %v632, %v624
  %v697 = vpack.c.b16 %v633, %v625
  %v698 = vpack.c.b16 %v634, %v626
  %v699 = vpack.c.b16 %v643, %v635
  %v700 = vpack.c.b16 %v644, %v636
  %v701 = vpack.c.b16 %v645, %v637
  %v702 = vpack.c.b16 %v646, %v638
  %v703 = vpack.c.b16 %v647, %v639
  %v704 = vpack.c.b16 %v648, %v640
  %v705 = vpack.c.b16 %v649, %v641
  %v706 = vpack.c.b16 %v650, %v642
  %v707 = vpack.c.b16 %v659, %v651
  %v708 = vpack.c.b16 %v660, %v652
  %v709 = vpack.c.b16 %v661, %v653
  %v710 = vpack.c.b16 %v662, %v654
  %v711 = vpack.c.b16 %v663, %v655
  %v712 = vpack.c.b16 %v664, %v656
  %v713 = vpack.c.b16 %v665, %v657
  %v714 = vpack.c.b16 %v666, %v658
  %vm763 = vcmask 785408
  %v765 = vsel %vm763, %v459, 0
  %v768 = vsel %vm763, %v460, 0
  %v771 = vsel %vm763, %v461, 0
  %v774 = vsel %vm763, %v462, 0
  %v777 = vsel %vm763, %v463, 0
  %v780 = vsel %vm763, %v464, 0
  %v783 = vsel %vm763, %v465, 0
  %v786 = vsel %vm763, %v466, 0
  %v789 = vsel %vm763, %v467, 0
  %v792 = vsel %vm763, %v468, 0
  %v795 = vsel %vm763, %v469, 0
  %v798 = vsel %vm763, %v470, 0
  %v801 = vsel %vm763, %v471, 0
  %v804 = vsel %vm763, %v472, 0
  %v807 = vsel %vm763, %v473, 0
  %v810 = vsel %vm763, %v474, 0
  %v813 = vsel %vm763, %v475, 0
  %v816 = vsel %vm763, %v476, 0
  %v819 = vsel %vm763, %v477, 0
  %v822 = vsel %vm763, %v478, 0
  %v825 = vsel %vm763, %v479, 0
  %v828 = vsel %vm763, %v480, 0
  %v831 = vsel %vm763, %v481, 0
  %v834 = vsel %vm763, %v482, 0
  %v837 = vsel %vm763, %v483, 0
  %v840 = vsel %vm763, %v484, 0
  %v843 = vsel %vm763, %v485, 0
  %v846 = vsel %vm763, %v486, 0
  %v849 = vsel %vm763, %v487, 0
  %v852 = vsel %vm763, %v488, 0
  %v855 = vsel %vm763, %v489, 0
  %v858 = vsel %vm763, %v490, 0
  %v861 = vsel %vm763, %v491, 0
  %v864 = vsel %vm763, %v492, 0
  %v867 = vsel %vm763, %v493, 0
  %v870 = vsel %vm763, %v494, 0
  %v873 = vsel %vm763, %v495, 0
  %v876 = vsel %vm763, %v496, 0
  %v879 = vsel %vm763, %v497, 0
  %v882 = vsel %vm763, %v498, 0
  %v885 = vsel %vm763, %v499, 0
  %v888 = vsel %vm763, %v500, 0
  %v891 = vsel %vm763, %v501, 0
  %v894 = vsel %vm763, %v502, 0
  %v897 = vsel %vm763, %v503, 0
  %v900 = vsel %vm763, %v504, 0
  %v903 = vsel %vm763, %v505, 0
  %v906 = vsel %vm763, %v506, 0
  %v909 = vsel %vm763, %v507, 0
  %v912 = vsel %vm763, %v508, 0
  %v915 = vsel %vm763, %v509, 0
  %v918 = vsel %vm763, %v510, 0
  %v921 = vsel %vm763, %v511, 0
  %v924 = vsel %vm763, %v512, 0
  %v927 = vsel %vm763, %v513, 0
  %v930 = vsel %vm763, %v514, 0
  %v933 = vsel %vm763, %v515, 0
  %v936 = vsel %vm763, %v516, 0
  %v939 = vsel %vm763, %v517, 0
  %v942 = vsel %vm763, %v518, 0
  %v945 = vsel %vm763, %v519, 0
  %v948 = vsel %vm763, %v520, 0
  %v951 = vsel %vm763, %v521, 0
  %v954 = vsel %vm763, %v522, 0
  %956 = vmatprep.subr.bf16.mxu0 0
  %957 = vmatpush1.bf16.msra.mxu0 0
  %958 = vmatprep.subr.bf16.mxu0 0
  %959 = vmatpush1.bf16.msra.mxu0 0
  %960 = vmatprep.subr.bf16.mxu0 %v708
  %961 = vmatpush1.bf16.msra.mxu0 %v707
  %962 = vmatprep.subr.bf16.mxu0 %v700
  %963 = vmatpush1.bf16.msra.mxu0 %v699
  %964 = vmatprep.subr.bf16.mxu0 %v692
  %965 = vmatpush1.bf16.msra.mxu0 %v691
  %966 = vmatprep.subr.bf16.mxu0 %v684
  %967 = vmatpush1.bf16.msra.mxu0 %v683
  %968 = vmatprep.subr.bf16.mxu0 %v676
  %969 = vmatpush1.bf16.msra.mxu0 %v675
  %970 = vmatprep.subr.bf16.mxu0 %v668
  %971 = vmatpush1.bf16.msra.mxu0 %v667
  %972 = vmatprep.subr.bf16.mxu0 0
  %973 = vmatpush2.bf16.msra.mxu0 0
  %974 = vmatprep.subr.bf16.mxu0 0
  %975 = vmatpush2.bf16.msra.mxu0 0
  %976 = vmatprep.subr.bf16.mxu0 0
  %977 = vmatpush2.bf16.msra.mxu0 0
  %978 = vmatprep.subr.bf16.mxu0 0
  %979 = vmatpush2.bf16.msra.mxu0 0
  %980 = vmatprep.subr.bf16.mxu0 0
  %981 = vmatpush2.bf16.msra.mxu0 0
  %982 = vmatprep.subr.bf16.mxu0 0
  %983 = vmatpush2.bf16.msra.mxu0 0
  %984 = vmatprep.subr.bf16.mxu0 0
  %985 = vmatpush2.bf16.msra.mxu0 0
  %986 = vmatprep.subr.bf16.mxu0 0
  %987 = vmatpush2.bf16.msra.mxu0 0
  %988 = vmatprep.mubr.bf16.mxu0 0
  %989 = vmatmul.mubr.bf16.gmra.mxu0 %v765
  %v990 = vpop.f32.mrf.mxu0
  %v991 = vadd.f32 0.0, %v990
  %v992 = vpop.f32.mrf.mxu0
  %v993 = vadd.f32 0.0, %v992
  %v994 = vpop.f32.mrf.mxu0
  %v995 = vadd.f32 0.0, %v994
  %v996 = vpop.f32.mrf.mxu0
  %v997 = vadd.f32 0.0, %v996
  %998 = vmatprep.mubr.bf16.mxu0 0
  %999 = vmatmul.mubr.bf16.gmra.mxu0 %v768
  %v1000 = vpop.f32.mrf.mxu0
  %v1001 = vadd.f32 0.0, %v1000
  %v1002 = vpop.f32.mrf.mxu0
  %v1003 = vadd.f32 0.0, %v1002
  %v1004 = vpop.f32.mrf.mxu0
  %v1005 = vadd.f32 0.0, %v1004
  %v1006 = vpop.f32.mrf.mxu0
  %v1007 = vadd.f32 0.0, %v1006
  %1008 = vmatprep.mubr.bf16.mxu0 0
  %1009 = vmatmul.mubr.bf16.gmra.mxu0 %v771
  %v1010 = vpop.f32.mrf.mxu0
  %v1011 = vadd.f32 0.0, %v1010
  %v1012 = vpop.f32.mrf.mxu0
  %v1013 = vadd.f32 0.0, %v1012
  %v1014 = vpop.f32.mrf.mxu0
  %v1015 = vadd.f32 0.0, %v1014
  %v1016 = vpop.f32.mrf.mxu0
  %v1017 = vadd.f32 0.0, %v1016
  %1018 = vmatprep.mubr.bf16.mxu0 0
  %1019 = vmatmul.mubr.bf16.gmra.mxu0 %v774
  %v1020 = vpop.f32.mrf.mxu0
  %v1021 = vadd.f32 0.0, %v1020
  %v1022 = vpop.f32.mrf.mxu0
  %v1023 = vadd.f32 0.0, %v1022
  %v1024 = vpop.f32.mrf.mxu0
  %v1025 = vadd.f32 0.0, %v1024
  %v1026 = vpop.f32.mrf.mxu0
  %v1027 = vadd.f32 0.0, %v1026
  %1028 = vmatprep.mubr.bf16.mxu0 0
  %1029 = vmatmul.mubr.bf16.gmra.mxu0 %v777
  %v1030 = vpop.f32.mrf.mxu0
  %v1031 = vadd.f32 0.0, %v1030
  %v1032 = vpop.f32.mrf.mxu0
  %v1033 = vadd.f32 0.0, %v1032
  %v1034 = vpop.f32.mrf.mxu0
  %v1035 = vadd.f32 0.0, %v1034
  %v1036 = vpop.f32.mrf.mxu0
  %v1037 = vadd.f32 0.0, %v1036
  %1038 = vmatprep.mubr.bf16.mxu0 0
  %1039 = vmatmul.mubr.bf16.gmra.mxu0 %v780
  %v1040 = vpop.f32.mrf.mxu0
  %v1041 = vadd.f32 0.0, %v1040
  %v1042 = vpop.f32.mrf.mxu0
  %v1043 = vadd.f32 0.0, %v1042
  %v1044 = vpop.f32.mrf.mxu0
  %v1045 = vadd.f32 0.0, %v1044
  %v1046 = vpop.f32.mrf.mxu0
  %v1047 = vadd.f32 0.0, %v1046
  %1048 = vmatprep.mubr.bf16.mxu0 0
  %1049 = vmatmul.mubr.bf16.gmra.mxu0 %v783
  %v1050 = vpop.f32.mrf.mxu0
  %v1051 = vadd.f32 0.0, %v1050
  %v1052 = vpop.f32.mrf.mxu0
  %v1053 = vadd.f32 0.0, %v1052
  %v1054 = vpop.f32.mrf.mxu0
  %v1055 = vadd.f32 0.0, %v1054
  %v1056 = vpop.f32.mrf.mxu0
  %v1057 = vadd.f32 0.0, %v1056
  %1058 = vmatprep.mubr.bf16.mxu0 0
  %1059 = vmatmul.mubr.bf16.gmra.mxu0 %v786
  %v1060 = vpop.f32.mrf.mxu0
  %v1061 = vadd.f32 0.0, %v1060
  %v1062 = vpop.f32.mrf.mxu0
  %v1063 = vadd.f32 0.0, %v1062
  %v1064 = vpop.f32.mrf.mxu0
  %v1065 = vadd.f32 0.0, %v1064
  %v1066 = vpop.f32.mrf.mxu0
  %v1067 = vadd.f32 0.0, %v1066
  %1068 = vmatprep.mubr.bf16.mxu0 0
  %1069 = vmatmul.mubr.bf16.gmra.mxu0 %v789
  %v1070 = vpop.f32.mrf.mxu0
  %v1071 = vadd.f32 0.0, %v1070
  %v1072 = vpop.f32.mrf.mxu0
  %v1073 = vadd.f32 0.0, %v1072
  %v1074 = vpop.f32.mrf.mxu0
  %v1075 = vadd.f32 0.0, %v1074
  %v1076 = vpop.f32.mrf.mxu0
  %v1077 = vadd.f32 0.0, %v1076
  %1078 = vmatprep.mubr.bf16.mxu0 0
  %1079 = vmatmul.mubr.bf16.gmra.mxu0 %v792
  %v1080 = vpop.f32.mrf.mxu0
  %v1081 = vadd.f32 0.0, %v1080
  %v1082 = vpop.f32.mrf.mxu0
  %v1083 = vadd.f32 0.0, %v1082
  %v1084 = vpop.f32.mrf.mxu0
  %v1085 = vadd.f32 0.0, %v1084
  %v1086 = vpop.f32.mrf.mxu0
  %v1087 = vadd.f32 0.0, %v1086
  %1088 = vmatprep.mubr.bf16.mxu0 0
  %1089 = vmatmul.mubr.bf16.gmra.mxu0 %v795
  %v1090 = vpop.f32.mrf.mxu0
  %v1091 = vadd.f32 0.0, %v1090
  %v1092 = vpop.f32.mrf.mxu0
  %v1093 = vadd.f32 0.0, %v1092
  %v1094 = vpop.f32.mrf.mxu0
  %v1095 = vadd.f32 0.0, %v1094
  %v1096 = vpop.f32.mrf.mxu0
  %v1097 = vadd.f32 0.0, %v1096
  %1098 = vmatprep.mubr.bf16.mxu0 0
  %1099 = vmatmul.mubr.bf16.gmra.mxu0 %v798
  %v1100 = vpop.f32.mrf.mxu0
  %v1101 = vadd.f32 0.0, %v1100
  %v1102 = vpop.f32.mrf.mxu0
  %v1103 = vadd.f32 0.0, %v1102
  %v1104 = vpop.f32.mrf.mxu0
  %v1105 = vadd.f32 0.0, %v1104
  %v1106 = vpop.f32.mrf.mxu0
  %v1107 = vadd.f32 0.0, %v1106
  %1108 = vmatprep.mubr.bf16.mxu0 0
  %1109 = vmatmul.mubr.bf16.gmra.mxu0 %v801
  %v1110 = vpop.f32.mrf.mxu0
  %v1111 = vadd.f32 0.0, %v1110
  %v1112 = vpop.f32.mrf.mxu0
  %v1113 = vadd.f32 0.0, %v1112
  %v1114 = vpop.f32.mrf.mxu0
  %v1115 = vadd.f32 0.0, %v1114
  %v1116 = vpop.f32.mrf.mxu0
  %v1117 = vadd.f32 0.0, %v1116
  %1118 = vmatprep.mubr.bf16.mxu0 0
  %1119 = vmatmul.mubr.bf16.gmra.mxu0 %v804
  %v1120 = vpop.f32.mrf.mxu0
  %v1121 = vadd.f32 0.0, %v1120
  %v1122 = vpop.f32.mrf.mxu0
  %v1123 = vadd.f32 0.0, %v1122
  %v1124 = vpop.f32.mrf.mxu0
  %v1125 = vadd.f32 0.0, %v1124
  %v1126 = vpop.f32.mrf.mxu0
  %v1127 = vadd.f32 0.0, %v1126
  %1128 = vmatprep.mubr.bf16.mxu0 0
  %1129 = vmatmul.mubr.bf16.gmra.mxu0 %v807
  %v1130 = vpop.f32.mrf.mxu0
  %v1131 = vadd.f32 0.0, %v1130
  %v1132 = vpop.f32.mrf.mxu0
  %v1133 = vadd.f32 0.0, %v1132
  %v1134 = vpop.f32.mrf.mxu0
  %v1135 = vadd.f32 0.0, %v1134
  %v1136 = vpop.f32.mrf.mxu0
  %v1137 = vadd.f32 0.0, %v1136
  %1138 = vmatprep.mubr.bf16.mxu0 0
  %1139 = vmatmul.mubr.bf16.gmra.mxu0 %v810
  %v1140 = vpop.f32.mrf.mxu0
  %v1141 = vadd.f32 0.0, %v1140
  %v1142 = vpop.f32.mrf.mxu0
  %v1143 = vadd.f32 0.0, %v1142
  %v1144 = vpop.f32.mrf.mxu0
  %v1145 = vadd.f32 0.0, %v1144
  %v1146 = vpop.f32.mrf.mxu0
  %v1147 = vadd.f32 0.0, %v1146
  %1148 = vmatprep.mubr.bf16.mxu0 0
  %1149 = vmatmul.mubr.bf16.gmra.mxu0 %v813
  %v1150 = vpop.f32.mrf.mxu0
  %v1151 = vadd.f32 0.0, %v1150
  %v1152 = vpop.f32.mrf.mxu0
  %v1153 = vadd.f32 0.0, %v1152
  %v1154 = vpop.f32.mrf.mxu0
  %v1155 = vadd.f32 0.0, %v1154
  %v1156 = vpop.f32.mrf.mxu0
  %v1157 = vadd.f32 0.0, %v1156
  %1158 = vmatprep.mubr.bf16.mxu0 0
  %1159 = vmatmul.mubr.bf16.gmra.mxu0 %v816
  %v1160 = vpop.f32.mrf.mxu0
  %v1161 = vadd.f32 0.0, %v1160
  %v1162 = vpop.f32.mrf.mxu0
  %v1163 = vadd.f32 0.0, %v1162
  %v1164 = vpop.f32.mrf.mxu0
  %v1165 = vadd.f32 0.0, %v1164
  %v1166 = vpop.f32.mrf.mxu0
  %v1167 = vadd.f32 0.0, %v1166
  %1168 = vmatprep.mubr.bf16.mxu0 0
  %1169 = vmatmul.mubr.bf16.gmra.mxu0 %v819
  %v1170 = vpop.f32.mrf.mxu0
  %v1171 = vadd.f32 0.0, %v1170
  %v1172 = vpop.f32.mrf.mxu0
  %v1173 = vadd.f32 0.0, %v1172
  %v1174 = vpop.f32.mrf.mxu0
  %v1175 = vadd.f32 0.0, %v1174
  %v1176 = vpop.f32.mrf.mxu0
  %v1177 = vadd.f32 0.0, %v1176
  %1178 = vmatprep.mubr.bf16.mxu0 0
  %1179 = vmatmul.mubr.bf16.gmra.mxu0 %v822
  %v1180 = vpop.f32.mrf.mxu0
  %v1181 = vadd.f32 0.0, %v1180
  %v1182 = vpop.f32.mrf.mxu0
  %v1183 = vadd.f32 0.0, %v1182
  %v1184 = vpop.f32.mrf.mxu0
  %v1185 = vadd.f32 0.0, %v1184
  %v1186 = vpop.f32.mrf.mxu0
  %v1187 = vadd.f32 0.0, %v1186
  %1188 = vmatprep.mubr.bf16.mxu0 0
  %1189 = vmatmul.mubr.bf16.gmra.mxu0 %v825
  %v1190 = vpop.f32.mrf.mxu0
  %v1191 = vadd.f32 0.0, %v1190
  %v1192 = vpop.f32.mrf.mxu0
  %v1193 = vadd.f32 0.0, %v1192
  %v1194 = vpop.f32.mrf.mxu0
  %v1195 = vadd.f32 0.0, %v1194
  %v1196 = vpop.f32.mrf.mxu0
  %v1197 = vadd.f32 0.0, %v1196
  %1198 = vmatprep.mubr.bf16.mxu0 0
  %1199 = vmatmul.mubr.bf16.gmra.mxu0 %v828
  %v1200 = vpop.f32.mrf.mxu0
  %v1201 = vadd.f32 0.0, %v1200
  %v1202 = vpop.f32.mrf.mxu0
  %v1203 = vadd.f32 0.0, %v1202
  %v1204 = vpop.f32.mrf.mxu0
  %v1205 = vadd.f32 0.0, %v1204
  %v1206 = vpop.f32.mrf.mxu0
  %v1207 = vadd.f32 0.0, %v1206
  %1208 = vmatprep.mubr.bf16.mxu0 0
  %1209 = vmatmul.mubr.bf16.gmra.mxu0 %v831
  %v1210 = vpop.f32.mrf.mxu0
  %v1211 = vadd.f32 0.0, %v1210
  %v1212 = vpop.f32.mrf.mxu0
  %v1213 = vadd.f32 0.0, %v1212
  %v1214 = vpop.f32.mrf.mxu0
  %v1215 = vadd.f32 0.0, %v1214
  %v1216 = vpop.f32.mrf.mxu0
  %v1217 = vadd.f32 0.0, %v1216
  %1218 = vmatprep.mubr.bf16.mxu0 0
  %1219 = vmatmul.mubr.bf16.gmra.mxu0 %v834
  %v1220 = vpop.f32.mrf.mxu0
  %v1221 = vadd.f32 0.0, %v1220
  %v1222 = vpop.f32.mrf.mxu0
  %v1223 = vadd.f32 0.0, %v1222
  %v1224 = vpop.f32.mrf.mxu0
  %v1225 = vadd.f32 0.0, %v1224
  %v1226 = vpop.f32.mrf.mxu0
  %v1227 = vadd.f32 0.0, %v1226
  %1228 = vmatprep.mubr.bf16.mxu0 0
  %1229 = vmatmul.mubr.bf16.gmra.mxu0 %v837
  %v1230 = vpop.f32.mrf.mxu0
  %v1231 = vadd.f32 0.0, %v1230
  %v1232 = vpop.f32.mrf.mxu0
  %v1233 = vadd.f32 0.0, %v1232
  %v1234 = vpop.f32.mrf.mxu0
  %v1235 = vadd.f32 0.0, %v1234
  %v1236 = vpop.f32.mrf.mxu0
  %v1237 = vadd.f32 0.0, %v1236
  %1238 = vmatprep.mubr.bf16.mxu0 0
  %1239 = vmatmul.mubr.bf16.gmra.mxu0 %v840
  %v1240 = vpop.f32.mrf.mxu0
  %v1241 = vadd.f32 0.0, %v1240
  %v1242 = vpop.f32.mrf.mxu0
  %v1243 = vadd.f32 0.0, %v1242
  %v1244 = vpop.f32.mrf.mxu0
  %v1245 = vadd.f32 0.0, %v1244
  %v1246 = vpop.f32.mrf.mxu0
  %v1247 = vadd.f32 0.0, %v1246
  %1248 = vmatprep.mubr.bf16.mxu0 0
  %1249 = vmatmul.mubr.bf16.gmra.mxu0 %v843
  %v1250 = vpop.f32.mrf.mxu0
  %v1251 = vadd.f32 0.0, %v1250
  %v1252 = vpop.f32.mrf.mxu0
  %v1253 = vadd.f32 0.0, %v1252
  %v1254 = vpop.f32.mrf.mxu0
  %v1255 = vadd.f32 0.0, %v1254
  %v1256 = vpop.f32.mrf.mxu0
  %v1257 = vadd.f32 0.0, %v1256
  %1258 = vmatprep.mubr.bf16.mxu0 0
  %1259 = vmatmul.mubr.bf16.gmra.mxu0 %v846
  %v1260 = vpop.f32.mrf.mxu0
  %v1261 = vadd.f32 0.0, %v1260
  %v1262 = vpop.f32.mrf.mxu0
  %v1263 = vadd.f32 0.0, %v1262
  %v1264 = vpop.f32.mrf.mxu0
  %v1265 = vadd.f32 0.0, %v1264
  %v1266 = vpop.f32.mrf.mxu0
  %v1267 = vadd.f32 0.0, %v1266
  %1268 = vmatprep.mubr.bf16.mxu0 0
  %1269 = vmatmul.mubr.bf16.gmra.mxu0 %v849
  %v1270 = vpop.f32.mrf.mxu0
  %v1271 = vpop.f32.mrf.mxu0
  %v1272 = vpop.f32.mrf.mxu0
  %v1273 = vpop.f32.mrf.mxu0
  %1274 = vmatprep.mubr.bf16.mxu0 0
  %1275 = vmatmul.mubr.bf16.gmra.mxu0 %v852
  %v1276 = vpop.f32.mrf.mxu0
  %v1277 = vpop.f32.mrf.mxu0
  %v1278 = vpop.f32.mrf.mxu0
  %v1279 = vpop.f32.mrf.mxu0
  %1280 = vmatprep.mubr.bf16.mxu0 0
  %1281 = vmatmul.mubr.bf16.gmra.mxu0 %v855
  %v1282 = vpop.f32.mrf.mxu0
  %v1283 = vpop.f32.mrf.mxu0
  %v1284 = vpop.f32.mrf.mxu0
  %v1285 = vpop.f32.mrf.mxu0
  %1286 = vmatprep.mubr.bf16.mxu0 0
  %1287 = vmatmul.mubr.bf16.gmra.mxu0 %v858
  %v1288 = vpop.f32.mrf.mxu0
  %v1289 = vpop.f32.mrf.mxu0
  %v1290 = vpop.f32.mrf.mxu0
  %v1291 = vpop.f32.mrf.mxu0
  %1292 = vmatprep.mubr.bf16.mxu0 0
  %1293 = vmatmul.mubr.bf16.gmra.mxu0 %v861
  %v1294 = vpop.f32.mrf.mxu0
  %v1295 = vadd.f32 0.0, %v1294
  %v1296 = vpop.f32.mrf.mxu0
  %v1297 = vadd.f32 0.0, %v1296
  %v1298 = vpop.f32.mrf.mxu0
  %v1299 = vadd.f32 0.0, %v1298
  %v1300 = vpop.f32.mrf.mxu0
  %v1301 = vadd.f32 0.0, %v1300
  %1302 = vmatprep.mubr.bf16.mxu0 0
  %1303 = vmatmul.mubr.bf16.gmra.mxu0 %v864
  %v1304 = vpop.f32.mrf.mxu0
  %v1305 = vadd.f32 0.0, %v1304
  %v1306 = vpop.f32.mrf.mxu0
  %v1307 = vadd.f32 0.0, %v1306
  %v1308 = vpop.f32.mrf.mxu0
  %v1309 = vadd.f32 0.0, %v1308
  %v1310 = vpop.f32.mrf.mxu0
  %v1311 = vadd.f32 0.0, %v1310
  %1312 = vmatprep.mubr.bf16.mxu0 0
  %1313 = vmatmul.mubr.bf16.gmra.mxu0 %v867
  %v1314 = vpop.f32.mrf.mxu0
  %v1315 = vadd.f32 0.0, %v1314
  %v1316 = vpop.f32.mrf.mxu0
  %v1317 = vadd.f32 0.0, %v1316
  %v1318 = vpop.f32.mrf.mxu0
  %v1319 = vadd.f32 0.0, %v1318
  %v1320 = vpop.f32.mrf.mxu0
  %v1321 = vadd.f32 0.0, %v1320
  %1322 = vmatprep.mubr.bf16.mxu0 0
  %1323 = vmatmul.mubr.bf16.gmra.mxu0 %v870
  %v1324 = vpop.f32.mrf.mxu0
  %v1325 = vadd.f32 0.0, %v1324
  %v1326 = vpop.f32.mrf.mxu0
  %v1327 = vadd.f32 0.0, %v1326
  %v1328 = vpop.f32.mrf.mxu0
  %v1329 = vadd.f32 0.0, %v1328
  %v1330 = vpop.f32.mrf.mxu0
  %v1331 = vadd.f32 0.0, %v1330
  %1332 = vmatprep.mubr.bf16.mxu0 0
  %1333 = vmatmul.mubr.bf16.gmra.mxu0 %v873
  %v1334 = vpop.f32.mrf.mxu0
  %v1335 = vadd.f32 0.0, %v1334
  %v1336 = vpop.f32.mrf.mxu0
  %v1337 = vadd.f32 0.0, %v1336
  %v1338 = vpop.f32.mrf.mxu0
  %v1339 = vadd.f32 0.0, %v1338
  %v1340 = vpop.f32.mrf.mxu0
  %v1341 = vadd.f32 0.0, %v1340
  %1342 = vmatprep.mubr.bf16.mxu0 0
  %1343 = vmatmul.mubr.bf16.gmra.mxu0 %v876
  %v1344 = vpop.f32.mrf.mxu0
  %v1345 = vadd.f32 0.0, %v1344
  %v1346 = vpop.f32.mrf.mxu0
  %v1347 = vadd.f32 0.0, %v1346
  %v1348 = vpop.f32.mrf.mxu0
  %v1349 = vadd.f32 0.0, %v1348
  %v1350 = vpop.f32.mrf.mxu0
  %v1351 = vadd.f32 0.0, %v1350
  %1352 = vmatprep.mubr.bf16.mxu0 0
  %1353 = vmatmul.mubr.bf16.gmra.mxu0 %v879
  %v1354 = vpop.f32.mrf.mxu0
  %v1355 = vadd.f32 0.0, %v1354
  %v1356 = vpop.f32.mrf.mxu0
  %v1357 = vadd.f32 0.0, %v1356
  %v1358 = vpop.f32.mrf.mxu0
  %v1359 = vadd.f32 0.0, %v1358
  %v1360 = vpop.f32.mrf.mxu0
  %v1361 = vadd.f32 0.0, %v1360
  %1362 = vmatprep.mubr.bf16.mxu0 0
  %1363 = vmatmul.mubr.bf16.gmra.mxu0 %v882
  %v1364 = vpop.f32.mrf.mxu0
  %v1365 = vadd.f32 0.0, %v1364
  %v1366 = vpop.f32.mrf.mxu0
  %v1367 = vadd.f32 0.0, %v1366
  %v1368 = vpop.f32.mrf.mxu0
  %v1369 = vadd.f32 0.0, %v1368
  %v1370 = vpop.f32.mrf.mxu0
  %v1371 = vadd.f32 0.0, %v1370
  %1372 = vmatprep.mubr.bf16.mxu0 0
  %1373 = vmatmul.mubr.bf16.gmra.mxu0 %v885
  %v1374 = vpop.f32.mrf.mxu0
  %v1375 = vadd.f32 0.0, %v1374
  %v1376 = vpop.f32.mrf.mxu0
  %v1377 = vadd.f32 0.0, %v1376
  %v1378 = vpop.f32.mrf.mxu0
  %v1379 = vadd.f32 0.0, %v1378
  %v1380 = vpop.f32.mrf.mxu0
  %v1381 = vadd.f32 0.0, %v1380
  %1382 = vmatprep.mubr.bf16.mxu0 0
  %1383 = vmatmul.mubr.bf16.gmra.mxu0 %v888
  %v1384 = vpop.f32.mrf.mxu0
  %v1385 = vadd.f32 0.0, %v1384
  %v1386 = vpop.f32.mrf.mxu0
  %v1387 = vadd.f32 0.0, %v1386
  %v1388 = vpop.f32.mrf.mxu0
  %v1389 = vadd.f32 0.0, %v1388
  %v1390 = vpop.f32.mrf.mxu0
  %v1391 = vadd.f32 0.0, %v1390
  %1392 = vmatprep.mubr.bf16.mxu0 0
  %1393 = vmatmul.mubr.bf16.gmra.mxu0 %v891
  %v1394 = vpop.f32.mrf.mxu0
  %v1395 = vadd.f32 0.0, %v1394
  %v1396 = vpop.f32.mrf.mxu0
  %v1397 = vadd.f32 0.0, %v1396
  %v1398 = vpop.f32.mrf.mxu0
  %v1399 = vadd.f32 0.0, %v1398
  %v1400 = vpop.f32.mrf.mxu0
  %v1401 = vadd.f32 0.0, %v1400
  %1402 = vmatprep.mubr.bf16.mxu0 0
  %1403 = vmatmul.mubr.bf16.gmra.mxu0 %v894
  %v1404 = vpop.f32.mrf.mxu0
  %v1405 = vadd.f32 0.0, %v1404
  %v1406 = vpop.f32.mrf.mxu0
  %v1407 = vadd.f32 0.0, %v1406
  %v1408 = vpop.f32.mrf.mxu0
  %v1409 = vadd.f32 0.0, %v1408
  %v1410 = vpop.f32.mrf.mxu0
  %v1411 = vadd.f32 0.0, %v1410
  %1412 = vmatprep.mubr.bf16.mxu0 0
  %1413 = vmatmul.mubr.bf16.gmra.mxu0 %v897
  %v1414 = vpop.f32.mrf.mxu0
  %v1415 = vadd.f32 0.0, %v1414
  %v1416 = vpop.f32.mrf.mxu0
  %v1417 = vadd.f32 0.0, %v1416
  %v1418 = vpop.f32.mrf.mxu0
  %v1419 = vadd.f32 0.0, %v1418
  %v1420 = vpop.f32.mrf.mxu0
  %v1421 = vadd.f32 0.0, %v1420
  %1422 = vmatprep.mubr.bf16.mxu0 0
  %1423 = vmatmul.mubr.bf16.gmra.mxu0 %v900
  %v1424 = vpop.f32.mrf.mxu0
  %v1425 = vadd.f32 0.0, %v1424
  %v1426 = vpop.f32.mrf.mxu0
  %v1427 = vadd.f32 0.0, %v1426
  %v1428 = vpop.f32.mrf.mxu0
  %v1429 = vadd.f32 0.0, %v1428
  %v1430 = vpop.f32.mrf.mxu0
  %v1431 = vadd.f32 0.0, %v1430
  %1432 = vmatprep.mubr.bf16.mxu0 0
  %1433 = vmatmul.mubr.bf16.gmra.mxu0 %v903
  %v1434 = vpop.f32.mrf.mxu0
  %v1435 = vadd.f32 0.0, %v1434
  %v1436 = vpop.f32.mrf.mxu0
  %v1437 = vadd.f32 0.0, %v1436
  %v1438 = vpop.f32.mrf.mxu0
  %v1439 = vadd.f32 0.0, %v1438
  %v1440 = vpop.f32.mrf.mxu0
  %v1441 = vadd.f32 0.0, %v1440
  %1442 = vmatprep.mubr.bf16.mxu0 0
  %1443 = vmatmul.mubr.bf16.gmra.mxu0 %v906
  %v1444 = vpop.f32.mrf.mxu0
  %v1445 = vadd.f32 0.0, %v1444
  %v1446 = vpop.f32.mrf.mxu0
  %v1447 = vadd.f32 0.0, %v1446
  %v1448 = vpop.f32.mrf.mxu0
  %v1449 = vadd.f32 0.0, %v1448
  %v1450 = vpop.f32.mrf.mxu0
  %v1451 = vadd.f32 0.0, %v1450
  %1452 = vmatprep.mubr.bf16.mxu0 0
  %1453 = vmatmul.mubr.bf16.gmra.mxu0 %v909
  %v1454 = vpop.f32.mrf.mxu0
  %v1455 = vadd.f32 0.0, %v1454
  %v1456 = vpop.f32.mrf.mxu0
  %v1457 = vadd.f32 0.0, %v1456
  %v1458 = vpop.f32.mrf.mxu0
  %v1459 = vadd.f32 0.0, %v1458
  %v1460 = vpop.f32.mrf.mxu0
  %v1461 = vadd.f32 0.0, %v1460
  %1462 = vmatprep.mubr.bf16.mxu0 0
  %1463 = vmatmul.mubr.bf16.gmra.mxu0 %v912
  %v1464 = vpop.f32.mrf.mxu0
  %v1465 = vadd.f32 0.0, %v1464
  %v1466 = vpop.f32.mrf.mxu0
  %v1467 = vadd.f32 0.0, %v1466
  %v1468 = vpop.f32.mrf.mxu0
  %v1469 = vadd.f32 0.0, %v1468
  %v1470 = vpop.f32.mrf.mxu0
  %v1471 = vadd.f32 0.0, %v1470
  %1472 = vmatprep.mubr.bf16.mxu0 0
  %1473 = vmatmul.mubr.bf16.gmra.mxu0 %v915
  %v1474 = vpop.f32.mrf.mxu0
  %v1475 = vadd.f32 0.0, %v1474
  %v1476 = vpop.f32.mrf.mxu0
  %v1477 = vadd.f32 0.0, %v1476
  %v1478 = vpop.f32.mrf.mxu0
  %v1479 = vadd.f32 0.0, %v1478
  %v1480 = vpop.f32.mrf.mxu0
  %v1481 = vadd.f32 0.0, %v1480
  %1482 = vmatprep.mubr.bf16.mxu0 0
  %1483 = vmatmul.mubr.bf16.gmra.mxu0 %v918
  %v1484 = vpop.f32.mrf.mxu0
  %v1485 = vadd.f32 0.0, %v1484
  %v1486 = vpop.f32.mrf.mxu0
  %v1487 = vadd.f32 0.0, %v1486
  %v1488 = vpop.f32.mrf.mxu0
  %v1489 = vadd.f32 0.0, %v1488
  %v1490 = vpop.f32.mrf.mxu0
  %v1491 = vadd.f32 0.0, %v1490
  %1492 = vmatprep.mubr.bf16.mxu0 0
  %1493 = vmatmul.mubr.bf16.gmra.mxu0 %v921
  %v1494 = vpop.f32.mrf.mxu0
  %v1495 = vadd.f32 0.0, %v1494
  %v1496 = vpop.f32.mrf.mxu0
  %v1497 = vadd.f32 0.0, %v1496
  %v1498 = vpop.f32.mrf.mxu0
  %v1499 = vadd.f32 0.0, %v1498
  %v1500 = vpop.f32.mrf.mxu0
  %v1501 = vadd.f32 0.0, %v1500
  %1502 = vmatprep.mubr.bf16.mxu0 0
  %1503 = vmatmul.mubr.bf16.gmra.mxu0 %v924
  %v1504 = vpop.f32.mrf.mxu0
  %v1505 = vadd.f32 0.0, %v1504
  %v1506 = vpop.f32.mrf.mxu0
  %v1507 = vadd.f32 0.0, %v1506
  %v1508 = vpop.f32.mrf.mxu0
  %v1509 = vadd.f32 0.0, %v1508
  %v1510 = vpop.f32.mrf.mxu0
  %v1511 = vadd.f32 0.0, %v1510
  %1512 = vmatprep.mubr.bf16.mxu0 0
  %1513 = vmatmul.mubr.bf16.gmra.mxu0 %v927
  %v1514 = vpop.f32.mrf.mxu0
  %v1515 = vadd.f32 0.0, %v1514
  %v1516 = vpop.f32.mrf.mxu0
  %v1517 = vadd.f32 0.0, %v1516
  %v1518 = vpop.f32.mrf.mxu0
  %v1519 = vadd.f32 0.0, %v1518
  %v1520 = vpop.f32.mrf.mxu0
  %v1521 = vadd.f32 0.0, %v1520
  %1522 = vmatprep.mubr.bf16.mxu0 0
  %1523 = vmatmul.mubr.bf16.gmra.mxu0 %v930
  %v1524 = vpop.f32.mrf.mxu0
  %v1525 = vadd.f32 0.0, %v1524
  %v1526 = vpop.f32.mrf.mxu0
  %v1527 = vadd.f32 0.0, %v1526
  %v1528 = vpop.f32.mrf.mxu0
  %v1529 = vadd.f32 0.0, %v1528
  %v1530 = vpop.f32.mrf.mxu0
  %v1531 = vadd.f32 0.0, %v1530
  %1532 = vmatprep.mubr.bf16.mxu0 0
  %1533 = vmatmul.mubr.bf16.gmra.mxu0 %v933
  %v1534 = vpop.f32.mrf.mxu0
  %v1535 = vadd.f32 0.0, %v1534
  %v1536 = vpop.f32.mrf.mxu0
  %v1537 = vadd.f32 0.0, %v1536
  %v1538 = vpop.f32.mrf.mxu0
  %v1539 = vadd.f32 0.0, %v1538
  %v1540 = vpop.f32.mrf.mxu0
  %v1541 = vadd.f32 0.0, %v1540
  %1542 = vmatprep.mubr.bf16.mxu0 0
  %1543 = vmatmul.mubr.bf16.gmra.mxu0 %v936
  %v1544 = vpop.f32.mrf.mxu0
  %v1545 = vadd.f32 0.0, %v1544
  %v1546 = vpop.f32.mrf.mxu0
  %v1547 = vadd.f32 0.0, %v1546
  %v1548 = vpop.f32.mrf.mxu0
  %v1549 = vadd.f32 0.0, %v1548
  %v1550 = vpop.f32.mrf.mxu0
  %v1551 = vadd.f32 0.0, %v1550
  %1552 = vmatprep.mubr.bf16.mxu0 0
  %1553 = vmatmul.mubr.bf16.gmra.mxu0 %v939
  %v1554 = vpop.f32.mrf.mxu0
  %v1555 = vadd.f32 0.0, %v1554
  %v1556 = vpop.f32.mrf.mxu0
  %v1557 = vadd.f32 0.0, %v1556
  %v1558 = vpop.f32.mrf.mxu0
  %v1559 = vadd.f32 0.0, %v1558
  %v1560 = vpop.f32.mrf.mxu0
  %v1561 = vadd.f32 0.0, %v1560
  %1562 = vmatprep.mubr.bf16.mxu0 0
  %1563 = vmatmul.mubr.bf16.gmra.mxu0 %v942
  %v1564 = vpop.f32.mrf.mxu0
  %v1565 = vadd.f32 0.0, %v1564
  %v1566 = vpop.f32.mrf.mxu0
  %v1567 = vadd.f32 0.0, %v1566
  %v1568 = vpop.f32.mrf.mxu0
  %v1569 = vadd.f32 0.0, %v1568
  %v1570 = vpop.f32.mrf.mxu0
  %v1571 = vadd.f32 0.0, %v1570
  %1572 = vmatprep.mubr.bf16.mxu0 0
  %1573 = vmatmul.mubr.bf16.gmra.mxu0 %v945
  %v1574 = vpop.f32.mrf.mxu0
  %v1575 = vpop.f32.mrf.mxu0
  %v1576 = vpop.f32.mrf.mxu0
  %v1577 = vpop.f32.mrf.mxu0
  %1578 = vmatprep.mubr.bf16.mxu0 0
  %1579 = vmatmul.mubr.bf16.gmra.mxu0 %v948
  %v1580 = vpop.f32.mrf.mxu0
  %v1581 = vpop.f32.mrf.mxu0
  %v1582 = vpop.f32.mrf.mxu0
  %v1583 = vpop.f32.mrf.mxu0
  %1584 = vmatprep.mubr.bf16.mxu0 0
  %1585 = vmatmul.mubr.bf16.gmra.mxu0 %v951
  %v1586 = vpop.f32.mrf.mxu0
  %v1587 = vpop.f32.mrf.mxu0
  %v1588 = vpop.f32.mrf.mxu0
  %v1589 = vpop.f32.mrf.mxu0
  %1590 = vmatprep.mubr.bf16.mxu0 0
  %1591 = vmatmul.mubr.bf16.gmra.mxu0 %v954
  %v1592 = vpop.f32.mrf.mxu0
  %v1593 = vpop.f32.mrf.mxu0
  %v1594 = vpop.f32.mrf.mxu0
  %v1595 = vpop.f32.mrf.mxu0
  %1596 = vdwg.mxu0
  %1597 = vmatprep.subr.bf16.mxu0 0
  %1598 = vmatpush1.bf16.msra.mxu0 0
  %1599 = vmatprep.subr.bf16.mxu0 0
  %1600 = vmatpush1.bf16.msra.mxu0 0
  %1601 = vmatprep.subr.bf16.mxu0 %v710
  %1602 = vmatpush1.bf16.msra.mxu0 %v709
  %1603 = vmatprep.subr.bf16.mxu0 %v702
  %1604 = vmatpush1.bf16.msra.mxu0 %v701
  %1605 = vmatprep.subr.bf16.mxu0 %v694
  %1606 = vmatpush1.bf16.msra.mxu0 %v693
  %1607 = vmatprep.subr.bf16.mxu0 %v686
  %1608 = vmatpush1.bf16.msra.mxu0 %v685
  %1609 = vmatprep.subr.bf16.mxu0 %v678
  %1610 = vmatpush1.bf16.msra.mxu0 %v677
  %1611 = vmatprep.subr.bf16.mxu0 %v670
  %1612 = vmatpush1.bf16.msra.mxu0 %v669
  %1613 = vmatprep.subr.bf16.mxu0 0
  %1614 = vmatpush2.bf16.msra.mxu0 0
  %1615 = vmatprep.subr.bf16.mxu0 0
  %1616 = vmatpush2.bf16.msra.mxu0 0
  %1617 = vmatprep.subr.bf16.mxu0 0
  %1618 = vmatpush2.bf16.msra.mxu0 0
  %1619 = vmatprep.subr.bf16.mxu0 0
  %1620 = vmatpush2.bf16.msra.mxu0 0
  %1621 = vmatprep.subr.bf16.mxu0 0
  %1622 = vmatpush2.bf16.msra.mxu0 0
  %1623 = vmatprep.subr.bf16.mxu0 0
  %1624 = vmatpush2.bf16.msra.mxu0 0
  %1625 = vmatprep.subr.bf16.mxu0 0
  %1626 = vmatpush2.bf16.msra.mxu0 0
  %1627 = vmatprep.subr.bf16.mxu0 0
  %1628 = vmatpush2.bf16.msra.mxu0 0
  %1629 = vmatprep.mubr.bf16.mxu0 0
  %1630 = vmatmul.mubr.bf16.gmra.mxu0 %v765
  %v1631 = vpop.f32.mrf.mxu0
  %v1632 = vadd.f32 0.0, %v1631
  %v1633 = vpop.f32.mrf.mxu0
  %v1634 = vadd.f32 0.0, %v1633
  %v1635 = vpop.f32.mrf.mxu0
  %v1636 = vadd.f32 0.0, %v1635
  %v1637 = vpop.f32.mrf.mxu0
  %v1638 = vadd.f32 0.0, %v1637
  %1639 = vmatprep.mubr.bf16.mxu0 0
  %1640 = vmatmul.mubr.bf16.gmra.mxu0 %v768
  %v1641 = vpop.f32.mrf.mxu0
  %v1642 = vadd.f32 0.0, %v1641
  %v1643 = vpop.f32.mrf.mxu0
  %v1644 = vadd.f32 0.0, %v1643
  %v1645 = vpop.f32.mrf.mxu0
  %v1646 = vadd.f32 0.0, %v1645
  %v1647 = vpop.f32.mrf.mxu0
  %v1648 = vadd.f32 0.0, %v1647
  %1649 = vmatprep.mubr.bf16.mxu0 0
  %1650 = vmatmul.mubr.bf16.gmra.mxu0 %v771
  %v1651 = vpop.f32.mrf.mxu0
  %v1652 = vadd.f32 0.0, %v1651
  %v1653 = vpop.f32.mrf.mxu0
  %v1654 = vadd.f32 0.0, %v1653
  %v1655 = vpop.f32.mrf.mxu0
  %v1656 = vadd.f32 0.0, %v1655
  %v1657 = vpop.f32.mrf.mxu0
  %v1658 = vadd.f32 0.0, %v1657
  %1659 = vmatprep.mubr.bf16.mxu0 0
  %1660 = vmatmul.mubr.bf16.gmra.mxu0 %v774
  %v1661 = vpop.f32.mrf.mxu0
  %v1662 = vadd.f32 0.0, %v1661
  %v1663 = vpop.f32.mrf.mxu0
  %v1664 = vadd.f32 0.0, %v1663
  %v1665 = vpop.f32.mrf.mxu0
  %v1666 = vadd.f32 0.0, %v1665
  %v1667 = vpop.f32.mrf.mxu0
  %v1668 = vadd.f32 0.0, %v1667
  %1669 = vmatprep.mubr.bf16.mxu0 0
  %1670 = vmatmul.mubr.bf16.gmra.mxu0 %v777
  %v1671 = vpop.f32.mrf.mxu0
  %v1672 = vadd.f32 0.0, %v1671
  %v1673 = vpop.f32.mrf.mxu0
  %v1674 = vadd.f32 0.0, %v1673
  %v1675 = vpop.f32.mrf.mxu0
  %v1676 = vadd.f32 0.0, %v1675
  %v1677 = vpop.f32.mrf.mxu0
  %v1678 = vadd.f32 0.0, %v1677
  %1679 = vmatprep.mubr.bf16.mxu0 0
  %1680 = vmatmul.mubr.bf16.gmra.mxu0 %v780
  %v1681 = vpop.f32.mrf.mxu0
  %v1682 = vadd.f32 0.0, %v1681
  %v1683 = vpop.f32.mrf.mxu0
  %v1684 = vadd.f32 0.0, %v1683
  %v1685 = vpop.f32.mrf.mxu0
  %v1686 = vadd.f32 0.0, %v1685
  %v1687 = vpop.f32.mrf.mxu0
  %v1688 = vadd.f32 0.0, %v1687
  %1689 = vmatprep.mubr.bf16.mxu0 0
  %1690 = vmatmul.mubr.bf16.gmra.mxu0 %v783
  %v1691 = vpop.f32.mrf.mxu0
  %v1692 = vadd.f32 0.0, %v1691
  %v1693 = vpop.f32.mrf.mxu0
  %v1694 = vadd.f32 0.0, %v1693
  %v1695 = vpop.f32.mrf.mxu0
  %v1696 = vadd.f32 0.0, %v1695
  %v1697 = vpop.f32.mrf.mxu0
  %v1698 = vadd.f32 0.0, %v1697
  %1699 = vmatprep.mubr.bf16.mxu0 0
  %1700 = vmatmul.mubr.bf16.gmra.mxu0 %v786
  %v1701 = vpop.f32.mrf.mxu0
  %v1702 = vadd.f32 0.0, %v1701
  %v1703 = vpop.f32.mrf.mxu0
  %v1704 = vadd.f32 0.0, %v1703
  %v1705 = vpop.f32.mrf.mxu0
  %v1706 = vadd.f32 0.0, %v1705
  %v1707 = vpop.f32.mrf.mxu0
  %v1708 = vadd.f32 0.0, %v1707
  %1709 = vmatprep.mubr.bf16.mxu0 0
  %1710 = vmatmul.mubr.bf16.gmra.mxu0 %v789
  %v1711 = vpop.f32.mrf.mxu0
  %v1712 = vadd.f32 0.0, %v1711
  %v1713 = vpop.f32.mrf.mxu0
  %v1714 = vadd.f32 0.0, %v1713
  %v1715 = vpop.f32.mrf.mxu0
  %v1716 = vadd.f32 0.0, %v1715
  %v1717 = vpop.f32.mrf.mxu0
  %v1718 = vadd.f32 0.0, %v1717
  %1719 = vmatprep.mubr.bf16.mxu0 0
  %1720 = vmatmul.mubr.bf16.gmra.mxu0 %v792
  %v1721 = vpop.f32.mrf.mxu0
  %v1722 = vadd.f32 0.0, %v1721
  %v1723 = vpop.f32.mrf.mxu0
  %v1724 = vadd.f32 0.0, %v1723
  %v1725 = vpop.f32.mrf.mxu0
  %v1726 = vadd.f32 0.0, %v1725
  %v1727 = vpop.f32.mrf.mxu0
  %v1728 = vadd.f32 0.0, %v1727
  %1729 = vmatprep.mubr.bf16.mxu0 0
  %1730 = vmatmul.mubr.bf16.gmra.mxu0 %v795
  %v1731 = vpop.f32.mrf.mxu0
  %v1732 = vadd.f32 0.0, %v1731
  %v1733 = vpop.f32.mrf.mxu0
  %v1734 = vadd.f32 0.0, %v1733
  %v1735 = vpop.f32.mrf.mxu0
  %v1736 = vadd.f32 0.0, %v1735
  %v1737 = vpop.f32.mrf.mxu0
  %v1738 = vadd.f32 0.0, %v1737
  %1739 = vmatprep.mubr.bf16.mxu0 0
  %1740 = vmatmul.mubr.bf16.gmra.mxu0 %v798
  %v1741 = vpop.f32.mrf.mxu0
  %v1742 = vadd.f32 0.0, %v1741
  %v1743 = vpop.f32.mrf.mxu0
  %v1744 = vadd.f32 0.0, %v1743
  %v1745 = vpop.f32.mrf.mxu0
  %v1746 = vadd.f32 0.0, %v1745
  %v1747 = vpop.f32.mrf.mxu0
  %v1748 = vadd.f32 0.0, %v1747
  %1749 = vmatprep.mubr.bf16.mxu0 0
  %1750 = vmatmul.mubr.bf16.gmra.mxu0 %v801
  %v1751 = vpop.f32.mrf.mxu0
  %v1752 = vadd.f32 0.0, %v1751
  %v1753 = vpop.f32.mrf.mxu0
  %v1754 = vadd.f32 0.0, %v1753
  %v1755 = vpop.f32.mrf.mxu0
  %v1756 = vadd.f32 0.0, %v1755
  %v1757 = vpop.f32.mrf.mxu0
  %v1758 = vadd.f32 0.0, %v1757
  %1759 = vmatprep.mubr.bf16.mxu0 0
  %1760 = vmatmul.mubr.bf16.gmra.mxu0 %v804
  %v1761 = vpop.f32.mrf.mxu0
  %v1762 = vadd.f32 0.0, %v1761
  %v1763 = vpop.f32.mrf.mxu0
  %v1764 = vadd.f32 0.0, %v1763
  %v1765 = vpop.f32.mrf.mxu0
  %v1766 = vadd.f32 0.0, %v1765
  %v1767 = vpop.f32.mrf.mxu0
  %v1768 = vadd.f32 0.0, %v1767
  %1769 = vmatprep.mubr.bf16.mxu0 0
  %1770 = vmatmul.mubr.bf16.gmra.mxu0 %v807
  %v1771 = vpop.f32.mrf.mxu0
  %v1772 = vadd.f32 0.0, %v1771
  %v1773 = vpop.f32.mrf.mxu0
  %v1774 = vadd.f32 0.0, %v1773
  %v1775 = vpop.f32.mrf.mxu0
  %v1776 = vadd.f32 0.0, %v1775
  %v1777 = vpop.f32.mrf.mxu0
  %v1778 = vadd.f32 0.0, %v1777
  %1779 = vmatprep.mubr.bf16.mxu0 0
  %1780 = vmatmul.mubr.bf16.gmra.mxu0 %v810
  %v1781 = vpop.f32.mrf.mxu0
  %v1782 = vadd.f32 0.0, %v1781
  %v1783 = vpop.f32.mrf.mxu0
  %v1784 = vadd.f32 0.0, %v1783
  %v1785 = vpop.f32.mrf.mxu0
  %v1786 = vadd.f32 0.0, %v1785
  %v1787 = vpop.f32.mrf.mxu0
  %v1788 = vadd.f32 0.0, %v1787
  %1789 = vmatprep.mubr.bf16.mxu0 0
  %1790 = vmatmul.mubr.bf16.gmra.mxu0 %v813
  %v1791 = vpop.f32.mrf.mxu0
  %v1792 = vadd.f32 0.0, %v1791
  %v1793 = vpop.f32.mrf.mxu0
  %v1794 = vadd.f32 0.0, %v1793
  %v1795 = vpop.f32.mrf.mxu0
  %v1796 = vadd.f32 0.0, %v1795
  %v1797 = vpop.f32.mrf.mxu0
  %v1798 = vadd.f32 0.0, %v1797
  %1799 = vmatprep.mubr.bf16.mxu0 0
  %1800 = vmatmul.mubr.bf16.gmra.mxu0 %v816
  %v1801 = vpop.f32.mrf.mxu0
  %v1802 = vadd.f32 0.0, %v1801
  %v1803 = vpop.f32.mrf.mxu0
  %v1804 = vadd.f32 0.0, %v1803
  %v1805 = vpop.f32.mrf.mxu0
  %v1806 = vadd.f32 0.0, %v1805
  %v1807 = vpop.f32.mrf.mxu0
  %v1808 = vadd.f32 0.0, %v1807
  %1809 = vmatprep.mubr.bf16.mxu0 0
  %1810 = vmatmul.mubr.bf16.gmra.mxu0 %v819
  %v1811 = vpop.f32.mrf.mxu0
  %v1812 = vadd.f32 0.0, %v1811
  %v1813 = vpop.f32.mrf.mxu0
  %v1814 = vadd.f32 0.0, %v1813
  %v1815 = vpop.f32.mrf.mxu0
  %v1816 = vadd.f32 0.0, %v1815
  %v1817 = vpop.f32.mrf.mxu0
  %v1818 = vadd.f32 0.0, %v1817
  %1819 = vmatprep.mubr.bf16.mxu0 0
  %1820 = vmatmul.mubr.bf16.gmra.mxu0 %v822
  %v1821 = vpop.f32.mrf.mxu0
  %v1822 = vadd.f32 0.0, %v1821
  %v1823 = vpop.f32.mrf.mxu0
  %v1824 = vadd.f32 0.0, %v1823
  %v1825 = vpop.f32.mrf.mxu0
  %v1826 = vadd.f32 0.0, %v1825
  %v1827 = vpop.f32.mrf.mxu0
  %v1828 = vadd.f32 0.0, %v1827
  %1829 = vmatprep.mubr.bf16.mxu0 0
  %1830 = vmatmul.mubr.bf16.gmra.mxu0 %v825
  %v1831 = vpop.f32.mrf.mxu0
  %v1832 = vadd.f32 0.0, %v1831
  %v1833 = vpop.f32.mrf.mxu0
  %v1834 = vadd.f32 0.0, %v1833
  %v1835 = vpop.f32.mrf.mxu0
  %v1836 = vadd.f32 0.0, %v1835
  %v1837 = vpop.f32.mrf.mxu0
  %v1838 = vadd.f32 0.0, %v1837
  %1839 = vmatprep.mubr.bf16.mxu0 0
  %1840 = vmatmul.mubr.bf16.gmra.mxu0 %v828
  %v1841 = vpop.f32.mrf.mxu0
  %v1842 = vadd.f32 0.0, %v1841
  %v1843 = vpop.f32.mrf.mxu0
  %v1844 = vadd.f32 0.0, %v1843
  %v1845 = vpop.f32.mrf.mxu0
  %v1846 = vadd.f32 0.0, %v1845
  %v1847 = vpop.f32.mrf.mxu0
  %v1848 = vadd.f32 0.0, %v1847
  %1849 = vmatprep.mubr.bf16.mxu0 0
  %1850 = vmatmul.mubr.bf16.gmra.mxu0 %v831
  %v1851 = vpop.f32.mrf.mxu0
  %v1852 = vadd.f32 0.0, %v1851
  %v1853 = vpop.f32.mrf.mxu0
  %v1854 = vadd.f32 0.0, %v1853
  %v1855 = vpop.f32.mrf.mxu0
  %v1856 = vadd.f32 0.0, %v1855
  %v1857 = vpop.f32.mrf.mxu0
  %v1858 = vadd.f32 0.0, %v1857
  %1859 = vmatprep.mubr.bf16.mxu0 0
  %1860 = vmatmul.mubr.bf16.gmra.mxu0 %v834
  %v1861 = vpop.f32.mrf.mxu0
  %v1862 = vadd.f32 0.0, %v1861
  %v1863 = vpop.f32.mrf.mxu0
  %v1864 = vadd.f32 0.0, %v1863
  %v1865 = vpop.f32.mrf.mxu0
  %v1866 = vadd.f32 0.0, %v1865
  %v1867 = vpop.f32.mrf.mxu0
  %v1868 = vadd.f32 0.0, %v1867
  %1869 = vmatprep.mubr.bf16.mxu0 0
  %1870 = vmatmul.mubr.bf16.gmra.mxu0 %v837
  %v1871 = vpop.f32.mrf.mxu0
  %v1872 = vadd.f32 0.0, %v1871
  %v1873 = vpop.f32.mrf.mxu0
  %v1874 = vadd.f32 0.0, %v1873
  %v1875 = vpop.f32.mrf.mxu0
  %v1876 = vadd.f32 0.0, %v1875
  %v1877 = vpop.f32.mrf.mxu0
  %v1878 = vadd.f32 0.0, %v1877
  %1879 = vmatprep.mubr.bf16.mxu0 0
  %1880 = vmatmul.mubr.bf16.gmra.mxu0 %v840
  %v1881 = vpop.f32.mrf.mxu0
  %v1882 = vadd.f32 0.0, %v1881
  %v1883 = vpop.f32.mrf.mxu0
  %v1884 = vadd.f32 0.0, %v1883
  %v1885 = vpop.f32.mrf.mxu0
  %v1886 = vadd.f32 0.0, %v1885
  %v1887 = vpop.f32.mrf.mxu0
  %v1888 = vadd.f32 0.0, %v1887
  %1889 = vmatprep.mubr.bf16.mxu0 0
  %1890 = vmatmul.mubr.bf16.gmra.mxu0 %v843
  %v1891 = vpop.f32.mrf.mxu0
  %v1892 = vadd.f32 0.0, %v1891
  %v1893 = vpop.f32.mrf.mxu0
  %v1894 = vadd.f32 0.0, %v1893
  %v1895 = vpop.f32.mrf.mxu0
  %v1896 = vadd.f32 0.0, %v1895
  %v1897 = vpop.f32.mrf.mxu0
  %v1898 = vadd.f32 0.0, %v1897
  %1899 = vmatprep.mubr.bf16.mxu0 0
  %1900 = vmatmul.mubr.bf16.gmra.mxu0 %v846
  %v1901 = vpop.f32.mrf.mxu0
  %v1902 = vadd.f32 0.0, %v1901
  %v1903 = vpop.f32.mrf.mxu0
  %v1904 = vadd.f32 0.0, %v1903
  %v1905 = vpop.f32.mrf.mxu0
  %v1906 = vadd.f32 0.0, %v1905
  %v1907 = vpop.f32.mrf.mxu0
  %v1908 = vadd.f32 0.0, %v1907
  %1909 = vmatprep.mubr.bf16.mxu0 0
  %1910 = vmatmul.mubr.bf16.gmra.mxu0 %v849
  %v1911 = vpop.f32.mrf.mxu0
  %v1912 = vpop.f32.mrf.mxu0
  %v1913 = vpop.f32.mrf.mxu0
  %v1914 = vpop.f32.mrf.mxu0
  %1915 = vmatprep.mubr.bf16.mxu0 0
  %1916 = vmatmul.mubr.bf16.gmra.mxu0 %v852
  %v1917 = vpop.f32.mrf.mxu0
  %v1918 = vpop.f32.mrf.mxu0
  %v1919 = vpop.f32.mrf.mxu0
  %v1920 = vpop.f32.mrf.mxu0
  %1921 = vmatprep.mubr.bf16.mxu0 0
  %1922 = vmatmul.mubr.bf16.gmra.mxu0 %v855
  %v1923 = vpop.f32.mrf.mxu0
  %v1924 = vpop.f32.mrf.mxu0
  %v1925 = vpop.f32.mrf.mxu0
  %v1926 = vpop.f32.mrf.mxu0
  %1927 = vmatprep.mubr.bf16.mxu0 0
  %1928 = vmatmul.mubr.bf16.gmra.mxu0 %v858
  %v1929 = vpop.f32.mrf.mxu0
  %v1930 = vpop.f32.mrf.mxu0
  %v1931 = vpop.f32.mrf.mxu0
  %v1932 = vpop.f32.mrf.mxu0
  %1933 = vmatprep.mubr.bf16.mxu0 0
  %1934 = vmatmul.mubr.bf16.gmra.mxu0 %v861
  %v1935 = vpop.f32.mrf.mxu0
  %v1936 = vadd.f32 0.0, %v1935
  %v1937 = vpop.f32.mrf.mxu0
  %v1938 = vadd.f32 0.0, %v1937
  %v1939 = vpop.f32.mrf.mxu0
  %v1940 = vadd.f32 0.0, %v1939
  %v1941 = vpop.f32.mrf.mxu0
  %v1942 = vadd.f32 0.0, %v1941
  %1943 = vmatprep.mubr.bf16.mxu0 0
  %1944 = vmatmul.mubr.bf16.gmra.mxu0 %v864
  %v1945 = vpop.f32.mrf.mxu0
  %v1946 = vadd.f32 0.0, %v1945
  %v1947 = vpop.f32.mrf.mxu0
  %v1948 = vadd.f32 0.0, %v1947
  %v1949 = vpop.f32.mrf.mxu0
  %v1950 = vadd.f32 0.0, %v1949
  %v1951 = vpop.f32.mrf.mxu0
  %v1952 = vadd.f32 0.0, %v1951
  %1953 = vmatprep.mubr.bf16.mxu0 0
  %1954 = vmatmul.mubr.bf16.gmra.mxu0 %v867
  %v1955 = vpop.f32.mrf.mxu0
  %v1956 = vadd.f32 0.0, %v1955
  %v1957 = vpop.f32.mrf.mxu0
  %v1958 = vadd.f32 0.0, %v1957
  %v1959 = vpop.f32.mrf.mxu0
  %v1960 = vadd.f32 0.0, %v1959
  %v1961 = vpop.f32.mrf.mxu0
  %v1962 = vadd.f32 0.0, %v1961
  %1963 = vmatprep.mubr.bf16.mxu0 0
  %1964 = vmatmul.mubr.bf16.gmra.mxu0 %v870
  %v1965 = vpop.f32.mrf.mxu0
  %v1966 = vadd.f32 0.0, %v1965
  %v1967 = vpop.f32.mrf.mxu0
  %v1968 = vadd.f32 0.0, %v1967
  %v1969 = vpop.f32.mrf.mxu0
  %v1970 = vadd.f32 0.0, %v1969
  %v1971 = vpop.f32.mrf.mxu0
  %v1972 = vadd.f32 0.0, %v1971
  %1973 = vmatprep.mubr.bf16.mxu0 0
  %1974 = vmatmul.mubr.bf16.gmra.mxu0 %v873
  %v1975 = vpop.f32.mrf.mxu0
  %v1976 = vadd.f32 0.0, %v1975
  %v1977 = vpop.f32.mrf.mxu0
  %v1978 = vadd.f32 0.0, %v1977
  %v1979 = vpop.f32.mrf.mxu0
  %v1980 = vadd.f32 0.0, %v1979
  %v1981 = vpop.f32.mrf.mxu0
  %v1982 = vadd.f32 0.0, %v1981
  %1983 = vmatprep.mubr.bf16.mxu0 0
  %1984 = vmatmul.mubr.bf16.gmra.mxu0 %v876
  %v1985 = vpop.f32.mrf.mxu0
  %v1986 = vadd.f32 0.0, %v1985
  %v1987 = vpop.f32.mrf.mxu0
  %v1988 = vadd.f32 0.0, %v1987
  %v1989 = vpop.f32.mrf.mxu0
  %v1990 = vadd.f32 0.0, %v1989
  %v1991 = vpop.f32.mrf.mxu0
  %v1992 = vadd.f32 0.0, %v1991
  %1993 = vmatprep.mubr.bf16.mxu0 0
  %1994 = vmatmul.mubr.bf16.gmra.mxu0 %v879
  %v1995 = vpop.f32.mrf.mxu0
  %v1996 = vadd.f32 0.0, %v1995
  %v1997 = vpop.f32.mrf.mxu0
  %v1998 = vadd.f32 0.0, %v1997
  %v1999 = vpop.f32.mrf.mxu0
  %v2000 = vadd.f32 0.0, %v1999
  %v2001 = vpop.f32.mrf.mxu0
  %v2002 = vadd.f32 0.0, %v2001
  %2003 = vmatprep.mubr.bf16.mxu0 0
  %2004 = vmatmul.mubr.bf16.gmra.mxu0 %v882
  %v2005 = vpop.f32.mrf.mxu0
  %v2006 = vadd.f32 0.0, %v2005
  %v2007 = vpop.f32.mrf.mxu0
  %v2008 = vadd.f32 0.0, %v2007
  %v2009 = vpop.f32.mrf.mxu0
  %v2010 = vadd.f32 0.0, %v2009
  %v2011 = vpop.f32.mrf.mxu0
  %v2012 = vadd.f32 0.0, %v2011
  %2013 = vmatprep.mubr.bf16.mxu0 0
  %2014 = vmatmul.mubr.bf16.gmra.mxu0 %v885
  %v2015 = vpop.f32.mrf.mxu0
  %v2016 = vadd.f32 0.0, %v2015
  %v2017 = vpop.f32.mrf.mxu0
  %v2018 = vadd.f32 0.0, %v2017
  %v2019 = vpop.f32.mrf.mxu0
  %v2020 = vadd.f32 0.0, %v2019
  %v2021 = vpop.f32.mrf.mxu0
  %v2022 = vadd.f32 0.0, %v2021
  %2023 = vmatprep.mubr.bf16.mxu0 0
  %2024 = vmatmul.mubr.bf16.gmra.mxu0 %v888
  %v2025 = vpop.f32.mrf.mxu0
  %v2026 = vadd.f32 0.0, %v2025
  %v2027 = vpop.f32.mrf.mxu0
  %v2028 = vadd.f32 0.0, %v2027
  %v2029 = vpop.f32.mrf.mxu0
  %v2030 = vadd.f32 0.0, %v2029
  %v2031 = vpop.f32.mrf.mxu0
  %v2032 = vadd.f32 0.0, %v2031
  %2033 = vmatprep.mubr.bf16.mxu0 0
  %2034 = vmatmul.mubr.bf16.gmra.mxu0 %v891
  %v2035 = vpop.f32.mrf.mxu0
  %v2036 = vadd.f32 0.0, %v2035
  %v2037 = vpop.f32.mrf.mxu0
  %v2038 = vadd.f32 0.0, %v2037
  %v2039 = vpop.f32.mrf.mxu0
  %v2040 = vadd.f32 0.0, %v2039
  %v2041 = vpop.f32.mrf.mxu0
  %v2042 = vadd.f32 0.0, %v2041
  %2043 = vmatprep.mubr.bf16.mxu0 0
  %2044 = vmatmul.mubr.bf16.gmra.mxu0 %v894
  %v2045 = vpop.f32.mrf.mxu0
  %v2046 = vadd.f32 0.0, %v2045
  %v2047 = vpop.f32.mrf.mxu0
  %v2048 = vadd.f32 0.0, %v2047
  %v2049 = vpop.f32.mrf.mxu0
  %v2050 = vadd.f32 0.0, %v2049
  %v2051 = vpop.f32.mrf.mxu0
  %v2052 = vadd.f32 0.0, %v2051
  %2053 = vmatprep.mubr.bf16.mxu0 0
  %2054 = vmatmul.mubr.bf16.gmra.mxu0 %v897
  %v2055 = vpop.f32.mrf.mxu0
  %v2056 = vadd.f32 0.0, %v2055
  %v2057 = vpop.f32.mrf.mxu0
  %v2058 = vadd.f32 0.0, %v2057
  %v2059 = vpop.f32.mrf.mxu0
  %v2060 = vadd.f32 0.0, %v2059
  %v2061 = vpop.f32.mrf.mxu0
  %v2062 = vadd.f32 0.0, %v2061
  %2063 = vmatprep.mubr.bf16.mxu0 0
  %2064 = vmatmul.mubr.bf16.gmra.mxu0 %v900
  %v2065 = vpop.f32.mrf.mxu0
  %v2066 = vadd.f32 0.0, %v2065
  %v2067 = vpop.f32.mrf.mxu0
  %v2068 = vadd.f32 0.0, %v2067
  %v2069 = vpop.f32.mrf.mxu0
  %v2070 = vadd.f32 0.0, %v2069
  %v2071 = vpop.f32.mrf.mxu0
  %v2072 = vadd.f32 0.0, %v2071
  %2073 = vmatprep.mubr.bf16.mxu0 0
  %2074 = vmatmul.mubr.bf16.gmra.mxu0 %v903
  %v2075 = vpop.f32.mrf.mxu0
  %v2076 = vadd.f32 0.0, %v2075
  %v2077 = vpop.f32.mrf.mxu0
  %v2078 = vadd.f32 0.0, %v2077
  %v2079 = vpop.f32.mrf.mxu0
  %v2080 = vadd.f32 0.0, %v2079
  %v2081 = vpop.f32.mrf.mxu0
  %v2082 = vadd.f32 0.0, %v2081
  %2083 = vmatprep.mubr.bf16.mxu0 0
  %2084 = vmatmul.mubr.bf16.gmra.mxu0 %v906
  %v2085 = vpop.f32.mrf.mxu0
  %v2086 = vadd.f32 0.0, %v2085
  %v2087 = vpop.f32.mrf.mxu0
  %v2088 = vadd.f32 0.0, %v2087
  %v2089 = vpop.f32.mrf.mxu0
  %v2090 = vadd.f32 0.0, %v2089
  %v2091 = vpop.f32.mrf.mxu0
  %v2092 = vadd.f32 0.0, %v2091
  %2093 = vmatprep.mubr.bf16.mxu0 0
  %2094 = vmatmul.mubr.bf16.gmra.mxu0 %v909
  %v2095 = vpop.f32.mrf.mxu0
  %v2096 = vadd.f32 0.0, %v2095
  %v2097 = vpop.f32.mrf.mxu0
  %v2098 = vadd.f32 0.0, %v2097
  %v2099 = vpop.f32.mrf.mxu0
  %v2100 = vadd.f32 0.0, %v2099
  %v2101 = vpop.f32.mrf.mxu0
  %v2102 = vadd.f32 0.0, %v2101
  %2103 = vmatprep.mubr.bf16.mxu0 0
  %2104 = vmatmul.mubr.bf16.gmra.mxu0 %v912
  %v2105 = vpop.f32.mrf.mxu0
  %v2106 = vadd.f32 0.0, %v2105
  %v2107 = vpop.f32.mrf.mxu0
  %v2108 = vadd.f32 0.0, %v2107
  %v2109 = vpop.f32.mrf.mxu0
  %v2110 = vadd.f32 0.0, %v2109
  %v2111 = vpop.f32.mrf.mxu0
  %v2112 = vadd.f32 0.0, %v2111
  %2113 = vmatprep.mubr.bf16.mxu0 0
  %2114 = vmatmul.mubr.bf16.gmra.mxu0 %v915
  %v2115 = vpop.f32.mrf.mxu0
  %v2116 = vadd.f32 0.0, %v2115
  %v2117 = vpop.f32.mrf.mxu0
  %v2118 = vadd.f32 0.0, %v2117
  %v2119 = vpop.f32.mrf.mxu0
  %v2120 = vadd.f32 0.0, %v2119
  %v2121 = vpop.f32.mrf.mxu0
  %v2122 = vadd.f32 0.0, %v2121
  %2123 = vmatprep.mubr.bf16.mxu0 0
  %2124 = vmatmul.mubr.bf16.gmra.mxu0 %v918
  %v2125 = vpop.f32.mrf.mxu0
  %v2126 = vadd.f32 0.0, %v2125
  %v2127 = vpop.f32.mrf.mxu0
  %v2128 = vadd.f32 0.0, %v2127
  %v2129 = vpop.f32.mrf.mxu0
  %v2130 = vadd.f32 0.0, %v2129
  %v2131 = vpop.f32.mrf.mxu0
  %v2132 = vadd.f32 0.0, %v2131
  %2133 = vmatprep.mubr.bf16.mxu0 0
  %2134 = vmatmul.mubr.bf16.gmra.mxu0 %v921
  %v2135 = vpop.f32.mrf.mxu0
  %v2136 = vadd.f32 0.0, %v2135
  %v2137 = vpop.f32.mrf.mxu0
  %v2138 = vadd.f32 0.0, %v2137
  %v2139 = vpop.f32.mrf.mxu0
  %v2140 = vadd.f32 0.0, %v2139
  %v2141 = vpop.f32.mrf.mxu0
  %v2142 = vadd.f32 0.0, %v2141
  %2143 = vmatprep.mubr.bf16.mxu0 0
  %2144 = vmatmul.mubr.bf16.gmra.mxu0 %v924
  %v2145 = vpop.f32.mrf.mxu0
  %v2146 = vadd.f32 0.0, %v2145
  %v2147 = vpop.f32.mrf.mxu0
  %v2148 = vadd.f32 0.0, %v2147
  %v2149 = vpop.f32.mrf.mxu0
  %v2150 = vadd.f32 0.0, %v2149
  %v2151 = vpop.f32.mrf.mxu0
  %v2152 = vadd.f32 0.0, %v2151
  %2153 = vmatprep.mubr.bf16.mxu0 0
  %2154 = vmatmul.mubr.bf16.gmra.mxu0 %v927
  %v2155 = vpop.f32.mrf.mxu0
  %v2156 = vadd.f32 0.0, %v2155
  %v2157 = vpop.f32.mrf.mxu0
  %v2158 = vadd.f32 0.0, %v2157
  %v2159 = vpop.f32.mrf.mxu0
  %v2160 = vadd.f32 0.0, %v2159
  %v2161 = vpop.f32.mrf.mxu0
  %v2162 = vadd.f32 0.0, %v2161
  %2163 = vmatprep.mubr.bf16.mxu0 0
  %2164 = vmatmul.mubr.bf16.gmra.mxu0 %v930
  %v2165 = vpop.f32.mrf.mxu0
  %v2166 = vadd.f32 0.0, %v2165
  %v2167 = vpop.f32.mrf.mxu0
  %v2168 = vadd.f32 0.0, %v2167
  %v2169 = vpop.f32.mrf.mxu0
  %v2170 = vadd.f32 0.0, %v2169
  %v2171 = vpop.f32.mrf.mxu0
  %v2172 = vadd.f32 0.0, %v2171
  %2173 = vmatprep.mubr.bf16.mxu0 0
  %2174 = vmatmul.mubr.bf16.gmra.mxu0 %v933
  %v2175 = vpop.f32.mrf.mxu0
  %v2176 = vadd.f32 0.0, %v2175
  %v2177 = vpop.f32.mrf.mxu0
  %v2178 = vadd.f32 0.0, %v2177
  %v2179 = vpop.f32.mrf.mxu0
  %v2180 = vadd.f32 0.0, %v2179
  %v2181 = vpop.f32.mrf.mxu0
  %v2182 = vadd.f32 0.0, %v2181
  %2183 = vmatprep.mubr.bf16.mxu0 0
  %2184 = vmatmul.mubr.bf16.gmra.mxu0 %v936
  %v2185 = vpop.f32.mrf.mxu0
  %v2186 = vadd.f32 0.0, %v2185
  %v2187 = vpop.f32.mrf.mxu0
  %v2188 = vadd.f32 0.0, %v2187
  %v2189 = vpop.f32.mrf.mxu0
  %v2190 = vadd.f32 0.0, %v2189
  %v2191 = vpop.f32.mrf.mxu0
  %v2192 = vadd.f32 0.0, %v2191
  %2193 = vmatprep.mubr.bf16.mxu0 0
  %2194 = vmatmul.mubr.bf16.gmra.mxu0 %v939
  %v2195 = vpop.f32.mrf.mxu0
  %v2196 = vadd.f32 0.0, %v2195
  %v2197 = vpop.f32.mrf.mxu0
  %v2198 = vadd.f32 0.0, %v2197
  %v2199 = vpop.f32.mrf.mxu0
  %v2200 = vadd.f32 0.0, %v2199
  %v2201 = vpop.f32.mrf.mxu0
  %v2202 = vadd.f32 0.0, %v2201
  %2203 = vmatprep.mubr.bf16.mxu0 0
  %2204 = vmatmul.mubr.bf16.gmra.mxu0 %v942
  %v2205 = vpop.f32.mrf.mxu0
  %v2206 = vadd.f32 0.0, %v2205
  %v2207 = vpop.f32.mrf.mxu0
  %v2208 = vadd.f32 0.0, %v2207
  %v2209 = vpop.f32.mrf.mxu0
  %v2210 = vadd.f32 0.0, %v2209
  %v2211 = vpop.f32.mrf.mxu0
  %v2212 = vadd.f32 0.0, %v2211
  %2213 = vmatprep.mubr.bf16.mxu0 0
  %2214 = vmatmul.mubr.bf16.gmra.mxu0 %v945
  %v2215 = vpop.f32.mrf.mxu0
  %v2216 = vpop.f32.mrf.mxu0
  %v2217 = vpop.f32.mrf.mxu0
  %v2218 = vpop.f32.mrf.mxu0
  %2219 = vmatprep.mubr.bf16.mxu0 0
  %2220 = vmatmul.mubr.bf16.gmra.mxu0 %v948
  %v2221 = vpop.f32.mrf.mxu0
  %v2222 = vpop.f32.mrf.mxu0
  %v2223 = vpop.f32.mrf.mxu0
  %v2224 = vpop.f32.mrf.mxu0
  %2225 = vmatprep.mubr.bf16.mxu0 0
  %2226 = vmatmul.mubr.bf16.gmra.mxu0 %v951
  %v2227 = vpop.f32.mrf.mxu0
  %v2228 = vpop.f32.mrf.mxu0
  %v2229 = vpop.f32.mrf.mxu0
  %v2230 = vpop.f32.mrf.mxu0
  %2231 = vmatprep.mubr.bf16.mxu0 0
  %2232 = vmatmul.mubr.bf16.gmra.mxu0 %v954
  %v2233 = vpop.f32.mrf.mxu0
  %v2234 = vpop.f32.mrf.mxu0
  %v2235 = vpop.f32.mrf.mxu0
  %v2236 = vpop.f32.mrf.mxu0
  %2237 = vdwg.mxu0
  %2238 = vmatprep.subr.bf16.mxu0 0
  %2239 = vmatpush1.bf16.msra.mxu0 0
  %2240 = vmatprep.subr.bf16.mxu0 0
  %2241 = vmatpush1.bf16.msra.mxu0 0
  %2242 = vmatprep.subr.bf16.mxu0 %v712
  %2243 = vmatpush1.bf16.msra.mxu0 %v711
  %2244 = vmatprep.subr.bf16.mxu0 %v704
  %2245 = vmatpush1.bf16.msra.mxu0 %v703
  %2246 = vmatprep.subr.bf16.mxu0 %v696
  %2247 = vmatpush1.bf16.msra.mxu0 %v695
  %2248 = vmatprep.subr.bf16.mxu0 %v688
  %2249 = vmatpush1.bf16.msra.mxu0 %v687
  %2250 = vmatprep.subr.bf16.mxu0 %v680
  %2251 = vmatpush1.bf16.msra.mxu0 %v679
  %2252 = vmatprep.subr.bf16.mxu0 %v672
  %2253 = vmatpush1.bf16.msra.mxu0 %v671
  %2254 = vmatprep.subr.bf16.mxu0 0
  %2255 = vmatpush2.bf16.msra.mxu0 0
  %2256 = vmatprep.subr.bf16.mxu0 0
  %2257 = vmatpush2.bf16.msra.mxu0 0
  %2258 = vmatprep.subr.bf16.mxu0 0
  %2259 = vmatpush2.bf16.msra.mxu0 0
  %2260 = vmatprep.subr.bf16.mxu0 0
  %2261 = vmatpush2.bf16.msra.mxu0 0
  %2262 = vmatprep.subr.bf16.mxu0 0
  %2263 = vmatpush2.bf16.msra.mxu0 0
  %2264 = vmatprep.subr.bf16.mxu0 0
  %2265 = vmatpush2.bf16.msra.mxu0 0
  %2266 = vmatprep.subr.bf16.mxu0 0
  %2267 = vmatpush2.bf16.msra.mxu0 0
  %2268 = vmatprep.subr.bf16.mxu0 0
  %2269 = vmatpush2.bf16.msra.mxu0 0
  %2270 = vmatprep.mubr.bf16.mxu0 0
  %2271 = vmatmul.mubr.bf16.gmra.mxu0 %v765
  %v2272 = vpop.f32.mrf.mxu0
  %v2273 = vadd.f32 0.0, %v2272
  %v2274 = vpop.f32.mrf.mxu0
  %v2275 = vadd.f32 0.0, %v2274
  %v2276 = vpop.f32.mrf.mxu0
  %v2277 = vadd.f32 0.0, %v2276
  %v2278 = vpop.f32.mrf.mxu0
  %v2279 = vadd.f32 0.0, %v2278
  %2280 = vmatprep.mubr.bf16.mxu0 0
  %2281 = vmatmul.mubr.bf16.gmra.mxu0 %v768
  %v2282 = vpop.f32.mrf.mxu0
  %v2283 = vadd.f32 0.0, %v2282
  %v2284 = vpop.f32.mrf.mxu0
  %v2285 = vadd.f32 0.0, %v2284
  %v2286 = vpop.f32.mrf.mxu0
  %v2287 = vadd.f32 0.0, %v2286
  %v2288 = vpop.f32.mrf.mxu0
  %v2289 = vadd.f32 0.0, %v2288
  %2290 = vmatprep.mubr.bf16.mxu0 0
  %2291 = vmatmul.mubr.bf16.gmra.mxu0 %v771
  %v2292 = vpop.f32.mrf.mxu0
  %v2293 = vadd.f32 0.0, %v2292
  %v2294 = vpop.f32.mrf.mxu0
  %v2295 = vadd.f32 0.0, %v2294
  %v2296 = vpop.f32.mrf.mxu0
  %v2297 = vadd.f32 0.0, %v2296
  %v2298 = vpop.f32.mrf.mxu0
  %v2299 = vadd.f32 0.0, %v2298
  %2300 = vmatprep.mubr.bf16.mxu0 0
  %2301 = vmatmul.mubr.bf16.gmra.mxu0 %v774
  %v2302 = vpop.f32.mrf.mxu0
  %v2303 = vadd.f32 0.0, %v2302
  %v2304 = vpop.f32.mrf.mxu0
  %v2305 = vadd.f32 0.0, %v2304
  %v2306 = vpop.f32.mrf.mxu0
  %v2307 = vadd.f32 0.0, %v2306
  %v2308 = vpop.f32.mrf.mxu0
  %v2309 = vadd.f32 0.0, %v2308
  %2310 = vmatprep.mubr.bf16.mxu0 0
  %2311 = vmatmul.mubr.bf16.gmra.mxu0 %v777
  %v2312 = vpop.f32.mrf.mxu0
  %v2313 = vadd.f32 0.0, %v2312
  %v2314 = vpop.f32.mrf.mxu0
  %v2315 = vadd.f32 0.0, %v2314
  %v2316 = vpop.f32.mrf.mxu0
  %v2317 = vadd.f32 0.0, %v2316
  %v2318 = vpop.f32.mrf.mxu0
  %v2319 = vadd.f32 0.0, %v2318
  %2320 = vmatprep.mubr.bf16.mxu0 0
  %2321 = vmatmul.mubr.bf16.gmra.mxu0 %v780
  %v2322 = vpop.f32.mrf.mxu0
  %v2323 = vadd.f32 0.0, %v2322
  %v2324 = vpop.f32.mrf.mxu0
  %v2325 = vadd.f32 0.0, %v2324
  %v2326 = vpop.f32.mrf.mxu0
  %v2327 = vadd.f32 0.0, %v2326
  %v2328 = vpop.f32.mrf.mxu0
  %v2329 = vadd.f32 0.0, %v2328
  %2330 = vmatprep.mubr.bf16.mxu0 0
  %2331 = vmatmul.mubr.bf16.gmra.mxu0 %v783
  %v2332 = vpop.f32.mrf.mxu0
  %v2333 = vadd.f32 0.0, %v2332
  %v2334 = vpop.f32.mrf.mxu0
  %v2335 = vadd.f32 0.0, %v2334
  %v2336 = vpop.f32.mrf.mxu0
  %v2337 = vadd.f32 0.0, %v2336
  %v2338 = vpop.f32.mrf.mxu0
  %v2339 = vadd.f32 0.0, %v2338
  %2340 = vmatprep.mubr.bf16.mxu0 0
  %2341 = vmatmul.mubr.bf16.gmra.mxu0 %v786
  %v2342 = vpop.f32.mrf.mxu0
  %v2343 = vadd.f32 0.0, %v2342
  %v2344 = vpop.f32.mrf.mxu0
  %v2345 = vadd.f32 0.0, %v2344
  %v2346 = vpop.f32.mrf.mxu0
  %v2347 = vadd.f32 0.0, %v2346
  %v2348 = vpop.f32.mrf.mxu0
  %v2349 = vadd.f32 0.0, %v2348
  %2350 = vmatprep.mubr.bf16.mxu0 0
  %2351 = vmatmul.mubr.bf16.gmra.mxu0 %v789
  %v2352 = vpop.f32.mrf.mxu0
  %v2353 = vadd.f32 0.0, %v2352
  %v2354 = vpop.f32.mrf.mxu0
  %v2355 = vadd.f32 0.0, %v2354
  %v2356 = vpop.f32.mrf.mxu0
  %v2357 = vadd.f32 0.0, %v2356
  %v2358 = vpop.f32.mrf.mxu0
  %v2359 = vadd.f32 0.0, %v2358
  %2360 = vmatprep.mubr.bf16.mxu0 0
  %2361 = vmatmul.mubr.bf16.gmra.mxu0 %v792
  %v2362 = vpop.f32.mrf.mxu0
  %v2363 = vadd.f32 0.0, %v2362
  %v2364 = vpop.f32.mrf.mxu0
  %v2365 = vadd.f32 0.0, %v2364
  %v2366 = vpop.f32.mrf.mxu0
  %v2367 = vadd.f32 0.0, %v2366
  %v2368 = vpop.f32.mrf.mxu0
  %v2369 = vadd.f32 0.0, %v2368
  %2370 = vmatprep.mubr.bf16.mxu0 0
  %2371 = vmatmul.mubr.bf16.gmra.mxu0 %v795
  %v2372 = vpop.f32.mrf.mxu0
  %v2373 = vadd.f32 0.0, %v2372
  %v2374 = vpop.f32.mrf.mxu0
  %v2375 = vadd.f32 0.0, %v2374
  %v2376 = vpop.f32.mrf.mxu0
  %v2377 = vadd.f32 0.0, %v2376
  %v2378 = vpop.f32.mrf.mxu0
  %v2379 = vadd.f32 0.0, %v2378
  %2380 = vmatprep.mubr.bf16.mxu0 0
  %2381 = vmatmul.mubr.bf16.gmra.mxu0 %v798
  %v2382 = vpop.f32.mrf.mxu0
  %v2383 = vadd.f32 0.0, %v2382
  %v2384 = vpop.f32.mrf.mxu0
  %v2385 = vadd.f32 0.0, %v2384
  %v2386 = vpop.f32.mrf.mxu0
  %v2387 = vadd.f32 0.0, %v2386
  %v2388 = vpop.f32.mrf.mxu0
  %v2389 = vadd.f32 0.0, %v2388
  %2390 = vmatprep.mubr.bf16.mxu0 0
  %2391 = vmatmul.mubr.bf16.gmra.mxu0 %v801
  %v2392 = vpop.f32.mrf.mxu0
  %v2393 = vadd.f32 0.0, %v2392
  %v2394 = vpop.f32.mrf.mxu0
  %v2395 = vadd.f32 0.0, %v2394
  %v2396 = vpop.f32.mrf.mxu0
  %v2397 = vadd.f32 0.0, %v2396
  %v2398 = vpop.f32.mrf.mxu0
  %v2399 = vadd.f32 0.0, %v2398
  %2400 = vmatprep.mubr.bf16.mxu0 0
  %2401 = vmatmul.mubr.bf16.gmra.mxu0 %v804
  %v2402 = vpop.f32.mrf.mxu0
  %v2403 = vadd.f32 0.0, %v2402
  %v2404 = vpop.f32.mrf.mxu0
  %v2405 = vadd.f32 0.0, %v2404
  %v2406 = vpop.f32.mrf.mxu0
  %v2407 = vadd.f32 0.0, %v2406
  %v2408 = vpop.f32.mrf.mxu0
  %v2409 = vadd.f32 0.0, %v2408
  %2410 = vmatprep.mubr.bf16.mxu0 0
  %2411 = vmatmul.mubr.bf16.gmra.mxu0 %v807
  %v2412 = vpop.f32.mrf.mxu0
  %v2413 = vadd.f32 0.0, %v2412
  %v2414 = vpop.f32.mrf.mxu0
  %v2415 = vadd.f32 0.0, %v2414
  %v2416 = vpop.f32.mrf.mxu0
  %v2417 = vadd.f32 0.0, %v2416
  %v2418 = vpop.f32.mrf.mxu0
  %v2419 = vadd.f32 0.0, %v2418
  %2420 = vmatprep.mubr.bf16.mxu0 0
  %2421 = vmatmul.mubr.bf16.gmra.mxu0 %v810
  %v2422 = vpop.f32.mrf.mxu0
  %v2423 = vadd.f32 0.0, %v2422
  %v2424 = vpop.f32.mrf.mxu0
  %v2425 = vadd.f32 0.0, %v2424
  %v2426 = vpop.f32.mrf.mxu0
  %v2427 = vadd.f32 0.0, %v2426
  %v2428 = vpop.f32.mrf.mxu0
  %v2429 = vadd.f32 0.0, %v2428
  %2430 = vmatprep.mubr.bf16.mxu0 0
  %2431 = vmatmul.mubr.bf16.gmra.mxu0 %v813
  %v2432 = vpop.f32.mrf.mxu0
  %v2433 = vadd.f32 0.0, %v2432
  %v2434 = vpop.f32.mrf.mxu0
  %v2435 = vadd.f32 0.0, %v2434
  %v2436 = vpop.f32.mrf.mxu0
  %v2437 = vadd.f32 0.0, %v2436
  %v2438 = vpop.f32.mrf.mxu0
  %v2439 = vadd.f32 0.0, %v2438
  %2440 = vmatprep.mubr.bf16.mxu0 0
  %2441 = vmatmul.mubr.bf16.gmra.mxu0 %v816
  %v2442 = vpop.f32.mrf.mxu0
  %v2443 = vadd.f32 0.0, %v2442
  %v2444 = vpop.f32.mrf.mxu0
  %v2445 = vadd.f32 0.0, %v2444
  %v2446 = vpop.f32.mrf.mxu0
  %v2447 = vadd.f32 0.0, %v2446
  %v2448 = vpop.f32.mrf.mxu0
  %v2449 = vadd.f32 0.0, %v2448
  %2450 = vmatprep.mubr.bf16.mxu0 0
  %2451 = vmatmul.mubr.bf16.gmra.mxu0 %v819
  %v2452 = vpop.f32.mrf.mxu0
  %v2453 = vadd.f32 0.0, %v2452
  %v2454 = vpop.f32.mrf.mxu0
  %v2455 = vadd.f32 0.0, %v2454
  %v2456 = vpop.f32.mrf.mxu0
  %v2457 = vadd.f32 0.0, %v2456
  %v2458 = vpop.f32.mrf.mxu0
  %v2459 = vadd.f32 0.0, %v2458
  %2460 = vmatprep.mubr.bf16.mxu0 0
  %2461 = vmatmul.mubr.bf16.gmra.mxu0 %v822
  %v2462 = vpop.f32.mrf.mxu0
  %v2463 = vadd.f32 0.0, %v2462
  %v2464 = vpop.f32.mrf.mxu0
  %v2465 = vadd.f32 0.0, %v2464
  %v2466 = vpop.f32.mrf.mxu0
  %v2467 = vadd.f32 0.0, %v2466
  %v2468 = vpop.f32.mrf.mxu0
  %v2469 = vadd.f32 0.0, %v2468
  %2470 = vmatprep.mubr.bf16.mxu0 0
  %2471 = vmatmul.mubr.bf16.gmra.mxu0 %v825
  %v2472 = vpop.f32.mrf.mxu0
  %v2473 = vadd.f32 0.0, %v2472
  %v2474 = vpop.f32.mrf.mxu0
  %v2475 = vadd.f32 0.0, %v2474
  %v2476 = vpop.f32.mrf.mxu0
  %v2477 = vadd.f32 0.0, %v2476
  %v2478 = vpop.f32.mrf.mxu0
  %v2479 = vadd.f32 0.0, %v2478
  %2480 = vmatprep.mubr.bf16.mxu0 0
  %2481 = vmatmul.mubr.bf16.gmra.mxu0 %v828
  %v2482 = vpop.f32.mrf.mxu0
  %v2483 = vadd.f32 0.0, %v2482
  %v2484 = vpop.f32.mrf.mxu0
  %v2485 = vadd.f32 0.0, %v2484
  %v2486 = vpop.f32.mrf.mxu0
  %v2487 = vadd.f32 0.0, %v2486
  %v2488 = vpop.f32.mrf.mxu0
  %v2489 = vadd.f32 0.0, %v2488
  %2490 = vmatprep.mubr.bf16.mxu0 0
  %2491 = vmatmul.mubr.bf16.gmra.mxu0 %v831
  %v2492 = vpop.f32.mrf.mxu0
  %v2493 = vadd.f32 0.0, %v2492
  %v2494 = vpop.f32.mrf.mxu0
  %v2495 = vadd.f32 0.0, %v2494
  %v2496 = vpop.f32.mrf.mxu0
  %v2497 = vadd.f32 0.0, %v2496
  %v2498 = vpop.f32.mrf.mxu0
  %v2499 = vadd.f32 0.0, %v2498
  %2500 = vmatprep.mubr.bf16.mxu0 0
  %2501 = vmatmul.mubr.bf16.gmra.mxu0 %v834
  %v2502 = vpop.f32.mrf.mxu0
  %v2503 = vadd.f32 0.0, %v2502
  %v2504 = vpop.f32.mrf.mxu0
  %v2505 = vadd.f32 0.0, %v2504
  %v2506 = vpop.f32.mrf.mxu0
  %v2507 = vadd.f32 0.0, %v2506
  %v2508 = vpop.f32.mrf.mxu0
  %v2509 = vadd.f32 0.0, %v2508
  %2510 = vmatprep.mubr.bf16.mxu0 0
  %2511 = vmatmul.mubr.bf16.gmra.mxu0 %v837
  %v2512 = vpop.f32.mrf.mxu0
  %v2513 = vadd.f32 0.0, %v2512
  %v2514 = vpop.f32.mrf.mxu0
  %v2515 = vadd.f32 0.0, %v2514
  %v2516 = vpop.f32.mrf.mxu0
  %v2517 = vadd.f32 0.0, %v2516
  %v2518 = vpop.f32.mrf.mxu0
  %v2519 = vadd.f32 0.0, %v2518
  %2520 = vmatprep.mubr.bf16.mxu0 0
  %2521 = vmatmul.mubr.bf16.gmra.mxu0 %v840
  %v2522 = vpop.f32.mrf.mxu0
  %v2523 = vadd.f32 0.0, %v2522
  %v2524 = vpop.f32.mrf.mxu0
  %v2525 = vadd.f32 0.0, %v2524
  %v2526 = vpop.f32.mrf.mxu0
  %v2527 = vadd.f32 0.0, %v2526
  %v2528 = vpop.f32.mrf.mxu0
  %v2529 = vadd.f32 0.0, %v2528
  %2530 = vmatprep.mubr.bf16.mxu0 0
  %2531 = vmatmul.mubr.bf16.gmra.mxu0 %v843
  %v2532 = vpop.f32.mrf.mxu0
  %v2533 = vadd.f32 0.0, %v2532
  %v2534 = vpop.f32.mrf.mxu0
  %v2535 = vadd.f32 0.0, %v2534
  %v2536 = vpop.f32.mrf.mxu0
  %v2537 = vadd.f32 0.0, %v2536
  %v2538 = vpop.f32.mrf.mxu0
  %v2539 = vadd.f32 0.0, %v2538
  %2540 = vmatprep.mubr.bf16.mxu0 0
  %2541 = vmatmul.mubr.bf16.gmra.mxu0 %v846
  %v2542 = vpop.f32.mrf.mxu0
  %v2543 = vadd.f32 0.0, %v2542
  %v2544 = vpop.f32.mrf.mxu0
  %v2545 = vadd.f32 0.0, %v2544
  %v2546 = vpop.f32.mrf.mxu0
  %v2547 = vadd.f32 0.0, %v2546
  %v2548 = vpop.f32.mrf.mxu0
  %v2549 = vadd.f32 0.0, %v2548
  %2550 = vmatprep.mubr.bf16.mxu0 0
  %2551 = vmatmul.mubr.bf16.gmra.mxu0 %v849
  %v2552 = vpop.f32.mrf.mxu0
  %v2553 = vpop.f32.mrf.mxu0
  %v2554 = vpop.f32.mrf.mxu0
  %v2555 = vpop.f32.mrf.mxu0
  %2556 = vmatprep.mubr.bf16.mxu0 0
  %2557 = vmatmul.mubr.bf16.gmra.mxu0 %v852
  %v2558 = vpop.f32.mrf.mxu0
  %v2559 = vpop.f32.mrf.mxu0
  %v2560 = vpop.f32.mrf.mxu0
  %v2561 = vpop.f32.mrf.mxu0
  %2562 = vmatprep.mubr.bf16.mxu0 0
  %2563 = vmatmul.mubr.bf16.gmra.mxu0 %v855
  %v2564 = vpop.f32.mrf.mxu0
  %v2565 = vpop.f32.mrf.mxu0
  %v2566 = vpop.f32.mrf.mxu0
  %v2567 = vpop.f32.mrf.mxu0
  %2568 = vmatprep.mubr.bf16.mxu0 0
  %2569 = vmatmul.mubr.bf16.gmra.mxu0 %v858
  %v2570 = vpop.f32.mrf.mxu0
  %v2571 = vpop.f32.mrf.mxu0
  %v2572 = vpop.f32.mrf.mxu0
  %v2573 = vpop.f32.mrf.mxu0
  %2574 = vmatprep.mubr.bf16.mxu0 0
  %2575 = vmatmul.mubr.bf16.gmra.mxu0 %v861
  %v2576 = vpop.f32.mrf.mxu0
  %v2577 = vadd.f32 0.0, %v2576
  %v2578 = vpop.f32.mrf.mxu0
  %v2579 = vadd.f32 0.0, %v2578
  %v2580 = vpop.f32.mrf.mxu0
  %v2581 = vadd.f32 0.0, %v2580
  %v2582 = vpop.f32.mrf.mxu0
  %v2583 = vadd.f32 0.0, %v2582
  %2584 = vmatprep.mubr.bf16.mxu0 0
  %2585 = vmatmul.mubr.bf16.gmra.mxu0 %v864
  %v2586 = vpop.f32.mrf.mxu0
  %v2587 = vadd.f32 0.0, %v2586
  %v2588 = vpop.f32.mrf.mxu0
  %v2589 = vadd.f32 0.0, %v2588
  %v2590 = vpop.f32.mrf.mxu0
  %v2591 = vadd.f32 0.0, %v2590
  %v2592 = vpop.f32.mrf.mxu0
  %v2593 = vadd.f32 0.0, %v2592
  %2594 = vmatprep.mubr.bf16.mxu0 0
  %2595 = vmatmul.mubr.bf16.gmra.mxu0 %v867
  %v2596 = vpop.f32.mrf.mxu0
  %v2597 = vadd.f32 0.0, %v2596
  %v2598 = vpop.f32.mrf.mxu0
  %v2599 = vadd.f32 0.0, %v2598
  %v2600 = vpop.f32.mrf.mxu0
  %v2601 = vadd.f32 0.0, %v2600
  %v2602 = vpop.f32.mrf.mxu0
  %v2603 = vadd.f32 0.0, %v2602
  %2604 = vmatprep.mubr.bf16.mxu0 0
  %2605 = vmatmul.mubr.bf16.gmra.mxu0 %v870
  %v2606 = vpop.f32.mrf.mxu0
  %v2607 = vadd.f32 0.0, %v2606
  %v2608 = vpop.f32.mrf.mxu0
  %v2609 = vadd.f32 0.0, %v2608
  %v2610 = vpop.f32.mrf.mxu0
  %v2611 = vadd.f32 0.0, %v2610
  %v2612 = vpop.f32.mrf.mxu0
  %v2613 = vadd.f32 0.0, %v2612
  %2614 = vmatprep.mubr.bf16.mxu0 0
  %2615 = vmatmul.mubr.bf16.gmra.mxu0 %v873
  %v2616 = vpop.f32.mrf.mxu0
  %v2617 = vadd.f32 0.0, %v2616
  %v2618 = vpop.f32.mrf.mxu0
  %v2619 = vadd.f32 0.0, %v2618
  %v2620 = vpop.f32.mrf.mxu0
  %v2621 = vadd.f32 0.0, %v2620
  %v2622 = vpop.f32.mrf.mxu0
  %v2623 = vadd.f32 0.0, %v2622
  %2624 = vmatprep.mubr.bf16.mxu0 0
  %2625 = vmatmul.mubr.bf16.gmra.mxu0 %v876
  %v2626 = vpop.f32.mrf.mxu0
  %v2627 = vadd.f32 0.0, %v2626
  %v2628 = vpop.f32.mrf.mxu0
  %v2629 = vadd.f32 0.0, %v2628
  %v2630 = vpop.f32.mrf.mxu0
  %v2631 = vadd.f32 0.0, %v2630
  %v2632 = vpop.f32.mrf.mxu0
  %v2633 = vadd.f32 0.0, %v2632
  %2634 = vmatprep.mubr.bf16.mxu0 0
  %2635 = vmatmul.mubr.bf16.gmra.mxu0 %v879
  %v2636 = vpop.f32.mrf.mxu0
  %v2637 = vadd.f32 0.0, %v2636
  %v2638 = vpop.f32.mrf.mxu0
  %v2639 = vadd.f32 0.0, %v2638
  %v2640 = vpop.f32.mrf.mxu0
  %v2641 = vadd.f32 0.0, %v2640
  %v2642 = vpop.f32.mrf.mxu0
  %v2643 = vadd.f32 0.0, %v2642
  %2644 = vmatprep.mubr.bf16.mxu0 0
  %2645 = vmatmul.mubr.bf16.gmra.mxu0 %v882
  %v2646 = vpop.f32.mrf.mxu0
  %v2647 = vadd.f32 0.0, %v2646
  %v2648 = vpop.f32.mrf.mxu0
  %v2649 = vadd.f32 0.0, %v2648
  %v2650 = vpop.f32.mrf.mxu0
  %v2651 = vadd.f32 0.0, %v2650
  %v2652 = vpop.f32.mrf.mxu0
  %v2653 = vadd.f32 0.0, %v2652
  %2654 = vmatprep.mubr.bf16.mxu0 0
  %2655 = vmatmul.mubr.bf16.gmra.mxu0 %v885
  %v2656 = vpop.f32.mrf.mxu0
  %v2657 = vadd.f32 0.0, %v2656
  %v2658 = vpop.f32.mrf.mxu0
  %v2659 = vadd.f32 0.0, %v2658
  %v2660 = vpop.f32.mrf.mxu0
  %v2661 = vadd.f32 0.0, %v2660
  %v2662 = vpop.f32.mrf.mxu0
  %v2663 = vadd.f32 0.0, %v2662
  %2664 = vmatprep.mubr.bf16.mxu0 0
  %2665 = vmatmul.mubr.bf16.gmra.mxu0 %v888
  %v2666 = vpop.f32.mrf.mxu0
  %v2667 = vadd.f32 0.0, %v2666
  %v2668 = vpop.f32.mrf.mxu0
  %v2669 = vadd.f32 0.0, %v2668
  %v2670 = vpop.f32.mrf.mxu0
  %v2671 = vadd.f32 0.0, %v2670
  %v2672 = vpop.f32.mrf.mxu0
  %v2673 = vadd.f32 0.0, %v2672
  %2674 = vmatprep.mubr.bf16.mxu0 0
  %2675 = vmatmul.mubr.bf16.gmra.mxu0 %v891
  %v2676 = vpop.f32.mrf.mxu0
  %v2677 = vadd.f32 0.0, %v2676
  %v2678 = vpop.f32.mrf.mxu0
  %v2679 = vadd.f32 0.0, %v2678
  %v2680 = vpop.f32.mrf.mxu0
  %v2681 = vadd.f32 0.0, %v2680
  %v2682 = vpop.f32.mrf.mxu0
  %v2683 = vadd.f32 0.0, %v2682
  %2684 = vmatprep.mubr.bf16.mxu0 0
  %2685 = vmatmul.mubr.bf16.gmra.mxu0 %v894
  %v2686 = vpop.f32.mrf.mxu0
  %v2687 = vadd.f32 0.0, %v2686
  %v2688 = vpop.f32.mrf.mxu0
  %v2689 = vadd.f32 0.0, %v2688
  %v2690 = vpop.f32.mrf.mxu0
  %v2691 = vadd.f32 0.0, %v2690
  %v2692 = vpop.f32.mrf.mxu0
  %v2693 = vadd.f32 0.0, %v2692
  %2694 = vmatprep.mubr.bf16.mxu0 0
  %2695 = vmatmul.mubr.bf16.gmra.mxu0 %v897
  %v2696 = vpop.f32.mrf.mxu0
  %v2697 = vadd.f32 0.0, %v2696
  %v2698 = vpop.f32.mrf.mxu0
  %v2699 = vadd.f32 0.0, %v2698
  %v2700 = vpop.f32.mrf.mxu0
  %v2701 = vadd.f32 0.0, %v2700
  %v2702 = vpop.f32.mrf.mxu0
  %v2703 = vadd.f32 0.0, %v2702
  %2704 = vmatprep.mubr.bf16.mxu0 0
  %2705 = vmatmul.mubr.bf16.gmra.mxu0 %v900
  %v2706 = vpop.f32.mrf.mxu0
  %v2707 = vadd.f32 0.0, %v2706
  %v2708 = vpop.f32.mrf.mxu0
  %v2709 = vadd.f32 0.0, %v2708
  %v2710 = vpop.f32.mrf.mxu0
  %v2711 = vadd.f32 0.0, %v2710
  %v2712 = vpop.f32.mrf.mxu0
  %v2713 = vadd.f32 0.0, %v2712
  %2714 = vmatprep.mubr.bf16.mxu0 0
  %2715 = vmatmul.mubr.bf16.gmra.mxu0 %v903
  %v2716 = vpop.f32.mrf.mxu0
  %v2717 = vadd.f32 0.0, %v2716
  %v2718 = vpop.f32.mrf.mxu0
  %v2719 = vadd.f32 0.0, %v2718
  %v2720 = vpop.f32.mrf.mxu0
  %v2721 = vadd.f32 0.0, %v2720
  %v2722 = vpop.f32.mrf.mxu0
  %v2723 = vadd.f32 0.0, %v2722
  %2724 = vmatprep.mubr.bf16.mxu0 0
  %2725 = vmatmul.mubr.bf16.gmra.mxu0 %v906
  %v2726 = vpop.f32.mrf.mxu0
  %v2727 = vadd.f32 0.0, %v2726
  %v2728 = vpop.f32.mrf.mxu0
  %v2729 = vadd.f32 0.0, %v2728
  %v2730 = vpop.f32.mrf.mxu0
  %v2731 = vadd.f32 0.0, %v2730
  %v2732 = vpop.f32.mrf.mxu0
  %v2733 = vadd.f32 0.0, %v2732
  %2734 = vmatprep.mubr.bf16.mxu0 0
  %2735 = vmatmul.mubr.bf16.gmra.mxu0 %v909
  %v2736 = vpop.f32.mrf.mxu0
  %v2737 = vadd.f32 0.0, %v2736
  %v2738 = vpop.f32.mrf.mxu0
  %v2739 = vadd.f32 0.0, %v2738
  %v2740 = vpop.f32.mrf.mxu0
  %v2741 = vadd.f32 0.0, %v2740
  %v2742 = vpop.f32.mrf.mxu0
  %v2743 = vadd.f32 0.0, %v2742
  %2744 = vmatprep.mubr.bf16.mxu0 0
  %2745 = vmatmul.mubr.bf16.gmra.mxu0 %v912
  %v2746 = vpop.f32.mrf.mxu0
  %v2747 = vadd.f32 0.0, %v2746
  %v2748 = vpop.f32.mrf.mxu0
  %v2749 = vadd.f32 0.0, %v2748
  %v2750 = vpop.f32.mrf.mxu0
  %v2751 = vadd.f32 0.0, %v2750
  %v2752 = vpop.f32.mrf.mxu0
  %v2753 = vadd.f32 0.0, %v2752
  %2754 = vmatprep.mubr.bf16.mxu0 0
  %2755 = vmatmul.mubr.bf16.gmra.mxu0 %v915
  %v2756 = vpop.f32.mrf.mxu0
  %v2757 = vadd.f32 0.0, %v2756
  %v2758 = vpop.f32.mrf.mxu0
  %v2759 = vadd.f32 0.0, %v2758
  %v2760 = vpop.f32.mrf.mxu0
  %v2761 = vadd.f32 0.0, %v2760
  %v2762 = vpop.f32.mrf.mxu0
  %v2763 = vadd.f32 0.0, %v2762
  %2764 = vmatprep.mubr.bf16.mxu0 0
  %2765 = vmatmul.mubr.bf16.gmra.mxu0 %v918
  %v2766 = vpop.f32.mrf.mxu0
  %v2767 = vadd.f32 0.0, %v2766
  %v2768 = vpop.f32.mrf.mxu0
  %v2769 = vadd.f32 0.0, %v2768
  %v2770 = vpop.f32.mrf.mxu0
  %v2771 = vadd.f32 0.0, %v2770
  %v2772 = vpop.f32.mrf.mxu0
  %v2773 = vadd.f32 0.0, %v2772
  %2774 = vmatprep.mubr.bf16.mxu0 0
  %2775 = vmatmul.mubr.bf16.gmra.mxu0 %v921
  %v2776 = vpop.f32.mrf.mxu0
  %v2777 = vadd.f32 0.0, %v2776
  %v2778 = vpop.f32.mrf.mxu0
  %v2779 = vadd.f32 0.0, %v2778
  %v2780 = vpop.f32.mrf.mxu0
  %v2781 = vadd.f32 0.0, %v2780
  %v2782 = vpop.f32.mrf.mxu0
  %v2783 = vadd.f32 0.0, %v2782
  %2784 = vmatprep.mubr.bf16.mxu0 0
  %2785 = vmatmul.mubr.bf16.gmra.mxu0 %v924
  %v2786 = vpop.f32.mrf.mxu0
  %v2787 = vadd.f32 0.0, %v2786
  %v2788 = vpop.f32.mrf.mxu0
  %v2789 = vadd.f32 0.0, %v2788
  %v2790 = vpop.f32.mrf.mxu0
  %v2791 = vadd.f32 0.0, %v2790
  %v2792 = vpop.f32.mrf.mxu0
  %v2793 = vadd.f32 0.0, %v2792
  %2794 = vmatprep.mubr.bf16.mxu0 0
  %2795 = vmatmul.mubr.bf16.gmra.mxu0 %v927
  %v2796 = vpop.f32.mrf.mxu0
  %v2797 = vadd.f32 0.0, %v2796
  %v2798 = vpop.f32.mrf.mxu0
  %v2799 = vadd.f32 0.0, %v2798
  %v2800 = vpop.f32.mrf.mxu0
  %v2801 = vadd.f32 0.0, %v2800
  %v2802 = vpop.f32.mrf.mxu0
  %v2803 = vadd.f32 0.0, %v2802
  %2804 = vmatprep.mubr.bf16.mxu0 0
  %2805 = vmatmul.mubr.bf16.gmra.mxu0 %v930
  %v2806 = vpop.f32.mrf.mxu0
  %v2807 = vadd.f32 0.0, %v2806
  %v2808 = vpop.f32.mrf.mxu0
  %v2809 = vadd.f32 0.0, %v2808
  %v2810 = vpop.f32.mrf.mxu0
  %v2811 = vadd.f32 0.0, %v2810
  %v2812 = vpop.f32.mrf.mxu0
  %v2813 = vadd.f32 0.0, %v2812
  %2814 = vmatprep.mubr.bf16.mxu0 0
  %2815 = vmatmul.mubr.bf16.gmra.mxu0 %v933
  %v2816 = vpop.f32.mrf.mxu0
  %v2817 = vadd.f32 0.0, %v2816
  %v2818 = vpop.f32.mrf.mxu0
  %v2819 = vadd.f32 0.0, %v2818
  %v2820 = vpop.f32.mrf.mxu0
  %v2821 = vadd.f32 0.0, %v2820
  %v2822 = vpop.f32.mrf.mxu0
  %v2823 = vadd.f32 0.0, %v2822
  %2824 = vmatprep.mubr.bf16.mxu0 0
  %2825 = vmatmul.mubr.bf16.gmra.mxu0 %v936
  %v2826 = vpop.f32.mrf.mxu0
  %v2827 = vadd.f32 0.0, %v2826
  %v2828 = vpop.f32.mrf.mxu0
  %v2829 = vadd.f32 0.0, %v2828
  %v2830 = vpop.f32.mrf.mxu0
  %v2831 = vadd.f32 0.0, %v2830
  %v2832 = vpop.f32.mrf.mxu0
  %v2833 = vadd.f32 0.0, %v2832
  %2834 = vmatprep.mubr.bf16.mxu0 0
  %2835 = vmatmul.mubr.bf16.gmra.mxu0 %v939
  %v2836 = vpop.f32.mrf.mxu0
  %v2837 = vadd.f32 0.0, %v2836
  %v2838 = vpop.f32.mrf.mxu0
  %v2839 = vadd.f32 0.0, %v2838
  %v2840 = vpop.f32.mrf.mxu0
  %v2841 = vadd.f32 0.0, %v2840
  %v2842 = vpop.f32.mrf.mxu0
  %v2843 = vadd.f32 0.0, %v2842
  %2844 = vmatprep.mubr.bf16.mxu0 0
  %2845 = vmatmul.mubr.bf16.gmra.mxu0 %v942
  %v2846 = vpop.f32.mrf.mxu0
  %v2847 = vadd.f32 0.0, %v2846
  %v2848 = vpop.f32.mrf.mxu0
  %v2849 = vadd.f32 0.0, %v2848
  %v2850 = vpop.f32.mrf.mxu0
  %v2851 = vadd.f32 0.0, %v2850
  %v2852 = vpop.f32.mrf.mxu0
  %v2853 = vadd.f32 0.0, %v2852
  %2854 = vmatprep.mubr.bf16.mxu0 0
  %2855 = vmatmul.mubr.bf16.gmra.mxu0 %v945
  %v2856 = vpop.f32.mrf.mxu0
  %v2857 = vpop.f32.mrf.mxu0
  %v2858 = vpop.f32.mrf.mxu0
  %v2859 = vpop.f32.mrf.mxu0
  %2860 = vmatprep.mubr.bf16.mxu0 0
  %2861 = vmatmul.mubr.bf16.gmra.mxu0 %v948
  %v2862 = vpop.f32.mrf.mxu0
  %v2863 = vpop.f32.mrf.mxu0
  %v2864 = vpop.f32.mrf.mxu0
  %v2865 = vpop.f32.mrf.mxu0
  %2866 = vmatprep.mubr.bf16.mxu0 0
  %2867 = vmatmul.mubr.bf16.gmra.mxu0 %v951
  %v2868 = vpop.f32.mrf.mxu0
  %v2869 = vpop.f32.mrf.mxu0
  %v2870 = vpop.f32.mrf.mxu0
  %v2871 = vpop.f32.mrf.mxu0
  %2872 = vmatprep.mubr.bf16.mxu0 0
  %2873 = vmatmul.mubr.bf16.gmra.mxu0 %v954
  %v2874 = vpop.f32.mrf.mxu0
  %v2875 = vpop.f32.mrf.mxu0
  %v2876 = vpop.f32.mrf.mxu0
  %v2877 = vpop.f32.mrf.mxu0
  %2878 = vdwg.mxu0
  %2879 = vmatprep.subr.bf16.mxu0 0
  %2880 = vmatpush1.bf16.msra.mxu0 0
  %2881 = vmatprep.subr.bf16.mxu0 0
  %2882 = vmatpush1.bf16.msra.mxu0 0
  %2883 = vmatprep.subr.bf16.mxu0 %v714
  %2884 = vmatpush1.bf16.msra.mxu0 %v713
  %2885 = vmatprep.subr.bf16.mxu0 %v706
  %2886 = vmatpush1.bf16.msra.mxu0 %v705
  %2887 = vmatprep.subr.bf16.mxu0 %v698
  %2888 = vmatpush1.bf16.msra.mxu0 %v697
  %2889 = vmatprep.subr.bf16.mxu0 %v690
  %2890 = vmatpush1.bf16.msra.mxu0 %v689
  %2891 = vmatprep.subr.bf16.mxu0 %v682
  %2892 = vmatpush1.bf16.msra.mxu0 %v681
  %2893 = vmatprep.subr.bf16.mxu0 %v674
  %2894 = vmatpush1.bf16.msra.mxu0 %v673
  %2895 = vmatprep.subr.bf16.mxu0 0
  %2896 = vmatpush2.bf16.msra.mxu0 0
  %2897 = vmatprep.subr.bf16.mxu0 0
  %2898 = vmatpush2.bf16.msra.mxu0 0
  %2899 = vmatprep.subr.bf16.mxu0 0
  %2900 = vmatpush2.bf16.msra.mxu0 0
  %2901 = vmatprep.subr.bf16.mxu0 0
  %2902 = vmatpush2.bf16.msra.mxu0 0
  %2903 = vmatprep.subr.bf16.mxu0 0
  %2904 = vmatpush2.bf16.msra.mxu0 0
  %2905 = vmatprep.subr.bf16.mxu0 0
  %2906 = vmatpush2.bf16.msra.mxu0 0
  %2907 = vmatprep.subr.bf16.mxu0 0
  %2908 = vmatpush2.bf16.msra.mxu0 0
  %2909 = vmatprep.subr.bf16.mxu0 0
  %2910 = vmatpush2.bf16.msra.mxu0 0
  %2911 = vmatprep.mubr.bf16.mxu0 0
  %2912 = vmatmul.mubr.bf16.gmra.mxu0 %v765
  %v2913 = vpop.f32.mrf.mxu0
  %v2914 = vadd.f32 0.0, %v2913
  %v2915 = vpop.f32.mrf.mxu0
  %v2916 = vadd.f32 0.0, %v2915
  %v2917 = vpop.f32.mrf.mxu0
  %v2918 = vadd.f32 0.0, %v2917
  %v2919 = vpop.f32.mrf.mxu0
  %v2920 = vadd.f32 0.0, %v2919
  %2921 = vmatprep.mubr.bf16.mxu0 0
  %2922 = vmatmul.mubr.bf16.gmra.mxu0 %v768
  %v2923 = vpop.f32.mrf.mxu0
  %v2924 = vadd.f32 0.0, %v2923
  %v2925 = vpop.f32.mrf.mxu0
  %v2926 = vadd.f32 0.0, %v2925
  %v2927 = vpop.f32.mrf.mxu0
  %v2928 = vadd.f32 0.0, %v2927
  %v2929 = vpop.f32.mrf.mxu0
  %v2930 = vadd.f32 0.0, %v2929
  %2931 = vmatprep.mubr.bf16.mxu0 0
  %2932 = vmatmul.mubr.bf16.gmra.mxu0 %v771
  %v2933 = vpop.f32.mrf.mxu0
  %v2934 = vadd.f32 0.0, %v2933
  %v2935 = vpop.f32.mrf.mxu0
  %v2936 = vadd.f32 0.0, %v2935
  %v2937 = vpop.f32.mrf.mxu0
  %v2938 = vadd.f32 0.0, %v2937
  %v2939 = vpop.f32.mrf.mxu0
  %v2940 = vadd.f32 0.0, %v2939
  %2941 = vmatprep.mubr.bf16.mxu0 0
  %2942 = vmatmul.mubr.bf16.gmra.mxu0 %v774
  %v2943 = vpop.f32.mrf.mxu0
  %v2944 = vadd.f32 0.0, %v2943
  %v2945 = vpop.f32.mrf.mxu0
  %v2946 = vadd.f32 0.0, %v2945
  %v2947 = vpop.f32.mrf.mxu0
  %v2948 = vadd.f32 0.0, %v2947
  %v2949 = vpop.f32.mrf.mxu0
  %v2950 = vadd.f32 0.0, %v2949
  %2951 = vmatprep.mubr.bf16.mxu0 0
  %2952 = vmatmul.mubr.bf16.gmra.mxu0 %v777
  %v2953 = vpop.f32.mrf.mxu0
  %v2954 = vadd.f32 0.0, %v2953
  %v2955 = vpop.f32.mrf.mxu0
  %v2956 = vadd.f32 0.0, %v2955
  %v2957 = vpop.f32.mrf.mxu0
  %v2958 = vadd.f32 0.0, %v2957
  %v2959 = vpop.f32.mrf.mxu0
  %v2960 = vadd.f32 0.0, %v2959
  %2961 = vmatprep.mubr.bf16.mxu0 0
  %2962 = vmatmul.mubr.bf16.gmra.mxu0 %v780
  %v2963 = vpop.f32.mrf.mxu0
  %v2964 = vadd.f32 0.0, %v2963
  %v2965 = vpop.f32.mrf.mxu0
  %v2966 = vadd.f32 0.0, %v2965
  %v2967 = vpop.f32.mrf.mxu0
  %v2968 = vadd.f32 0.0, %v2967
  %v2969 = vpop.f32.mrf.mxu0
  %v2970 = vadd.f32 0.0, %v2969
  %2971 = vmatprep.mubr.bf16.mxu0 0
  %2972 = vmatmul.mubr.bf16.gmra.mxu0 %v783
  %v2973 = vpop.f32.mrf.mxu0
  %v2974 = vadd.f32 0.0, %v2973
  %v2975 = vpop.f32.mrf.mxu0
  %v2976 = vadd.f32 0.0, %v2975
  %v2977 = vpop.f32.mrf.mxu0
  %v2978 = vadd.f32 0.0, %v2977
  %v2979 = vpop.f32.mrf.mxu0
  %v2980 = vadd.f32 0.0, %v2979
  %2981 = vmatprep.mubr.bf16.mxu0 0
  %2982 = vmatmul.mubr.bf16.gmra.mxu0 %v786
  %v2983 = vpop.f32.mrf.mxu0
  %v2984 = vadd.f32 0.0, %v2983
  %v2985 = vpop.f32.mrf.mxu0
  %v2986 = vadd.f32 0.0, %v2985
  %v2987 = vpop.f32.mrf.mxu0
  %v2988 = vadd.f32 0.0, %v2987
  %v2989 = vpop.f32.mrf.mxu0
  %v2990 = vadd.f32 0.0, %v2989
  %2991 = vmatprep.mubr.bf16.mxu0 0
  %2992 = vmatmul.mubr.bf16.gmra.mxu0 %v789
  %v2993 = vpop.f32.mrf.mxu0
  %v2994 = vadd.f32 0.0, %v2993
  %v2995 = vpop.f32.mrf.mxu0
  %v2996 = vadd.f32 0.0, %v2995
  %v2997 = vpop.f32.mrf.mxu0
  %v2998 = vadd.f32 0.0, %v2997
  %v2999 = vpop.f32.mrf.mxu0
  %v3000 = vadd.f32 0.0, %v2999
  %3001 = vmatprep.mubr.bf16.mxu0 0
  %3002 = vmatmul.mubr.bf16.gmra.mxu0 %v792
  %v3003 = vpop.f32.mrf.mxu0
  %v3004 = vadd.f32 0.0, %v3003
  %v3005 = vpop.f32.mrf.mxu0
  %v3006 = vadd.f32 0.0, %v3005
  %v3007 = vpop.f32.mrf.mxu0
  %v3008 = vadd.f32 0.0, %v3007
  %v3009 = vpop.f32.mrf.mxu0
  %v3010 = vadd.f32 0.0, %v3009
  %3011 = vmatprep.mubr.bf16.mxu0 0
  %3012 = vmatmul.mubr.bf16.gmra.mxu0 %v795
  %v3013 = vpop.f32.mrf.mxu0
  %v3014 = vadd.f32 0.0, %v3013
  %v3015 = vpop.f32.mrf.mxu0
  %v3016 = vadd.f32 0.0, %v3015
  %v3017 = vpop.f32.mrf.mxu0
  %v3018 = vadd.f32 0.0, %v3017
  %v3019 = vpop.f32.mrf.mxu0
  %v3020 = vadd.f32 0.0, %v3019
  %3021 = vmatprep.mubr.bf16.mxu0 0
  %3022 = vmatmul.mubr.bf16.gmra.mxu0 %v798
  %v3023 = vpop.f32.mrf.mxu0
  %v3024 = vadd.f32 0.0, %v3023
  %v3025 = vpop.f32.mrf.mxu0
  %v3026 = vadd.f32 0.0, %v3025
  %v3027 = vpop.f32.mrf.mxu0
  %v3028 = vadd.f32 0.0, %v3027
  %v3029 = vpop.f32.mrf.mxu0
  %v3030 = vadd.f32 0.0, %v3029
  %3031 = vmatprep.mubr.bf16.mxu0 0
  %3032 = vmatmul.mubr.bf16.gmra.mxu0 %v801
  %v3033 = vpop.f32.mrf.mxu0
  %v3034 = vadd.f32 0.0, %v3033
  %v3035 = vpop.f32.mrf.mxu0
  %v3036 = vadd.f32 0.0, %v3035
  %v3037 = vpop.f32.mrf.mxu0
  %v3038 = vadd.f32 0.0, %v3037
  %v3039 = vpop.f32.mrf.mxu0
  %v3040 = vadd.f32 0.0, %v3039
  %3041 = vmatprep.mubr.bf16.mxu0 0
  %3042 = vmatmul.mubr.bf16.gmra.mxu0 %v804
  %v3043 = vpop.f32.mrf.mxu0
  %v3044 = vadd.f32 0.0, %v3043
  %v3045 = vpop.f32.mrf.mxu0
  %v3046 = vadd.f32 0.0, %v3045
  %v3047 = vpop.f32.mrf.mxu0
  %v3048 = vadd.f32 0.0, %v3047
  %v3049 = vpop.f32.mrf.mxu0
  %v3050 = vadd.f32 0.0, %v3049
  %3051 = vmatprep.mubr.bf16.mxu0 0
  %3052 = vmatmul.mubr.bf16.gmra.mxu0 %v807
  %v3053 = vpop.f32.mrf.mxu0
  %v3054 = vadd.f32 0.0, %v3053
  %v3055 = vpop.f32.mrf.mxu0
  %v3056 = vadd.f32 0.0, %v3055
  %v3057 = vpop.f32.mrf.mxu0
  %v3058 = vadd.f32 0.0, %v3057
  %v3059 = vpop.f32.mrf.mxu0
  %v3060 = vadd.f32 0.0, %v3059
  %3061 = vmatprep.mubr.bf16.mxu0 0
  %3062 = vmatmul.mubr.bf16.gmra.mxu0 %v810
  %v3063 = vpop.f32.mrf.mxu0
  %v3064 = vadd.f32 0.0, %v3063
  %v3065 = vpop.f32.mrf.mxu0
  %v3066 = vadd.f32 0.0, %v3065
  %v3067 = vpop.f32.mrf.mxu0
  %v3068 = vadd.f32 0.0, %v3067
  %v3069 = vpop.f32.mrf.mxu0
  %v3070 = vadd.f32 0.0, %v3069
  %3071 = vmatprep.mubr.bf16.mxu0 0
  %3072 = vmatmul.mubr.bf16.gmra.mxu0 %v813
  %v3073 = vpop.f32.mrf.mxu0
  %v3074 = vadd.f32 0.0, %v3073
  %v3075 = vpop.f32.mrf.mxu0
  %v3076 = vadd.f32 0.0, %v3075
  %v3077 = vpop.f32.mrf.mxu0
  %v3078 = vadd.f32 0.0, %v3077
  %v3079 = vpop.f32.mrf.mxu0
  %v3080 = vadd.f32 0.0, %v3079
  %3081 = vmatprep.mubr.bf16.mxu0 0
  %3082 = vmatmul.mubr.bf16.gmra.mxu0 %v816
  %v3083 = vpop.f32.mrf.mxu0
  %v3084 = vadd.f32 0.0, %v3083
  %v3085 = vpop.f32.mrf.mxu0
  %v3086 = vadd.f32 0.0, %v3085
  %v3087 = vpop.f32.mrf.mxu0
  %v3088 = vadd.f32 0.0, %v3087
  %v3089 = vpop.f32.mrf.mxu0
  %v3090 = vadd.f32 0.0, %v3089
  %3091 = vmatprep.mubr.bf16.mxu0 0
  %3092 = vmatmul.mubr.bf16.gmra.mxu0 %v819
  %v3093 = vpop.f32.mrf.mxu0
  %v3094 = vadd.f32 0.0, %v3093
  %v3095 = vpop.f32.mrf.mxu0
  %v3096 = vadd.f32 0.0, %v3095
  %v3097 = vpop.f32.mrf.mxu0
  %v3098 = vadd.f32 0.0, %v3097
  %v3099 = vpop.f32.mrf.mxu0
  %v3100 = vadd.f32 0.0, %v3099
  %3101 = vmatprep.mubr.bf16.mxu0 0
  %3102 = vmatmul.mubr.bf16.gmra.mxu0 %v822
  %v3103 = vpop.f32.mrf.mxu0
  %v3104 = vadd.f32 0.0, %v3103
  %v3105 = vpop.f32.mrf.mxu0
  %v3106 = vadd.f32 0.0, %v3105
  %v3107 = vpop.f32.mrf.mxu0
  %v3108 = vadd.f32 0.0, %v3107
  %v3109 = vpop.f32.mrf.mxu0
  %v3110 = vadd.f32 0.0, %v3109
  %3111 = vmatprep.mubr.bf16.mxu0 0
  %3112 = vmatmul.mubr.bf16.gmra.mxu0 %v825
  %v3113 = vpop.f32.mrf.mxu0
  %v3114 = vadd.f32 0.0, %v3113
  %v3115 = vpop.f32.mrf.mxu0
  %v3116 = vadd.f32 0.0, %v3115
  %v3117 = vpop.f32.mrf.mxu0
  %v3118 = vadd.f32 0.0, %v3117
  %v3119 = vpop.f32.mrf.mxu0
  %v3120 = vadd.f32 0.0, %v3119
  %3121 = vmatprep.mubr.bf16.mxu0 0
  %3122 = vmatmul.mubr.bf16.gmra.mxu0 %v828
  %v3123 = vpop.f32.mrf.mxu0
  %v3124 = vadd.f32 0.0, %v3123
  %v3125 = vpop.f32.mrf.mxu0
  %v3126 = vadd.f32 0.0, %v3125
  %v3127 = vpop.f32.mrf.mxu0
  %v3128 = vadd.f32 0.0, %v3127
  %v3129 = vpop.f32.mrf.mxu0
  %v3130 = vadd.f32 0.0, %v3129
  %3131 = vmatprep.mubr.bf16.mxu0 0
  %3132 = vmatmul.mubr.bf16.gmra.mxu0 %v831
  %v3133 = vpop.f32.mrf.mxu0
  %v3134 = vadd.f32 0.0, %v3133
  %v3135 = vpop.f32.mrf.mxu0
  %v3136 = vadd.f32 0.0, %v3135
  %v3137 = vpop.f32.mrf.mxu0
  %v3138 = vadd.f32 0.0, %v3137
  %v3139 = vpop.f32.mrf.mxu0
  %v3140 = vadd.f32 0.0, %v3139
  %3141 = vmatprep.mubr.bf16.mxu0 0
  %3142 = vmatmul.mubr.bf16.gmra.mxu0 %v834
  %v3143 = vpop.f32.mrf.mxu0
  %v3144 = vadd.f32 0.0, %v3143
  %v3145 = vpop.f32.mrf.mxu0
  %v3146 = vadd.f32 0.0, %v3145
  %v3147 = vpop.f32.mrf.mxu0
  %v3148 = vadd.f32 0.0, %v3147
  %v3149 = vpop.f32.mrf.mxu0
  %v3150 = vadd.f32 0.0, %v3149
  %3151 = vmatprep.mubr.bf16.mxu0 0
  %3152 = vmatmul.mubr.bf16.gmra.mxu0 %v837
  %v3153 = vpop.f32.mrf.mxu0
  %v3154 = vadd.f32 0.0, %v3153
  %v3155 = vpop.f32.mrf.mxu0
  %v3156 = vadd.f32 0.0, %v3155
  %v3157 = vpop.f32.mrf.mxu0
  %v3158 = vadd.f32 0.0, %v3157
  %v3159 = vpop.f32.mrf.mxu0
  %v3160 = vadd.f32 0.0, %v3159
  %3161 = vmatprep.mubr.bf16.mxu0 0
  %3162 = vmatmul.mubr.bf16.gmra.mxu0 %v840
  %v3163 = vpop.f32.mrf.mxu0
  %v3164 = vadd.f32 0.0, %v3163
  %v3165 = vpop.f32.mrf.mxu0
  %v3166 = vadd.f32 0.0, %v3165
  %v3167 = vpop.f32.mrf.mxu0
  %v3168 = vadd.f32 0.0, %v3167
  %v3169 = vpop.f32.mrf.mxu0
  %v3170 = vadd.f32 0.0, %v3169
  %3171 = vmatprep.mubr.bf16.mxu0 0
  %3172 = vmatmul.mubr.bf16.gmra.mxu0 %v843
  %v3173 = vpop.f32.mrf.mxu0
  %v3174 = vadd.f32 0.0, %v3173
  %v3175 = vpop.f32.mrf.mxu0
  %v3176 = vadd.f32 0.0, %v3175
  %v3177 = vpop.f32.mrf.mxu0
  %v3178 = vadd.f32 0.0, %v3177
  %v3179 = vpop.f32.mrf.mxu0
  %v3180 = vadd.f32 0.0, %v3179
  %3181 = vmatprep.mubr.bf16.mxu0 0
  %3182 = vmatmul.mubr.bf16.gmra.mxu0 %v846
  %v3183 = vpop.f32.mrf.mxu0
  %v3184 = vadd.f32 0.0, %v3183
  %v3185 = vpop.f32.mrf.mxu0
  %v3186 = vadd.f32 0.0, %v3185
  %v3187 = vpop.f32.mrf.mxu0
  %v3188 = vadd.f32 0.0, %v3187
  %v3189 = vpop.f32.mrf.mxu0
  %v3190 = vadd.f32 0.0, %v3189
  %3191 = vmatprep.mubr.bf16.mxu0 0
  %3192 = vmatmul.mubr.bf16.gmra.mxu0 %v849
  %v3193 = vpop.f32.mrf.mxu0
  %v3194 = vpop.f32.mrf.mxu0
  %v3195 = vpop.f32.mrf.mxu0
  %v3196 = vpop.f32.mrf.mxu0
  %3197 = vmatprep.mubr.bf16.mxu0 0
  %3198 = vmatmul.mubr.bf16.gmra.mxu0 %v852
  %v3199 = vpop.f32.mrf.mxu0
  %v3200 = vpop.f32.mrf.mxu0
  %v3201 = vpop.f32.mrf.mxu0
  %v3202 = vpop.f32.mrf.mxu0
  %3203 = vmatprep.mubr.bf16.mxu0 0
  %3204 = vmatmul.mubr.bf16.gmra.mxu0 %v855
  %v3205 = vpop.f32.mrf.mxu0
  %v3206 = vpop.f32.mrf.mxu0
  %v3207 = vpop.f32.mrf.mxu0
  %v3208 = vpop.f32.mrf.mxu0
  %3209 = vmatprep.mubr.bf16.mxu0 0
  %3210 = vmatmul.mubr.bf16.gmra.mxu0 %v858
  %v3211 = vpop.f32.mrf.mxu0
  %v3212 = vpop.f32.mrf.mxu0
  %v3213 = vpop.f32.mrf.mxu0
  %v3214 = vpop.f32.mrf.mxu0
  %3215 = vmatprep.mubr.bf16.mxu0 0
  %3216 = vmatmul.mubr.bf16.gmra.mxu0 %v861
  %v3217 = vpop.f32.mrf.mxu0
  %v3218 = vadd.f32 0.0, %v3217
  %v3219 = vpop.f32.mrf.mxu0
  %v3220 = vadd.f32 0.0, %v3219
  %v3221 = vpop.f32.mrf.mxu0
  %v3222 = vadd.f32 0.0, %v3221
  %v3223 = vpop.f32.mrf.mxu0
  %v3224 = vadd.f32 0.0, %v3223
  %3225 = vmatprep.mubr.bf16.mxu0 0
  %3226 = vmatmul.mubr.bf16.gmra.mxu0 %v864
  %v3227 = vpop.f32.mrf.mxu0
  %v3228 = vadd.f32 0.0, %v3227
  %v3229 = vpop.f32.mrf.mxu0
  %v3230 = vadd.f32 0.0, %v3229
  %v3231 = vpop.f32.mrf.mxu0
  %v3232 = vadd.f32 0.0, %v3231
  %v3233 = vpop.f32.mrf.mxu0
  %v3234 = vadd.f32 0.0, %v3233
  %3235 = vmatprep.mubr.bf16.mxu0 0
  %3236 = vmatmul.mubr.bf16.gmra.mxu0 %v867
  %v3237 = vpop.f32.mrf.mxu0
  %v3238 = vadd.f32 0.0, %v3237
  %v3239 = vpop.f32.mrf.mxu0
  %v3240 = vadd.f32 0.0, %v3239
  %v3241 = vpop.f32.mrf.mxu0
  %v3242 = vadd.f32 0.0, %v3241
  %v3243 = vpop.f32.mrf.mxu0
  %v3244 = vadd.f32 0.0, %v3243
  %3245 = vmatprep.mubr.bf16.mxu0 0
  %3246 = vmatmul.mubr.bf16.gmra.mxu0 %v870
  %v3247 = vpop.f32.mrf.mxu0
  %v3248 = vadd.f32 0.0, %v3247
  %v3249 = vpop.f32.mrf.mxu0
  %v3250 = vadd.f32 0.0, %v3249
  %v3251 = vpop.f32.mrf.mxu0
  %v3252 = vadd.f32 0.0, %v3251
  %v3253 = vpop.f32.mrf.mxu0
  %v3254 = vadd.f32 0.0, %v3253
  %3255 = vmatprep.mubr.bf16.mxu0 0
  %3256 = vmatmul.mubr.bf16.gmra.mxu0 %v873
  %v3257 = vpop.f32.mrf.mxu0
  %v3258 = vadd.f32 0.0, %v3257
  %v3259 = vpop.f32.mrf.mxu0
  %v3260 = vadd.f32 0.0, %v3259
  %v3261 = vpop.f32.mrf.mxu0
  %v3262 = vadd.f32 0.0, %v3261
  %v3263 = vpop.f32.mrf.mxu0
  %v3264 = vadd.f32 0.0, %v3263
  %3265 = vmatprep.mubr.bf16.mxu0 0
  %3266 = vmatmul.mubr.bf16.gmra.mxu0 %v876
  %v3267 = vpop.f32.mrf.mxu0
  %v3268 = vadd.f32 0.0, %v3267
  %v3269 = vpop.f32.mrf.mxu0
  %v3270 = vadd.f32 0.0, %v3269
  %v3271 = vpop.f32.mrf.mxu0
  %v3272 = vadd.f32 0.0, %v3271
  %v3273 = vpop.f32.mrf.mxu0
  %v3274 = vadd.f32 0.0, %v3273
  %3275 = vmatprep.mubr.bf16.mxu0 0
  %3276 = vmatmul.mubr.bf16.gmra.mxu0 %v879
  %v3277 = vpop.f32.mrf.mxu0
  %v3278 = vadd.f32 0.0, %v3277
  %v3279 = vpop.f32.mrf.mxu0
  %v3280 = vadd.f32 0.0, %v3279
  %v3281 = vpop.f32.mrf.mxu0
  %v3282 = vadd.f32 0.0, %v3281
  %v3283 = vpop.f32.mrf.mxu0
  %v3284 = vadd.f32 0.0, %v3283
  %3285 = vmatprep.mubr.bf16.mxu0 0
  %3286 = vmatmul.mubr.bf16.gmra.mxu0 %v882
  %v3287 = vpop.f32.mrf.mxu0
  %v3288 = vadd.f32 0.0, %v3287
  %v3289 = vpop.f32.mrf.mxu0
  %v3290 = vadd.f32 0.0, %v3289
  %v3291 = vpop.f32.mrf.mxu0
  %v3292 = vadd.f32 0.0, %v3291
  %v3293 = vpop.f32.mrf.mxu0
  %v3294 = vadd.f32 0.0, %v3293
  %3295 = vmatprep.mubr.bf16.mxu0 0
  %3296 = vmatmul.mubr.bf16.gmra.mxu0 %v885
  %v3297 = vpop.f32.mrf.mxu0
  %v3298 = vadd.f32 0.0, %v3297
  %v3299 = vpop.f32.mrf.mxu0
  %v3300 = vadd.f32 0.0, %v3299
  %v3301 = vpop.f32.mrf.mxu0
  %v3302 = vadd.f32 0.0, %v3301
  %v3303 = vpop.f32.mrf.mxu0
  %v3304 = vadd.f32 0.0, %v3303
  %3305 = vmatprep.mubr.bf16.mxu0 0
  %3306 = vmatmul.mubr.bf16.gmra.mxu0 %v888
  %v3307 = vpop.f32.mrf.mxu0
  %v3308 = vadd.f32 0.0, %v3307
  %v3309 = vpop.f32.mrf.mxu0
  %v3310 = vadd.f32 0.0, %v3309
  %v3311 = vpop.f32.mrf.mxu0
  %v3312 = vadd.f32 0.0, %v3311
  %v3313 = vpop.f32.mrf.mxu0
  %v3314 = vadd.f32 0.0, %v3313
  %3315 = vmatprep.mubr.bf16.mxu0 0
  %3316 = vmatmul.mubr.bf16.gmra.mxu0 %v891
  %v3317 = vpop.f32.mrf.mxu0
  %v3318 = vadd.f32 0.0, %v3317
  %v3319 = vpop.f32.mrf.mxu0
  %v3320 = vadd.f32 0.0, %v3319
  %v3321 = vpop.f32.mrf.mxu0
  %v3322 = vadd.f32 0.0, %v3321
  %v3323 = vpop.f32.mrf.mxu0
  %v3324 = vadd.f32 0.0, %v3323
  %3325 = vmatprep.mubr.bf16.mxu0 0
  %3326 = vmatmul.mubr.bf16.gmra.mxu0 %v894
  %v3327 = vpop.f32.mrf.mxu0
  %v3328 = vadd.f32 0.0, %v3327
  %v3329 = vpop.f32.mrf.mxu0
  %v3330 = vadd.f32 0.0, %v3329
  %v3331 = vpop.f32.mrf.mxu0
  %v3332 = vadd.f32 0.0, %v3331
  %v3333 = vpop.f32.mrf.mxu0
  %v3334 = vadd.f32 0.0, %v3333
  %3335 = vmatprep.mubr.bf16.mxu0 0
  %3336 = vmatmul.mubr.bf16.gmra.mxu0 %v897
  %v3337 = vpop.f32.mrf.mxu0
  %v3338 = vadd.f32 0.0, %v3337
  %v3339 = vpop.f32.mrf.mxu0
  %v3340 = vadd.f32 0.0, %v3339
  %v3341 = vpop.f32.mrf.mxu0
  %v3342 = vadd.f32 0.0, %v3341
  %v3343 = vpop.f32.mrf.mxu0
  %v3344 = vadd.f32 0.0, %v3343
  %3345 = vmatprep.mubr.bf16.mxu0 0
  %3346 = vmatmul.mubr.bf16.gmra.mxu0 %v900
  %v3347 = vpop.f32.mrf.mxu0
  %v3348 = vadd.f32 0.0, %v3347
  %v3349 = vpop.f32.mrf.mxu0
  %v3350 = vadd.f32 0.0, %v3349
  %v3351 = vpop.f32.mrf.mxu0
  %v3352 = vadd.f32 0.0, %v3351
  %v3353 = vpop.f32.mrf.mxu0
  %v3354 = vadd.f32 0.0, %v3353
  %3355 = vmatprep.mubr.bf16.mxu0 0
  %3356 = vmatmul.mubr.bf16.gmra.mxu0 %v903
  %v3357 = vpop.f32.mrf.mxu0
  %v3358 = vadd.f32 0.0, %v3357
  %v3359 = vpop.f32.mrf.mxu0
  %v3360 = vadd.f32 0.0, %v3359
  %v3361 = vpop.f32.mrf.mxu0
  %v3362 = vadd.f32 0.0, %v3361
  %v3363 = vpop.f32.mrf.mxu0
  %v3364 = vadd.f32 0.0, %v3363
  %3365 = vmatprep.mubr.bf16.mxu0 0
  %3366 = vmatmul.mubr.bf16.gmra.mxu0 %v906
  %v3367 = vpop.f32.mrf.mxu0
  %v3368 = vadd.f32 0.0, %v3367
  %v3369 = vpop.f32.mrf.mxu0
  %v3370 = vadd.f32 0.0, %v3369
  %v3371 = vpop.f32.mrf.mxu0
  %v3372 = vadd.f32 0.0, %v3371
  %v3373 = vpop.f32.mrf.mxu0
  %v3374 = vadd.f32 0.0, %v3373
  %3375 = vmatprep.mubr.bf16.mxu0 0
  %3376 = vmatmul.mubr.bf16.gmra.mxu0 %v909
  %v3377 = vpop.f32.mrf.mxu0
  %v3378 = vadd.f32 0.0, %v3377
  %v3379 = vpop.f32.mrf.mxu0
  %v3380 = vadd.f32 0.0, %v3379
  %v3381 = vpop.f32.mrf.mxu0
  %v3382 = vadd.f32 0.0, %v3381
  %v3383 = vpop.f32.mrf.mxu0
  %v3384 = vadd.f32 0.0, %v3383
  %3385 = vmatprep.mubr.bf16.mxu0 0
  %3386 = vmatmul.mubr.bf16.gmra.mxu0 %v912
  %v3387 = vpop.f32.mrf.mxu0
  %v3388 = vadd.f32 0.0, %v3387
  %v3389 = vpop.f32.mrf.mxu0
  %v3390 = vadd.f32 0.0, %v3389
  %v3391 = vpop.f32.mrf.mxu0
  %v3392 = vadd.f32 0.0, %v3391
  %v3393 = vpop.f32.mrf.mxu0
  %v3394 = vadd.f32 0.0, %v3393
  %3395 = vmatprep.mubr.bf16.mxu0 0
  %3396 = vmatmul.mubr.bf16.gmra.mxu0 %v915
  %v3397 = vpop.f32.mrf.mxu0
  %v3398 = vadd.f32 0.0, %v3397
  %v3399 = vpop.f32.mrf.mxu0
  %v3400 = vadd.f32 0.0, %v3399
  %v3401 = vpop.f32.mrf.mxu0
  %v3402 = vadd.f32 0.0, %v3401
  %v3403 = vpop.f32.mrf.mxu0
  %v3404 = vadd.f32 0.0, %v3403
  %3405 = vmatprep.mubr.bf16.mxu0 0
  %3406 = vmatmul.mubr.bf16.gmra.mxu0 %v918
  %v3407 = vpop.f32.mrf.mxu0
  %v3408 = vadd.f32 0.0, %v3407
  %v3409 = vpop.f32.mrf.mxu0
  %v3410 = vadd.f32 0.0, %v3409
  %v3411 = vpop.f32.mrf.mxu0
  %v3412 = vadd.f32 0.0, %v3411
  %v3413 = vpop.f32.mrf.mxu0
  %v3414 = vadd.f32 0.0, %v3413
  %3415 = vmatprep.mubr.bf16.mxu0 0
  %3416 = vmatmul.mubr.bf16.gmra.mxu0 %v921
  %v3417 = vpop.f32.mrf.mxu0
  %v3418 = vadd.f32 0.0, %v3417
  %v3419 = vpop.f32.mrf.mxu0
  %v3420 = vadd.f32 0.0, %v3419
  %v3421 = vpop.f32.mrf.mxu0
  %v3422 = vadd.f32 0.0, %v3421
  %v3423 = vpop.f32.mrf.mxu0
  %v3424 = vadd.f32 0.0, %v3423
  %3425 = vmatprep.mubr.bf16.mxu0 0
  %3426 = vmatmul.mubr.bf16.gmra.mxu0 %v924
  %v3427 = vpop.f32.mrf.mxu0
  %v3428 = vadd.f32 0.0, %v3427
  %v3429 = vpop.f32.mrf.mxu0
  %v3430 = vadd.f32 0.0, %v3429
  %v3431 = vpop.f32.mrf.mxu0
  %v3432 = vadd.f32 0.0, %v3431
  %v3433 = vpop.f32.mrf.mxu0
  %v3434 = vadd.f32 0.0, %v3433
  %3435 = vmatprep.mubr.bf16.mxu0 0
  %3436 = vmatmul.mubr.bf16.gmra.mxu0 %v927
  %v3437 = vpop.f32.mrf.mxu0
  %v3438 = vadd.f32 0.0, %v3437
  %v3439 = vpop.f32.mrf.mxu0
  %v3440 = vadd.f32 0.0, %v3439
  %v3441 = vpop.f32.mrf.mxu0
  %v3442 = vadd.f32 0.0, %v3441
  %v3443 = vpop.f32.mrf.mxu0
  %v3444 = vadd.f32 0.0, %v3443
  %3445 = vmatprep.mubr.bf16.mxu0 0
  %3446 = vmatmul.mubr.bf16.gmra.mxu0 %v930
  %v3447 = vpop.f32.mrf.mxu0
  %v3448 = vadd.f32 0.0, %v3447
  %v3449 = vpop.f32.mrf.mxu0
  %v3450 = vadd.f32 0.0, %v3449
  %v3451 = vpop.f32.mrf.mxu0
  %v3452 = vadd.f32 0.0, %v3451
  %v3453 = vpop.f32.mrf.mxu0
  %v3454 = vadd.f32 0.0, %v3453
  %3455 = vmatprep.mubr.bf16.mxu0 0
  %3456 = vmatmul.mubr.bf16.gmra.mxu0 %v933
  %v3457 = vpop.f32.mrf.mxu0
  %v3458 = vadd.f32 0.0, %v3457
  %v3459 = vpop.f32.mrf.mxu0
  %v3460 = vadd.f32 0.0, %v3459
  %v3461 = vpop.f32.mrf.mxu0
  %v3462 = vadd.f32 0.0, %v3461
  %v3463 = vpop.f32.mrf.mxu0
  %v3464 = vadd.f32 0.0, %v3463
  %3465 = vmatprep.mubr.bf16.mxu0 0
  %3466 = vmatmul.mubr.bf16.gmra.mxu0 %v936
  %v3467 = vpop.f32.mrf.mxu0
  %v3468 = vadd.f32 0.0, %v3467
  %v3469 = vpop.f32.mrf.mxu0
  %v3470 = vadd.f32 0.0, %v3469
  %v3471 = vpop.f32.mrf.mxu0
  %v3472 = vadd.f32 0.0, %v3471
  %v3473 = vpop.f32.mrf.mxu0
  %v3474 = vadd.f32 0.0, %v3473
  %3475 = vmatprep.mubr.bf16.mxu0 0
  %3476 = vmatmul.mubr.bf16.gmra.mxu0 %v939
  %v3477 = vpop.f32.mrf.mxu0
  %v3478 = vadd.f32 0.0, %v3477
  %v3479 = vpop.f32.mrf.mxu0
  %v3480 = vadd.f32 0.0, %v3479
  %v3481 = vpop.f32.mrf.mxu0
  %v3482 = vadd.f32 0.0, %v3481
  %v3483 = vpop.f32.mrf.mxu0
  %v3484 = vadd.f32 0.0, %v3483
  %3485 = vmatprep.mubr.bf16.mxu0 0
  %3486 = vmatmul.mubr.bf16.gmra.mxu0 %v942
  %v3487 = vpop.f32.mrf.mxu0
  %v3488 = vadd.f32 0.0, %v3487
  %v3489 = vpop.f32.mrf.mxu0
  %v3490 = vadd.f32 0.0, %v3489
  %v3491 = vpop.f32.mrf.mxu0
  %v3492 = vadd.f32 0.0, %v3491
  %v3493 = vpop.f32.mrf.mxu0
  %v3494 = vadd.f32 0.0, %v3493
  %3495 = vmatprep.mubr.bf16.mxu0 0
  %3496 = vmatmul.mubr.bf16.gmra.mxu0 %v945
  %v3497 = vpop.f32.mrf.mxu0
  %v3498 = vpop.f32.mrf.mxu0
  %v3499 = vpop.f32.mrf.mxu0
  %v3500 = vpop.f32.mrf.mxu0
  %3501 = vmatprep.mubr.bf16.mxu0 0
  %3502 = vmatmul.mubr.bf16.gmra.mxu0 %v948
  %v3503 = vpop.f32.mrf.mxu0
  %v3504 = vpop.f32.mrf.mxu0
  %v3505 = vpop.f32.mrf.mxu0
  %v3506 = vpop.f32.mrf.mxu0
  %3507 = vmatprep.mubr.bf16.mxu0 0
  %3508 = vmatmul.mubr.bf16.gmra.mxu0 %v951
  %v3509 = vpop.f32.mrf.mxu0
  %v3510 = vpop.f32.mrf.mxu0
  %v3511 = vpop.f32.mrf.mxu0
  %v3512 = vpop.f32.mrf.mxu0
  %3513 = vmatprep.mubr.bf16.mxu0 0
  %3514 = vmatmul.mubr.bf16.gmra.mxu0 %v954
  %v3515 = vpop.f32.mrf.mxu0
  %v3516 = vpop.f32.mrf.mxu0
  %v3517 = vpop.f32.mrf.mxu0
  %v3518 = vpop.f32.mrf.mxu0
  %3519 = vdwg.mxu0
  %v3520 = vmax.f32 %v991, %v1295
  %v3521 = vmax.f32 %v993, %v1297
  %v3522 = vmax.f32 %v1632, %v1936
  %v3523 = vmax.f32 %v1634, %v1938
  %v3524 = vmax.f32 %v2273, %v2577
  %v3525 = vmax.f32 %v2275, %v2579
  %v3526 = vmax.f32 %v2914, %v3218
  %v3527 = vmax.f32 %v2916, %v3220
  %v3528 = vmax.f32 %v995, %v1299
  %v3529 = vmax.f32 %v997, %v1301
  %v3530 = vmax.f32 %v1636, %v1940
  %v3531 = vmax.f32 %v1638, %v1942
  %v3532 = vmax.f32 %v2277, %v2581
  %v3533 = vmax.f32 %v2279, %v2583
  %v3534 = vmax.f32 %v2918, %v3222
  %v3535 = vmax.f32 %v2920, %v3224
  %v3536 = vmax.f32 %v1001, %v1305
  %v3537 = vmax.f32 %v1003, %v1307
  %v3538 = vmax.f32 %v1642, %v1946
  %v3539 = vmax.f32 %v1644, %v1948
  %v3540 = vmax.f32 %v2283, %v2587
  %v3541 = vmax.f32 %v2285, %v2589
  %v3542 = vmax.f32 %v2924, %v3228
  %v3543 = vmax.f32 %v2926, %v3230
  %v3544 = vmax.f32 %v1005, %v1309
  %v3545 = vmax.f32 %v1007, %v1311
  %v3546 = vmax.f32 %v1646, %v1950
  %v3547 = vmax.f32 %v1648, %v1952
  %v3548 = vmax.f32 %v2287, %v2591
  %v3549 = vmax.f32 %v2289, %v2593
  %v3550 = vmax.f32 %v2928, %v3232
  %v3551 = vmax.f32 %v2930, %v3234
  %v3552 = vmax.f32 %v1011, %v1315
  %v3553 = vmax.f32 %v1013, %v1317
  %v3554 = vmax.f32 %v1652, %v1956
  %v3555 = vmax.f32 %v1654, %v1958
  %v3556 = vmax.f32 %v2293, %v2597
  %v3557 = vmax.f32 %v2295, %v2599
  %v3558 = vmax.f32 %v2934, %v3238
  %v3559 = vmax.f32 %v2936, %v3240
  %v3560 = vmax.f32 %v1015, %v1319
  %v3561 = vmax.f32 %v1017, %v1321
  %v3562 = vmax.f32 %v1656, %v1960
  %v3563 = vmax.f32 %v1658, %v1962
  %v3564 = vmax.f32 %v2297, %v2601
  %v3565 = vmax.f32 %v2299, %v2603
  %v3566 = vmax.f32 %v2938, %v3242
  %v3567 = vmax.f32 %v2940, %v3244
  %v3568 = vmax.f32 %v1021, %v1325
  %v3569 = vmax.f32 %v1023, %v1327
  %v3570 = vmax.f32 %v1662, %v1966
  %v3571 = vmax.f32 %v1664, %v1968
  %v3572 = vmax.f32 %v2303, %v2607
  %v3573 = vmax.f32 %v2305, %v2609
  %v3574 = vmax.f32 %v2944, %v3248
  %v3575 = vmax.f32 %v2946, %v3250
  %v3576 = vmax.f32 %v1025, %v1329
  %v3577 = vmax.f32 %v1027, %v1331
  %v3578 = vmax.f32 %v1666, %v1970
  %v3579 = vmax.f32 %v1668, %v1972
  %v3580 = vmax.f32 %v2307, %v2611
  %v3581 = vmax.f32 %v2309, %v2613
  %v3582 = vmax.f32 %v2948, %v3252
  %v3583 = vmax.f32 %v2950, %v3254
  %v3584 = vmax.f32 %v1031, %v1335
  %v3585 = vmax.f32 %v1033, %v1337
  %v3586 = vmax.f32 %v1672, %v1976
  %v3587 = vmax.f32 %v1674, %v1978
  %v3588 = vmax.f32 %v2313, %v2617
  %v3589 = vmax.f32 %v2315, %v2619
  %v3590 = vmax.f32 %v2954, %v3258
  %v3591 = vmax.f32 %v2956, %v3260
  %v3592 = vmax.f32 %v1035, %v1339
  %v3593 = vmax.f32 %v1037, %v1341
  %v3594 = vmax.f32 %v1676, %v1980
  %v3595 = vmax.f32 %v1678, %v1982
  %v3596 = vmax.f32 %v2317, %v2621
  %v3597 = vmax.f32 %v2319, %v2623
  %v3598 = vmax.f32 %v2958, %v3262
  %v3599 = vmax.f32 %v2960, %v3264
  %v3600 = vmax.f32 %v1041, %v1345
  %v3601 = vmax.f32 %v1043, %v1347
  %v3602 = vmax.f32 %v1682, %v1986
  %v3603 = vmax.f32 %v1684, %v1988
  %v3604 = vmax.f32 %v2323, %v2627
  %v3605 = vmax.f32 %v2325, %v2629
  %v3606 = vmax.f32 %v2964, %v3268
  %v3607 = vmax.f32 %v2966, %v3270
  %v3608 = vmax.f32 %v1045, %v1349
  %v3609 = vmax.f32 %v1047, %v1351
  %v3610 = vmax.f32 %v1686, %v1990
  %v3611 = vmax.f32 %v1688, %v1992
  %v3612 = vmax.f32 %v2327, %v2631
  %v3613 = vmax.f32 %v2329, %v2633
  %v3614 = vmax.f32 %v2968, %v3272
  %v3615 = vmax.f32 %v2970, %v3274
  %v3616 = vmax.f32 %v1051, %v1355
  %v3617 = vmax.f32 %v1053, %v1357
  %v3618 = vmax.f32 %v1692, %v1996
  %v3619 = vmax.f32 %v1694, %v1998
  %v3620 = vmax.f32 %v2333, %v2637
  %v3621 = vmax.f32 %v2335, %v2639
  %v3622 = vmax.f32 %v2974, %v3278
  %v3623 = vmax.f32 %v2976, %v3280
  %v3624 = vmax.f32 %v1055, %v1359
  %v3625 = vmax.f32 %v1057, %v1361
  %v3626 = vmax.f32 %v1696, %v2000
  %v3627 = vmax.f32 %v1698, %v2002
  %v3628 = vmax.f32 %v2337, %v2641
  %v3629 = vmax.f32 %v2339, %v2643
  %v3630 = vmax.f32 %v2978, %v3282
  %v3631 = vmax.f32 %v2980, %v3284
  %v3632 = vmax.f32 %v1061, %v1365
  %v3633 = vmax.f32 %v1063, %v1367
  %v3634 = vmax.f32 %v1702, %v2006
  %v3635 = vmax.f32 %v1704, %v2008
  %v3636 = vmax.f32 %v2343, %v2647
  %v3637 = vmax.f32 %v2345, %v2649
  %v3638 = vmax.f32 %v2984, %v3288
  %v3639 = vmax.f32 %v2986, %v3290
  %v3640 = vmax.f32 %v1065, %v1369
  %v3641 = vmax.f32 %v1067, %v1371
  %v3642 = vmax.f32 %v1706, %v2010
  %v3643 = vmax.f32 %v1708, %v2012
  %v3644 = vmax.f32 %v2347, %v2651
  %v3645 = vmax.f32 %v2349, %v2653
  %v3646 = vmax.f32 %v2988, %v3292
  %v3647 = vmax.f32 %v2990, %v3294
  %v3648 = vmax.f32 %v1071, %v1375
  %v3649 = vmax.f32 %v1073, %v1377
  %v3650 = vmax.f32 %v1712, %v2016
  %v3651 = vmax.f32 %v1714, %v2018
  %v3652 = vmax.f32 %v2353, %v2657
  %v3653 = vmax.f32 %v2355, %v2659
  %v3654 = vmax.f32 %v2994, %v3298
  %v3655 = vmax.f32 %v2996, %v3300
  %v3656 = vmax.f32 %v1075, %v1379
  %v3657 = vmax.f32 %v1077, %v1381
  %v3658 = vmax.f32 %v1716, %v2020
  %v3659 = vmax.f32 %v1718, %v2022
  %v3660 = vmax.f32 %v2357, %v2661
  %v3661 = vmax.f32 %v2359, %v2663
  %v3662 = vmax.f32 %v2998, %v3302
  %v3663 = vmax.f32 %v3000, %v3304
  %v3664 = vmax.f32 %v1081, %v1385
  %v3665 = vmax.f32 %v1083, %v1387
  %v3666 = vmax.f32 %v1722, %v2026
  %v3667 = vmax.f32 %v1724, %v2028
  %v3668 = vmax.f32 %v2363, %v2667
  %v3669 = vmax.f32 %v2365, %v2669
  %v3670 = vmax.f32 %v3004, %v3308
  %v3671 = vmax.f32 %v3006, %v3310
  %v3672 = vmax.f32 %v1085, %v1389
  %v3673 = vmax.f32 %v1087, %v1391
  %v3674 = vmax.f32 %v1726, %v2030
  %v3675 = vmax.f32 %v1728, %v2032
  %v3676 = vmax.f32 %v2367, %v2671
  %v3677 = vmax.f32 %v2369, %v2673
  %v3678 = vmax.f32 %v3008, %v3312
  %v3679 = vmax.f32 %v3010, %v3314
  %v3680 = vmax.f32 %v1091, %v1395
  %v3681 = vmax.f32 %v1093, %v1397
  %v3682 = vmax.f32 %v1732, %v2036
  %v3683 = vmax.f32 %v1734, %v2038
  %v3684 = vmax.f32 %v2373, %v2677
  %v3685 = vmax.f32 %v2375, %v2679
  %v3686 = vmax.f32 %v3014, %v3318
  %v3687 = vmax.f32 %v3016, %v3320
  %v3688 = vmax.f32 %v1095, %v1399
  %v3689 = vmax.f32 %v1097, %v1401
  %v3690 = vmax.f32 %v1736, %v2040
  %v3691 = vmax.f32 %v1738, %v2042
  %v3692 = vmax.f32 %v2377, %v2681
  %v3693 = vmax.f32 %v2379, %v2683
  %v3694 = vmax.f32 %v3018, %v3322
  %v3695 = vmax.f32 %v3020, %v3324
  %v3696 = vmax.f32 %v1101, %v1405
  %v3697 = vmax.f32 %v1103, %v1407
  %v3698 = vmax.f32 %v1742, %v2046
  %v3699 = vmax.f32 %v1744, %v2048
  %v3700 = vmax.f32 %v2383, %v2687
  %v3701 = vmax.f32 %v2385, %v2689
  %v3702 = vmax.f32 %v3024, %v3328
  %v3703 = vmax.f32 %v3026, %v3330
  %v3704 = vmax.f32 %v1105, %v1409
  %v3705 = vmax.f32 %v1107, %v1411
  %v3706 = vmax.f32 %v1746, %v2050
  %v3707 = vmax.f32 %v1748, %v2052
  %v3708 = vmax.f32 %v2387, %v2691
  %v3709 = vmax.f32 %v2389, %v2693
  %v3710 = vmax.f32 %v3028, %v3332
  %v3711 = vmax.f32 %v3030, %v3334
  %v3712 = vmax.f32 %v1111, %v1415
  %v3713 = vmax.f32 %v1113, %v1417
  %v3714 = vmax.f32 %v1752, %v2056
  %v3715 = vmax.f32 %v1754, %v2058
  %v3716 = vmax.f32 %v2393, %v2697
  %v3717 = vmax.f32 %v2395, %v2699
  %v3718 = vmax.f32 %v3034, %v3338
  %v3719 = vmax.f32 %v3036, %v3340
  %v3720 = vmax.f32 %v1115, %v1419
  %v3721 = vmax.f32 %v1117, %v1421
  %v3722 = vmax.f32 %v1756, %v2060
  %v3723 = vmax.f32 %v1758, %v2062
  %v3724 = vmax.f32 %v2397, %v2701
  %v3725 = vmax.f32 %v2399, %v2703
  %v3726 = vmax.f32 %v3038, %v3342
  %v3727 = vmax.f32 %v3040, %v3344
  %v3728 = vmax.f32 %v1121, %v1425
  %v3729 = vmax.f32 %v1123, %v1427
  %v3730 = vmax.f32 %v1762, %v2066
  %v3731 = vmax.f32 %v1764, %v2068
  %v3732 = vmax.f32 %v2403, %v2707
  %v3733 = vmax.f32 %v2405, %v2709
  %v3734 = vmax.f32 %v3044, %v3348
  %v3735 = vmax.f32 %v3046, %v3350
  %v3736 = vmax.f32 %v1125, %v1429
  %v3737 = vmax.f32 %v1127, %v1431
  %v3738 = vmax.f32 %v1766, %v2070
  %v3739 = vmax.f32 %v1768, %v2072
  %v3740 = vmax.f32 %v2407, %v2711
  %v3741 = vmax.f32 %v2409, %v2713
  %v3742 = vmax.f32 %v3048, %v3352
  %v3743 = vmax.f32 %v3050, %v3354
  %v3744 = vmax.f32 %v1131, %v1435
  %v3745 = vmax.f32 %v1133, %v1437
  %v3746 = vmax.f32 %v1772, %v2076
  %v3747 = vmax.f32 %v1774, %v2078
  %v3748 = vmax.f32 %v2413, %v2717
  %v3749 = vmax.f32 %v2415, %v2719
  %v3750 = vmax.f32 %v3054, %v3358
  %v3751 = vmax.f32 %v3056, %v3360
  %v3752 = vmax.f32 %v1135, %v1439
  %v3753 = vmax.f32 %v1137, %v1441
  %v3754 = vmax.f32 %v1776, %v2080
  %v3755 = vmax.f32 %v1778, %v2082
  %v3756 = vmax.f32 %v2417, %v2721
  %v3757 = vmax.f32 %v2419, %v2723
  %v3758 = vmax.f32 %v3058, %v3362
  %v3759 = vmax.f32 %v3060, %v3364
  %v3760 = vmax.f32 %v1141, %v1445
  %v3761 = vmax.f32 %v1143, %v1447
  %v3762 = vmax.f32 %v1782, %v2086
  %v3763 = vmax.f32 %v1784, %v2088
  %v3764 = vmax.f32 %v2423, %v2727
  %v3765 = vmax.f32 %v2425, %v2729
  %v3766 = vmax.f32 %v3064, %v3368
  %v3767 = vmax.f32 %v3066, %v3370
  %v3768 = vmax.f32 %v1145, %v1449
  %v3769 = vmax.f32 %v1147, %v1451
  %v3770 = vmax.f32 %v1786, %v2090
  %v3771 = vmax.f32 %v1788, %v2092
  %v3772 = vmax.f32 %v2427, %v2731
  %v3773 = vmax.f32 %v2429, %v2733
  %v3774 = vmax.f32 %v3068, %v3372
  %v3775 = vmax.f32 %v3070, %v3374
  %v3776 = vmax.f32 %v1151, %v1455
  %v3777 = vmax.f32 %v1153, %v1457
  %v3778 = vmax.f32 %v1792, %v2096
  %v3779 = vmax.f32 %v1794, %v2098
  %v3780 = vmax.f32 %v2433, %v2737
  %v3781 = vmax.f32 %v2435, %v2739
  %v3782 = vmax.f32 %v3074, %v3378
  %v3783 = vmax.f32 %v3076, %v3380
  %v3784 = vmax.f32 %v1155, %v1459
  %v3785 = vmax.f32 %v1157, %v1461
  %v3786 = vmax.f32 %v1796, %v2100
  %v3787 = vmax.f32 %v1798, %v2102
  %v3788 = vmax.f32 %v2437, %v2741
  %v3789 = vmax.f32 %v2439, %v2743
  %v3790 = vmax.f32 %v3078, %v3382
  %v3791 = vmax.f32 %v3080, %v3384
  %v3792 = vmax.f32 %v1161, %v1465
  %v3793 = vmax.f32 %v1163, %v1467
  %v3794 = vmax.f32 %v1802, %v2106
  %v3795 = vmax.f32 %v1804, %v2108
  %v3796 = vmax.f32 %v2443, %v2747
  %v3797 = vmax.f32 %v2445, %v2749
  %v3798 = vmax.f32 %v3084, %v3388
  %v3799 = vmax.f32 %v3086, %v3390
  %v3800 = vmax.f32 %v1165, %v1469
  %v3801 = vmax.f32 %v1167, %v1471
  %v3802 = vmax.f32 %v1806, %v2110
  %v3803 = vmax.f32 %v1808, %v2112
  %v3804 = vmax.f32 %v2447, %v2751
  %v3805 = vmax.f32 %v2449, %v2753
  %v3806 = vmax.f32 %v3088, %v3392
  %v3807 = vmax.f32 %v3090, %v3394
  %v3808 = vmax.f32 %v1171, %v1475
  %v3809 = vmax.f32 %v1173, %v1477
  %v3810 = vmax.f32 %v1812, %v2116
  %v3811 = vmax.f32 %v1814, %v2118
  %v3812 = vmax.f32 %v2453, %v2757
  %v3813 = vmax.f32 %v2455, %v2759
  %v3814 = vmax.f32 %v3094, %v3398
  %v3815 = vmax.f32 %v3096, %v3400
  %v3816 = vmax.f32 %v1175, %v1479
  %v3817 = vmax.f32 %v1177, %v1481
  %v3818 = vmax.f32 %v1816, %v2120
  %v3819 = vmax.f32 %v1818, %v2122
  %v3820 = vmax.f32 %v2457, %v2761
  %v3821 = vmax.f32 %v2459, %v2763
  %v3822 = vmax.f32 %v3098, %v3402
  %v3823 = vmax.f32 %v3100, %v3404
  %v3824 = vmax.f32 %v1181, %v1485
  %v3825 = vmax.f32 %v1183, %v1487
  %v3826 = vmax.f32 %v1822, %v2126
  %v3827 = vmax.f32 %v1824, %v2128
  %v3828 = vmax.f32 %v2463, %v2767
  %v3829 = vmax.f32 %v2465, %v2769
  %v3830 = vmax.f32 %v3104, %v3408
  %v3831 = vmax.f32 %v3106, %v3410
  %v3832 = vmax.f32 %v1185, %v1489
  %v3833 = vmax.f32 %v1187, %v1491
  %v3834 = vmax.f32 %v1826, %v2130
  %v3835 = vmax.f32 %v1828, %v2132
  %v3836 = vmax.f32 %v2467, %v2771
  %v3837 = vmax.f32 %v2469, %v2773
  %v3838 = vmax.f32 %v3108, %v3412
  %v3839 = vmax.f32 %v3110, %v3414
  %v3840 = vmax.f32 %v1191, %v1495
  %v3841 = vmax.f32 %v1193, %v1497
  %v3842 = vmax.f32 %v1832, %v2136
  %v3843 = vmax.f32 %v1834, %v2138
  %v3844 = vmax.f32 %v2473, %v2777
  %v3845 = vmax.f32 %v2475, %v2779
  %v3846 = vmax.f32 %v3114, %v3418
  %v3847 = vmax.f32 %v3116, %v3420
  %v3848 = vmax.f32 %v1195, %v1499
  %v3849 = vmax.f32 %v1197, %v1501
  %v3850 = vmax.f32 %v1836, %v2140
  %v3851 = vmax.f32 %v1838, %v2142
  %v3852 = vmax.f32 %v2477, %v2781
  %v3853 = vmax.f32 %v2479, %v2783
  %v3854 = vmax.f32 %v3118, %v3422
  %v3855 = vmax.f32 %v3120, %v3424
  %v3856 = vmax.f32 %v1201, %v1505
  %v3857 = vmax.f32 %v1203, %v1507
  %v3858 = vmax.f32 %v1842, %v2146
  %v3859 = vmax.f32 %v1844, %v2148
  %v3860 = vmax.f32 %v2483, %v2787
  %v3861 = vmax.f32 %v2485, %v2789
  %v3862 = vmax.f32 %v3124, %v3428
  %v3863 = vmax.f32 %v3126, %v3430
  %v3864 = vmax.f32 %v1205, %v1509
  %v3865 = vmax.f32 %v1207, %v1511
  %v3866 = vmax.f32 %v1846, %v2150
  %v3867 = vmax.f32 %v1848, %v2152
  %v3868 = vmax.f32 %v2487, %v2791
  %v3869 = vmax.f32 %v2489, %v2793
  %v3870 = vmax.f32 %v3128, %v3432
  %v3871 = vmax.f32 %v3130, %v3434
  %v3872 = vmax.f32 %v1211, %v1515
  %v3873 = vmax.f32 %v1213, %v1517
  %v3874 = vmax.f32 %v1852, %v2156
  %v3875 = vmax.f32 %v1854, %v2158
  %v3876 = vmax.f32 %v2493, %v2797
  %v3877 = vmax.f32 %v2495, %v2799
  %v3878 = vmax.f32 %v3134, %v3438
  %v3879 = vmax.f32 %v3136, %v3440
  %v3880 = vmax.f32 %v1215, %v1519
  %v3881 = vmax.f32 %v1217, %v1521
  %v3882 = vmax.f32 %v1856, %v2160
  %v3883 = vmax.f32 %v1858, %v2162
  %v3884 = vmax.f32 %v2497, %v2801
  %v3885 = vmax.f32 %v2499, %v2803
  %v3886 = vmax.f32 %v3138, %v3442
  %v3887 = vmax.f32 %v3140, %v3444
  %v3888 = vmax.f32 %v1221, %v1525
  %v3889 = vmax.f32 %v1223, %v1527
  %v3890 = vmax.f32 %v1862, %v2166
  %v3891 = vmax.f32 %v1864, %v2168
  %v3892 = vmax.f32 %v2503, %v2807
  %v3893 = vmax.f32 %v2505, %v2809
  %v3894 = vmax.f32 %v3144, %v3448
  %v3895 = vmax.f32 %v3146, %v3450
  %v3896 = vmax.f32 %v1225, %v1529
  %v3897 = vmax.f32 %v1227, %v1531
  %v3898 = vmax.f32 %v1866, %v2170
  %v3899 = vmax.f32 %v1868, %v2172
  %v3900 = vmax.f32 %v2507, %v2811
  %v3901 = vmax.f32 %v2509, %v2813
  %v3902 = vmax.f32 %v3148, %v3452
  %v3903 = vmax.f32 %v3150, %v3454
  %v3904 = vmax.f32 %v1231, %v1535
  %v3905 = vmax.f32 %v1233, %v1537
  %v3906 = vmax.f32 %v1872, %v2176
  %v3907 = vmax.f32 %v1874, %v2178
  %v3908 = vmax.f32 %v2513, %v2817
  %v3909 = vmax.f32 %v2515, %v2819
  %v3910 = vmax.f32 %v3154, %v3458
  %v3911 = vmax.f32 %v3156, %v3460
  %v3912 = vmax.f32 %v1235, %v1539
  %v3913 = vmax.f32 %v1237, %v1541
  %v3914 = vmax.f32 %v1876, %v2180
  %v3915 = vmax.f32 %v1878, %v2182
  %v3916 = vmax.f32 %v2517, %v2821
  %v3917 = vmax.f32 %v2519, %v2823
  %v3918 = vmax.f32 %v3158, %v3462
  %v3919 = vmax.f32 %v3160, %v3464
  %v3920 = vmax.f32 %v1241, %v1545
  %v3921 = vmax.f32 %v1243, %v1547
  %v3922 = vmax.f32 %v1882, %v2186
  %v3923 = vmax.f32 %v1884, %v2188
  %v3924 = vmax.f32 %v2523, %v2827
  %v3925 = vmax.f32 %v2525, %v2829
  %v3926 = vmax.f32 %v3164, %v3468
  %v3927 = vmax.f32 %v3166, %v3470
  %v3928 = vmax.f32 %v1245, %v1549
  %v3929 = vmax.f32 %v1247, %v1551
  %v3930 = vmax.f32 %v1886, %v2190
  %v3931 = vmax.f32 %v1888, %v2192
  %v3932 = vmax.f32 %v2527, %v2831
  %v3933 = vmax.f32 %v2529, %v2833
  %v3934 = vmax.f32 %v3168, %v3472
  %v3935 = vmax.f32 %v3170, %v3474
  %v3936 = vmax.f32 %v1251, %v1555
  %v3937 = vmax.f32 %v1253, %v1557
  %v3938 = vmax.f32 %v1892, %v2196
  %v3939 = vmax.f32 %v1894, %v2198
  %v3940 = vmax.f32 %v2533, %v2837
  %v3941 = vmax.f32 %v2535, %v2839
  %v3942 = vmax.f32 %v3174, %v3478
  %v3943 = vmax.f32 %v3176, %v3480
  %v3944 = vmax.f32 %v1255, %v1559
  %v3945 = vmax.f32 %v1257, %v1561
  %v3946 = vmax.f32 %v1896, %v2200
  %v3947 = vmax.f32 %v1898, %v2202
  %v3948 = vmax.f32 %v2537, %v2841
  %v3949 = vmax.f32 %v2539, %v2843
  %v3950 = vmax.f32 %v3178, %v3482
  %v3951 = vmax.f32 %v3180, %v3484
  %v3952 = vmax.f32 %v1261, %v1565
  %v3953 = vmax.f32 %v1263, %v1567
  %v3954 = vmax.f32 %v1902, %v2206
  %v3955 = vmax.f32 %v1904, %v2208
  %v3956 = vmax.f32 %v2543, %v2847
  %v3957 = vmax.f32 %v2545, %v2849
  %v3958 = vmax.f32 %v3184, %v3488
  %v3959 = vmax.f32 %v3186, %v3490
  %v3960 = vmax.f32 %v1265, %v1569
  %v3961 = vmax.f32 %v1267, %v1571
  %v3962 = vmax.f32 %v1906, %v2210
  %v3963 = vmax.f32 %v1908, %v2212
  %v3964 = vmax.f32 %v2547, %v2851
  %v3965 = vmax.f32 %v2549, %v2853
  %v3966 = vmax.f32 %v3188, %v3492
  %v3967 = vmax.f32 %v3190, %v3494
  %v3968 = vmax.f32 %v3520, %v3524
  %v3969 = vmax.f32 %v3521, %v3525
  %v3970 = vmax.f32 %v3522, %v3526
  %v3971 = vmax.f32 %v3523, %v3527
  %v3972 = vmax.f32 %v3528, %v3532
  %v3973 = vmax.f32 %v3529, %v3533
  %v3974 = vmax.f32 %v3530, %v3534
  %v3975 = vmax.f32 %v3531, %v3535
  %v3976 = vmax.f32 %v3536, %v3540
  %v3977 = vmax.f32 %v3537, %v3541
  %v3978 = vmax.f32 %v3538, %v3542
  %v3979 = vmax.f32 %v3539, %v3543
  %v3980 = vmax.f32 %v3544, %v3548
  %v3981 = vmax.f32 %v3545, %v3549
  %v3982 = vmax.f32 %v3546, %v3550
  %v3983 = vmax.f32 %v3547, %v3551
  %v3984 = vmax.f32 %v3552, %v3556
  %v3985 = vmax.f32 %v3553, %v3557
  %v3986 = vmax.f32 %v3554, %v3558
  %v3987 = vmax.f32 %v3555, %v3559
  %v3988 = vmax.f32 %v3560, %v3564
  %v3989 = vmax.f32 %v3561, %v3565
  %v3990 = vmax.f32 %v3562, %v3566
  %v3991 = vmax.f32 %v3563, %v3567
  %v3992 = vmax.f32 %v3568, %v3572
  %v3993 = vmax.f32 %v3569, %v3573
  %v3994 = vmax.f32 %v3570, %v3574
  %v3995 = vmax.f32 %v3571, %v3575
  %v3996 = vmax.f32 %v3576, %v3580
  %v3997 = vmax.f32 %v3577, %v3581
  %v3998 = vmax.f32 %v3578, %v3582
  %v3999 = vmax.f32 %v3579, %v3583
  %v4000 = vmax.f32 %v3584, %v3588
  %v4001 = vmax.f32 %v3585, %v3589
  %v4002 = vmax.f32 %v3586, %v3590
  %v4003 = vmax.f32 %v3587, %v3591
  %v4004 = vmax.f32 %v3592, %v3596
  %v4005 = vmax.f32 %v3593, %v3597
  %v4006 = vmax.f32 %v3594, %v3598
  %v4007 = vmax.f32 %v3595, %v3599
  %v4008 = vmax.f32 %v3600, %v3604
  %v4009 = vmax.f32 %v3601, %v3605
  %v4010 = vmax.f32 %v3602, %v3606
  %v4011 = vmax.f32 %v3603, %v3607
  %v4012 = vmax.f32 %v3608, %v3612
  %v4013 = vmax.f32 %v3609, %v3613
  %v4014 = vmax.f32 %v3610, %v3614
  %v4015 = vmax.f32 %v3611, %v3615
  %v4016 = vmax.f32 %v3616, %v3620
  %v4017 = vmax.f32 %v3617, %v3621
  %v4018 = vmax.f32 %v3618, %v3622
  %v4019 = vmax.f32 %v3619, %v3623
  %v4020 = vmax.f32 %v3624, %v3628
  %v4021 = vmax.f32 %v3625, %v3629
  %v4022 = vmax.f32 %v3626, %v3630
  %v4023 = vmax.f32 %v3627, %v3631
  %v4024 = vmax.f32 %v3632, %v3636
  %v4025 = vmax.f32 %v3633, %v3637
  %v4026 = vmax.f32 %v3634, %v3638
  %v4027 = vmax.f32 %v3635, %v3639
  %v4028 = vmax.f32 %v3640, %v3644
  %v4029 = vmax.f32 %v3641, %v3645
  %v4030 = vmax.f32 %v3642, %v3646
  %v4031 = vmax.f32 %v3643, %v3647
  %v4032 = vmax.f32 %v3648, %v3652
  %v4033 = vmax.f32 %v3649, %v3653
  %v4034 = vmax.f32 %v3650, %v3654
  %v4035 = vmax.f32 %v3651, %v3655
  %v4036 = vmax.f32 %v3656, %v3660
  %v4037 = vmax.f32 %v3657, %v3661
  %v4038 = vmax.f32 %v3658, %v3662
  %v4039 = vmax.f32 %v3659, %v3663
  %v4040 = vmax.f32 %v3664, %v3668
  %v4041 = vmax.f32 %v3665, %v3669
  %v4042 = vmax.f32 %v3666, %v3670
  %v4043 = vmax.f32 %v3667, %v3671
  %v4044 = vmax.f32 %v3672, %v3676
  %v4045 = vmax.f32 %v3673, %v3677
  %v4046 = vmax.f32 %v3674, %v3678
  %v4047 = vmax.f32 %v3675, %v3679
  %v4048 = vmax.f32 %v3680, %v3684
  %v4049 = vmax.f32 %v3681, %v3685
  %v4050 = vmax.f32 %v3682, %v3686
  %v4051 = vmax.f32 %v3683, %v3687
  %v4052 = vmax.f32 %v3688, %v3692
  %v4053 = vmax.f32 %v3689, %v3693
  %v4054 = vmax.f32 %v3690, %v3694
  %v4055 = vmax.f32 %v3691, %v3695
  %v4056 = vmax.f32 %v3696, %v3700
  %v4057 = vmax.f32 %v3697, %v3701
  %v4058 = vmax.f32 %v3698, %v3702
  %v4059 = vmax.f32 %v3699, %v3703
  %v4060 = vmax.f32 %v3704, %v3708
  %v4061 = vmax.f32 %v3705, %v3709
  %v4062 = vmax.f32 %v3706, %v3710
  %v4063 = vmax.f32 %v3707, %v3711
  %v4064 = vmax.f32 %v3712, %v3716
  %v4065 = vmax.f32 %v3713, %v3717
  %v4066 = vmax.f32 %v3714, %v3718
  %v4067 = vmax.f32 %v3715, %v3719
  %v4068 = vmax.f32 %v3720, %v3724
  %v4069 = vmax.f32 %v3721, %v3725
  %v4070 = vmax.f32 %v3722, %v3726
  %v4071 = vmax.f32 %v3723, %v3727
  %v4072 = vmax.f32 %v3728, %v3732
  %v4073 = vmax.f32 %v3729, %v3733
  %v4074 = vmax.f32 %v3730, %v3734
  %v4075 = vmax.f32 %v3731, %v3735
  %v4076 = vmax.f32 %v3736, %v3740
  %v4077 = vmax.f32 %v3737, %v3741
  %v4078 = vmax.f32 %v3738, %v3742
  %v4079 = vmax.f32 %v3739, %v3743
  %v4080 = vmax.f32 %v3744, %v3748
  %v4081 = vmax.f32 %v3745, %v3749
  %v4082 = vmax.f32 %v3746, %v3750
  %v4083 = vmax.f32 %v3747, %v3751
  %v4084 = vmax.f32 %v3752, %v3756
  %v4085 = vmax.f32 %v3753, %v3757
  %v4086 = vmax.f32 %v3754, %v3758
  %v4087 = vmax.f32 %v3755, %v3759
  %v4088 = vmax.f32 %v3760, %v3764
  %v4089 = vmax.f32 %v3761, %v3765
  %v4090 = vmax.f32 %v3762, %v3766
  %v4091 = vmax.f32 %v3763, %v3767
  %v4092 = vmax.f32 %v3768, %v3772
  %v4093 = vmax.f32 %v3769, %v3773
  %v4094 = vmax.f32 %v3770, %v3774
  %v4095 = vmax.f32 %v3771, %v3775
  %v4096 = vmax.f32 %v3776, %v3780
  %v4097 = vmax.f32 %v3777, %v3781
  %v4098 = vmax.f32 %v3778, %v3782
  %v4099 = vmax.f32 %v3779, %v3783
  %v4100 = vmax.f32 %v3784, %v3788
  %v4101 = vmax.f32 %v3785, %v3789
  %v4102 = vmax.f32 %v3786, %v3790
  %v4103 = vmax.f32 %v3787, %v3791
  %v4104 = vmax.f32 %v3792, %v3796
  %v4105 = vmax.f32 %v3793, %v3797
  %v4106 = vmax.f32 %v3794, %v3798
  %v4107 = vmax.f32 %v3795, %v3799
  %v4108 = vmax.f32 %v3800, %v3804
  %v4109 = vmax.f32 %v3801, %v3805
  %v4110 = vmax.f32 %v3802, %v3806
  %v4111 = vmax.f32 %v3803, %v3807
  %v4112 = vmax.f32 %v3808, %v3812
  %v4113 = vmax.f32 %v3809, %v3813
  %v4114 = vmax.f32 %v3810, %v3814
  %v4115 = vmax.f32 %v3811, %v3815
  %v4116 = vmax.f32 %v3816, %v3820
  %v4117 = vmax.f32 %v3817, %v3821
  %v4118 = vmax.f32 %v3818, %v3822
  %v4119 = vmax.f32 %v3819, %v3823
  %v4120 = vmax.f32 %v3824, %v3828
  %v4121 = vmax.f32 %v3825, %v3829
  %v4122 = vmax.f32 %v3826, %v3830
  %v4123 = vmax.f32 %v3827, %v3831
  %v4124 = vmax.f32 %v3832, %v3836
  %v4125 = vmax.f32 %v3833, %v3837
  %v4126 = vmax.f32 %v3834, %v3838
  %v4127 = vmax.f32 %v3835, %v3839
  %v4128 = vmax.f32 %v3840, %v3844
  %v4129 = vmax.f32 %v3841, %v3845
  %v4130 = vmax.f32 %v3842, %v3846
  %v4131 = vmax.f32 %v3843, %v3847
  %v4132 = vmax.f32 %v3848, %v3852
  %v4133 = vmax.f32 %v3849, %v3853
  %v4134 = vmax.f32 %v3850, %v3854
  %v4135 = vmax.f32 %v3851, %v3855
  %v4136 = vmax.f32 %v3856, %v3860
  %v4137 = vmax.f32 %v3857, %v3861
  %v4138 = vmax.f32 %v3858, %v3862
  %v4139 = vmax.f32 %v3859, %v3863
  %v4140 = vmax.f32 %v3864, %v3868
  %v4141 = vmax.f32 %v3865, %v3869
  %v4142 = vmax.f32 %v3866, %v3870
  %v4143 = vmax.f32 %v3867, %v3871
  %v4144 = vmax.f32 %v3872, %v3876
  %v4145 = vmax.f32 %v3873, %v3877
  %v4146 = vmax.f32 %v3874, %v3878
  %v4147 = vmax.f32 %v3875, %v3879
  %v4148 = vmax.f32 %v3880, %v3884
  %v4149 = vmax.f32 %v3881, %v3885
  %v4150 = vmax.f32 %v3882, %v3886
  %v4151 = vmax.f32 %v3883, %v3887
  %v4152 = vmax.f32 %v3888, %v3892
  %v4153 = vmax.f32 %v3889, %v3893
  %v4154 = vmax.f32 %v3890, %v3894
  %v4155 = vmax.f32 %v3891, %v3895
  %v4156 = vmax.f32 %v3896, %v3900
  %v4157 = vmax.f32 %v3897, %v3901
  %v4158 = vmax.f32 %v3898, %v3902
  %v4159 = vmax.f32 %v3899, %v3903
  %v4160 = vmax.f32 %v3904, %v3908
  %v4161 = vmax.f32 %v3905, %v3909
  %v4162 = vmax.f32 %v3906, %v3910
  %v4163 = vmax.f32 %v3907, %v3911
  %v4164 = vmax.f32 %v3912, %v3916
  %v4165 = vmax.f32 %v3913, %v3917
  %v4166 = vmax.f32 %v3914, %v3918
  %v4167 = vmax.f32 %v3915, %v3919
  %v4168 = vmax.f32 %v3920, %v3924
  %v4169 = vmax.f32 %v3921, %v3925
  %v4170 = vmax.f32 %v3922, %v3926
  %v4171 = vmax.f32 %v3923, %v3927
  %v4172 = vmax.f32 %v3928, %v3932
  %v4173 = vmax.f32 %v3929, %v3933
  %v4174 = vmax.f32 %v3930, %v3934
  %v4175 = vmax.f32 %v3931, %v3935
  %v4176 = vmax.f32 %v3936, %v3940
  %v4177 = vmax.f32 %v3937, %v3941
  %v4178 = vmax.f32 %v3938, %v3942
  %v4179 = vmax.f32 %v3939, %v3943
  %v4180 = vmax.f32 %v3944, %v3948
  %v4181 = vmax.f32 %v3945, %v3949
  %v4182 = vmax.f32 %v3946, %v3950
  %v4183 = vmax.f32 %v3947, %v3951
  %v4184 = vmax.f32 %v3952, %v3956
  %v4185 = vmax.f32 %v3953, %v3957
  %v4186 = vmax.f32 %v3954, %v3958
  %v4187 = vmax.f32 %v3955, %v3959
  %v4188 = vmax.f32 %v3960, %v3964
  %v4189 = vmax.f32 %v3961, %v3965
  %v4190 = vmax.f32 %v3962, %v3966
  %v4191 = vmax.f32 %v3963, %v3967
  %v4192 = vld [vmem:[%s2] sm:$0xf]
  %v4194 = vlaneseq
  %v4195 = vshrl.u32 %v4194, 7
  %v4196 = vsub.s32 0, %v4195
  %v4197 = vrot.slane %v4192, %v4196
  %v4198 = vlaneseq
  %v4199 = vshrl.u32 %v4198, 7
  %v4200 = vsub.s32 1, %v4199
  %v4201 = vrot.slane %v4192, %v4200
  %v4202 = vlaneseq
  %v4203 = vshrl.u32 %v4202, 7
  %v4204 = vsub.s32 2, %v4203
  %v4205 = vrot.slane %v4192, %v4204
  %v4206 = vlaneseq
  %v4207 = vshrl.u32 %v4206, 7
  %v4208 = vsub.s32 3, %v4207
  %v4209 = vrot.slane %v4192, %v4208
  %v4214 = vadd.f32 %v3968, %v4197
  %v4215 = vadd.f32 %v3969, %v4201
  %v4216 = vadd.f32 %v3970, %v4205
  %v4217 = vadd.f32 %v3971, %v4209
  %v4218 = vadd.f32 %v3972, %v4197
  %v4219 = vadd.f32 %v3973, %v4201
  %v4220 = vadd.f32 %v3974, %v4205
  %v4221 = vadd.f32 %v3975, %v4209
  %v4222 = vadd.f32 %v3976, %v4197
  %v4223 = vadd.f32 %v3977, %v4201
  %v4224 = vadd.f32 %v3978, %v4205
  %v4225 = vadd.f32 %v3979, %v4209
  %v4226 = vadd.f32 %v3980, %v4197
  %v4227 = vadd.f32 %v3981, %v4201
  %v4228 = vadd.f32 %v3982, %v4205
  %v4229 = vadd.f32 %v3983, %v4209
  %v4230 = vadd.f32 %v3984, %v4197
  %v4231 = vadd.f32 %v3985, %v4201
  %v4232 = vadd.f32 %v3986, %v4205
  %v4233 = vadd.f32 %v3987, %v4209
  %v4234 = vadd.f32 %v3988, %v4197
  %v4235 = vadd.f32 %v3989, %v4201
  %v4236 = vadd.f32 %v3990, %v4205
  %v4237 = vadd.f32 %v3991, %v4209
  %v4238 = vadd.f32 %v3992, %v4197
  %v4239 = vadd.f32 %v3993, %v4201
  %v4240 = vadd.f32 %v3994, %v4205
  %v4241 = vadd.f32 %v3995, %v4209
  %v4242 = vadd.f32 %v3996, %v4197
  %v4243 = vadd.f32 %v3997, %v4201
  %v4244 = vadd.f32 %v3998, %v4205
  %v4245 = vadd.f32 %v3999, %v4209
  %v4246 = vadd.f32 %v4000, %v4197
  %v4247 = vadd.f32 %v4001, %v4201
  %v4248 = vadd.f32 %v4002, %v4205
  %v4249 = vadd.f32 %v4003, %v4209
  %v4250 = vadd.f32 %v4004, %v4197
  %v4251 = vadd.f32 %v4005, %v4201
  %v4252 = vadd.f32 %v4006, %v4205
  %v4253 = vadd.f32 %v4007, %v4209
  %v4254 = vadd.f32 %v4008, %v4197
  %v4255 = vadd.f32 %v4009, %v4201
  %v4256 = vadd.f32 %v4010, %v4205
  %v4257 = vadd.f32 %v4011, %v4209
  %v4258 = vadd.f32 %v4012, %v4197
  %v4259 = vadd.f32 %v4013, %v4201
  %v4260 = vadd.f32 %v4014, %v4205
  %v4261 = vadd.f32 %v4015, %v4209
  %v4262 = vadd.f32 %v4016, %v4197
  %v4263 = vadd.f32 %v4017, %v4201
  %v4264 = vadd.f32 %v4018, %v4205
  %v4265 = vadd.f32 %v4019, %v4209
  %v4266 = vadd.f32 %v4020, %v4197
  %v4267 = vadd.f32 %v4021, %v4201
  %v4268 = vadd.f32 %v4022, %v4205
  %v4269 = vadd.f32 %v4023, %v4209
  %v4270 = vadd.f32 %v4024, %v4197
  %v4271 = vadd.f32 %v4025, %v4201
  %v4272 = vadd.f32 %v4026, %v4205
  %v4273 = vadd.f32 %v4027, %v4209
  %v4274 = vadd.f32 %v4028, %v4197
  %v4275 = vadd.f32 %v4029, %v4201
  %v4276 = vadd.f32 %v4030, %v4205
  %v4277 = vadd.f32 %v4031, %v4209
  %v4278 = vadd.f32 %v4032, %v4197
  %v4279 = vadd.f32 %v4033, %v4201
  %v4280 = vadd.f32 %v4034, %v4205
  %v4281 = vadd.f32 %v4035, %v4209
  %v4282 = vadd.f32 %v4036, %v4197
  %v4283 = vadd.f32 %v4037, %v4201
  %v4284 = vadd.f32 %v4038, %v4205
  %v4285 = vadd.f32 %v4039, %v4209
  %v4286 = vadd.f32 %v4040, %v4197
  %v4287 = vadd.f32 %v4041, %v4201
  %v4288 = vadd.f32 %v4042, %v4205
  %v4289 = vadd.f32 %v4043, %v4209
  %v4290 = vadd.f32 %v4044, %v4197
  %v4291 = vadd.f32 %v4045, %v4201
  %v4292 = vadd.f32 %v4046, %v4205
  %v4293 = vadd.f32 %v4047, %v4209
  %v4294 = vadd.f32 %v4048, %v4197
  %v4295 = vadd.f32 %v4049, %v4201
  %v4296 = vadd.f32 %v4050, %v4205
  %v4297 = vadd.f32 %v4051, %v4209
  %v4298 = vadd.f32 %v4052, %v4197
  %v4299 = vadd.f32 %v4053, %v4201
  %v4300 = vadd.f32 %v4054, %v4205
  %v4301 = vadd.f32 %v4055, %v4209
  %v4302 = vadd.f32 %v4056, %v4197
  %v4303 = vadd.f32 %v4057, %v4201
  %v4304 = vadd.f32 %v4058, %v4205
  %v4305 = vadd.f32 %v4059, %v4209
  %v4306 = vadd.f32 %v4060, %v4197
  %v4307 = vadd.f32 %v4061, %v4201
  %v4308 = vadd.f32 %v4062, %v4205
  %v4309 = vadd.f32 %v4063, %v4209
  %v4310 = vadd.f32 %v4064, %v4197
  %v4311 = vadd.f32 %v4065, %v4201
  %v4312 = vadd.f32 %v4066, %v4205
  %v4313 = vadd.f32 %v4067, %v4209
  %v4314 = vadd.f32 %v4068, %v4197
  %v4315 = vadd.f32 %v4069, %v4201
  %v4316 = vadd.f32 %v4070, %v4205
  %v4317 = vadd.f32 %v4071, %v4209
  %v4318 = vadd.f32 %v4072, %v4197
  %v4319 = vadd.f32 %v4073, %v4201
  %v4320 = vadd.f32 %v4074, %v4205
  %v4321 = vadd.f32 %v4075, %v4209
  %v4322 = vadd.f32 %v4076, %v4197
  %v4323 = vadd.f32 %v4077, %v4201
  %v4324 = vadd.f32 %v4078, %v4205
  %v4325 = vadd.f32 %v4079, %v4209
  %v4326 = vadd.f32 %v4080, %v4197
  %v4327 = vadd.f32 %v4081, %v4201
  %v4328 = vadd.f32 %v4082, %v4205
  %v4329 = vadd.f32 %v4083, %v4209
  %v4330 = vadd.f32 %v4084, %v4197
  %v4331 = vadd.f32 %v4085, %v4201
  %v4332 = vadd.f32 %v4086, %v4205
  %v4333 = vadd.f32 %v4087, %v4209
  %v4334 = vadd.f32 %v4088, %v4197
  %v4335 = vadd.f32 %v4089, %v4201
  %v4336 = vadd.f32 %v4090, %v4205
  %v4337 = vadd.f32 %v4091, %v4209
  %v4338 = vadd.f32 %v4092, %v4197
  %v4339 = vadd.f32 %v4093, %v4201
  %v4340 = vadd.f32 %v4094, %v4205
  %v4341 = vadd.f32 %v4095, %v4209
  %v4342 = vadd.f32 %v4096, %v4197
  %v4343 = vadd.f32 %v4097, %v4201
  %v4344 = vadd.f32 %v4098, %v4205
  %v4345 = vadd.f32 %v4099, %v4209
  %v4346 = vadd.f32 %v4100, %v4197
  %v4347 = vadd.f32 %v4101, %v4201
  %v4348 = vadd.f32 %v4102, %v4205
  %v4349 = vadd.f32 %v4103, %v4209
  %v4350 = vadd.f32 %v4104, %v4197
  %v4351 = vadd.f32 %v4105, %v4201
  %v4352 = vadd.f32 %v4106, %v4205
  %v4353 = vadd.f32 %v4107, %v4209
  %v4354 = vadd.f32 %v4108, %v4197
  %v4355 = vadd.f32 %v4109, %v4201
  %v4356 = vadd.f32 %v4110, %v4205
  %v4357 = vadd.f32 %v4111, %v4209
  %v4358 = vadd.f32 %v4112, %v4197
  %v4359 = vadd.f32 %v4113, %v4201
  %v4360 = vadd.f32 %v4114, %v4205
  %v4361 = vadd.f32 %v4115, %v4209
  %v4362 = vadd.f32 %v4116, %v4197
  %v4363 = vadd.f32 %v4117, %v4201
  %v4364 = vadd.f32 %v4118, %v4205
  %v4365 = vadd.f32 %v4119, %v4209
  %v4366 = vadd.f32 %v4120, %v4197
  %v4367 = vadd.f32 %v4121, %v4201
  %v4368 = vadd.f32 %v4122, %v4205
  %v4369 = vadd.f32 %v4123, %v4209
  %v4370 = vadd.f32 %v4124, %v4197
  %v4371 = vadd.f32 %v4125, %v4201
  %v4372 = vadd.f32 %v4126, %v4205
  %v4373 = vadd.f32 %v4127, %v4209
  %v4374 = vadd.f32 %v4128, %v4197
  %v4375 = vadd.f32 %v4129, %v4201
  %v4376 = vadd.f32 %v4130, %v4205
  %v4377 = vadd.f32 %v4131, %v4209
  %v4378 = vadd.f32 %v4132, %v4197
  %v4379 = vadd.f32 %v4133, %v4201
  %v4380 = vadd.f32 %v4134, %v4205
  %v4381 = vadd.f32 %v4135, %v4209
  %v4382 = vadd.f32 %v4136, %v4197
  %v4383 = vadd.f32 %v4137, %v4201
  %v4384 = vadd.f32 %v4138, %v4205
  %v4385 = vadd.f32 %v4139, %v4209
  %v4386 = vadd.f32 %v4140, %v4197
  %v4387 = vadd.f32 %v4141, %v4201
  %v4388 = vadd.f32 %v4142, %v4205
  %v4389 = vadd.f32 %v4143, %v4209
  %v4390 = vadd.f32 %v4144, %v4197
  %v4391 = vadd.f32 %v4145, %v4201
  %v4392 = vadd.f32 %v4146, %v4205
  %v4393 = vadd.f32 %v4147, %v4209
  %v4394 = vadd.f32 %v4148, %v4197
  %v4395 = vadd.f32 %v4149, %v4201
  %v4396 = vadd.f32 %v4150, %v4205
  %v4397 = vadd.f32 %v4151, %v4209
  %v4398 = vadd.f32 %v4152, %v4197
  %v4399 = vadd.f32 %v4153, %v4201
  %v4400 = vadd.f32 %v4154, %v4205
  %v4401 = vadd.f32 %v4155, %v4209
  %v4402 = vadd.f32 %v4156, %v4197
  %v4403 = vadd.f32 %v4157, %v4201
  %v4404 = vadd.f32 %v4158, %v4205
  %v4405 = vadd.f32 %v4159, %v4209
  %v4406 = vadd.f32 %v4160, %v4197
  %v4407 = vadd.f32 %v4161, %v4201
  %v4408 = vadd.f32 %v4162, %v4205
  %v4409 = vadd.f32 %v4163, %v4209
  %v4410 = vadd.f32 %v4164, %v4197
  %v4411 = vadd.f32 %v4165, %v4201
  %v4412 = vadd.f32 %v4166, %v4205
  %v4413 = vadd.f32 %v4167, %v4209
  %v4414 = vadd.f32 %v4168, %v4197
  %v4415 = vadd.f32 %v4169, %v4201
  %v4416 = vadd.f32 %v4170, %v4205
  %v4417 = vadd.f32 %v4171, %v4209
  %v4418 = vadd.f32 %v4172, %v4197
  %v4419 = vadd.f32 %v4173, %v4201
  %v4420 = vadd.f32 %v4174, %v4205
  %v4421 = vadd.f32 %v4175, %v4209
  %v4422 = vadd.f32 %v4176, %v4197
  %v4423 = vadd.f32 %v4177, %v4201
  %v4424 = vadd.f32 %v4178, %v4205
  %v4425 = vadd.f32 %v4179, %v4209
  %v4426 = vadd.f32 %v4180, %v4197
  %v4427 = vadd.f32 %v4181, %v4201
  %v4428 = vadd.f32 %v4182, %v4205
  %v4429 = vadd.f32 %v4183, %v4209
  %v4430 = vadd.f32 %v4184, %v4197
  %v4431 = vadd.f32 %v4185, %v4201
  %v4432 = vadd.f32 %v4186, %v4205
  %v4433 = vadd.f32 %v4187, %v4209
  %v4434 = vadd.f32 %v4188, %v4197
  %v4435 = vadd.f32 %v4189, %v4201
  %v4436 = vadd.f32 %v4190, %v4205
  %v4437 = vadd.f32 %v4191, %v4209
  %v4438 = vmax.f32 %v4214, 0.0
  %v4439 = vmax.f32 %v4215, 0.0
  %v4440 = vmax.f32 %v4216, 0.0
  %v4441 = vmax.f32 %v4217, 0.0
  %v4442 = vmax.f32 %v4218, 0.0
  %v4443 = vmax.f32 %v4219, 0.0
  %v4444 = vmax.f32 %v4220, 0.0
  %v4445 = vmax.f32 %v4221, 0.0
  %v4446 = vmax.f32 %v4222, 0.0
  %v4447 = vmax.f32 %v4223, 0.0
  %v4448 = vmax.f32 %v4224, 0.0
  %v4449 = vmax.f32 %v4225, 0.0
  %v4450 = vmax.f32 %v4226, 0.0
  %v4451 = vmax.f32 %v4227, 0.0
  %v4452 = vmax.f32 %v4228, 0.0
  %v4453 = vmax.f32 %v4229, 0.0
  %v4454 = vmax.f32 %v4230, 0.0
  %v4455 = vmax.f32 %v4231, 0.0
  %v4456 = vmax.f32 %v4232, 0.0
  %v4457 = vmax.f32 %v4233, 0.0
  %v4458 = vmax.f32 %v4234, 0.0
  %v4459 = vmax.f32 %v4235, 0.0
  %v4460 = vmax.f32 %v4236, 0.0
  %v4461 = vmax.f32 %v4237, 0.0
  %v4462 = vmax.f32 %v4238, 0.0
  %v4463 = vmax.f32 %v4239, 0.0
  %v4464 = vmax.f32 %v4240, 0.0
  %v4465 = vmax.f32 %v4241, 0.0
  %v4466 = vmax.f32 %v4242, 0.0
  %v4467 = vmax.f32 %v4243, 0.0
  %v4468 = vmax.f32 %v4244, 0.0
  %v4469 = vmax.f32 %v4245, 0.0
  %v4470 = vmax.f32 %v4246, 0.0
  %v4471 = vmax.f32 %v4247, 0.0
  %v4472 = vmax.f32 %v4248, 0.0
  %v4473 = vmax.f32 %v4249, 0.0
  %v4474 = vmax.f32 %v4250, 0.0
  %v4475 = vmax.f32 %v4251, 0.0
  %v4476 = vmax.f32 %v4252, 0.0
  %v4477 = vmax.f32 %v4253, 0.0
  %v4478 = vmax.f32 %v4254, 0.0
  %v4479 = vmax.f32 %v4255, 0.0
  %v4480 = vmax.f32 %v4256, 0.0
  %v4481 = vmax.f32 %v4257, 0.0
  %v4482 = vmax.f32 %v4258, 0.0
  %v4483 = vmax.f32 %v4259, 0.0
  %v4484 = vmax.f32 %v4260, 0.0
  %v4485 = vmax.f32 %v4261, 0.0
  %v4486 = vmax.f32 %v4262, 0.0
  %v4487 = vmax.f32 %v4263, 0.0
  %v4488 = vmax.f32 %v4264, 0.0
  %v4489 = vmax.f32 %v4265, 0.0
  %v4490 = vmax.f32 %v4266, 0.0
  %v4491 = vmax.f32 %v4267, 0.0
  %v4492 = vmax.f32 %v4268, 0.0
  %v4493 = vmax.f32 %v4269, 0.0
  %v4494 = vmax.f32 %v4270, 0.0
  %v4495 = vmax.f32 %v4271, 0.0
  %v4496 = vmax.f32 %v4272, 0.0
  %v4497 = vmax.f32 %v4273, 0.0
  %v4498 = vmax.f32 %v4274, 0.0
  %v4499 = vmax.f32 %v4275, 0.0
  %v4500 = vmax.f32 %v4276, 0.0
  %v4501 = vmax.f32 %v4277, 0.0
  %v4502 = vmax.f32 %v4278, 0.0
  %v4503 = vmax.f32 %v4279, 0.0
  %v4504 = vmax.f32 %v4280, 0.0
  %v4505 = vmax.f32 %v4281, 0.0
  %v4506 = vmax.f32 %v4282, 0.0
  %v4507 = vmax.f32 %v4283, 0.0
  %v4508 = vmax.f32 %v4284, 0.0
  %v4509 = vmax.f32 %v4285, 0.0
  %v4510 = vmax.f32 %v4286, 0.0
  %v4511 = vmax.f32 %v4287, 0.0
  %v4512 = vmax.f32 %v4288, 0.0
  %v4513 = vmax.f32 %v4289, 0.0
  %v4514 = vmax.f32 %v4290, 0.0
  %v4515 = vmax.f32 %v4291, 0.0
  %v4516 = vmax.f32 %v4292, 0.0
  %v4517 = vmax.f32 %v4293, 0.0
  %v4518 = vmax.f32 %v4294, 0.0
  %v4519 = vmax.f32 %v4295, 0.0
  %v4520 = vmax.f32 %v4296, 0.0
  %v4521 = vmax.f32 %v4297, 0.0
  %v4522 = vmax.f32 %v4298, 0.0
  %v4523 = vmax.f32 %v4299, 0.0
  %v4524 = vmax.f32 %v4300, 0.0
  %v4525 = vmax.f32 %v4301, 0.0
  %v4526 = vmax.f32 %v4302, 0.0
  %v4527 = vmax.f32 %v4303, 0.0
  %v4528 = vmax.f32 %v4304, 0.0
  %v4529 = vmax.f32 %v4305, 0.0
  %v4530 = vmax.f32 %v4306, 0.0
  %v4531 = vmax.f32 %v4307, 0.0
  %v4532 = vmax.f32 %v4308, 0.0
  %v4533 = vmax.f32 %v4309, 0.0
  %v4534 = vmax.f32 %v4310, 0.0
  %v4535 = vmax.f32 %v4311, 0.0
  %v4536 = vmax.f32 %v4312, 0.0
  %v4537 = vmax.f32 %v4313, 0.0
  %v4538 = vmax.f32 %v4314, 0.0
  %v4539 = vmax.f32 %v4315, 0.0
  %v4540 = vmax.f32 %v4316, 0.0
  %v4541 = vmax.f32 %v4317, 0.0
  %v4542 = vmax.f32 %v4318, 0.0
  %v4543 = vmax.f32 %v4319, 0.0
  %v4544 = vmax.f32 %v4320, 0.0
  %v4545 = vmax.f32 %v4321, 0.0
  %v4546 = vmax.f32 %v4322, 0.0
  %v4547 = vmax.f32 %v4323, 0.0
  %v4548 = vmax.f32 %v4324, 0.0
  %v4549 = vmax.f32 %v4325, 0.0
  %v4550 = vmax.f32 %v4326, 0.0
  %v4551 = vmax.f32 %v4327, 0.0
  %v4552 = vmax.f32 %v4328, 0.0
  %v4553 = vmax.f32 %v4329, 0.0
  %v4554 = vmax.f32 %v4330, 0.0
  %v4555 = vmax.f32 %v4331, 0.0
  %v4556 = vmax.f32 %v4332, 0.0
  %v4557 = vmax.f32 %v4333, 0.0
  %v4558 = vmax.f32 %v4334, 0.0
  %v4559 = vmax.f32 %v4335, 0.0
  %v4560 = vmax.f32 %v4336, 0.0
  %v4561 = vmax.f32 %v4337, 0.0
  %v4562 = vmax.f32 %v4338, 0.0
  %v4563 = vmax.f32 %v4339, 0.0
  %v4564 = vmax.f32 %v4340, 0.0
  %v4565 = vmax.f32 %v4341, 0.0
  %v4566 = vmax.f32 %v4342, 0.0
  %v4567 = vmax.f32 %v4343, 0.0
  %v4568 = vmax.f32 %v4344, 0.0
  %v4569 = vmax.f32 %v4345, 0.0
  %v4570 = vmax.f32 %v4346, 0.0
  %v4571 = vmax.f32 %v4347, 0.0
  %v4572 = vmax.f32 %v4348, 0.0
  %v4573 = vmax.f32 %v4349, 0.0
  %v4574 = vmax.f32 %v4350, 0.0
  %v4575 = vmax.f32 %v4351, 0.0
  %v4576 = vmax.f32 %v4352, 0.0
  %v4577 = vmax.f32 %v4353, 0.0
  %v4578 = vmax.f32 %v4354, 0.0
  %v4579 = vmax.f32 %v4355, 0.0
  %v4580 = vmax.f32 %v4356, 0.0
  %v4581 = vmax.f32 %v4357, 0.0
  %v4582 = vmax.f32 %v4358, 0.0
  %v4583 = vmax.f32 %v4359, 0.0
  %v4584 = vmax.f32 %v4360, 0.0
  %v4585 = vmax.f32 %v4361, 0.0
  %v4586 = vmax.f32 %v4362, 0.0
  %v4587 = vmax.f32 %v4363, 0.0
  %v4588 = vmax.f32 %v4364, 0.0
  %v4589 = vmax.f32 %v4365, 0.0
  %v4590 = vmax.f32 %v4366, 0.0
  %v4591 = vmax.f32 %v4367, 0.0
  %v4592 = vmax.f32 %v4368, 0.0
  %v4593 = vmax.f32 %v4369, 0.0
  %v4594 = vmax.f32 %v4370, 0.0
  %v4595 = vmax.f32 %v4371, 0.0
  %v4596 = vmax.f32 %v4372, 0.0
  %v4597 = vmax.f32 %v4373, 0.0
  %v4598 = vmax.f32 %v4374, 0.0
  %v4599 = vmax.f32 %v4375, 0.0
  %v4600 = vmax.f32 %v4376, 0.0
  %v4601 = vmax.f32 %v4377, 0.0
  %v4602 = vmax.f32 %v4378, 0.0
  %v4603 = vmax.f32 %v4379, 0.0
  %v4604 = vmax.f32 %v4380, 0.0
  %v4605 = vmax.f32 %v4381, 0.0
  %v4606 = vmax.f32 %v4382, 0.0
  %v4607 = vmax.f32 %v4383, 0.0
  %v4608 = vmax.f32 %v4384, 0.0
  %v4609 = vmax.f32 %v4385, 0.0
  %v4610 = vmax.f32 %v4386, 0.0
  %v4611 = vmax.f32 %v4387, 0.0
  %v4612 = vmax.f32 %v4388, 0.0
  %v4613 = vmax.f32 %v4389, 0.0
  %v4614 = vmax.f32 %v4390, 0.0
  %v4615 = vmax.f32 %v4391, 0.0
  %v4616 = vmax.f32 %v4392, 0.0
  %v4617 = vmax.f32 %v4393, 0.0
  %v4618 = vmax.f32 %v4394, 0.0
  %v4619 = vmax.f32 %v4395, 0.0
  %v4620 = vmax.f32 %v4396, 0.0
  %v4621 = vmax.f32 %v4397, 0.0
  %v4622 = vmax.f32 %v4398, 0.0
  %v4623 = vmax.f32 %v4399, 0.0
  %v4624 = vmax.f32 %v4400, 0.0
  %v4625 = vmax.f32 %v4401, 0.0
  %v4626 = vmax.f32 %v4402, 0.0
  %v4627 = vmax.f32 %v4403, 0.0
  %v4628 = vmax.f32 %v4404, 0.0
  %v4629 = vmax.f32 %v4405, 0.0
  %v4630 = vmax.f32 %v4406, 0.0
  %v4631 = vmax.f32 %v4407, 0.0
  %v4632 = vmax.f32 %v4408, 0.0
  %v4633 = vmax.f32 %v4409, 0.0
  %v4634 = vmax.f32 %v4410, 0.0
  %v4635 = vmax.f32 %v4411, 0.0
  %v4636 = vmax.f32 %v4412, 0.0
  %v4637 = vmax.f32 %v4413, 0.0
  %v4638 = vmax.f32 %v4414, 0.0
  %v4639 = vmax.f32 %v4415, 0.0
  %v4640 = vmax.f32 %v4416, 0.0
  %v4641 = vmax.f32 %v4417, 0.0
  %v4642 = vmax.f32 %v4418, 0.0
  %v4643 = vmax.f32 %v4419, 0.0
  %v4644 = vmax.f32 %v4420, 0.0
  %v4645 = vmax.f32 %v4421, 0.0
  %v4646 = vmax.f32 %v4422, 0.0
  %v4647 = vmax.f32 %v4423, 0.0
  %v4648 = vmax.f32 %v4424, 0.0
  %v4649 = vmax.f32 %v4425, 0.0
  %v4650 = vmax.f32 %v4426, 0.0
  %v4651 = vmax.f32 %v4427, 0.0
  %v4652 = vmax.f32 %v4428, 0.0
  %v4653 = vmax.f32 %v4429, 0.0
  %v4654 = vmax.f32 %v4430, 0.0
  %v4655 = vmax.f32 %v4431, 0.0
  %v4656 = vmax.f32 %v4432, 0.0
  %v4657 = vmax.f32 %v4433, 0.0
  %v4658 = vmax.f32 %v4434, 0.0
  %v4659 = vmax.f32 %v4435, 0.0
  %v4660 = vmax.f32 %v4436, 0.0
  %v4661 = vmax.f32 %v4437, 0.0
  %v4662 = vpack.c.bf16 %v4442, %v4438
  %v4663 = vpack.c.bf16 %v4443, %v4439
  %v4664 = vpack.c.bf16 %v4444, %v4440
  %v4665 = vpack.c.bf16 %v4445, %v4441
  %v4666 = vpack.c.bf16 %v4450, %v4446
  %v4667 = vpack.c.bf16 %v4451, %v4447
  %v4668 = vpack.c.bf16 %v4452, %v4448
  %v4669 = vpack.c.bf16 %v4453, %v4449
  %v4670 = vpack.c.bf16 %v4458, %v4454
  %v4671 = vpack.c.bf16 %v4459, %v4455
  %v4672 = vpack.c.bf16 %v4460, %v4456
  %v4673 = vpack.c.bf16 %v4461, %v4457
  %v4674 = vpack.c.bf16 %v4466, %v4462
  %v4675 = vpack.c.bf16 %v4467, %v4463
  %v4676 = vpack.c.bf16 %v4468, %v4464
  %v4677 = vpack.c.bf16 %v4469, %v4465
  %v4678 = vpack.c.bf16 %v4474, %v4470
  %v4679 = vpack.c.bf16 %v4475, %v4471
  %v4680 = vpack.c.bf16 %v4476, %v4472
  %v4681 = vpack.c.bf16 %v4477, %v4473
  %v4682 = vpack.c.bf16 %v4482, %v4478
  %v4683 = vpack.c.bf16 %v4483, %v4479
  %v4684 = vpack.c.bf16 %v4484, %v4480
  %v4685 = vpack.c.bf16 %v4485, %v4481
  %v4686 = vpack.c.bf16 %v4490, %v4486
  %v4687 = vpack.c.bf16 %v4491, %v4487
  %v4688 = vpack.c.bf16 %v4492, %v4488
  %v4689 = vpack.c.bf16 %v4493, %v4489
  %v4690 = vpack.c.bf16 %v4498, %v4494
  %v4691 = vpack.c.bf16 %v4499, %v4495
  %v4692 = vpack.c.bf16 %v4500, %v4496
  %v4693 = vpack.c.bf16 %v4501, %v4497
  %v4694 = vpack.c.bf16 %v4506, %v4502
  %v4695 = vpack.c.bf16 %v4507, %v4503
  %v4696 = vpack.c.bf16 %v4508, %v4504
  %v4697 = vpack.c.bf16 %v4509, %v4505
  %v4698 = vpack.c.bf16 %v4514, %v4510
  %v4699 = vpack.c.bf16 %v4515, %v4511
  %v4700 = vpack.c.bf16 %v4516, %v4512
  %v4701 = vpack.c.bf16 %v4517, %v4513
  %v4702 = vpack.c.bf16 %v4522, %v4518
  %v4703 = vpack.c.bf16 %v4523, %v4519
  %v4704 = vpack.c.bf16 %v4524, %v4520
  %v4705 = vpack.c.bf16 %v4525, %v4521
  %v4706 = vpack.c.bf16 %v4530, %v4526
  %v4707 = vpack.c.bf16 %v4531, %v4527
  %v4708 = vpack.c.bf16 %v4532, %v4528
  %v4709 = vpack.c.bf16 %v4533, %v4529
  %v4710 = vpack.c.bf16 %v4538, %v4534
  %v4711 = vpack.c.bf16 %v4539, %v4535
  %v4712 = vpack.c.bf16 %v4540, %v4536
  %v4713 = vpack.c.bf16 %v4541, %v4537
  %v4714 = vpack.c.bf16 %v4546, %v4542
  %v4715 = vpack.c.bf16 %v4547, %v4543
  %v4716 = vpack.c.bf16 %v4548, %v4544
  %v4717 = vpack.c.bf16 %v4549, %v4545
  %v4718 = vpack.c.bf16 %v4554, %v4550
  %v4719 = vpack.c.bf16 %v4555, %v4551
  %v4720 = vpack.c.bf16 %v4556, %v4552
  %v4721 = vpack.c.bf16 %v4557, %v4553
  %v4722 = vpack.c.bf16 %v4562, %v4558
  %v4723 = vpack.c.bf16 %v4563, %v4559
  %v4724 = vpack.c.bf16 %v4564, %v4560
  %v4725 = vpack.c.bf16 %v4565, %v4561
  %v4726 = vpack.c.bf16 %v4570, %v4566
  %v4727 = vpack.c.bf16 %v4571, %v4567
  %v4728 = vpack.c.bf16 %v4572, %v4568
  %v4729 = vpack.c.bf16 %v4573, %v4569
  %v4730 = vpack.c.bf16 %v4578, %v4574
  %v4731 = vpack.c.bf16 %v4579, %v4575
  %v4732 = vpack.c.bf16 %v4580, %v4576
  %v4733 = vpack.c.bf16 %v4581, %v4577
  %v4734 = vpack.c.bf16 %v4586, %v4582
  %v4735 = vpack.c.bf16 %v4587, %v4583
  %v4736 = vpack.c.bf16 %v4588, %v4584
  %v4737 = vpack.c.bf16 %v4589, %v4585
  %v4738 = vpack.c.bf16 %v4594, %v4590
  %v4739 = vpack.c.bf16 %v4595, %v4591
  %v4740 = vpack.c.bf16 %v4596, %v4592
  %v4741 = vpack.c.bf16 %v4597, %v4593
  %v4742 = vpack.c.bf16 %v4602, %v4598
  %v4743 = vpack.c.bf16 %v4603, %v4599
  %v4744 = vpack.c.bf16 %v4604, %v4600
  %v4745 = vpack.c.bf16 %v4605, %v4601
  %v4746 = vpack.c.bf16 %v4610, %v4606
  %v4747 = vpack.c.bf16 %v4611, %v4607
  %v4748 = vpack.c.bf16 %v4612, %v4608
  %v4749 = vpack.c.bf16 %v4613, %v4609
  %v4750 = vpack.c.bf16 %v4618, %v4614
  %v4751 = vpack.c.bf16 %v4619, %v4615
  %v4752 = vpack.c.bf16 %v4620, %v4616
  %v4753 = vpack.c.bf16 %v4621, %v4617
  %v4754 = vpack.c.bf16 %v4626, %v4622
  %v4755 = vpack.c.bf16 %v4627, %v4623
  %v4756 = vpack.c.bf16 %v4628, %v4624
  %v4757 = vpack.c.bf16 %v4629, %v4625
  %v4758 = vpack.c.bf16 %v4634, %v4630
  %v4759 = vpack.c.bf16 %v4635, %v4631
  %v4760 = vpack.c.bf16 %v4636, %v4632
  %v4761 = vpack.c.bf16 %v4637, %v4633
  %v4762 = vpack.c.bf16 %v4642, %v4638
  %v4763 = vpack.c.bf16 %v4643, %v4639
  %v4764 = vpack.c.bf16 %v4644, %v4640
  %v4765 = vpack.c.bf16 %v4645, %v4641
  %v4766 = vpack.c.bf16 %v4650, %v4646
  %v4767 = vpack.c.bf16 %v4651, %v4647
  %v4768 = vpack.c.bf16 %v4652, %v4648
  %v4769 = vpack.c.bf16 %v4653, %v4649
  %v4770 = vpack.c.bf16 %v4658, %v4654
  %v4771 = vpack.c.bf16 %v4659, %v4655
  %v4772 = vpack.c.bf16 %v4660, %v4656
  %v4773 = vpack.c.bf16 %v4661, %v4657
  %v4774 = vld [vmem:[%s3] sm:$0xf]
  %v4775 = vld [vmem:[%s3 + $0x4] sm:$0xf]
  %v4776 = vld [vmem:[%s3 + $0x8] sm:$0xf]
  %v4777 = vld [vmem:[%s3 + $0xc] sm:$0xf]
  %v4778 = vld [vmem:[%s3 + $0x10] sm:$0xf]
  %v4779 = vld [vmem:[%s3 + $0x14] sm:$0xf]
  %v4780 = vld [vmem:[%s3 + $0x18] sm:$0xf]
  %v4781 = vld [vmem:[%s3 + $0x1c] sm:$0xf]
  %v4782 = vld [vmem:[%s3 + $0x20] sm:$0xf]
  %v4783 = vld [vmem:[%s3 + $0x24] sm:$0xf]
  %v4784 = vld [vmem:[%s3 + $0x28] sm:$0xf]
  %v4785 = vld [vmem:[%s3 + $0x2c] sm:$0xf]
  %v4786 = vld [vmem:[%s3 + $0x30] sm:$0xf]
  %v4787 = vld [vmem:[%s3 + $0x34] sm:$0xf]
  %v4788 = vld [vmem:[%s3 + $0x38] sm:$0xf]
  %v4789 = vld [vmem:[%s3 + $0x3c] sm:$0xf]
  %v4790 = vld [vmem:[%s3 + $0x40] sm:$0xf]
  %v4791 = vld [vmem:[%s3 + $0x44] sm:$0xf]
  %v4792 = vld [vmem:[%s3 + $0x48] sm:$0xf]
  %v4793 = vld [vmem:[%s3 + $0x4c] sm:$0xf]
  %v4794 = vld [vmem:[%s3 + $0x50] sm:$0xf]
  %v4795 = vld [vmem:[%s3 + $0x54] sm:$0xf]
  %v4796 = vld [vmem:[%s3 + $0x58] sm:$0xf]
  %v4797 = vld [vmem:[%s3 + $0x5c] sm:$0xf]
  %v4798 = vld [vmem:[%s3 + $0x60] sm:$0xf]
  %v4799 = vld [vmem:[%s3 + $0x64] sm:$0xf]
  %v4800 = vld [vmem:[%s3 + $0x68] sm:$0xf]
  %v4801 = vld [vmem:[%s3 + $0x6c] sm:$0xf]
  %v4802 = vld [vmem:[%s3 + $0x70] sm:$0xf]
  %v4803 = vld [vmem:[%s3 + $0x74] sm:$0xf]
  %v4804 = vld [vmem:[%s3 + $0x78] sm:$0xf]
  %v4805 = vld [vmem:[%s3 + $0x7c] sm:$0xf]
  %v4806 = vld [vmem:[%s3 + $0x80] sm:$0xf]
  %v4807 = vld [vmem:[%s3 + $0x84] sm:$0xf]
  %v4808 = vld [vmem:[%s3 + $0x88] sm:$0xf]
  %v4809 = vld [vmem:[%s3 + $0x8c] sm:$0xf]
  %v4810 = vld [vmem:[%s3 + $0x90] sm:$0xf]
  %v4811 = vld [vmem:[%s3 + $0x94] sm:$0xf]
  %v4812 = vld [vmem:[%s3 + $0x98] sm:$0xf]
  %v4813 = vld [vmem:[%s3 + $0x9c] sm:$0xf]
  %v4814 = vld [vmem:[%s3 + $0xa0] sm:$0xf]
  %v4815 = vld [vmem:[%s3 + $0xa4] sm:$0xf]
  %v4816 = vld [vmem:[%s3 + $0xa8] sm:$0xf]
  %v4817 = vld [vmem:[%s3 + $0xac] sm:$0xf]
  %v4818 = vld [vmem:[%s3 + $0xb0] sm:$0xf]
  %v4819 = vld [vmem:[%s3 + $0xb4] sm:$0xf]
  %v4820 = vld [vmem:[%s3 + $0xb8] sm:$0xf]
  %v4821 = vld [vmem:[%s3 + $0xbc] sm:$0xf]
  %v4822 = vld [vmem:[%s3 + $0xc0] sm:$0xf]
  %v4823 = vld [vmem:[%s3 + $0xc4] sm:$0xf]
  %v4824 = vld [vmem:[%s3 + $0xc8] sm:$0xf]
  %v4825 = vld [vmem:[%s3 + $0xcc] sm:$0xf]
  %v4826 = vld [vmem:[%s3 + $0xd0] sm:$0xf]
  %v4827 = vld [vmem:[%s3 + $0xd4] sm:$0xf]
  %v4828 = vld [vmem:[%s3 + $0xd8] sm:$0xf]
  %v4829 = vld [vmem:[%s3 + $0xdc] sm:$0xf]
  %v4830 = vld [vmem:[%s3 + $0xe0] sm:$0xf]
  %v4831 = vld [vmem:[%s3 + $0xe4] sm:$0xf]
  %v4832 = vld [vmem:[%s3 + $0xe8] sm:$0xf]
  %v4833 = vld [vmem:[%s3 + $0xec] sm:$0xf]
  %v4834 = vld [vmem:[%s3 + $0xf0] sm:$0xf]
  %v4835 = vld [vmem:[%s3 + $0xf4] sm:$0xf]
  %v4836 = vld [vmem:[%s3 + $0xf8] sm:$0xf]
  %v4837 = vld [vmem:[%s3 + $0xfc] sm:$0xf]
  %s4838 = scalar_lea.vmem %s3, 256
  %v4839 = vld [vmem:[%s4838] sm:$0xf]
  %v4840 = vld [vmem:[%s4838 + $0x4] sm:$0xf]
  %v4841 = vld [vmem:[%s4838 + $0x8] sm:$0xf]
  %v4842 = vld [vmem:[%s4838 + $0xc] sm:$0xf]
  %v4843 = vld [vmem:[%s4838 + $0x10] sm:$0xf]
  %v4844 = vld [vmem:[%s4838 + $0x14] sm:$0xf]
  %v4845 = vld [vmem:[%s4838 + $0x18] sm:$0xf]
  %v4846 = vld [vmem:[%s4838 + $0x1c] sm:$0xf]
  %v4847 = vld [vmem:[%s4838 + $0x20] sm:$0xf]
  %v4848 = vld [vmem:[%s4838 + $0x24] sm:$0xf]
  %v4849 = vld [vmem:[%s4838 + $0x28] sm:$0xf]
  %v4850 = vld [vmem:[%s4838 + $0x2c] sm:$0xf]
  %v4851 = vld [vmem:[%s4838 + $0x30] sm:$0xf]
  %v4852 = vld [vmem:[%s4838 + $0x34] sm:$0xf]
  %v4853 = vld [vmem:[%s4838 + $0x38] sm:$0xf]
  %v4854 = vld [vmem:[%s4838 + $0x3c] sm:$0xf]
  %v4855 = vld [vmem:[%s4838 + $0x40] sm:$0xf]
  %v4856 = vld [vmem:[%s4838 + $0x44] sm:$0xf]
  %v4857 = vld [vmem:[%s4838 + $0x48] sm:$0xf]
  %v4858 = vld [vmem:[%s4838 + $0x4c] sm:$0xf]
  %v4859 = vld [vmem:[%s4838 + $0x50] sm:$0xf]
  %v4860 = vld [vmem:[%s4838 + $0x54] sm:$0xf]
  %v4861 = vld [vmem:[%s4838 + $0x58] sm:$0xf]
  %v4862 = vld [vmem:[%s4838 + $0x5c] sm:$0xf]
  %v4863 = vld [vmem:[%s4838 + $0x60] sm:$0xf]
  %v4864 = vld [vmem:[%s4838 + $0x64] sm:$0xf]
  %v4865 = vld [vmem:[%s4838 + $0x68] sm:$0xf]
  %v4866 = vld [vmem:[%s4838 + $0x6c] sm:$0xf]
  %v4867 = vld [vmem:[%s4838 + $0x70] sm:$0xf]
  %v4868 = vld [vmem:[%s4838 + $0x74] sm:$0xf]
  %v4869 = vld [vmem:[%s4838 + $0x78] sm:$0xf]
  %v4870 = vld [vmem:[%s4838 + $0x7c] sm:$0xf]
  %v4871 = vld [vmem:[%s4838 + $0x80] sm:$0xf]
  %v4872 = vld [vmem:[%s4838 + $0x84] sm:$0xf]
  %v4873 = vld [vmem:[%s4838 + $0x88] sm:$0xf]
  %v4874 = vld [vmem:[%s4838 + $0x8c] sm:$0xf]
  %v4875 = vld [vmem:[%s4838 + $0x90] sm:$0xf]
  %v4876 = vld [vmem:[%s4838 + $0x94] sm:$0xf]
  %v4877 = vld [vmem:[%s4838 + $0x98] sm:$0xf]
  %v4878 = vld [vmem:[%s4838 + $0x9c] sm:$0xf]
  %v4879 = vld [vmem:[%s4838 + $0xa0] sm:$0xf]
  %v4880 = vld [vmem:[%s4838 + $0xa4] sm:$0xf]
  %v4881 = vld [vmem:[%s4838 + $0xa8] sm:$0xf]
  %v4882 = vld [vmem:[%s4838 + $0xac] sm:$0xf]
  %v4883 = vld [vmem:[%s4838 + $0xb0] sm:$0xf]
  %v4884 = vld [vmem:[%s4838 + $0xb4] sm:$0xf]
  %v4885 = vld [vmem:[%s4838 + $0xb8] sm:$0xf]
  %v4886 = vld [vmem:[%s4838 + $0xbc] sm:$0xf]
  %v4887 = vld [vmem:[%s4838 + $0xc0] sm:$0xf]
  %v4888 = vld [vmem:[%s4838 + $0xc4] sm:$0xf]
  %v4889 = vld [vmem:[%s4838 + $0xc8] sm:$0xf]
  %v4890 = vld [vmem:[%s4838 + $0xcc] sm:$0xf]
  %v4891 = vld [vmem:[%s4838 + $0xd0] sm:$0xf]
  %v4892 = vld [vmem:[%s4838 + $0xd4] sm:$0xf]
  %v4893 = vld [vmem:[%s4838 + $0xd8] sm:$0xf]
  %v4894 = vld [vmem:[%s4838 + $0xdc] sm:$0xf]
  %v4895 = vld [vmem:[%s4838 + $0xe0] sm:$0xf]
  %v4896 = vld [vmem:[%s4838 + $0xe4] sm:$0xf]
  %v4897 = vld [vmem:[%s4838 + $0xe8] sm:$0xf]
  %v4898 = vld [vmem:[%s4838 + $0xec] sm:$0xf]
  %v4899 = vld [vmem:[%s4838 + $0xf0] sm:$0xf]
  %v4900 = vld [vmem:[%s4838 + $0xf4] sm:$0xf]
  %v4901 = vld [vmem:[%s4838 + $0xf8] sm:$0xf]
  %v4902 = vld [vmem:[%s4838 + $0xfc] sm:$0xf]
  %v4967 = vunpack.c.l.b16 %v4839
  %v4968 = vunpack.c.l.b16 %v4840
  %v4969 = vunpack.c.l.b16 %v4841
  %v4970 = vunpack.c.l.b16 %v4842
  %v4971 = vunpack.c.l.b16 %v4843
  %v4972 = vunpack.c.l.b16 %v4844
  %v4973 = vunpack.c.l.b16 %v4845
  %v4974 = vunpack.c.l.b16 %v4846
  %v4975 = vunpack.c.l.b16 %v4847
  %v4976 = vunpack.c.l.b16 %v4848
  %v4977 = vunpack.c.l.b16 %v4849
  %v4978 = vunpack.c.l.b16 %v4850
  %v4979 = vunpack.c.l.b16 %v4851
  %v4980 = vunpack.c.l.b16 %v4852
  %v4981 = vunpack.c.l.b16 %v4853
  %v4982 = vunpack.c.l.b16 %v4854
  %v4983 = vunpack.c.l.b16 %v4855
  %v4984 = vunpack.c.l.b16 %v4856
  %v4985 = vunpack.c.l.b16 %v4857
  %v4986 = vunpack.c.l.b16 %v4858
  %v4987 = vunpack.c.l.b16 %v4859
  %v4988 = vunpack.c.l.b16 %v4860
  %v4989 = vunpack.c.l.b16 %v4861
  %v4990 = vunpack.c.l.b16 %v4862
  %v4991 = vunpack.c.l.b16 %v4863
  %v4992 = vunpack.c.l.b16 %v4864
  %v4993 = vunpack.c.l.b16 %v4865
  %v4994 = vunpack.c.l.b16 %v4866
  %v4995 = vunpack.c.l.b16 %v4867
  %v4996 = vunpack.c.l.b16 %v4868
  %v4997 = vunpack.c.l.b16 %v4869
  %v4998 = vunpack.c.l.b16 %v4870
  %v4999 = vunpack.c.l.b16 %v4871
  %v5000 = vunpack.c.l.b16 %v4872
  %v5001 = vunpack.c.l.b16 %v4873
  %v5002 = vunpack.c.l.b16 %v4874
  %v5003 = vunpack.c.l.b16 %v4875
  %v5004 = vunpack.c.l.b16 %v4876
  %v5005 = vunpack.c.l.b16 %v4877
  %v5006 = vunpack.c.l.b16 %v4878
  %v5007 = vunpack.c.l.b16 %v4879
  %v5008 = vunpack.c.l.b16 %v4880
  %v5009 = vunpack.c.l.b16 %v4881
  %v5010 = vunpack.c.l.b16 %v4882
  %v5011 = vunpack.c.l.b16 %v4883
  %v5012 = vunpack.c.l.b16 %v4884
  %v5013 = vunpack.c.l.b16 %v4885
  %v5014 = vunpack.c.l.b16 %v4886
  %v5015 = vunpack.c.l.b16 %v4887
  %v5016 = vunpack.c.l.b16 %v4888
  %v5017 = vunpack.c.l.b16 %v4889
  %v5018 = vunpack.c.l.b16 %v4890
  %v5019 = vunpack.c.l.b16 %v4891
  %v5020 = vunpack.c.l.b16 %v4892
  %v5021 = vunpack.c.l.b16 %v4893
  %v5022 = vunpack.c.l.b16 %v4894
  %v5023 = vunpack.c.l.b16 %v4895
  %v5024 = vunpack.c.l.b16 %v4896
  %v5025 = vunpack.c.l.b16 %v4897
  %v5026 = vunpack.c.l.b16 %v4898
  %v5027 = vunpack.c.l.b16 %v4899
  %v5028 = vunpack.c.l.b16 %v4900
  %v5029 = vunpack.c.l.b16 %v4901
  %v5030 = vunpack.c.l.b16 %v4902
  %v5031 = vpack.c.b16 %v4968, %v4967
  %v5032 = vpack.c.b16 %v4970, %v4969
  %v5033 = vpack.c.b16 %v4972, %v4971
  %v5034 = vpack.c.b16 %v4974, %v4973
  %v5035 = vpack.c.b16 %v4976, %v4975
  %v5036 = vpack.c.b16 %v4978, %v4977
  %v5037 = vpack.c.b16 %v4980, %v4979
  %v5038 = vpack.c.b16 %v4982, %v4981
  %v5039 = vpack.c.b16 %v4984, %v4983
  %v5040 = vpack.c.b16 %v4986, %v4985
  %v5041 = vpack.c.b16 %v4988, %v4987
  %v5042 = vpack.c.b16 %v4990, %v4989
  %v5043 = vpack.c.b16 %v4992, %v4991
  %v5044 = vpack.c.b16 %v4994, %v4993
  %v5045 = vpack.c.b16 %v4996, %v4995
  %v5046 = vpack.c.b16 %v4998, %v4997
  %v5047 = vpack.c.b16 %v5000, %v4999
  %v5048 = vpack.c.b16 %v5002, %v5001
  %v5049 = vpack.c.b16 %v5004, %v5003
  %v5050 = vpack.c.b16 %v5006, %v5005
  %v5051 = vpack.c.b16 %v5008, %v5007
  %v5052 = vpack.c.b16 %v5010, %v5009
  %v5053 = vpack.c.b16 %v5012, %v5011
  %v5054 = vpack.c.b16 %v5014, %v5013
  %v5055 = vpack.c.b16 %v5016, %v5015
  %v5056 = vpack.c.b16 %v5018, %v5017
  %v5057 = vpack.c.b16 %v5020, %v5019
  %v5058 = vpack.c.b16 %v5022, %v5021
  %v5059 = vpack.c.b16 %v5024, %v5023
  %v5060 = vpack.c.b16 %v5026, %v5025
  %v5061 = vpack.c.b16 %v5028, %v5027
  %v5062 = vpack.c.b16 %v5030, %v5029
  %5095 = vmatprep.subr.bf16.mxu0 0
  %5096 = vmatpush1.bf16.msra.mxu0 %v5038
  %5097 = vmatprep.subr.bf16.mxu0 0
  %5098 = vmatpush1.bf16.msra.mxu0 %v5037
  %5099 = vmatprep.subr.bf16.mxu0 0
  %5100 = vmatpush1.bf16.msra.mxu0 %v5036
  %5101 = vmatprep.subr.bf16.mxu0 0
  %5102 = vmatpush1.bf16.msra.mxu0 %v5035
  %5103 = vmatprep.subr.bf16.mxu0 0
  %5104 = vmatpush1.bf16.msra.mxu0 %v5034
  %5105 = vmatprep.subr.bf16.mxu0 0
  %5106 = vmatpush1.bf16.msra.mxu0 %v5033
  %5107 = vmatprep.subr.bf16.mxu0 0
  %5108 = vmatpush1.bf16.msra.mxu0 %v5032
  %5109 = vmatprep.subr.bf16.mxu0 0
  %5110 = vmatpush1.bf16.msra.mxu0 %v5031
  %5111 = vmatprep.subr.bf16.mxu0 0
  %5112 = vmatpush2.bf16.msra.mxu0 %v5046
  %5113 = vmatprep.subr.bf16.mxu0 0
  %5114 = vmatpush2.bf16.msra.mxu0 %v5045
  %5115 = vmatprep.subr.bf16.mxu0 0
  %5116 = vmatpush2.bf16.msra.mxu0 %v5044
  %5117 = vmatprep.subr.bf16.mxu0 0
  %5118 = vmatpush2.bf16.msra.mxu0 %v5043
  %5119 = vmatprep.subr.bf16.mxu0 0
  %5120 = vmatpush2.bf16.msra.mxu0 %v5042
  %5121 = vmatprep.subr.bf16.mxu0 0
  %5122 = vmatpush2.bf16.msra.mxu0 %v5041
  %5123 = vmatprep.subr.bf16.mxu0 0
  %5124 = vmatpush2.bf16.msra.mxu0 %v5040
  %5125 = vmatprep.subr.bf16.mxu0 0
  %5126 = vmatpush2.bf16.msra.mxu0 %v5039
  %5127 = vmatprep.mubr.bf16.mxu0 %v4671
  %5128 = vmatmul.mubr.bf16.gmra.mxu0 %v4670
  %v5129 = vpop.f32.mrf.mxu0
  %v5130 = vadd.f32 0.0, %v5129
  %v5131 = vpop.f32.mrf.mxu0
  %v5132 = vpop.f32.mrf.mxu0
  %v5133 = vadd.f32 0.0, %v5132
  %v5134 = vpop.f32.mrf.mxu0
  %5135 = vmatprep.mubr.bf16.mxu0 %v4675
  %5136 = vmatmul.mubr.bf16.gmra.mxu0 %v4674
  %v5137 = vpop.f32.mrf.mxu0
  %v5138 = vadd.f32 0.0, %v5137
  %v5139 = vpop.f32.mrf.mxu0
  %v5140 = vpop.f32.mrf.mxu0
  %v5141 = vadd.f32 0.0, %v5140
  %v5142 = vpop.f32.mrf.mxu0
  %5143 = vdwg.mxu0
  %5144 = vmatprep.subr.bf16.mxu0 0
  %5145 = vmatpush1.bf16.msra.mxu0 %v5054
  %5146 = vmatprep.subr.bf16.mxu0 0
  %5147 = vmatpush1.bf16.msra.mxu0 %v5053
  %5148 = vmatprep.subr.bf16.mxu0 0
  %5149 = vmatpush1.bf16.msra.mxu0 %v5052
  %5150 = vmatprep.subr.bf16.mxu0 0
  %5151 = vmatpush1.bf16.msra.mxu0 %v5051
  %5152 = vmatprep.subr.bf16.mxu0 0
  %5153 = vmatpush1.bf16.msra.mxu0 %v5050
  %5154 = vmatprep.subr.bf16.mxu0 0
  %5155 = vmatpush1.bf16.msra.mxu0 %v5049
  %5156 = vmatprep.subr.bf16.mxu0 0
  %5157 = vmatpush1.bf16.msra.mxu0 %v5048
  %5158 = vmatprep.subr.bf16.mxu0 0
  %5159 = vmatpush1.bf16.msra.mxu0 %v5047
  %5160 = vmatprep.subr.bf16.mxu0 0
  %5161 = vmatpush2.bf16.msra.mxu0 %v5062
  %5162 = vmatprep.subr.bf16.mxu0 0
  %5163 = vmatpush2.bf16.msra.mxu0 %v5061
  %5164 = vmatprep.subr.bf16.mxu0 0
  %5165 = vmatpush2.bf16.msra.mxu0 %v5060
  %5166 = vmatprep.subr.bf16.mxu0 0
  %5167 = vmatpush2.bf16.msra.mxu0 %v5059
  %5168 = vmatprep.subr.bf16.mxu0 0
  %5169 = vmatpush2.bf16.msra.mxu0 %v5058
  %5170 = vmatprep.subr.bf16.mxu0 0
  %5171 = vmatpush2.bf16.msra.mxu0 %v5057
  %5172 = vmatprep.subr.bf16.mxu0 0
  %5173 = vmatpush2.bf16.msra.mxu0 %v5056
  %5174 = vmatprep.subr.bf16.mxu0 0
  %5175 = vmatpush2.bf16.msra.mxu0 %v5055
  %5176 = vmatprep.mubr.bf16.mxu0 %v4673
  %5177 = vmatmul.mubr.bf16.gmra.mxu0 %v4672
  %v5178 = vpop.f32.mrf.mxu0
  %v5179 = vadd.f32 %v5130, %v5178
  %v5180 = vpop.f32.mrf.mxu0
  %v5181 = vpop.f32.mrf.mxu0
  %v5182 = vadd.f32 %v5133, %v5181
  %v5183 = vpop.f32.mrf.mxu0
  %5184 = vmatprep.mubr.bf16.mxu0 %v4677
  %5185 = vmatmul.mubr.bf16.gmra.mxu0 %v4676
  %v5186 = vpop.f32.mrf.mxu0
  %v5187 = vadd.f32 %v5138, %v5186
  %v5188 = vpop.f32.mrf.mxu0
  %v5189 = vpop.f32.mrf.mxu0
  %v5190 = vadd.f32 %v5141, %v5189
  %v5191 = vpop.f32.mrf.mxu0
  %5192 = vdwg.mxu0
  %v5257 = vunpack.c.l.b16 %v4774
  %v5258 = vunpack.c.l.b16 %v4775
  %v5259 = vunpack.c.l.b16 %v4776
  %v5260 = vunpack.c.l.b16 %v4777
  %v5261 = vunpack.c.l.b16 %v4778
  %v5262 = vunpack.c.l.b16 %v4779
  %v5263 = vunpack.c.l.b16 %v4780
  %v5264 = vunpack.c.l.b16 %v4781
  %v5265 = vunpack.c.l.b16 %v4782
  %v5266 = vunpack.c.l.b16 %v4783
  %v5267 = vunpack.c.l.b16 %v4784
  %v5268 = vunpack.c.l.b16 %v4785
  %v5269 = vunpack.c.l.b16 %v4786
  %v5270 = vunpack.c.l.b16 %v4787
  %v5271 = vunpack.c.l.b16 %v4788
  %v5272 = vunpack.c.l.b16 %v4789
  %v5273 = vunpack.c.l.b16 %v4790
  %v5274 = vunpack.c.l.b16 %v4791
  %v5275 = vunpack.c.l.b16 %v4792
  %v5276 = vunpack.c.l.b16 %v4793
  %v5277 = vunpack.c.l.b16 %v4794
  %v5278 = vunpack.c.l.b16 %v4795
  %v5279 = vunpack.c.l.b16 %v4796
  %v5280 = vunpack.c.l.b16 %v4797
  %v5281 = vunpack.c.l.b16 %v4798
  %v5282 = vunpack.c.l.b16 %v4799
  %v5283 = vunpack.c.l.b16 %v4800
  %v5284 = vunpack.c.l.b16 %v4801
  %v5285 = vunpack.c.l.b16 %v4802
  %v5286 = vunpack.c.l.b16 %v4803
  %v5287 = vunpack.c.l.b16 %v4804
  %v5288 = vunpack.c.l.b16 %v4805
  %v5289 = vunpack.c.l.b16 %v4806
  %v5290 = vunpack.c.l.b16 %v4807
  %v5291 = vunpack.c.l.b16 %v4808
  %v5292 = vunpack.c.l.b16 %v4809
  %v5293 = vunpack.c.l.b16 %v4810
  %v5294 = vunpack.c.l.b16 %v4811
  %v5295 = vunpack.c.l.b16 %v4812
  %v5296 = vunpack.c.l.b16 %v4813
  %v5297 = vunpack.c.l.b16 %v4814
  %v5298 = vunpack.c.l.b16 %v4815
  %v5299 = vunpack.c.l.b16 %v4816
  %v5300 = vunpack.c.l.b16 %v4817
  %v5301 = vunpack.c.l.b16 %v4818
  %v5302 = vunpack.c.l.b16 %v4819
  %v5303 = vunpack.c.l.b16 %v4820
  %v5304 = vunpack.c.l.b16 %v4821
  %v5305 = vunpack.c.l.b16 %v4822
  %v5306 = vunpack.c.l.b16 %v4823
  %v5307 = vunpack.c.l.b16 %v4824
  %v5308 = vunpack.c.l.b16 %v4825
  %v5309 = vunpack.c.l.b16 %v4826
  %v5310 = vunpack.c.l.b16 %v4827
  %v5311 = vunpack.c.l.b16 %v4828
  %v5312 = vunpack.c.l.b16 %v4829
  %v5313 = vunpack.c.l.b16 %v4830
  %v5314 = vunpack.c.l.b16 %v4831
  %v5315 = vunpack.c.l.b16 %v4832
  %v5316 = vunpack.c.l.b16 %v4833
  %v5317 = vunpack.c.l.b16 %v4834
  %v5318 = vunpack.c.l.b16 %v4835
  %v5319 = vunpack.c.l.b16 %v4836
  %v5320 = vunpack.c.l.b16 %v4837
  %v5321 = vpack.c.b16 %v5258, %v5257
  %v5322 = vpack.c.b16 %v5260, %v5259
  %v5323 = vpack.c.b16 %v5262, %v5261
  %v5324 = vpack.c.b16 %v5264, %v5263
  %v5325 = vpack.c.b16 %v5266, %v5265
  %v5326 = vpack.c.b16 %v5268, %v5267
  %v5327 = vpack.c.b16 %v5270, %v5269
  %v5328 = vpack.c.b16 %v5272, %v5271
  %v5329 = vpack.c.b16 %v5274, %v5273
  %v5330 = vpack.c.b16 %v5276, %v5275
  %v5331 = vpack.c.b16 %v5278, %v5277
  %v5332 = vpack.c.b16 %v5280, %v5279
  %v5333 = vpack.c.b16 %v5282, %v5281
  %v5334 = vpack.c.b16 %v5284, %v5283
  %v5335 = vpack.c.b16 %v5286, %v5285
  %v5336 = vpack.c.b16 %v5288, %v5287
  %v5337 = vpack.c.b16 %v5290, %v5289
  %v5338 = vpack.c.b16 %v5292, %v5291
  %v5339 = vpack.c.b16 %v5294, %v5293
  %v5340 = vpack.c.b16 %v5296, %v5295
  %v5341 = vpack.c.b16 %v5298, %v5297
  %v5342 = vpack.c.b16 %v5300, %v5299
  %v5343 = vpack.c.b16 %v5302, %v5301
  %v5344 = vpack.c.b16 %v5304, %v5303
  %v5345 = vpack.c.b16 %v5306, %v5305
  %v5346 = vpack.c.b16 %v5308, %v5307
  %v5347 = vpack.c.b16 %v5310, %v5309
  %v5348 = vpack.c.b16 %v5312, %v5311
  %v5349 = vpack.c.b16 %v5314, %v5313
  %v5350 = vpack.c.b16 %v5316, %v5315
  %v5351 = vpack.c.b16 %v5318, %v5317
  %v5352 = vpack.c.b16 %v5320, %v5319
  %5385 = vmatprep.subr.bf16.mxu0 0
  %5386 = vmatpush1.bf16.msra.mxu0 %v5328
  %5387 = vmatprep.subr.bf16.mxu0 0
  %5388 = vmatpush1.bf16.msra.mxu0 %v5327
  %5389 = vmatprep.subr.bf16.mxu0 0
  %5390 = vmatpush1.bf16.msra.mxu0 %v5326
  %5391 = vmatprep.subr.bf16.mxu0 0
  %5392 = vmatpush1.bf16.msra.mxu0 %v5325
  %5393 = vmatprep.subr.bf16.mxu0 0
  %5394 = vmatpush1.bf16.msra.mxu0 %v5324
  %5395 = vmatprep.subr.bf16.mxu0 0
  %5396 = vmatpush1.bf16.msra.mxu0 %v5323
  %5397 = vmatprep.subr.bf16.mxu0 0
  %5398 = vmatpush1.bf16.msra.mxu0 %v5322
  %5399 = vmatprep.subr.bf16.mxu0 0
  %5400 = vmatpush1.bf16.msra.mxu0 %v5321
  %5401 = vmatprep.subr.bf16.mxu0 0
  %5402 = vmatpush2.bf16.msra.mxu0 %v5336
  %5403 = vmatprep.subr.bf16.mxu0 0
  %5404 = vmatpush2.bf16.msra.mxu0 %v5335
  %5405 = vmatprep.subr.bf16.mxu0 0
  %5406 = vmatpush2.bf16.msra.mxu0 %v5334
  %5407 = vmatprep.subr.bf16.mxu0 0
  %5408 = vmatpush2.bf16.msra.mxu0 %v5333
  %5409 = vmatprep.subr.bf16.mxu0 0
  %5410 = vmatpush2.bf16.msra.mxu0 %v5332
  %5411 = vmatprep.subr.bf16.mxu0 0
  %5412 = vmatpush2.bf16.msra.mxu0 %v5331
  %5413 = vmatprep.subr.bf16.mxu0 0
  %5414 = vmatpush2.bf16.msra.mxu0 %v5330
  %5415 = vmatprep.subr.bf16.mxu0 0
  %5416 = vmatpush2.bf16.msra.mxu0 %v5329
  %5417 = vmatprep.mubr.bf16.mxu0 %v4663
  %5418 = vmatmul.mubr.bf16.gmra.mxu0 %v4662
  %v5419 = vpop.f32.mrf.mxu0
  %v5420 = vadd.f32 %v5179, %v5419
  %v5421 = vpop.f32.mrf.mxu0
  %v5422 = vpop.f32.mrf.mxu0
  %v5423 = vadd.f32 %v5182, %v5422
  %v5424 = vpop.f32.mrf.mxu0
  %5425 = vmatprep.mubr.bf16.mxu0 %v4667
  %5426 = vmatmul.mubr.bf16.gmra.mxu0 %v4666
  %v5427 = vpop.f32.mrf.mxu0
  %v5428 = vadd.f32 %v5187, %v5427
  %v5429 = vpop.f32.mrf.mxu0
  %v5430 = vpop.f32.mrf.mxu0
  %v5431 = vadd.f32 %v5190, %v5430
  %v5432 = vpop.f32.mrf.mxu0
  %5433 = vdwg.mxu0
  %5434 = vmatprep.subr.bf16.mxu0 0
  %5435 = vmatpush1.bf16.msra.mxu0 %v5344
  %5436 = vmatprep.subr.bf16.mxu0 0
  %5437 = vmatpush1.bf16.msra.mxu0 %v5343
  %5438 = vmatprep.subr.bf16.mxu0 0
  %5439 = vmatpush1.bf16.msra.mxu0 %v5342
  %5440 = vmatprep.subr.bf16.mxu0 0
  %5441 = vmatpush1.bf16.msra.mxu0 %v5341
  %5442 = vmatprep.subr.bf16.mxu0 0
  %5443 = vmatpush1.bf16.msra.mxu0 %v5340
  %5444 = vmatprep.subr.bf16.mxu0 0
  %5445 = vmatpush1.bf16.msra.mxu0 %v5339
  %5446 = vmatprep.subr.bf16.mxu0 0
  %5447 = vmatpush1.bf16.msra.mxu0 %v5338
  %5448 = vmatprep.subr.bf16.mxu0 0
  %5449 = vmatpush1.bf16.msra.mxu0 %v5337
  %5450 = vmatprep.subr.bf16.mxu0 0
  %5451 = vmatpush2.bf16.msra.mxu0 %v5352
  %5452 = vmatprep.subr.bf16.mxu0 0
  %5453 = vmatpush2.bf16.msra.mxu0 %v5351
  %5454 = vmatprep.subr.bf16.mxu0 0
  %5455 = vmatpush2.bf16.msra.mxu0 %v5350
  %5456 = vmatprep.subr.bf16.mxu0 0
  %5457 = vmatpush2.bf16.msra.mxu0 %v5349
  %5458 = vmatprep.subr.bf16.mxu0 0
  %5459 = vmatpush2.bf16.msra.mxu0 %v5348
  %5460 = vmatprep.subr.bf16.mxu0 0
  %5461 = vmatpush2.bf16.msra.mxu0 %v5347
  %5462 = vmatprep.subr.bf16.mxu0 0
  %5463 = vmatpush2.bf16.msra.mxu0 %v5346
  %5464 = vmatprep.subr.bf16.mxu0 0
  %5465 = vmatpush2.bf16.msra.mxu0 %v5345
  %5466 = vmatprep.mubr.bf16.mxu0 %v4665
  %5467 = vmatmul.mubr.bf16.gmra.mxu0 %v4664
  %v5468 = vpop.f32.mrf.mxu0
  %v5469 = vadd.f32 %v5420, %v5468
  %v5470 = vpop.f32.mrf.mxu0
  %v5471 = vpop.f32.mrf.mxu0
  %v5472 = vadd.f32 %v5423, %v5471
  %v5473 = vpop.f32.mrf.mxu0
  %5474 = vmatprep.mubr.bf16.mxu0 %v4669
  %5475 = vmatmul.mubr.bf16.gmra.mxu0 %v4668
  %v5476 = vpop.f32.mrf.mxu0
  %v5477 = vadd.f32 %v5428, %v5476
  %v5478 = vpop.f32.mrf.mxu0
  %v5479 = vpop.f32.mrf.mxu0
  %v5480 = vadd.f32 %v5431, %v5479
  %v5481 = vpop.f32.mrf.mxu0
  %5482 = vdwg.mxu0
  %s5483 = scalar_lea.vmem %s3, 512
  %v5484 = vld [vmem:[%s5483] sm:$0xf]
  %v5485 = vld [vmem:[%s5483 + $0x4] sm:$0xf]
  %v5486 = vld [vmem:[%s5483 + $0x8] sm:$0xf]
  %v5487 = vld [vmem:[%s5483 + $0xc] sm:$0xf]
  %v5488 = vld [vmem:[%s5483 + $0x10] sm:$0xf]
  %v5489 = vld [vmem:[%s5483 + $0x14] sm:$0xf]
  %v5490 = vld [vmem:[%s5483 + $0x18] sm:$0xf]
  %v5491 = vld [vmem:[%s5483 + $0x1c] sm:$0xf]
  %v5492 = vld [vmem:[%s5483 + $0x20] sm:$0xf]
  %v5493 = vld [vmem:[%s5483 + $0x24] sm:$0xf]
  %v5494 = vld [vmem:[%s5483 + $0x28] sm:$0xf]
  %v5495 = vld [vmem:[%s5483 + $0x2c] sm:$0xf]
  %v5496 = vld [vmem:[%s5483 + $0x30] sm:$0xf]
  %v5497 = vld [vmem:[%s5483 + $0x34] sm:$0xf]
  %v5498 = vld [vmem:[%s5483 + $0x38] sm:$0xf]
  %v5499 = vld [vmem:[%s5483 + $0x3c] sm:$0xf]
  %v5500 = vld [vmem:[%s5483 + $0x40] sm:$0xf]
  %v5501 = vld [vmem:[%s5483 + $0x44] sm:$0xf]
  %v5502 = vld [vmem:[%s5483 + $0x48] sm:$0xf]
  %v5503 = vld [vmem:[%s5483 + $0x4c] sm:$0xf]
  %v5504 = vld [vmem:[%s5483 + $0x50] sm:$0xf]
  %v5505 = vld [vmem:[%s5483 + $0x54] sm:$0xf]
  %v5506 = vld [vmem:[%s5483 + $0x58] sm:$0xf]
  %v5507 = vld [vmem:[%s5483 + $0x5c] sm:$0xf]
  %v5508 = vld [vmem:[%s5483 + $0x60] sm:$0xf]
  %v5509 = vld [vmem:[%s5483 + $0x64] sm:$0xf]
  %v5510 = vld [vmem:[%s5483 + $0x68] sm:$0xf]
  %v5511 = vld [vmem:[%s5483 + $0x6c] sm:$0xf]
  %v5512 = vld [vmem:[%s5483 + $0x70] sm:$0xf]
  %v5513 = vld [vmem:[%s5483 + $0x74] sm:$0xf]
  %v5514 = vld [vmem:[%s5483 + $0x78] sm:$0xf]
  %v5515 = vld [vmem:[%s5483 + $0x7c] sm:$0xf]
  %v5516 = vld [vmem:[%s5483 + $0x80] sm:$0xf]
  %v5517 = vld [vmem:[%s5483 + $0x84] sm:$0xf]
  %v5518 = vld [vmem:[%s5483 + $0x88] sm:$0xf]
  %v5519 = vld [vmem:[%s5483 + $0x8c] sm:$0xf]
  %v5520 = vld [vmem:[%s5483 + $0x90] sm:$0xf]
  %v5521 = vld [vmem:[%s5483 + $0x94] sm:$0xf]
  %v5522 = vld [vmem:[%s5483 + $0x98] sm:$0xf]
  %v5523 = vld [vmem:[%s5483 + $0x9c] sm:$0xf]
  %v5524 = vld [vmem:[%s5483 + $0xa0] sm:$0xf]
  %v5525 = vld [vmem:[%s5483 + $0xa4] sm:$0xf]
  %v5526 = vld [vmem:[%s5483 + $0xa8] sm:$0xf]
  %v5527 = vld [vmem:[%s5483 + $0xac] sm:$0xf]
  %v5528 = vld [vmem:[%s5483 + $0xb0] sm:$0xf]
  %v5529 = vld [vmem:[%s5483 + $0xb4] sm:$0xf]
  %v5530 = vld [vmem:[%s5483 + $0xb8] sm:$0xf]
  %v5531 = vld [vmem:[%s5483 + $0xbc] sm:$0xf]
  %v5532 = vld [vmem:[%s5483 + $0xc0] sm:$0xf]
  %v5533 = vld [vmem:[%s5483 + $0xc4] sm:$0xf]
  %v5534 = vld [vmem:[%s5483 + $0xc8] sm:$0xf]
  %v5535 = vld [vmem:[%s5483 + $0xcc] sm:$0xf]
  %v5536 = vld [vmem:[%s5483 + $0xd0] sm:$0xf]
  %v5537 = vld [vmem:[%s5483 + $0xd4] sm:$0xf]
  %v5538 = vld [vmem:[%s5483 + $0xd8] sm:$0xf]
  %v5539 = vld [vmem:[%s5483 + $0xdc] sm:$0xf]
  %v5540 = vld [vmem:[%s5483 + $0xe0] sm:$0xf]
  %v5541 = vld [vmem:[%s5483 + $0xe4] sm:$0xf]
  %v5542 = vld [vmem:[%s5483 + $0xe8] sm:$0xf]
  %v5543 = vld [vmem:[%s5483 + $0xec] sm:$0xf]
  %v5544 = vld [vmem:[%s5483 + $0xf0] sm:$0xf]
  %v5545 = vld [vmem:[%s5483 + $0xf4] sm:$0xf]
  %v5546 = vld [vmem:[%s5483 + $0xf8] sm:$0xf]
  %v5547 = vld [vmem:[%s5483 + $0xfc] sm:$0xf]
  %v5612 = vunpack.c.l.b16 %v5484
  %v5613 = vunpack.c.l.b16 %v5485
  %v5614 = vunpack.c.l.b16 %v5486
  %v5615 = vunpack.c.l.b16 %v5487
  %v5616 = vunpack.c.l.b16 %v5488
  %v5617 = vunpack.c.l.b16 %v5489
  %v5618 = vunpack.c.l.b16 %v5490
  %v5619 = vunpack.c.l.b16 %v5491
  %v5620 = vunpack.c.l.b16 %v5492
  %v5621 = vunpack.c.l.b16 %v5493
  %v5622 = vunpack.c.l.b16 %v5494
  %v5623 = vunpack.c.l.b16 %v5495
  %v5624 = vunpack.c.l.b16 %v5496
  %v5625 = vunpack.c.l.b16 %v5497
  %v5626 = vunpack.c.l.b16 %v5498
  %v5627 = vunpack.c.l.b16 %v5499
  %v5628 = vunpack.c.l.b16 %v5500
  %v5629 = vunpack.c.l.b16 %v5501
  %v5630 = vunpack.c.l.b16 %v5502
  %v5631 = vunpack.c.l.b16 %v5503
  %v5632 = vunpack.c.l.b16 %v5504
  %v5633 = vunpack.c.l.b16 %v5505
  %v5634 = vunpack.c.l.b16 %v5506
  %v5635 = vunpack.c.l.b16 %v5507
  %v5636 = vunpack.c.l.b16 %v5508
  %v5637 = vunpack.c.l.b16 %v5509
  %v5638 = vunpack.c.l.b16 %v5510
  %v5639 = vunpack.c.l.b16 %v5511
  %v5640 = vunpack.c.l.b16 %v5512
  %v5641 = vunpack.c.l.b16 %v5513
  %v5642 = vunpack.c.l.b16 %v5514
  %v5643 = vunpack.c.l.b16 %v5515
  %v5644 = vunpack.c.l.b16 %v5516
  %v5645 = vunpack.c.l.b16 %v5517
  %v5646 = vunpack.c.l.b16 %v5518
  %v5647 = vunpack.c.l.b16 %v5519
  %v5648 = vunpack.c.l.b16 %v5520
  %v5649 = vunpack.c.l.b16 %v5521
  %v5650 = vunpack.c.l.b16 %v5522
  %v5651 = vunpack.c.l.b16 %v5523
  %v5652 = vunpack.c.l.b16 %v5524
  %v5653 = vunpack.c.l.b16 %v5525
  %v5654 = vunpack.c.l.b16 %v5526
  %v5655 = vunpack.c.l.b16 %v5527
  %v5656 = vunpack.c.l.b16 %v5528
  %v5657 = vunpack.c.l.b16 %v5529
  %v5658 = vunpack.c.l.b16 %v5530
  %v5659 = vunpack.c.l.b16 %v5531
  %v5660 = vunpack.c.l.b16 %v5532
  %v5661 = vunpack.c.l.b16 %v5533
  %v5662 = vunpack.c.l.b16 %v5534
  %v5663 = vunpack.c.l.b16 %v5535
  %v5664 = vunpack.c.l.b16 %v5536
  %v5665 = vunpack.c.l.b16 %v5537
  %v5666 = vunpack.c.l.b16 %v5538
  %v5667 = vunpack.c.l.b16 %v5539
  %v5668 = vunpack.c.l.b16 %v5540
  %v5669 = vunpack.c.l.b16 %v5541
  %v5670 = vunpack.c.l.b16 %v5542
  %v5671 = vunpack.c.l.b16 %v5543
  %v5672 = vunpack.c.l.b16 %v5544
  %v5673 = vunpack.c.l.b16 %v5545
  %v5674 = vunpack.c.l.b16 %v5546
  %v5675 = vunpack.c.l.b16 %v5547
  %v5676 = vpack.c.b16 %v5613, %v5612
  %v5677 = vpack.c.b16 %v5615, %v5614
  %v5678 = vpack.c.b16 %v5617, %v5616
  %v5679 = vpack.c.b16 %v5619, %v5618
  %v5680 = vpack.c.b16 %v5621, %v5620
  %v5681 = vpack.c.b16 %v5623, %v5622
  %v5682 = vpack.c.b16 %v5625, %v5624
  %v5683 = vpack.c.b16 %v5627, %v5626
  %v5684 = vpack.c.b16 %v5629, %v5628
  %v5685 = vpack.c.b16 %v5631, %v5630
  %v5686 = vpack.c.b16 %v5633, %v5632
  %v5687 = vpack.c.b16 %v5635, %v5634
  %v5688 = vpack.c.b16 %v5637, %v5636
  %v5689 = vpack.c.b16 %v5639, %v5638
  %v5690 = vpack.c.b16 %v5641, %v5640
  %v5691 = vpack.c.b16 %v5643, %v5642
  %v5692 = vpack.c.b16 %v5645, %v5644
  %v5693 = vpack.c.b16 %v5647, %v5646
  %v5694 = vpack.c.b16 %v5649, %v5648
  %v5695 = vpack.c.b16 %v5651, %v5650
  %v5696 = vpack.c.b16 %v5653, %v5652
  %v5697 = vpack.c.b16 %v5655, %v5654
  %v5698 = vpack.c.b16 %v5657, %v5656
  %v5699 = vpack.c.b16 %v5659, %v5658
  %v5700 = vpack.c.b16 %v5661, %v5660
  %v5701 = vpack.c.b16 %v5663, %v5662
  %v5702 = vpack.c.b16 %v5665, %v5664
  %v5703 = vpack.c.b16 %v5667, %v5666
  %v5704 = vpack.c.b16 %v5669, %v5668
  %v5705 = vpack.c.b16 %v5671, %v5670
  %v5706 = vpack.c.b16 %v5673, %v5672
  %v5707 = vpack.c.b16 %v5675, %v5674
  %5740 = vmatprep.subr.bf16.mxu0 0
  %5741 = vmatpush1.bf16.msra.mxu0 %v5683
  %5742 = vmatprep.subr.bf16.mxu0 0
  %5743 = vmatpush1.bf16.msra.mxu0 %v5682
  %5744 = vmatprep.subr.bf16.mxu0 0
  %5745 = vmatpush1.bf16.msra.mxu0 %v5681
  %5746 = vmatprep.subr.bf16.mxu0 0
  %5747 = vmatpush1.bf16.msra.mxu0 %v5680
  %5748 = vmatprep.subr.bf16.mxu0 0
  %5749 = vmatpush1.bf16.msra.mxu0 %v5679
  %5750 = vmatprep.subr.bf16.mxu0 0
  %5751 = vmatpush1.bf16.msra.mxu0 %v5678
  %5752 = vmatprep.subr.bf16.mxu0 0
  %5753 = vmatpush1.bf16.msra.mxu0 %v5677
  %5754 = vmatprep.subr.bf16.mxu0 0
  %5755 = vmatpush1.bf16.msra.mxu0 %v5676
  %5756 = vmatprep.subr.bf16.mxu0 0
  %5757 = vmatpush2.bf16.msra.mxu0 %v5691
  %5758 = vmatprep.subr.bf16.mxu0 0
  %5759 = vmatpush2.bf16.msra.mxu0 %v5690
  %5760 = vmatprep.subr.bf16.mxu0 0
  %5761 = vmatpush2.bf16.msra.mxu0 %v5689
  %5762 = vmatprep.subr.bf16.mxu0 0
  %5763 = vmatpush2.bf16.msra.mxu0 %v5688
  %5764 = vmatprep.subr.bf16.mxu0 0
  %5765 = vmatpush2.bf16.msra.mxu0 %v5687
  %5766 = vmatprep.subr.bf16.mxu0 0
  %5767 = vmatpush2.bf16.msra.mxu0 %v5686
  %5768 = vmatprep.subr.bf16.mxu0 0
  %5769 = vmatpush2.bf16.msra.mxu0 %v5685
  %5770 = vmatprep.subr.bf16.mxu0 0
  %5771 = vmatpush2.bf16.msra.mxu0 %v5684
  %5772 = vmatprep.mubr.bf16.mxu0 %v4679
  %5773 = vmatmul.mubr.bf16.gmra.mxu0 %v4678
  %v5774 = vpop.f32.mrf.mxu0
  %v5775 = vadd.f32 0.0, %v5774
  %v5776 = vpop.f32.mrf.mxu0
  %v5777 = vpop.f32.mrf.mxu0
  %v5778 = vadd.f32 0.0, %v5777
  %v5779 = vpop.f32.mrf.mxu0
  %5780 = vmatprep.mubr.bf16.mxu0 %v4683
  %5781 = vmatmul.mubr.bf16.gmra.mxu0 %v4682
  %v5782 = vpop.f32.mrf.mxu0
  %v5783 = vadd.f32 0.0, %v5782
  %v5784 = vpop.f32.mrf.mxu0
  %v5785 = vpop.f32.mrf.mxu0
  %v5786 = vadd.f32 0.0, %v5785
  %v5787 = vpop.f32.mrf.mxu0
  %5788 = vdwg.mxu0
  %5789 = vmatprep.subr.bf16.mxu0 0
  %5790 = vmatpush1.bf16.msra.mxu0 %v5699
  %5791 = vmatprep.subr.bf16.mxu0 0
  %5792 = vmatpush1.bf16.msra.mxu0 %v5698
  %5793 = vmatprep.subr.bf16.mxu0 0
  %5794 = vmatpush1.bf16.msra.mxu0 %v5697
  %5795 = vmatprep.subr.bf16.mxu0 0
  %5796 = vmatpush1.bf16.msra.mxu0 %v5696
  %5797 = vmatprep.subr.bf16.mxu0 0
  %5798 = vmatpush1.bf16.msra.mxu0 %v5695
  %5799 = vmatprep.subr.bf16.mxu0 0
  %5800 = vmatpush1.bf16.msra.mxu0 %v5694
  %5801 = vmatprep.subr.bf16.mxu0 0
  %5802 = vmatpush1.bf16.msra.mxu0 %v5693
  %5803 = vmatprep.subr.bf16.mxu0 0
  %5804 = vmatpush1.bf16.msra.mxu0 %v5692
  %5805 = vmatprep.subr.bf16.mxu0 0
  %5806 = vmatpush2.bf16.msra.mxu0 %v5707
  %5807 = vmatprep.subr.bf16.mxu0 0
  %5808 = vmatpush2.bf16.msra.mxu0 %v5706
  %5809 = vmatprep.subr.bf16.mxu0 0
  %5810 = vmatpush2.bf16.msra.mxu0 %v5705
  %5811 = vmatprep.subr.bf16.mxu0 0
  %5812 = vmatpush2.bf16.msra.mxu0 %v5704
  %5813 = vmatprep.subr.bf16.mxu0 0
  %5814 = vmatpush2.bf16.msra.mxu0 %v5703
  %5815 = vmatprep.subr.bf16.mxu0 0
  %5816 = vmatpush2.bf16.msra.mxu0 %v5702
  %5817 = vmatprep.subr.bf16.mxu0 0
  %5818 = vmatpush2.bf16.msra.mxu0 %v5701
  %5819 = vmatprep.subr.bf16.mxu0 0
  %5820 = vmatpush2.bf16.msra.mxu0 %v5700
  %5821 = vmatprep.mubr.bf16.mxu0 %v4681
  %5822 = vmatmul.mubr.bf16.gmra.mxu0 %v4680
  %v5823 = vpop.f32.mrf.mxu0
  %v5824 = vadd.f32 %v5775, %v5823
  %v5825 = vpop.f32.mrf.mxu0
  %v5826 = vpop.f32.mrf.mxu0
  %v5827 = vadd.f32 %v5778, %v5826
  %v5828 = vpop.f32.mrf.mxu0
  %5829 = vmatprep.mubr.bf16.mxu0 %v4685
  %5830 = vmatmul.mubr.bf16.gmra.mxu0 %v4684
  %v5831 = vpop.f32.mrf.mxu0
  %v5832 = vadd.f32 %v5783, %v5831
  %v5833 = vpop.f32.mrf.mxu0
  %v5834 = vpop.f32.mrf.mxu0
  %v5835 = vadd.f32 %v5786, %v5834
  %v5836 = vpop.f32.mrf.mxu0
  %5837 = vdwg.mxu0
  %v5838 = vadd.f32 %v5469, %v5824
  %v5839 = vadd.f32 %v5472, %v5827
  %v5840 = vadd.f32 %v5477, %v5832
  %v5841 = vadd.f32 %v5480, %v5835
  %s5842 = scalar_lea.vmem %s3, 768
  %v5843 = vld [vmem:[%s5842] sm:$0xf]
  %v5844 = vld [vmem:[%s5842 + $0x4] sm:$0xf]
  %v5845 = vld [vmem:[%s5842 + $0x8] sm:$0xf]
  %v5846 = vld [vmem:[%s5842 + $0xc] sm:$0xf]
  %v5847 = vld [vmem:[%s5842 + $0x10] sm:$0xf]
  %v5848 = vld [vmem:[%s5842 + $0x14] sm:$0xf]
  %v5849 = vld [vmem:[%s5842 + $0x18] sm:$0xf]
  %v5850 = vld [vmem:[%s5842 + $0x1c] sm:$0xf]
  %v5851 = vld [vmem:[%s5842 + $0x20] sm:$0xf]
  %v5852 = vld [vmem:[%s5842 + $0x24] sm:$0xf]
  %v5853 = vld [vmem:[%s5842 + $0x28] sm:$0xf]
  %v5854 = vld [vmem:[%s5842 + $0x2c] sm:$0xf]
  %v5855 = vld [vmem:[%s5842 + $0x30] sm:$0xf]
  %v5856 = vld [vmem:[%s5842 + $0x34] sm:$0xf]
  %v5857 = vld [vmem:[%s5842 + $0x38] sm:$0xf]
  %v5858 = vld [vmem:[%s5842 + $0x3c] sm:$0xf]
  %v5859 = vld [vmem:[%s5842 + $0x40] sm:$0xf]
  %v5860 = vld [vmem:[%s5842 + $0x44] sm:$0xf]
  %v5861 = vld [vmem:[%s5842 + $0x48] sm:$0xf]
  %v5862 = vld [vmem:[%s5842 + $0x4c] sm:$0xf]
  %v5863 = vld [vmem:[%s5842 + $0x50] sm:$0xf]
  %v5864 = vld [vmem:[%s5842 + $0x54] sm:$0xf]
  %v5865 = vld [vmem:[%s5842 + $0x58] sm:$0xf]
  %v5866 = vld [vmem:[%s5842 + $0x5c] sm:$0xf]
  %v5867 = vld [vmem:[%s5842 + $0x60] sm:$0xf]
  %v5868 = vld [vmem:[%s5842 + $0x64] sm:$0xf]
  %v5869 = vld [vmem:[%s5842 + $0x68] sm:$0xf]
  %v5870 = vld [vmem:[%s5842 + $0x6c] sm:$0xf]
  %v5871 = vld [vmem:[%s5842 + $0x70] sm:$0xf]
  %v5872 = vld [vmem:[%s5842 + $0x74] sm:$0xf]
  %v5873 = vld [vmem:[%s5842 + $0x78] sm:$0xf]
  %v5874 = vld [vmem:[%s5842 + $0x7c] sm:$0xf]
  %v5875 = vld [vmem:[%s5842 + $0x80] sm:$0xf]
  %v5876 = vld [vmem:[%s5842 + $0x84] sm:$0xf]
  %v5877 = vld [vmem:[%s5842 + $0x88] sm:$0xf]
  %v5878 = vld [vmem:[%s5842 + $0x8c] sm:$0xf]
  %v5879 = vld [vmem:[%s5842 + $0x90] sm:$0xf]
  %v5880 = vld [vmem:[%s5842 + $0x94] sm:$0xf]
  %v5881 = vld [vmem:[%s5842 + $0x98] sm:$0xf]
  %v5882 = vld [vmem:[%s5842 + $0x9c] sm:$0xf]
  %v5883 = vld [vmem:[%s5842 + $0xa0] sm:$0xf]
  %v5884 = vld [vmem:[%s5842 + $0xa4] sm:$0xf]
  %v5885 = vld [vmem:[%s5842 + $0xa8] sm:$0xf]
  %v5886 = vld [vmem:[%s5842 + $0xac] sm:$0xf]
  %v5887 = vld [vmem:[%s5842 + $0xb0] sm:$0xf]
  %v5888 = vld [vmem:[%s5842 + $0xb4] sm:$0xf]
  %v5889 = vld [vmem:[%s5842 + $0xb8] sm:$0xf]
  %v5890 = vld [vmem:[%s5842 + $0xbc] sm:$0xf]
  %v5891 = vld [vmem:[%s5842 + $0xc0] sm:$0xf]
  %v5892 = vld [vmem:[%s5842 + $0xc4] sm:$0xf]
  %v5893 = vld [vmem:[%s5842 + $0xc8] sm:$0xf]
  %v5894 = vld [vmem:[%s5842 + $0xcc] sm:$0xf]
  %v5895 = vld [vmem:[%s5842 + $0xd0] sm:$0xf]
  %v5896 = vld [vmem:[%s5842 + $0xd4] sm:$0xf]
  %v5897 = vld [vmem:[%s5842 + $0xd8] sm:$0xf]
  %v5898 = vld [vmem:[%s5842 + $0xdc] sm:$0xf]
  %v5899 = vld [vmem:[%s5842 + $0xe0] sm:$0xf]
  %v5900 = vld [vmem:[%s5842 + $0xe4] sm:$0xf]
  %v5901 = vld [vmem:[%s5842 + $0xe8] sm:$0xf]
  %v5902 = vld [vmem:[%s5842 + $0xec] sm:$0xf]
  %v5903 = vld [vmem:[%s5842 + $0xf0] sm:$0xf]
  %v5904 = vld [vmem:[%s5842 + $0xf4] sm:$0xf]
  %v5905 = vld [vmem:[%s5842 + $0xf8] sm:$0xf]
  %v5906 = vld [vmem:[%s5842 + $0xfc] sm:$0xf]
  %v5971 = vunpack.c.l.b16 %v5843
  %v5972 = vunpack.c.l.b16 %v5844
  %v5973 = vunpack.c.l.b16 %v5845
  %v5974 = vunpack.c.l.b16 %v5846
  %v5975 = vunpack.c.l.b16 %v5847
  %v5976 = vunpack.c.l.b16 %v5848
  %v5977 = vunpack.c.l.b16 %v5849
  %v5978 = vunpack.c.l.b16 %v5850
  %v5979 = vunpack.c.l.b16 %v5851
  %v5980 = vunpack.c.l.b16 %v5852
  %v5981 = vunpack.c.l.b16 %v5853
  %v5982 = vunpack.c.l.b16 %v5854
  %v5983 = vunpack.c.l.b16 %v5855
  %v5984 = vunpack.c.l.b16 %v5856
  %v5985 = vunpack.c.l.b16 %v5857
  %v5986 = vunpack.c.l.b16 %v5858
  %v5987 = vunpack.c.l.b16 %v5859
  %v5988 = vunpack.c.l.b16 %v5860
  %v5989 = vunpack.c.l.b16 %v5861
  %v5990 = vunpack.c.l.b16 %v5862
  %v5991 = vunpack.c.l.b16 %v5863
  %v5992 = vunpack.c.l.b16 %v5864
  %v5993 = vunpack.c.l.b16 %v5865
  %v5994 = vunpack.c.l.b16 %v5866
  %v5995 = vunpack.c.l.b16 %v5867
  %v5996 = vunpack.c.l.b16 %v5868
  %v5997 = vunpack.c.l.b16 %v5869
  %v5998 = vunpack.c.l.b16 %v5870
  %v5999 = vunpack.c.l.b16 %v5871
  %v6000 = vunpack.c.l.b16 %v5872
  %v6001 = vunpack.c.l.b16 %v5873
  %v6002 = vunpack.c.l.b16 %v5874
  %v6003 = vunpack.c.l.b16 %v5875
  %v6004 = vunpack.c.l.b16 %v5876
  %v6005 = vunpack.c.l.b16 %v5877
  %v6006 = vunpack.c.l.b16 %v5878
  %v6007 = vunpack.c.l.b16 %v5879
  %v6008 = vunpack.c.l.b16 %v5880
  %v6009 = vunpack.c.l.b16 %v5881
  %v6010 = vunpack.c.l.b16 %v5882
  %v6011 = vunpack.c.l.b16 %v5883
  %v6012 = vunpack.c.l.b16 %v5884
  %v6013 = vunpack.c.l.b16 %v5885
  %v6014 = vunpack.c.l.b16 %v5886
  %v6015 = vunpack.c.l.b16 %v5887
  %v6016 = vunpack.c.l.b16 %v5888
  %v6017 = vunpack.c.l.b16 %v5889
  %v6018 = vunpack.c.l.b16 %v5890
  %v6019 = vunpack.c.l.b16 %v5891
  %v6020 = vunpack.c.l.b16 %v5892
  %v6021 = vunpack.c.l.b16 %v5893
  %v6022 = vunpack.c.l.b16 %v5894
  %v6023 = vunpack.c.l.b16 %v5895
  %v6024 = vunpack.c.l.b16 %v5896
  %v6025 = vunpack.c.l.b16 %v5897
  %v6026 = vunpack.c.l.b16 %v5898
  %v6027 = vunpack.c.l.b16 %v5899
  %v6028 = vunpack.c.l.b16 %v5900
  %v6029 = vunpack.c.l.b16 %v5901
  %v6030 = vunpack.c.l.b16 %v5902
  %v6031 = vunpack.c.l.b16 %v5903
  %v6032 = vunpack.c.l.b16 %v5904
  %v6033 = vunpack.c.l.b16 %v5905
  %v6034 = vunpack.c.l.b16 %v5906
  %v6035 = vpack.c.b16 %v5972, %v5971
  %v6036 = vpack.c.b16 %v5974, %v5973
  %v6037 = vpack.c.b16 %v5976, %v5975
  %v6038 = vpack.c.b16 %v5978, %v5977
  %v6039 = vpack.c.b16 %v5980, %v5979
  %v6040 = vpack.c.b16 %v5982, %v5981
  %v6041 = vpack.c.b16 %v5984, %v5983
  %v6042 = vpack.c.b16 %v5986, %v5985
  %v6043 = vpack.c.b16 %v5988, %v5987
  %v6044 = vpack.c.b16 %v5990, %v5989
  %v6045 = vpack.c.b16 %v5992, %v5991
  %v6046 = vpack.c.b16 %v5994, %v5993
  %v6047 = vpack.c.b16 %v5996, %v5995
  %v6048 = vpack.c.b16 %v5998, %v5997
  %v6049 = vpack.c.b16 %v6000, %v5999
  %v6050 = vpack.c.b16 %v6002, %v6001
  %v6051 = vpack.c.b16 %v6004, %v6003
  %v6052 = vpack.c.b16 %v6006, %v6005
  %v6053 = vpack.c.b16 %v6008, %v6007
  %v6054 = vpack.c.b16 %v6010, %v6009
  %v6055 = vpack.c.b16 %v6012, %v6011
  %v6056 = vpack.c.b16 %v6014, %v6013
  %v6057 = vpack.c.b16 %v6016, %v6015
  %v6058 = vpack.c.b16 %v6018, %v6017
  %v6059 = vpack.c.b16 %v6020, %v6019
  %v6060 = vpack.c.b16 %v6022, %v6021
  %v6061 = vpack.c.b16 %v6024, %v6023
  %v6062 = vpack.c.b16 %v6026, %v6025
  %v6063 = vpack.c.b16 %v6028, %v6027
  %v6064 = vpack.c.b16 %v6030, %v6029
  %v6065 = vpack.c.b16 %v6032, %v6031
  %v6066 = vpack.c.b16 %v6034, %v6033
  %6099 = vmatprep.subr.bf16.mxu0 0
  %6100 = vmatpush1.bf16.msra.mxu0 %v6042
  %6101 = vmatprep.subr.bf16.mxu0 0
  %6102 = vmatpush1.bf16.msra.mxu0 %v6041
  %6103 = vmatprep.subr.bf16.mxu0 0
  %6104 = vmatpush1.bf16.msra.mxu0 %v6040
  %6105 = vmatprep.subr.bf16.mxu0 0
  %6106 = vmatpush1.bf16.msra.mxu0 %v6039
  %6107 = vmatprep.subr.bf16.mxu0 0
  %6108 = vmatpush1.bf16.msra.mxu0 %v6038
  %6109 = vmatprep.subr.bf16.mxu0 0
  %6110 = vmatpush1.bf16.msra.mxu0 %v6037
  %6111 = vmatprep.subr.bf16.mxu0 0
  %6112 = vmatpush1.bf16.msra.mxu0 %v6036
  %6113 = vmatprep.subr.bf16.mxu0 0
  %6114 = vmatpush1.bf16.msra.mxu0 %v6035
  %6115 = vmatprep.subr.bf16.mxu0 0
  %6116 = vmatpush2.bf16.msra.mxu0 %v6050
  %6117 = vmatprep.subr.bf16.mxu0 0
  %6118 = vmatpush2.bf16.msra.mxu0 %v6049
  %6119 = vmatprep.subr.bf16.mxu0 0
  %6120 = vmatpush2.bf16.msra.mxu0 %v6048
  %6121 = vmatprep.subr.bf16.mxu0 0
  %6122 = vmatpush2.bf16.msra.mxu0 %v6047
  %6123 = vmatprep.subr.bf16.mxu0 0
  %6124 = vmatpush2.bf16.msra.mxu0 %v6046
  %6125 = vmatprep.subr.bf16.mxu0 0
  %6126 = vmatpush2.bf16.msra.mxu0 %v6045
  %6127 = vmatprep.subr.bf16.mxu0 0
  %6128 = vmatpush2.bf16.msra.mxu0 %v6044
  %6129 = vmatprep.subr.bf16.mxu0 0
  %6130 = vmatpush2.bf16.msra.mxu0 %v6043
  %6131 = vmatprep.mubr.bf16.mxu0 %v4687
  %6132 = vmatmul.mubr.bf16.gmra.mxu0 %v4686
  %v6133 = vpop.f32.mrf.mxu0
  %v6134 = vadd.f32 0.0, %v6133
  %v6135 = vpop.f32.mrf.mxu0
  %v6136 = vpop.f32.mrf.mxu0
  %v6137 = vadd.f32 0.0, %v6136
  %v6138 = vpop.f32.mrf.mxu0
  %6139 = vmatprep.mubr.bf16.mxu0 %v4691
  %6140 = vmatmul.mubr.bf16.gmra.mxu0 %v4690
  %v6141 = vpop.f32.mrf.mxu0
  %v6142 = vadd.f32 0.0, %v6141
  %v6143 = vpop.f32.mrf.mxu0
  %v6144 = vpop.f32.mrf.mxu0
  %v6145 = vadd.f32 0.0, %v6144
  %v6146 = vpop.f32.mrf.mxu0
  %6147 = vdwg.mxu0
  %6148 = vmatprep.subr.bf16.mxu0 0
  %6149 = vmatpush1.bf16.msra.mxu0 %v6058
  %6150 = vmatprep.subr.bf16.mxu0 0
  %6151 = vmatpush1.bf16.msra.mxu0 %v6057
  %6152 = vmatprep.subr.bf16.mxu0 0
  %6153 = vmatpush1.bf16.msra.mxu0 %v6056
  %6154 = vmatprep.subr.bf16.mxu0 0
  %6155 = vmatpush1.bf16.msra.mxu0 %v6055
  %6156 = vmatprep.subr.bf16.mxu0 0
  %6157 = vmatpush1.bf16.msra.mxu0 %v6054
  %6158 = vmatprep.subr.bf16.mxu0 0
  %6159 = vmatpush1.bf16.msra.mxu0 %v6053
  %6160 = vmatprep.subr.bf16.mxu0 0
  %6161 = vmatpush1.bf16.msra.mxu0 %v6052
  %6162 = vmatprep.subr.bf16.mxu0 0
  %6163 = vmatpush1.bf16.msra.mxu0 %v6051
  %6164 = vmatprep.subr.bf16.mxu0 0
  %6165 = vmatpush2.bf16.msra.mxu0 %v6066
  %6166 = vmatprep.subr.bf16.mxu0 0
  %6167 = vmatpush2.bf16.msra.mxu0 %v6065
  %6168 = vmatprep.subr.bf16.mxu0 0
  %6169 = vmatpush2.bf16.msra.mxu0 %v6064
  %6170 = vmatprep.subr.bf16.mxu0 0
  %6171 = vmatpush2.bf16.msra.mxu0 %v6063
  %6172 = vmatprep.subr.bf16.mxu0 0
  %6173 = vmatpush2.bf16.msra.mxu0 %v6062
  %6174 = vmatprep.subr.bf16.mxu0 0
  %6175 = vmatpush2.bf16.msra.mxu0 %v6061
  %6176 = vmatprep.subr.bf16.mxu0 0
  %6177 = vmatpush2.bf16.msra.mxu0 %v6060
  %6178 = vmatprep.subr.bf16.mxu0 0
  %6179 = vmatpush2.bf16.msra.mxu0 %v6059
  %6180 = vmatprep.mubr.bf16.mxu0 %v4689
  %6181 = vmatmul.mubr.bf16.gmra.mxu0 %v4688
  %v6182 = vpop.f32.mrf.mxu0
  %v6183 = vadd.f32 %v6134, %v6182
  %v6184 = vpop.f32.mrf.mxu0
  %v6185 = vpop.f32.mrf.mxu0
  %v6186 = vadd.f32 %v6137, %v6185
  %v6187 = vpop.f32.mrf.mxu0
  %6188 = vmatprep.mubr.bf16.mxu0 %v4693
  %6189 = vmatmul.mubr.bf16.gmra.mxu0 %v4692
  %v6190 = vpop.f32.mrf.mxu0
  %v6191 = vadd.f32 %v6142, %v6190
  %v6192 = vpop.f32.mrf.mxu0
  %v6193 = vpop.f32.mrf.mxu0
  %v6194 = vadd.f32 %v6145, %v6193
  %v6195 = vpop.f32.mrf.mxu0
  %6196 = vdwg.mxu0
  %v6197 = vadd.f32 %v5838, %v6183
  %v6198 = vadd.f32 %v5839, %v6186
  %v6199 = vadd.f32 %v5840, %v6191
  %v6200 = vadd.f32 %v5841, %v6194
  %s6201 = scalar_lea.vmem %s3, 1024
  %v6202 = vld [vmem:[%s6201] sm:$0xf]
  %v6203 = vld [vmem:[%s6201 + $0x4] sm:$0xf]
  %v6204 = vld [vmem:[%s6201 + $0x8] sm:$0xf]
  %v6205 = vld [vmem:[%s6201 + $0xc] sm:$0xf]
  %v6206 = vld [vmem:[%s6201 + $0x10] sm:$0xf]
  %v6207 = vld [vmem:[%s6201 + $0x14] sm:$0xf]
  %v6208 = vld [vmem:[%s6201 + $0x18] sm:$0xf]
  %v6209 = vld [vmem:[%s6201 + $0x1c] sm:$0xf]
  %v6210 = vld [vmem:[%s6201 + $0x20] sm:$0xf]
  %v6211 = vld [vmem:[%s6201 + $0x24] sm:$0xf]
  %v6212 = vld [vmem:[%s6201 + $0x28] sm:$0xf]
  %v6213 = vld [vmem:[%s6201 + $0x2c] sm:$0xf]
  %v6214 = vld [vmem:[%s6201 + $0x30] sm:$0xf]
  %v6215 = vld [vmem:[%s6201 + $0x34] sm:$0xf]
  %v6216 = vld [vmem:[%s6201 + $0x38] sm:$0xf]
  %v6217 = vld [vmem:[%s6201 + $0x3c] sm:$0xf]
  %v6218 = vld [vmem:[%s6201 + $0x40] sm:$0xf]
  %v6219 = vld [vmem:[%s6201 + $0x44] sm:$0xf]
  %v6220 = vld [vmem:[%s6201 + $0x48] sm:$0xf]
  %v6221 = vld [vmem:[%s6201 + $0x4c] sm:$0xf]
  %v6222 = vld [vmem:[%s6201 + $0x50] sm:$0xf]
  %v6223 = vld [vmem:[%s6201 + $0x54] sm:$0xf]
  %v6224 = vld [vmem:[%s6201 + $0x58] sm:$0xf]
  %v6225 = vld [vmem:[%s6201 + $0x5c] sm:$0xf]
  %v6226 = vld [vmem:[%s6201 + $0x60] sm:$0xf]
  %v6227 = vld [vmem:[%s6201 + $0x64] sm:$0xf]
  %v6228 = vld [vmem:[%s6201 + $0x68] sm:$0xf]
  %v6229 = vld [vmem:[%s6201 + $0x6c] sm:$0xf]
  %v6230 = vld [vmem:[%s6201 + $0x70] sm:$0xf]
  %v6231 = vld [vmem:[%s6201 + $0x74] sm:$0xf]
  %v6232 = vld [vmem:[%s6201 + $0x78] sm:$0xf]
  %v6233 = vld [vmem:[%s6201 + $0x7c] sm:$0xf]
  %v6234 = vld [vmem:[%s6201 + $0x80] sm:$0xf]
  %v6235 = vld [vmem:[%s6201 + $0x84] sm:$0xf]
  %v6236 = vld [vmem:[%s6201 + $0x88] sm:$0xf]
  %v6237 = vld [vmem:[%s6201 + $0x8c] sm:$0xf]
  %v6238 = vld [vmem:[%s6201 + $0x90] sm:$0xf]
  %v6239 = vld [vmem:[%s6201 + $0x94] sm:$0xf]
  %v6240 = vld [vmem:[%s6201 + $0x98] sm:$0xf]
  %v6241 = vld [vmem:[%s6201 + $0x9c] sm:$0xf]
  %v6242 = vld [vmem:[%s6201 + $0xa0] sm:$0xf]
  %v6243 = vld [vmem:[%s6201 + $0xa4] sm:$0xf]
  %v6244 = vld [vmem:[%s6201 + $0xa8] sm:$0xf]
  %v6245 = vld [vmem:[%s6201 + $0xac] sm:$0xf]
  %v6246 = vld [vmem:[%s6201 + $0xb0] sm:$0xf]
  %v6247 = vld [vmem:[%s6201 + $0xb4] sm:$0xf]
  %v6248 = vld [vmem:[%s6201 + $0xb8] sm:$0xf]
  %v6249 = vld [vmem:[%s6201 + $0xbc] sm:$0xf]
  %v6250 = vld [vmem:[%s6201 + $0xc0] sm:$0xf]
  %v6251 = vld [vmem:[%s6201 + $0xc4] sm:$0xf]
  %v6252 = vld [vmem:[%s6201 + $0xc8] sm:$0xf]
  %v6253 = vld [vmem:[%s6201 + $0xcc] sm:$0xf]
  %v6254 = vld [vmem:[%s6201 + $0xd0] sm:$0xf]
  %v6255 = vld [vmem:[%s6201 + $0xd4] sm:$0xf]
  %v6256 = vld [vmem:[%s6201 + $0xd8] sm:$0xf]
  %v6257 = vld [vmem:[%s6201 + $0xdc] sm:$0xf]
  %v6258 = vld [vmem:[%s6201 + $0xe0] sm:$0xf]
  %v6259 = vld [vmem:[%s6201 + $0xe4] sm:$0xf]
  %v6260 = vld [vmem:[%s6201 + $0xe8] sm:$0xf]
  %v6261 = vld [vmem:[%s6201 + $0xec] sm:$0xf]
  %v6262 = vld [vmem:[%s6201 + $0xf0] sm:$0xf]
  %v6263 = vld [vmem:[%s6201 + $0xf4] sm:$0xf]
  %v6264 = vld [vmem:[%s6201 + $0xf8] sm:$0xf]
  %v6265 = vld [vmem:[%s6201 + $0xfc] sm:$0xf]
  %v6330 = vunpack.c.l.b16 %v6202
  %v6331 = vunpack.c.l.b16 %v6203
  %v6332 = vunpack.c.l.b16 %v6204
  %v6333 = vunpack.c.l.b16 %v6205
  %v6334 = vunpack.c.l.b16 %v6206
  %v6335 = vunpack.c.l.b16 %v6207
  %v6336 = vunpack.c.l.b16 %v6208
  %v6337 = vunpack.c.l.b16 %v6209
  %v6338 = vunpack.c.l.b16 %v6210
  %v6339 = vunpack.c.l.b16 %v6211
  %v6340 = vunpack.c.l.b16 %v6212
  %v6341 = vunpack.c.l.b16 %v6213
  %v6342 = vunpack.c.l.b16 %v6214
  %v6343 = vunpack.c.l.b16 %v6215
  %v6344 = vunpack.c.l.b16 %v6216
  %v6345 = vunpack.c.l.b16 %v6217
  %v6346 = vunpack.c.l.b16 %v6218
  %v6347 = vunpack.c.l.b16 %v6219
  %v6348 = vunpack.c.l.b16 %v6220
  %v6349 = vunpack.c.l.b16 %v6221
  %v6350 = vunpack.c.l.b16 %v6222
  %v6351 = vunpack.c.l.b16 %v6223
  %v6352 = vunpack.c.l.b16 %v6224
  %v6353 = vunpack.c.l.b16 %v6225
  %v6354 = vunpack.c.l.b16 %v6226
  %v6355 = vunpack.c.l.b16 %v6227
  %v6356 = vunpack.c.l.b16 %v6228
  %v6357 = vunpack.c.l.b16 %v6229
  %v6358 = vunpack.c.l.b16 %v6230
  %v6359 = vunpack.c.l.b16 %v6231
  %v6360 = vunpack.c.l.b16 %v6232
  %v6361 = vunpack.c.l.b16 %v6233
  %v6362 = vunpack.c.l.b16 %v6234
  %v6363 = vunpack.c.l.b16 %v6235
  %v6364 = vunpack.c.l.b16 %v6236
  %v6365 = vunpack.c.l.b16 %v6237
  %v6366 = vunpack.c.l.b16 %v6238
  %v6367 = vunpack.c.l.b16 %v6239
  %v6368 = vunpack.c.l.b16 %v6240
  %v6369 = vunpack.c.l.b16 %v6241
  %v6370 = vunpack.c.l.b16 %v6242
  %v6371 = vunpack.c.l.b16 %v6243
  %v6372 = vunpack.c.l.b16 %v6244
  %v6373 = vunpack.c.l.b16 %v6245
  %v6374 = vunpack.c.l.b16 %v6246
  %v6375 = vunpack.c.l.b16 %v6247
  %v6376 = vunpack.c.l.b16 %v6248
  %v6377 = vunpack.c.l.b16 %v6249
  %v6378 = vunpack.c.l.b16 %v6250
  %v6379 = vunpack.c.l.b16 %v6251
  %v6380 = vunpack.c.l.b16 %v6252
  %v6381 = vunpack.c.l.b16 %v6253
  %v6382 = vunpack.c.l.b16 %v6254
  %v6383 = vunpack.c.l.b16 %v6255
  %v6384 = vunpack.c.l.b16 %v6256
  %v6385 = vunpack.c.l.b16 %v6257
  %v6386 = vunpack.c.l.b16 %v6258
  %v6387 = vunpack.c.l.b16 %v6259
  %v6388 = vunpack.c.l.b16 %v6260
  %v6389 = vunpack.c.l.b16 %v6261
  %v6390 = vunpack.c.l.b16 %v6262
  %v6391 = vunpack.c.l.b16 %v6263
  %v6392 = vunpack.c.l.b16 %v6264
  %v6393 = vunpack.c.l.b16 %v6265
  %v6394 = vpack.c.b16 %v6331, %v6330
  %v6395 = vpack.c.b16 %v6333, %v6332
  %v6396 = vpack.c.b16 %v6335, %v6334
  %v6397 = vpack.c.b16 %v6337, %v6336
  %v6398 = vpack.c.b16 %v6339, %v6338
  %v6399 = vpack.c.b16 %v6341, %v6340
  %v6400 = vpack.c.b16 %v6343, %v6342
  %v6401 = vpack.c.b16 %v6345, %v6344
  %v6402 = vpack.c.b16 %v6347, %v6346
  %v6403 = vpack.c.b16 %v6349, %v6348
  %v6404 = vpack.c.b16 %v6351, %v6350
  %v6405 = vpack.c.b16 %v6353, %v6352
  %v6406 = vpack.c.b16 %v6355, %v6354
  %v6407 = vpack.c.b16 %v6357, %v6356
  %v6408 = vpack.c.b16 %v6359, %v6358
  %v6409 = vpack.c.b16 %v6361, %v6360
  %v6410 = vpack.c.b16 %v6363, %v6362
  %v6411 = vpack.c.b16 %v6365, %v6364
  %v6412 = vpack.c.b16 %v6367, %v6366
  %v6413 = vpack.c.b16 %v6369, %v6368
  %v6414 = vpack.c.b16 %v6371, %v6370
  %v6415 = vpack.c.b16 %v6373, %v6372
  %v6416 = vpack.c.b16 %v6375, %v6374
  %v6417 = vpack.c.b16 %v6377, %v6376
  %v6418 = vpack.c.b16 %v6379, %v6378
  %v6419 = vpack.c.b16 %v6381, %v6380
  %v6420 = vpack.c.b16 %v6383, %v6382
  %v6421 = vpack.c.b16 %v6385, %v6384
  %v6422 = vpack.c.b16 %v6387, %v6386
  %v6423 = vpack.c.b16 %v6389, %v6388
  %v6424 = vpack.c.b16 %v6391, %v6390
  %v6425 = vpack.c.b16 %v6393, %v6392
  %6458 = vmatprep.subr.bf16.mxu0 0
  %6459 = vmatpush1.bf16.msra.mxu0 %v6401
  %6460 = vmatprep.subr.bf16.mxu0 0
  %6461 = vmatpush1.bf16.msra.mxu0 %v6400
  %6462 = vmatprep.subr.bf16.mxu0 0
  %6463 = vmatpush1.bf16.msra.mxu0 %v6399
  %6464 = vmatprep.subr.bf16.mxu0 0
  %6465 = vmatpush1.bf16.msra.mxu0 %v6398
  %6466 = vmatprep.subr.bf16.mxu0 0
  %6467 = vmatpush1.bf16.msra.mxu0 %v6397
  %6468 = vmatprep.subr.bf16.mxu0 0
  %6469 = vmatpush1.bf16.msra.mxu0 %v6396
  %6470 = vmatprep.subr.bf16.mxu0 0
  %6471 = vmatpush1.bf16.msra.mxu0 %v6395
  %6472 = vmatprep.subr.bf16.mxu0 0
  %6473 = vmatpush1.bf16.msra.mxu0 %v6394
  %6474 = vmatprep.subr.bf16.mxu0 0
  %6475 = vmatpush2.bf16.msra.mxu0 %v6409
  %6476 = vmatprep.subr.bf16.mxu0 0
  %6477 = vmatpush2.bf16.msra.mxu0 %v6408
  %6478 = vmatprep.subr.bf16.mxu0 0
  %6479 = vmatpush2.bf16.msra.mxu0 %v6407
  %6480 = vmatprep.subr.bf16.mxu0 0
  %6481 = vmatpush2.bf16.msra.mxu0 %v6406
  %6482 = vmatprep.subr.bf16.mxu0 0
  %6483 = vmatpush2.bf16.msra.mxu0 %v6405
  %6484 = vmatprep.subr.bf16.mxu0 0
  %6485 = vmatpush2.bf16.msra.mxu0 %v6404
  %6486 = vmatprep.subr.bf16.mxu0 0
  %6487 = vmatpush2.bf16.msra.mxu0 %v6403
  %6488 = vmatprep.subr.bf16.mxu0 0
  %6489 = vmatpush2.bf16.msra.mxu0 %v6402
  %6490 = vmatprep.mubr.bf16.mxu0 %v4695
  %6491 = vmatmul.mubr.bf16.gmra.mxu0 %v4694
  %v6492 = vpop.f32.mrf.mxu0
  %v6493 = vadd.f32 0.0, %v6492
  %v6494 = vpop.f32.mrf.mxu0
  %v6495 = vpop.f32.mrf.mxu0
  %v6496 = vadd.f32 0.0, %v6495
  %v6497 = vpop.f32.mrf.mxu0
  %6498 = vmatprep.mubr.bf16.mxu0 %v4699
  %6499 = vmatmul.mubr.bf16.gmra.mxu0 %v4698
  %v6500 = vpop.f32.mrf.mxu0
  %v6501 = vadd.f32 0.0, %v6500
  %v6502 = vpop.f32.mrf.mxu0
  %v6503 = vpop.f32.mrf.mxu0
  %v6504 = vadd.f32 0.0, %v6503
  %v6505 = vpop.f32.mrf.mxu0
  %6506 = vdwg.mxu0
  %6507 = vmatprep.subr.bf16.mxu0 0
  %6508 = vmatpush1.bf16.msra.mxu0 %v6417
  %6509 = vmatprep.subr.bf16.mxu0 0
  %6510 = vmatpush1.bf16.msra.mxu0 %v6416
  %6511 = vmatprep.subr.bf16.mxu0 0
  %6512 = vmatpush1.bf16.msra.mxu0 %v6415
  %6513 = vmatprep.subr.bf16.mxu0 0
  %6514 = vmatpush1.bf16.msra.mxu0 %v6414
  %6515 = vmatprep.subr.bf16.mxu0 0
  %6516 = vmatpush1.bf16.msra.mxu0 %v6413
  %6517 = vmatprep.subr.bf16.mxu0 0
  %6518 = vmatpush1.bf16.msra.mxu0 %v6412
  %6519 = vmatprep.subr.bf16.mxu0 0
  %6520 = vmatpush1.bf16.msra.mxu0 %v6411
  %6521 = vmatprep.subr.bf16.mxu0 0
  %6522 = vmatpush1.bf16.msra.mxu0 %v6410
  %6523 = vmatprep.subr.bf16.mxu0 0
  %6524 = vmatpush2.bf16.msra.mxu0 %v6425
  %6525 = vmatprep.subr.bf16.mxu0 0
  %6526 = vmatpush2.bf16.msra.mxu0 %v6424
  %6527 = vmatprep.subr.bf16.mxu0 0
  %6528 = vmatpush2.bf16.msra.mxu0 %v6423
  %6529 = vmatprep.subr.bf16.mxu0 0
  %6530 = vmatpush2.bf16.msra.mxu0 %v6422
  %6531 = vmatprep.subr.bf16.mxu0 0
  %6532 = vmatpush2.bf16.msra.mxu0 %v6421
  %6533 = vmatprep.subr.bf16.mxu0 0
  %6534 = vmatpush2.bf16.msra.mxu0 %v6420
  %6535 = vmatprep.subr.bf16.mxu0 0
  %6536 = vmatpush2.bf16.msra.mxu0 %v6419
  %6537 = vmatprep.subr.bf16.mxu0 0
  %6538 = vmatpush2.bf16.msra.mxu0 %v6418
  %6539 = vmatprep.mubr.bf16.mxu0 %v4697
  %6540 = vmatmul.mubr.bf16.gmra.mxu0 %v4696
  %v6541 = vpop.f32.mrf.mxu0
  %v6542 = vadd.f32 %v6493, %v6541
  %v6543 = vpop.f32.mrf.mxu0
  %v6544 = vpop.f32.mrf.mxu0
  %v6545 = vadd.f32 %v6496, %v6544
  %v6546 = vpop.f32.mrf.mxu0
  %6547 = vmatprep.mubr.bf16.mxu0 %v4701
  %6548 = vmatmul.mubr.bf16.gmra.mxu0 %v4700
  %v6549 = vpop.f32.mrf.mxu0
  %v6550 = vadd.f32 %v6501, %v6549
  %v6551 = vpop.f32.mrf.mxu0
  %v6552 = vpop.f32.mrf.mxu0
  %v6553 = vadd.f32 %v6504, %v6552
  %v6554 = vpop.f32.mrf.mxu0
  %6555 = vdwg.mxu0
  %v6556 = vadd.f32 %v6197, %v6542
  %v6557 = vadd.f32 %v6198, %v6545
  %v6558 = vadd.f32 %v6199, %v6550
  %v6559 = vadd.f32 %v6200, %v6553
  %s6560 = scalar_lea.vmem %s3, 1280
  %v6561 = vld [vmem:[%s6560] sm:$0xf]
  %v6562 = vld [vmem:[%s6560 + $0x4] sm:$0xf]
  %v6563 = vld [vmem:[%s6560 + $0x8] sm:$0xf]
  %v6564 = vld [vmem:[%s6560 + $0xc] sm:$0xf]
  %v6565 = vld [vmem:[%s6560 + $0x10] sm:$0xf]
  %v6566 = vld [vmem:[%s6560 + $0x14] sm:$0xf]
  %v6567 = vld [vmem:[%s6560 + $0x18] sm:$0xf]
  %v6568 = vld [vmem:[%s6560 + $0x1c] sm:$0xf]
  %v6569 = vld [vmem:[%s6560 + $0x20] sm:$0xf]
  %v6570 = vld [vmem:[%s6560 + $0x24] sm:$0xf]
  %v6571 = vld [vmem:[%s6560 + $0x28] sm:$0xf]
  %v6572 = vld [vmem:[%s6560 + $0x2c] sm:$0xf]
  %v6573 = vld [vmem:[%s6560 + $0x30] sm:$0xf]
  %v6574 = vld [vmem:[%s6560 + $0x34] sm:$0xf]
  %v6575 = vld [vmem:[%s6560 + $0x38] sm:$0xf]
  %v6576 = vld [vmem:[%s6560 + $0x3c] sm:$0xf]
  %v6577 = vld [vmem:[%s6560 + $0x40] sm:$0xf]
  %v6578 = vld [vmem:[%s6560 + $0x44] sm:$0xf]
  %v6579 = vld [vmem:[%s6560 + $0x48] sm:$0xf]
  %v6580 = vld [vmem:[%s6560 + $0x4c] sm:$0xf]
  %v6581 = vld [vmem:[%s6560 + $0x50] sm:$0xf]
  %v6582 = vld [vmem:[%s6560 + $0x54] sm:$0xf]
  %v6583 = vld [vmem:[%s6560 + $0x58] sm:$0xf]
  %v6584 = vld [vmem:[%s6560 + $0x5c] sm:$0xf]
  %v6585 = vld [vmem:[%s6560 + $0x60] sm:$0xf]
  %v6586 = vld [vmem:[%s6560 + $0x64] sm:$0xf]
  %v6587 = vld [vmem:[%s6560 + $0x68] sm:$0xf]
  %v6588 = vld [vmem:[%s6560 + $0x6c] sm:$0xf]
  %v6589 = vld [vmem:[%s6560 + $0x70] sm:$0xf]
  %v6590 = vld [vmem:[%s6560 + $0x74] sm:$0xf]
  %v6591 = vld [vmem:[%s6560 + $0x78] sm:$0xf]
  %v6592 = vld [vmem:[%s6560 + $0x7c] sm:$0xf]
  %v6593 = vld [vmem:[%s6560 + $0x80] sm:$0xf]
  %v6594 = vld [vmem:[%s6560 + $0x84] sm:$0xf]
  %v6595 = vld [vmem:[%s6560 + $0x88] sm:$0xf]
  %v6596 = vld [vmem:[%s6560 + $0x8c] sm:$0xf]
  %v6597 = vld [vmem:[%s6560 + $0x90] sm:$0xf]
  %v6598 = vld [vmem:[%s6560 + $0x94] sm:$0xf]
  %v6599 = vld [vmem:[%s6560 + $0x98] sm:$0xf]
  %v6600 = vld [vmem:[%s6560 + $0x9c] sm:$0xf]
  %v6601 = vld [vmem:[%s6560 + $0xa0] sm:$0xf]
  %v6602 = vld [vmem:[%s6560 + $0xa4] sm:$0xf]
  %v6603 = vld [vmem:[%s6560 + $0xa8] sm:$0xf]
  %v6604 = vld [vmem:[%s6560 + $0xac] sm:$0xf]
  %v6605 = vld [vmem:[%s6560 + $0xb0] sm:$0xf]
  %v6606 = vld [vmem:[%s6560 + $0xb4] sm:$0xf]
  %v6607 = vld [vmem:[%s6560 + $0xb8] sm:$0xf]
  %v6608 = vld [vmem:[%s6560 + $0xbc] sm:$0xf]
  %v6609 = vld [vmem:[%s6560 + $0xc0] sm:$0xf]
  %v6610 = vld [vmem:[%s6560 + $0xc4] sm:$0xf]
  %v6611 = vld [vmem:[%s6560 + $0xc8] sm:$0xf]
  %v6612 = vld [vmem:[%s6560 + $0xcc] sm:$0xf]
  %v6613 = vld [vmem:[%s6560 + $0xd0] sm:$0xf]
  %v6614 = vld [vmem:[%s6560 + $0xd4] sm:$0xf]
  %v6615 = vld [vmem:[%s6560 + $0xd8] sm:$0xf]
  %v6616 = vld [vmem:[%s6560 + $0xdc] sm:$0xf]
  %v6617 = vld [vmem:[%s6560 + $0xe0] sm:$0xf]
  %v6618 = vld [vmem:[%s6560 + $0xe4] sm:$0xf]
  %v6619 = vld [vmem:[%s6560 + $0xe8] sm:$0xf]
  %v6620 = vld [vmem:[%s6560 + $0xec] sm:$0xf]
  %v6621 = vld [vmem:[%s6560 + $0xf0] sm:$0xf]
  %v6622 = vld [vmem:[%s6560 + $0xf4] sm:$0xf]
  %v6623 = vld [vmem:[%s6560 + $0xf8] sm:$0xf]
  %v6624 = vld [vmem:[%s6560 + $0xfc] sm:$0xf]
  %v6689 = vunpack.c.l.b16 %v6561
  %v6690 = vunpack.c.l.b16 %v6562
  %v6691 = vunpack.c.l.b16 %v6563
  %v6692 = vunpack.c.l.b16 %v6564
  %v6693 = vunpack.c.l.b16 %v6565
  %v6694 = vunpack.c.l.b16 %v6566
  %v6695 = vunpack.c.l.b16 %v6567
  %v6696 = vunpack.c.l.b16 %v6568
  %v6697 = vunpack.c.l.b16 %v6569
  %v6698 = vunpack.c.l.b16 %v6570
  %v6699 = vunpack.c.l.b16 %v6571
  %v6700 = vunpack.c.l.b16 %v6572
  %v6701 = vunpack.c.l.b16 %v6573
  %v6702 = vunpack.c.l.b16 %v6574
  %v6703 = vunpack.c.l.b16 %v6575
  %v6704 = vunpack.c.l.b16 %v6576
  %v6705 = vunpack.c.l.b16 %v6577
  %v6706 = vunpack.c.l.b16 %v6578
  %v6707 = vunpack.c.l.b16 %v6579
  %v6708 = vunpack.c.l.b16 %v6580
  %v6709 = vunpack.c.l.b16 %v6581
  %v6710 = vunpack.c.l.b16 %v6582
  %v6711 = vunpack.c.l.b16 %v6583
  %v6712 = vunpack.c.l.b16 %v6584
  %v6713 = vunpack.c.l.b16 %v6585
  %v6714 = vunpack.c.l.b16 %v6586
  %v6715 = vunpack.c.l.b16 %v6587
  %v6716 = vunpack.c.l.b16 %v6588
  %v6717 = vunpack.c.l.b16 %v6589
  %v6718 = vunpack.c.l.b16 %v6590
  %v6719 = vunpack.c.l.b16 %v6591
  %v6720 = vunpack.c.l.b16 %v6592
  %v6721 = vunpack.c.l.b16 %v6593
  %v6722 = vunpack.c.l.b16 %v6594
  %v6723 = vunpack.c.l.b16 %v6595
  %v6724 = vunpack.c.l.b16 %v6596
  %v6725 = vunpack.c.l.b16 %v6597
  %v6726 = vunpack.c.l.b16 %v6598
  %v6727 = vunpack.c.l.b16 %v6599
  %v6728 = vunpack.c.l.b16 %v6600
  %v6729 = vunpack.c.l.b16 %v6601
  %v6730 = vunpack.c.l.b16 %v6602
  %v6731 = vunpack.c.l.b16 %v6603
  %v6732 = vunpack.c.l.b16 %v6604
  %v6733 = vunpack.c.l.b16 %v6605
  %v6734 = vunpack.c.l.b16 %v6606
  %v6735 = vunpack.c.l.b16 %v6607
  %v6736 = vunpack.c.l.b16 %v6608
  %v6737 = vunpack.c.l.b16 %v6609
  %v6738 = vunpack.c.l.b16 %v6610
  %v6739 = vunpack.c.l.b16 %v6611
  %v6740 = vunpack.c.l.b16 %v6612
  %v6741 = vunpack.c.l.b16 %v6613
  %v6742 = vunpack.c.l.b16 %v6614
  %v6743 = vunpack.c.l.b16 %v6615
  %v6744 = vunpack.c.l.b16 %v6616
  %v6745 = vunpack.c.l.b16 %v6617
  %v6746 = vunpack.c.l.b16 %v6618
  %v6747 = vunpack.c.l.b16 %v6619
  %v6748 = vunpack.c.l.b16 %v6620
  %v6749 = vunpack.c.l.b16 %v6621
  %v6750 = vunpack.c.l.b16 %v6622
  %v6751 = vunpack.c.l.b16 %v6623
  %v6752 = vunpack.c.l.b16 %v6624
  %v6753 = vpack.c.b16 %v6690, %v6689
  %v6754 = vpack.c.b16 %v6692, %v6691
  %v6755 = vpack.c.b16 %v6694, %v6693
  %v6756 = vpack.c.b16 %v6696, %v6695
  %v6757 = vpack.c.b16 %v6698, %v6697
  %v6758 = vpack.c.b16 %v6700, %v6699
  %v6759 = vpack.c.b16 %v6702, %v6701
  %v6760 = vpack.c.b16 %v6704, %v6703
  %v6761 = vpack.c.b16 %v6706, %v6705
  %v6762 = vpack.c.b16 %v6708, %v6707
  %v6763 = vpack.c.b16 %v6710, %v6709
  %v6764 = vpack.c.b16 %v6712, %v6711
  %v6765 = vpack.c.b16 %v6714, %v6713
  %v6766 = vpack.c.b16 %v6716, %v6715
  %v6767 = vpack.c.b16 %v6718, %v6717
  %v6768 = vpack.c.b16 %v6720, %v6719
  %v6769 = vpack.c.b16 %v6722, %v6721
  %v6770 = vpack.c.b16 %v6724, %v6723
  %v6771 = vpack.c.b16 %v6726, %v6725
  %v6772 = vpack.c.b16 %v6728, %v6727
  %v6773 = vpack.c.b16 %v6730, %v6729
  %v6774 = vpack.c.b16 %v6732, %v6731
  %v6775 = vpack.c.b16 %v6734, %v6733
  %v6776 = vpack.c.b16 %v6736, %v6735
  %v6777 = vpack.c.b16 %v6738, %v6737
  %v6778 = vpack.c.b16 %v6740, %v6739
  %v6779 = vpack.c.b16 %v6742, %v6741
  %v6780 = vpack.c.b16 %v6744, %v6743
  %v6781 = vpack.c.b16 %v6746, %v6745
  %v6782 = vpack.c.b16 %v6748, %v6747
  %v6783 = vpack.c.b16 %v6750, %v6749
  %v6784 = vpack.c.b16 %v6752, %v6751
  %6817 = vmatprep.subr.bf16.mxu0 0
  %6818 = vmatpush1.bf16.msra.mxu0 %v6760
  %6819 = vmatprep.subr.bf16.mxu0 0
  %6820 = vmatpush1.bf16.msra.mxu0 %v6759
  %6821 = vmatprep.subr.bf16.mxu0 0
  %6822 = vmatpush1.bf16.msra.mxu0 %v6758
  %6823 = vmatprep.subr.bf16.mxu0 0
  %6824 = vmatpush1.bf16.msra.mxu0 %v6757
  %6825 = vmatprep.subr.bf16.mxu0 0
  %6826 = vmatpush1.bf16.msra.mxu0 %v6756
  %6827 = vmatprep.subr.bf16.mxu0 0
  %6828 = vmatpush1.bf16.msra.mxu0 %v6755
  %6829 = vmatprep.subr.bf16.mxu0 0
  %6830 = vmatpush1.bf16.msra.mxu0 %v6754
  %6831 = vmatprep.subr.bf16.mxu0 0
  %6832 = vmatpush1.bf16.msra.mxu0 %v6753
  %6833 = vmatprep.subr.bf16.mxu0 0
  %6834 = vmatpush2.bf16.msra.mxu0 %v6768
  %6835 = vmatprep.subr.bf16.mxu0 0
  %6836 = vmatpush2.bf16.msra.mxu0 %v6767
  %6837 = vmatprep.subr.bf16.mxu0 0
  %6838 = vmatpush2.bf16.msra.mxu0 %v6766
  %6839 = vmatprep.subr.bf16.mxu0 0
  %6840 = vmatpush2.bf16.msra.mxu0 %v6765
  %6841 = vmatprep.subr.bf16.mxu0 0
  %6842 = vmatpush2.bf16.msra.mxu0 %v6764
  %6843 = vmatprep.subr.bf16.mxu0 0
  %6844 = vmatpush2.bf16.msra.mxu0 %v6763
  %6845 = vmatprep.subr.bf16.mxu0 0
  %6846 = vmatpush2.bf16.msra.mxu0 %v6762
  %6847 = vmatprep.subr.bf16.mxu0 0
  %6848 = vmatpush2.bf16.msra.mxu0 %v6761
  %6849 = vmatprep.mubr.bf16.mxu0 %v4703
  %6850 = vmatmul.mubr.bf16.gmra.mxu0 %v4702
  %v6851 = vpop.f32.mrf.mxu0
  %v6852 = vadd.f32 0.0, %v6851
  %v6853 = vpop.f32.mrf.mxu0
  %v6854 = vpop.f32.mrf.mxu0
  %v6855 = vadd.f32 0.0, %v6854
  %v6856 = vpop.f32.mrf.mxu0
  %6857 = vmatprep.mubr.bf16.mxu0 %v4707
  %6858 = vmatmul.mubr.bf16.gmra.mxu0 %v4706
  %v6859 = vpop.f32.mrf.mxu0
  %v6860 = vadd.f32 0.0, %v6859
  %v6861 = vpop.f32.mrf.mxu0
  %v6862 = vpop.f32.mrf.mxu0
  %v6863 = vadd.f32 0.0, %v6862
  %v6864 = vpop.f32.mrf.mxu0
  %6865 = vdwg.mxu0
  %6866 = vmatprep.subr.bf16.mxu0 0
  %6867 = vmatpush1.bf16.msra.mxu0 %v6776
  %6868 = vmatprep.subr.bf16.mxu0 0
  %6869 = vmatpush1.bf16.msra.mxu0 %v6775
  %6870 = vmatprep.subr.bf16.mxu0 0
  %6871 = vmatpush1.bf16.msra.mxu0 %v6774
  %6872 = vmatprep.subr.bf16.mxu0 0
  %6873 = vmatpush1.bf16.msra.mxu0 %v6773
  %6874 = vmatprep.subr.bf16.mxu0 0
  %6875 = vmatpush1.bf16.msra.mxu0 %v6772
  %6876 = vmatprep.subr.bf16.mxu0 0
  %6877 = vmatpush1.bf16.msra.mxu0 %v6771
  %6878 = vmatprep.subr.bf16.mxu0 0
  %6879 = vmatpush1.bf16.msra.mxu0 %v6770
  %6880 = vmatprep.subr.bf16.mxu0 0
  %6881 = vmatpush1.bf16.msra.mxu0 %v6769
  %6882 = vmatprep.subr.bf16.mxu0 0
  %6883 = vmatpush2.bf16.msra.mxu0 %v6784
  %6884 = vmatprep.subr.bf16.mxu0 0
  %6885 = vmatpush2.bf16.msra.mxu0 %v6783
  %6886 = vmatprep.subr.bf16.mxu0 0
  %6887 = vmatpush2.bf16.msra.mxu0 %v6782
  %6888 = vmatprep.subr.bf16.mxu0 0
  %6889 = vmatpush2.bf16.msra.mxu0 %v6781
  %6890 = vmatprep.subr.bf16.mxu0 0
  %6891 = vmatpush2.bf16.msra.mxu0 %v6780
  %6892 = vmatprep.subr.bf16.mxu0 0
  %6893 = vmatpush2.bf16.msra.mxu0 %v6779
  %6894 = vmatprep.subr.bf16.mxu0 0
  %6895 = vmatpush2.bf16.msra.mxu0 %v6778
  %6896 = vmatprep.subr.bf16.mxu0 0
  %6897 = vmatpush2.bf16.msra.mxu0 %v6777
  %6898 = vmatprep.mubr.bf16.mxu0 %v4705
  %6899 = vmatmul.mubr.bf16.gmra.mxu0 %v4704
  %v6900 = vpop.f32.mrf.mxu0
  %v6901 = vadd.f32 %v6852, %v6900
  %v6902 = vpop.f32.mrf.mxu0
  %v6903 = vpop.f32.mrf.mxu0
  %v6904 = vadd.f32 %v6855, %v6903
  %v6905 = vpop.f32.mrf.mxu0
  %6906 = vmatprep.mubr.bf16.mxu0 %v4709
  %6907 = vmatmul.mubr.bf16.gmra.mxu0 %v4708
  %v6908 = vpop.f32.mrf.mxu0
  %v6909 = vadd.f32 %v6860, %v6908
  %v6910 = vpop.f32.mrf.mxu0
  %v6911 = vpop.f32.mrf.mxu0
  %v6912 = vadd.f32 %v6863, %v6911
  %v6913 = vpop.f32.mrf.mxu0
  %6914 = vdwg.mxu0
  %v6915 = vadd.f32 %v6556, %v6901
  %v6916 = vadd.f32 %v6557, %v6904
  %v6917 = vadd.f32 %v6558, %v6909
  %v6918 = vadd.f32 %v6559, %v6912
  %s6919 = scalar_lea.vmem %s3, 1536
  %v6920 = vld [vmem:[%s6919] sm:$0xf]
  %v6921 = vld [vmem:[%s6919 + $0x4] sm:$0xf]
  %v6922 = vld [vmem:[%s6919 + $0x8] sm:$0xf]
  %v6923 = vld [vmem:[%s6919 + $0xc] sm:$0xf]
  %v6924 = vld [vmem:[%s6919 + $0x10] sm:$0xf]
  %v6925 = vld [vmem:[%s6919 + $0x14] sm:$0xf]
  %v6926 = vld [vmem:[%s6919 + $0x18] sm:$0xf]
  %v6927 = vld [vmem:[%s6919 + $0x1c] sm:$0xf]
  %v6928 = vld [vmem:[%s6919 + $0x20] sm:$0xf]
  %v6929 = vld [vmem:[%s6919 + $0x24] sm:$0xf]
  %v6930 = vld [vmem:[%s6919 + $0x28] sm:$0xf]
  %v6931 = vld [vmem:[%s6919 + $0x2c] sm:$0xf]
  %v6932 = vld [vmem:[%s6919 + $0x30] sm:$0xf]
  %v6933 = vld [vmem:[%s6919 + $0x34] sm:$0xf]
  %v6934 = vld [vmem:[%s6919 + $0x38] sm:$0xf]
  %v6935 = vld [vmem:[%s6919 + $0x3c] sm:$0xf]
  %v6936 = vld [vmem:[%s6919 + $0x40] sm:$0xf]
  %v6937 = vld [vmem:[%s6919 + $0x44] sm:$0xf]
  %v6938 = vld [vmem:[%s6919 + $0x48] sm:$0xf]
  %v6939 = vld [vmem:[%s6919 + $0x4c] sm:$0xf]
  %v6940 = vld [vmem:[%s6919 + $0x50] sm:$0xf]
  %v6941 = vld [vmem:[%s6919 + $0x54] sm:$0xf]
  %v6942 = vld [vmem:[%s6919 + $0x58] sm:$0xf]
  %v6943 = vld [vmem:[%s6919 + $0x5c] sm:$0xf]
  %v6944 = vld [vmem:[%s6919 + $0x60] sm:$0xf]
  %v6945 = vld [vmem:[%s6919 + $0x64] sm:$0xf]
  %v6946 = vld [vmem:[%s6919 + $0x68] sm:$0xf]
  %v6947 = vld [vmem:[%s6919 + $0x6c] sm:$0xf]
  %v6948 = vld [vmem:[%s6919 + $0x70] sm:$0xf]
  %v6949 = vld [vmem:[%s6919 + $0x74] sm:$0xf]
  %v6950 = vld [vmem:[%s6919 + $0x78] sm:$0xf]
  %v6951 = vld [vmem:[%s6919 + $0x7c] sm:$0xf]
  %v6952 = vld [vmem:[%s6919 + $0x80] sm:$0xf]
  %v6953 = vld [vmem:[%s6919 + $0x84] sm:$0xf]
  %v6954 = vld [vmem:[%s6919 + $0x88] sm:$0xf]
  %v6955 = vld [vmem:[%s6919 + $0x8c] sm:$0xf]
  %v6956 = vld [vmem:[%s6919 + $0x90] sm:$0xf]
  %v6957 = vld [vmem:[%s6919 + $0x94] sm:$0xf]
  %v6958 = vld [vmem:[%s6919 + $0x98] sm:$0xf]
  %v6959 = vld [vmem:[%s6919 + $0x9c] sm:$0xf]
  %v6960 = vld [vmem:[%s6919 + $0xa0] sm:$0xf]
  %v6961 = vld [vmem:[%s6919 + $0xa4] sm:$0xf]
  %v6962 = vld [vmem:[%s6919 + $0xa8] sm:$0xf]
  %v6963 = vld [vmem:[%s6919 + $0xac] sm:$0xf]
  %v6964 = vld [vmem:[%s6919 + $0xb0] sm:$0xf]
  %v6965 = vld [vmem:[%s6919 + $0xb4] sm:$0xf]
  %v6966 = vld [vmem:[%s6919 + $0xb8] sm:$0xf]
  %v6967 = vld [vmem:[%s6919 + $0xbc] sm:$0xf]
  %v6968 = vld [vmem:[%s6919 + $0xc0] sm:$0xf]
  %v6969 = vld [vmem:[%s6919 + $0xc4] sm:$0xf]
  %v6970 = vld [vmem:[%s6919 + $0xc8] sm:$0xf]
  %v6971 = vld [vmem:[%s6919 + $0xcc] sm:$0xf]
  %v6972 = vld [vmem:[%s6919 + $0xd0] sm:$0xf]
  %v6973 = vld [vmem:[%s6919 + $0xd4] sm:$0xf]
  %v6974 = vld [vmem:[%s6919 + $0xd8] sm:$0xf]
  %v6975 = vld [vmem:[%s6919 + $0xdc] sm:$0xf]
  %v6976 = vld [vmem:[%s6919 + $0xe0] sm:$0xf]
  %v6977 = vld [vmem:[%s6919 + $0xe4] sm:$0xf]
  %v6978 = vld [vmem:[%s6919 + $0xe8] sm:$0xf]
  %v6979 = vld [vmem:[%s6919 + $0xec] sm:$0xf]
  %v6980 = vld [vmem:[%s6919 + $0xf0] sm:$0xf]
  %v6981 = vld [vmem:[%s6919 + $0xf4] sm:$0xf]
  %v6982 = vld [vmem:[%s6919 + $0xf8] sm:$0xf]
  %v6983 = vld [vmem:[%s6919 + $0xfc] sm:$0xf]
  %v7048 = vunpack.c.l.b16 %v6920
  %v7049 = vunpack.c.l.b16 %v6921
  %v7050 = vunpack.c.l.b16 %v6922
  %v7051 = vunpack.c.l.b16 %v6923
  %v7052 = vunpack.c.l.b16 %v6924
  %v7053 = vunpack.c.l.b16 %v6925
  %v7054 = vunpack.c.l.b16 %v6926
  %v7055 = vunpack.c.l.b16 %v6927
  %v7056 = vunpack.c.l.b16 %v6928
  %v7057 = vunpack.c.l.b16 %v6929
  %v7058 = vunpack.c.l.b16 %v6930
  %v7059 = vunpack.c.l.b16 %v6931
  %v7060 = vunpack.c.l.b16 %v6932
  %v7061 = vunpack.c.l.b16 %v6933
  %v7062 = vunpack.c.l.b16 %v6934
  %v7063 = vunpack.c.l.b16 %v6935
  %v7064 = vunpack.c.l.b16 %v6936
  %v7065 = vunpack.c.l.b16 %v6937
  %v7066 = vunpack.c.l.b16 %v6938
  %v7067 = vunpack.c.l.b16 %v6939
  %v7068 = vunpack.c.l.b16 %v6940
  %v7069 = vunpack.c.l.b16 %v6941
  %v7070 = vunpack.c.l.b16 %v6942
  %v7071 = vunpack.c.l.b16 %v6943
  %v7072 = vunpack.c.l.b16 %v6944
  %v7073 = vunpack.c.l.b16 %v6945
  %v7074 = vunpack.c.l.b16 %v6946
  %v7075 = vunpack.c.l.b16 %v6947
  %v7076 = vunpack.c.l.b16 %v6948
  %v7077 = vunpack.c.l.b16 %v6949
  %v7078 = vunpack.c.l.b16 %v6950
  %v7079 = vunpack.c.l.b16 %v6951
  %v7080 = vunpack.c.l.b16 %v6952
  %v7081 = vunpack.c.l.b16 %v6953
  %v7082 = vunpack.c.l.b16 %v6954
  %v7083 = vunpack.c.l.b16 %v6955
  %v7084 = vunpack.c.l.b16 %v6956
  %v7085 = vunpack.c.l.b16 %v6957
  %v7086 = vunpack.c.l.b16 %v6958
  %v7087 = vunpack.c.l.b16 %v6959
  %v7088 = vunpack.c.l.b16 %v6960
  %v7089 = vunpack.c.l.b16 %v6961
  %v7090 = vunpack.c.l.b16 %v6962
  %v7091 = vunpack.c.l.b16 %v6963
  %v7092 = vunpack.c.l.b16 %v6964
  %v7093 = vunpack.c.l.b16 %v6965
  %v7094 = vunpack.c.l.b16 %v6966
  %v7095 = vunpack.c.l.b16 %v6967
  %v7096 = vunpack.c.l.b16 %v6968
  %v7097 = vunpack.c.l.b16 %v6969
  %v7098 = vunpack.c.l.b16 %v6970
  %v7099 = vunpack.c.l.b16 %v6971
  %v7100 = vunpack.c.l.b16 %v6972
  %v7101 = vunpack.c.l.b16 %v6973
  %v7102 = vunpack.c.l.b16 %v6974
  %v7103 = vunpack.c.l.b16 %v6975
  %v7104 = vunpack.c.l.b16 %v6976
  %v7105 = vunpack.c.l.b16 %v6977
  %v7106 = vunpack.c.l.b16 %v6978
  %v7107 = vunpack.c.l.b16 %v6979
  %v7108 = vunpack.c.l.b16 %v6980
  %v7109 = vunpack.c.l.b16 %v6981
  %v7110 = vunpack.c.l.b16 %v6982
  %v7111 = vunpack.c.l.b16 %v6983
  %v7112 = vpack.c.b16 %v7049, %v7048
  %v7113 = vpack.c.b16 %v7051, %v7050
  %v7114 = vpack.c.b16 %v7053, %v7052
  %v7115 = vpack.c.b16 %v7055, %v7054
  %v7116 = vpack.c.b16 %v7057, %v7056
  %v7117 = vpack.c.b16 %v7059, %v7058
  %v7118 = vpack.c.b16 %v7061, %v7060
  %v7119 = vpack.c.b16 %v7063, %v7062
  %v7120 = vpack.c.b16 %v7065, %v7064
  %v7121 = vpack.c.b16 %v7067, %v7066
  %v7122 = vpack.c.b16 %v7069, %v7068
  %v7123 = vpack.c.b16 %v7071, %v7070
  %v7124 = vpack.c.b16 %v7073, %v7072
  %v7125 = vpack.c.b16 %v7075, %v7074
  %v7126 = vpack.c.b16 %v7077, %v7076
  %v7127 = vpack.c.b16 %v7079, %v7078
  %v7128 = vpack.c.b16 %v7081, %v7080
  %v7129 = vpack.c.b16 %v7083, %v7082
  %v7130 = vpack.c.b16 %v7085, %v7084
  %v7131 = vpack.c.b16 %v7087, %v7086
  %v7132 = vpack.c.b16 %v7089, %v7088
  %v7133 = vpack.c.b16 %v7091, %v7090
  %v7134 = vpack.c.b16 %v7093, %v7092
  %v7135 = vpack.c.b16 %v7095, %v7094
  %v7136 = vpack.c.b16 %v7097, %v7096
  %v7137 = vpack.c.b16 %v7099, %v7098
  %v7138 = vpack.c.b16 %v7101, %v7100
  %v7139 = vpack.c.b16 %v7103, %v7102
  %v7140 = vpack.c.b16 %v7105, %v7104
  %v7141 = vpack.c.b16 %v7107, %v7106
  %v7142 = vpack.c.b16 %v7109, %v7108
  %v7143 = vpack.c.b16 %v7111, %v7110
  %7176 = vmatprep.subr.bf16.mxu0 0
  %7177 = vmatpush1.bf16.msra.mxu0 %v7119
  %7178 = vmatprep.subr.bf16.mxu0 0
  %7179 = vmatpush1.bf16.msra.mxu0 %v7118
  %7180 = vmatprep.subr.bf16.mxu0 0
  %7181 = vmatpush1.bf16.msra.mxu0 %v7117
  %7182 = vmatprep.subr.bf16.mxu0 0
  %7183 = vmatpush1.bf16.msra.mxu0 %v7116
  %7184 = vmatprep.subr.bf16.mxu0 0
  %7185 = vmatpush1.bf16.msra.mxu0 %v7115
  %7186 = vmatprep.subr.bf16.mxu0 0
  %7187 = vmatpush1.bf16.msra.mxu0 %v7114
  %7188 = vmatprep.subr.bf16.mxu0 0
  %7189 = vmatpush1.bf16.msra.mxu0 %v7113
  %7190 = vmatprep.subr.bf16.mxu0 0
  %7191 = vmatpush1.bf16.msra.mxu0 %v7112
  %7192 = vmatprep.subr.bf16.mxu0 0
  %7193 = vmatpush2.bf16.msra.mxu0 %v7127
  %7194 = vmatprep.subr.bf16.mxu0 0
  %7195 = vmatpush2.bf16.msra.mxu0 %v7126
  %7196 = vmatprep.subr.bf16.mxu0 0
  %7197 = vmatpush2.bf16.msra.mxu0 %v7125
  %7198 = vmatprep.subr.bf16.mxu0 0
  %7199 = vmatpush2.bf16.msra.mxu0 %v7124
  %7200 = vmatprep.subr.bf16.mxu0 0
  %7201 = vmatpush2.bf16.msra.mxu0 %v7123
  %7202 = vmatprep.subr.bf16.mxu0 0
  %7203 = vmatpush2.bf16.msra.mxu0 %v7122
  %7204 = vmatprep.subr.bf16.mxu0 0
  %7205 = vmatpush2.bf16.msra.mxu0 %v7121
  %7206 = vmatprep.subr.bf16.mxu0 0
  %7207 = vmatpush2.bf16.msra.mxu0 %v7120
  %7208 = vmatprep.mubr.bf16.mxu0 %v4711
  %7209 = vmatmul.mubr.bf16.gmra.mxu0 %v4710
  %v7210 = vpop.f32.mrf.mxu0
  %v7211 = vadd.f32 0.0, %v7210
  %v7212 = vpop.f32.mrf.mxu0
  %v7213 = vpop.f32.mrf.mxu0
  %v7214 = vadd.f32 0.0, %v7213
  %v7215 = vpop.f32.mrf.mxu0
  %7216 = vmatprep.mubr.bf16.mxu0 %v4715
  %7217 = vmatmul.mubr.bf16.gmra.mxu0 %v4714
  %v7218 = vpop.f32.mrf.mxu0
  %v7219 = vadd.f32 0.0, %v7218
  %v7220 = vpop.f32.mrf.mxu0
  %v7221 = vpop.f32.mrf.mxu0
  %v7222 = vadd.f32 0.0, %v7221
  %v7223 = vpop.f32.mrf.mxu0
  %7224 = vdwg.mxu0
  %7225 = vmatprep.subr.bf16.mxu0 0
  %7226 = vmatpush1.bf16.msra.mxu0 %v7135
  %7227 = vmatprep.subr.bf16.mxu0 0
  %7228 = vmatpush1.bf16.msra.mxu0 %v7134
  %7229 = vmatprep.subr.bf16.mxu0 0
  %7230 = vmatpush1.bf16.msra.mxu0 %v7133
  %7231 = vmatprep.subr.bf16.mxu0 0
  %7232 = vmatpush1.bf16.msra.mxu0 %v7132
  %7233 = vmatprep.subr.bf16.mxu0 0
  %7234 = vmatpush1.bf16.msra.mxu0 %v7131
  %7235 = vmatprep.subr.bf16.mxu0 0
  %7236 = vmatpush1.bf16.msra.mxu0 %v7130
  %7237 = vmatprep.subr.bf16.mxu0 0
  %7238 = vmatpush1.bf16.msra.mxu0 %v7129
  %7239 = vmatprep.subr.bf16.mxu0 0
  %7240 = vmatpush1.bf16.msra.mxu0 %v7128
  %7241 = vmatprep.subr.bf16.mxu0 0
  %7242 = vmatpush2.bf16.msra.mxu0 %v7143
  %7243 = vmatprep.subr.bf16.mxu0 0
  %7244 = vmatpush2.bf16.msra.mxu0 %v7142
  %7245 = vmatprep.subr.bf16.mxu0 0
  %7246 = vmatpush2.bf16.msra.mxu0 %v7141
  %7247 = vmatprep.subr.bf16.mxu0 0
  %7248 = vmatpush2.bf16.msra.mxu0 %v7140
  %7249 = vmatprep.subr.bf16.mxu0 0
  %7250 = vmatpush2.bf16.msra.mxu0 %v7139
  %7251 = vmatprep.subr.bf16.mxu0 0
  %7252 = vmatpush2.bf16.msra.mxu0 %v7138
  %7253 = vmatprep.subr.bf16.mxu0 0
  %7254 = vmatpush2.bf16.msra.mxu0 %v7137
  %7255 = vmatprep.subr.bf16.mxu0 0
  %7256 = vmatpush2.bf16.msra.mxu0 %v7136
  %7257 = vmatprep.mubr.bf16.mxu0 %v4713
  %7258 = vmatmul.mubr.bf16.gmra.mxu0 %v4712
  %v7259 = vpop.f32.mrf.mxu0
  %v7260 = vadd.f32 %v7211, %v7259
  %v7261 = vpop.f32.mrf.mxu0
  %v7262 = vpop.f32.mrf.mxu0
  %v7263 = vadd.f32 %v7214, %v7262
  %v7264 = vpop.f32.mrf.mxu0
  %7265 = vmatprep.mubr.bf16.mxu0 %v4717
  %7266 = vmatmul.mubr.bf16.gmra.mxu0 %v4716
  %v7267 = vpop.f32.mrf.mxu0
  %v7268 = vadd.f32 %v7219, %v7267
  %v7269 = vpop.f32.mrf.mxu0
  %v7270 = vpop.f32.mrf.mxu0
  %v7271 = vadd.f32 %v7222, %v7270
  %v7272 = vpop.f32.mrf.mxu0
  %7273 = vdwg.mxu0
  %v7274 = vadd.f32 %v6915, %v7260
  %v7275 = vadd.f32 %v6916, %v7263
  %v7276 = vadd.f32 %v6917, %v7268
  %v7277 = vadd.f32 %v6918, %v7271
  %s7278 = scalar_lea.vmem %s3, 1792
  %v7279 = vld [vmem:[%s7278] sm:$0xf]
  %v7280 = vld [vmem:[%s7278 + $0x4] sm:$0xf]
  %v7281 = vld [vmem:[%s7278 + $0x8] sm:$0xf]
  %v7282 = vld [vmem:[%s7278 + $0xc] sm:$0xf]
  %v7283 = vld [vmem:[%s7278 + $0x10] sm:$0xf]
  %v7284 = vld [vmem:[%s7278 + $0x14] sm:$0xf]
  %v7285 = vld [vmem:[%s7278 + $0x18] sm:$0xf]
  %v7286 = vld [vmem:[%s7278 + $0x1c] sm:$0xf]
  %v7287 = vld [vmem:[%s7278 + $0x20] sm:$0xf]
  %v7288 = vld [vmem:[%s7278 + $0x24] sm:$0xf]
  %v7289 = vld [vmem:[%s7278 + $0x28] sm:$0xf]
  %v7290 = vld [vmem:[%s7278 + $0x2c] sm:$0xf]
  %v7291 = vld [vmem:[%s7278 + $0x30] sm:$0xf]
  %v7292 = vld [vmem:[%s7278 + $0x34] sm:$0xf]
  %v7293 = vld [vmem:[%s7278 + $0x38] sm:$0xf]
  %v7294 = vld [vmem:[%s7278 + $0x3c] sm:$0xf]
  %v7295 = vld [vmem:[%s7278 + $0x40] sm:$0xf]
  %v7296 = vld [vmem:[%s7278 + $0x44] sm:$0xf]
  %v7297 = vld [vmem:[%s7278 + $0x48] sm:$0xf]
  %v7298 = vld [vmem:[%s7278 + $0x4c] sm:$0xf]
  %v7299 = vld [vmem:[%s7278 + $0x50] sm:$0xf]
  %v7300 = vld [vmem:[%s7278 + $0x54] sm:$0xf]
  %v7301 = vld [vmem:[%s7278 + $0x58] sm:$0xf]
  %v7302 = vld [vmem:[%s7278 + $0x5c] sm:$0xf]
  %v7303 = vld [vmem:[%s7278 + $0x60] sm:$0xf]
  %v7304 = vld [vmem:[%s7278 + $0x64] sm:$0xf]
  %v7305 = vld [vmem:[%s7278 + $0x68] sm:$0xf]
  %v7306 = vld [vmem:[%s7278 + $0x6c] sm:$0xf]
  %v7307 = vld [vmem:[%s7278 + $0x70] sm:$0xf]
  %v7308 = vld [vmem:[%s7278 + $0x74] sm:$0xf]
  %v7309 = vld [vmem:[%s7278 + $0x78] sm:$0xf]
  %v7310 = vld [vmem:[%s7278 + $0x7c] sm:$0xf]
  %v7311 = vld [vmem:[%s7278 + $0x80] sm:$0xf]
  %v7312 = vld [vmem:[%s7278 + $0x84] sm:$0xf]
  %v7313 = vld [vmem:[%s7278 + $0x88] sm:$0xf]
  %v7314 = vld [vmem:[%s7278 + $0x8c] sm:$0xf]
  %v7315 = vld [vmem:[%s7278 + $0x90] sm:$0xf]
  %v7316 = vld [vmem:[%s7278 + $0x94] sm:$0xf]
  %v7317 = vld [vmem:[%s7278 + $0x98] sm:$0xf]
  %v7318 = vld [vmem:[%s7278 + $0x9c] sm:$0xf]
  %v7319 = vld [vmem:[%s7278 + $0xa0] sm:$0xf]
  %v7320 = vld [vmem:[%s7278 + $0xa4] sm:$0xf]
  %v7321 = vld [vmem:[%s7278 + $0xa8] sm:$0xf]
  %v7322 = vld [vmem:[%s7278 + $0xac] sm:$0xf]
  %v7323 = vld [vmem:[%s7278 + $0xb0] sm:$0xf]
  %v7324 = vld [vmem:[%s7278 + $0xb4] sm:$0xf]
  %v7325 = vld [vmem:[%s7278 + $0xb8] sm:$0xf]
  %v7326 = vld [vmem:[%s7278 + $0xbc] sm:$0xf]
  %v7327 = vld [vmem:[%s7278 + $0xc0] sm:$0xf]
  %v7328 = vld [vmem:[%s7278 + $0xc4] sm:$0xf]
  %v7329 = vld [vmem:[%s7278 + $0xc8] sm:$0xf]
  %v7330 = vld [vmem:[%s7278 + $0xcc] sm:$0xf]
  %v7331 = vld [vmem:[%s7278 + $0xd0] sm:$0xf]
  %v7332 = vld [vmem:[%s7278 + $0xd4] sm:$0xf]
  %v7333 = vld [vmem:[%s7278 + $0xd8] sm:$0xf]
  %v7334 = vld [vmem:[%s7278 + $0xdc] sm:$0xf]
  %v7335 = vld [vmem:[%s7278 + $0xe0] sm:$0xf]
  %v7336 = vld [vmem:[%s7278 + $0xe4] sm:$0xf]
  %v7337 = vld [vmem:[%s7278 + $0xe8] sm:$0xf]
  %v7338 = vld [vmem:[%s7278 + $0xec] sm:$0xf]
  %v7339 = vld [vmem:[%s7278 + $0xf0] sm:$0xf]
  %v7340 = vld [vmem:[%s7278 + $0xf4] sm:$0xf]
  %v7341 = vld [vmem:[%s7278 + $0xf8] sm:$0xf]
  %v7342 = vld [vmem:[%s7278 + $0xfc] sm:$0xf]
  %v7407 = vunpack.c.l.b16 %v7279
  %v7408 = vunpack.c.l.b16 %v7280
  %v7409 = vunpack.c.l.b16 %v7281
  %v7410 = vunpack.c.l.b16 %v7282
  %v7411 = vunpack.c.l.b16 %v7283
  %v7412 = vunpack.c.l.b16 %v7284
  %v7413 = vunpack.c.l.b16 %v7285
  %v7414 = vunpack.c.l.b16 %v7286
  %v7415 = vunpack.c.l.b16 %v7287
  %v7416 = vunpack.c.l.b16 %v7288
  %v7417 = vunpack.c.l.b16 %v7289
  %v7418 = vunpack.c.l.b16 %v7290
  %v7419 = vunpack.c.l.b16 %v7291
  %v7420 = vunpack.c.l.b16 %v7292
  %v7421 = vunpack.c.l.b16 %v7293
  %v7422 = vunpack.c.l.b16 %v7294
  %v7423 = vunpack.c.l.b16 %v7295
  %v7424 = vunpack.c.l.b16 %v7296
  %v7425 = vunpack.c.l.b16 %v7297
  %v7426 = vunpack.c.l.b16 %v7298
  %v7427 = vunpack.c.l.b16 %v7299
  %v7428 = vunpack.c.l.b16 %v7300
  %v7429 = vunpack.c.l.b16 %v7301
  %v7430 = vunpack.c.l.b16 %v7302
  %v7431 = vunpack.c.l.b16 %v7303
  %v7432 = vunpack.c.l.b16 %v7304
  %v7433 = vunpack.c.l.b16 %v7305
  %v7434 = vunpack.c.l.b16 %v7306
  %v7435 = vunpack.c.l.b16 %v7307
  %v7436 = vunpack.c.l.b16 %v7308
  %v7437 = vunpack.c.l.b16 %v7309
  %v7438 = vunpack.c.l.b16 %v7310
  %v7439 = vunpack.c.l.b16 %v7311
  %v7440 = vunpack.c.l.b16 %v7312
  %v7441 = vunpack.c.l.b16 %v7313
  %v7442 = vunpack.c.l.b16 %v7314
  %v7443 = vunpack.c.l.b16 %v7315
  %v7444 = vunpack.c.l.b16 %v7316
  %v7445 = vunpack.c.l.b16 %v7317
  %v7446 = vunpack.c.l.b16 %v7318
  %v7447 = vunpack.c.l.b16 %v7319
  %v7448 = vunpack.c.l.b16 %v7320
  %v7449 = vunpack.c.l.b16 %v7321
  %v7450 = vunpack.c.l.b16 %v7322
  %v7451 = vunpack.c.l.b16 %v7323
  %v7452 = vunpack.c.l.b16 %v7324
  %v7453 = vunpack.c.l.b16 %v7325
  %v7454 = vunpack.c.l.b16 %v7326
  %v7455 = vunpack.c.l.b16 %v7327
  %v7456 = vunpack.c.l.b16 %v7328
  %v7457 = vunpack.c.l.b16 %v7329
  %v7458 = vunpack.c.l.b16 %v7330
  %v7459 = vunpack.c.l.b16 %v7331
  %v7460 = vunpack.c.l.b16 %v7332
  %v7461 = vunpack.c.l.b16 %v7333
  %v7462 = vunpack.c.l.b16 %v7334
  %v7463 = vunpack.c.l.b16 %v7335
  %v7464 = vunpack.c.l.b16 %v7336
  %v7465 = vunpack.c.l.b16 %v7337
  %v7466 = vunpack.c.l.b16 %v7338
  %v7467 = vunpack.c.l.b16 %v7339
  %v7468 = vunpack.c.l.b16 %v7340
  %v7469 = vunpack.c.l.b16 %v7341
  %v7470 = vunpack.c.l.b16 %v7342
  %v7471 = vpack.c.b16 %v7408, %v7407
  %v7472 = vpack.c.b16 %v7410, %v7409
  %v7473 = vpack.c.b16 %v7412, %v7411
  %v7474 = vpack.c.b16 %v7414, %v7413
  %v7475 = vpack.c.b16 %v7416, %v7415
  %v7476 = vpack.c.b16 %v7418, %v7417
  %v7477 = vpack.c.b16 %v7420, %v7419
  %v7478 = vpack.c.b16 %v7422, %v7421
  %v7479 = vpack.c.b16 %v7424, %v7423
  %v7480 = vpack.c.b16 %v7426, %v7425
  %v7481 = vpack.c.b16 %v7428, %v7427
  %v7482 = vpack.c.b16 %v7430, %v7429
  %v7483 = vpack.c.b16 %v7432, %v7431
  %v7484 = vpack.c.b16 %v7434, %v7433
  %v7485 = vpack.c.b16 %v7436, %v7435
  %v7486 = vpack.c.b16 %v7438, %v7437
  %v7487 = vpack.c.b16 %v7440, %v7439
  %v7488 = vpack.c.b16 %v7442, %v7441
  %v7489 = vpack.c.b16 %v7444, %v7443
  %v7490 = vpack.c.b16 %v7446, %v7445
  %v7491 = vpack.c.b16 %v7448, %v7447
  %v7492 = vpack.c.b16 %v7450, %v7449
  %v7493 = vpack.c.b16 %v7452, %v7451
  %v7494 = vpack.c.b16 %v7454, %v7453
  %v7495 = vpack.c.b16 %v7456, %v7455
  %v7496 = vpack.c.b16 %v7458, %v7457
  %v7497 = vpack.c.b16 %v7460, %v7459
  %v7498 = vpack.c.b16 %v7462, %v7461
  %v7499 = vpack.c.b16 %v7464, %v7463
  %v7500 = vpack.c.b16 %v7466, %v7465
  %v7501 = vpack.c.b16 %v7468, %v7467
  %v7502 = vpack.c.b16 %v7470, %v7469
  %7535 = vmatprep.subr.bf16.mxu0 0
  %7536 = vmatpush1.bf16.msra.mxu0 %v7478
  %7537 = vmatprep.subr.bf16.mxu0 0
  %7538 = vmatpush1.bf16.msra.mxu0 %v7477
  %7539 = vmatprep.subr.bf16.mxu0 0
  %7540 = vmatpush1.bf16.msra.mxu0 %v7476
  %7541 = vmatprep.subr.bf16.mxu0 0
  %7542 = vmatpush1.bf16.msra.mxu0 %v7475
  %7543 = vmatprep.subr.bf16.mxu0 0
  %7544 = vmatpush1.bf16.msra.mxu0 %v7474
  %7545 = vmatprep.subr.bf16.mxu0 0
  %7546 = vmatpush1.bf16.msra.mxu0 %v7473
  %7547 = vmatprep.subr.bf16.mxu0 0
  %7548 = vmatpush1.bf16.msra.mxu0 %v7472
  %7549 = vmatprep.subr.bf16.mxu0 0
  %7550 = vmatpush1.bf16.msra.mxu0 %v7471
  %7551 = vmatprep.subr.bf16.mxu0 0
  %7552 = vmatpush2.bf16.msra.mxu0 %v7486
  %7553 = vmatprep.subr.bf16.mxu0 0
  %7554 = vmatpush2.bf16.msra.mxu0 %v7485
  %7555 = vmatprep.subr.bf16.mxu0 0
  %7556 = vmatpush2.bf16.msra.mxu0 %v7484
  %7557 = vmatprep.subr.bf16.mxu0 0
  %7558 = vmatpush2.bf16.msra.mxu0 %v7483
  %7559 = vmatprep.subr.bf16.mxu0 0
  %7560 = vmatpush2.bf16.msra.mxu0 %v7482
  %7561 = vmatprep.subr.bf16.mxu0 0
  %7562 = vmatpush2.bf16.msra.mxu0 %v7481
  %7563 = vmatprep.subr.bf16.mxu0 0
  %7564 = vmatpush2.bf16.msra.mxu0 %v7480
  %7565 = vmatprep.subr.bf16.mxu0 0
  %7566 = vmatpush2.bf16.msra.mxu0 %v7479
  %7567 = vmatprep.mubr.bf16.mxu0 %v4719
  %7568 = vmatmul.mubr.bf16.gmra.mxu0 %v4718
  %v7569 = vpop.f32.mrf.mxu0
  %v7570 = vadd.f32 0.0, %v7569
  %v7571 = vpop.f32.mrf.mxu0
  %v7572 = vpop.f32.mrf.mxu0
  %v7573 = vadd.f32 0.0, %v7572
  %v7574 = vpop.f32.mrf.mxu0
  %7575 = vmatprep.mubr.bf16.mxu0 %v4723
  %7576 = vmatmul.mubr.bf16.gmra.mxu0 %v4722
  %v7577 = vpop.f32.mrf.mxu0
  %v7578 = vadd.f32 0.0, %v7577
  %v7579 = vpop.f32.mrf.mxu0
  %v7580 = vpop.f32.mrf.mxu0
  %v7581 = vadd.f32 0.0, %v7580
  %v7582 = vpop.f32.mrf.mxu0
  %7583 = vdwg.mxu0
  %7584 = vmatprep.subr.bf16.mxu0 0
  %7585 = vmatpush1.bf16.msra.mxu0 %v7494
  %7586 = vmatprep.subr.bf16.mxu0 0
  %7587 = vmatpush1.bf16.msra.mxu0 %v7493
  %7588 = vmatprep.subr.bf16.mxu0 0
  %7589 = vmatpush1.bf16.msra.mxu0 %v7492
  %7590 = vmatprep.subr.bf16.mxu0 0
  %7591 = vmatpush1.bf16.msra.mxu0 %v7491
  %7592 = vmatprep.subr.bf16.mxu0 0
  %7593 = vmatpush1.bf16.msra.mxu0 %v7490
  %7594 = vmatprep.subr.bf16.mxu0 0
  %7595 = vmatpush1.bf16.msra.mxu0 %v7489
  %7596 = vmatprep.subr.bf16.mxu0 0
  %7597 = vmatpush1.bf16.msra.mxu0 %v7488
  %7598 = vmatprep.subr.bf16.mxu0 0
  %7599 = vmatpush1.bf16.msra.mxu0 %v7487
  %7600 = vmatprep.subr.bf16.mxu0 0
  %7601 = vmatpush2.bf16.msra.mxu0 %v7502
  %7602 = vmatprep.subr.bf16.mxu0 0
  %7603 = vmatpush2.bf16.msra.mxu0 %v7501
  %7604 = vmatprep.subr.bf16.mxu0 0
  %7605 = vmatpush2.bf16.msra.mxu0 %v7500
  %7606 = vmatprep.subr.bf16.mxu0 0
  %7607 = vmatpush2.bf16.msra.mxu0 %v7499
  %7608 = vmatprep.subr.bf16.mxu0 0
  %7609 = vmatpush2.bf16.msra.mxu0 %v7498
  %7610 = vmatprep.subr.bf16.mxu0 0
  %7611 = vmatpush2.bf16.msra.mxu0 %v7497
  %7612 = vmatprep.subr.bf16.mxu0 0
  %7613 = vmatpush2.bf16.msra.mxu0 %v7496
  %7614 = vmatprep.subr.bf16.mxu0 0
  %7615 = vmatpush2.bf16.msra.mxu0 %v7495
  %7616 = vmatprep.mubr.bf16.mxu0 %v4721
  %7617 = vmatmul.mubr.bf16.gmra.mxu0 %v4720
  %v7618 = vpop.f32.mrf.mxu0
  %v7619 = vadd.f32 %v7570, %v7618
  %v7620 = vpop.f32.mrf.mxu0
  %v7621 = vpop.f32.mrf.mxu0
  %v7622 = vadd.f32 %v7573, %v7621
  %v7623 = vpop.f32.mrf.mxu0
  %7624 = vmatprep.mubr.bf16.mxu0 %v4725
  %7625 = vmatmul.mubr.bf16.gmra.mxu0 %v4724
  %v7626 = vpop.f32.mrf.mxu0
  %v7627 = vadd.f32 %v7578, %v7626
  %v7628 = vpop.f32.mrf.mxu0
  %v7629 = vpop.f32.mrf.mxu0
  %v7630 = vadd.f32 %v7581, %v7629
  %v7631 = vpop.f32.mrf.mxu0
  %7632 = vdwg.mxu0
  %v7633 = vadd.f32 %v7274, %v7619
  %v7634 = vadd.f32 %v7275, %v7622
  %v7635 = vadd.f32 %v7276, %v7627
  %v7636 = vadd.f32 %v7277, %v7630
  %s7637 = scalar_lea.vmem %s3, 2048
  %v7638 = vld [vmem:[%s7637] sm:$0xf]
  %v7639 = vld [vmem:[%s7637 + $0x4] sm:$0xf]
  %v7640 = vld [vmem:[%s7637 + $0x8] sm:$0xf]
  %v7641 = vld [vmem:[%s7637 + $0xc] sm:$0xf]
  %v7642 = vld [vmem:[%s7637 + $0x10] sm:$0xf]
  %v7643 = vld [vmem:[%s7637 + $0x14] sm:$0xf]
  %v7644 = vld [vmem:[%s7637 + $0x18] sm:$0xf]
  %v7645 = vld [vmem:[%s7637 + $0x1c] sm:$0xf]
  %v7646 = vld [vmem:[%s7637 + $0x20] sm:$0xf]
  %v7647 = vld [vmem:[%s7637 + $0x24] sm:$0xf]
  %v7648 = vld [vmem:[%s7637 + $0x28] sm:$0xf]
  %v7649 = vld [vmem:[%s7637 + $0x2c] sm:$0xf]
  %v7650 = vld [vmem:[%s7637 + $0x30] sm:$0xf]
  %v7651 = vld [vmem:[%s7637 + $0x34] sm:$0xf]
  %v7652 = vld [vmem:[%s7637 + $0x38] sm:$0xf]
  %v7653 = vld [vmem:[%s7637 + $0x3c] sm:$0xf]
  %v7654 = vld [vmem:[%s7637 + $0x40] sm:$0xf]
  %v7655 = vld [vmem:[%s7637 + $0x44] sm:$0xf]
  %v7656 = vld [vmem:[%s7637 + $0x48] sm:$0xf]
  %v7657 = vld [vmem:[%s7637 + $0x4c] sm:$0xf]
  %v7658 = vld [vmem:[%s7637 + $0x50] sm:$0xf]
  %v7659 = vld [vmem:[%s7637 + $0x54] sm:$0xf]
  %v7660 = vld [vmem:[%s7637 + $0x58] sm:$0xf]
  %v7661 = vld [vmem:[%s7637 + $0x5c] sm:$0xf]
  %v7662 = vld [vmem:[%s7637 + $0x60] sm:$0xf]
  %v7663 = vld [vmem:[%s7637 + $0x64] sm:$0xf]
  %v7664 = vld [vmem:[%s7637 + $0x68] sm:$0xf]
  %v7665 = vld [vmem:[%s7637 + $0x6c] sm:$0xf]
  %v7666 = vld [vmem:[%s7637 + $0x70] sm:$0xf]
  %v7667 = vld [vmem:[%s7637 + $0x74] sm:$0xf]
  %v7668 = vld [vmem:[%s7637 + $0x78] sm:$0xf]
  %v7669 = vld [vmem:[%s7637 + $0x7c] sm:$0xf]
  %v7670 = vld [vmem:[%s7637 + $0x80] sm:$0xf]
  %v7671 = vld [vmem:[%s7637 + $0x84] sm:$0xf]
  %v7672 = vld [vmem:[%s7637 + $0x88] sm:$0xf]
  %v7673 = vld [vmem:[%s7637 + $0x8c] sm:$0xf]
  %v7674 = vld [vmem:[%s7637 + $0x90] sm:$0xf]
  %v7675 = vld [vmem:[%s7637 + $0x94] sm:$0xf]
  %v7676 = vld [vmem:[%s7637 + $0x98] sm:$0xf]
  %v7677 = vld [vmem:[%s7637 + $0x9c] sm:$0xf]
  %v7678 = vld [vmem:[%s7637 + $0xa0] sm:$0xf]
  %v7679 = vld [vmem:[%s7637 + $0xa4] sm:$0xf]
  %v7680 = vld [vmem:[%s7637 + $0xa8] sm:$0xf]
  %v7681 = vld [vmem:[%s7637 + $0xac] sm:$0xf]
  %v7682 = vld [vmem:[%s7637 + $0xb0] sm:$0xf]
  %v7683 = vld [vmem:[%s7637 + $0xb4] sm:$0xf]
  %v7684 = vld [vmem:[%s7637 + $0xb8] sm:$0xf]
  %v7685 = vld [vmem:[%s7637 + $0xbc] sm:$0xf]
  %v7686 = vld [vmem:[%s7637 + $0xc0] sm:$0xf]
  %v7687 = vld [vmem:[%s7637 + $0xc4] sm:$0xf]
  %v7688 = vld [vmem:[%s7637 + $0xc8] sm:$0xf]
  %v7689 = vld [vmem:[%s7637 + $0xcc] sm:$0xf]
  %v7690 = vld [vmem:[%s7637 + $0xd0] sm:$0xf]
  %v7691 = vld [vmem:[%s7637 + $0xd4] sm:$0xf]
  %v7692 = vld [vmem:[%s7637 + $0xd8] sm:$0xf]
  %v7693 = vld [vmem:[%s7637 + $0xdc] sm:$0xf]
  %v7694 = vld [vmem:[%s7637 + $0xe0] sm:$0xf]
  %v7695 = vld [vmem:[%s7637 + $0xe4] sm:$0xf]
  %v7696 = vld [vmem:[%s7637 + $0xe8] sm:$0xf]
  %v7697 = vld [vmem:[%s7637 + $0xec] sm:$0xf]
  %v7698 = vld [vmem:[%s7637 + $0xf0] sm:$0xf]
  %v7699 = vld [vmem:[%s7637 + $0xf4] sm:$0xf]
  %v7700 = vld [vmem:[%s7637 + $0xf8] sm:$0xf]
  %v7701 = vld [vmem:[%s7637 + $0xfc] sm:$0xf]
  %v7766 = vunpack.c.l.b16 %v7638
  %v7767 = vunpack.c.l.b16 %v7639
  %v7768 = vunpack.c.l.b16 %v7640
  %v7769 = vunpack.c.l.b16 %v7641
  %v7770 = vunpack.c.l.b16 %v7642
  %v7771 = vunpack.c.l.b16 %v7643
  %v7772 = vunpack.c.l.b16 %v7644
  %v7773 = vunpack.c.l.b16 %v7645
  %v7774 = vunpack.c.l.b16 %v7646
  %v7775 = vunpack.c.l.b16 %v7647
  %v7776 = vunpack.c.l.b16 %v7648
  %v7777 = vunpack.c.l.b16 %v7649
  %v7778 = vunpack.c.l.b16 %v7650
  %v7779 = vunpack.c.l.b16 %v7651
  %v7780 = vunpack.c.l.b16 %v7652
  %v7781 = vunpack.c.l.b16 %v7653
  %v7782 = vunpack.c.l.b16 %v7654
  %v7783 = vunpack.c.l.b16 %v7655
  %v7784 = vunpack.c.l.b16 %v7656
  %v7785 = vunpack.c.l.b16 %v7657
  %v7786 = vunpack.c.l.b16 %v7658
  %v7787 = vunpack.c.l.b16 %v7659
  %v7788 = vunpack.c.l.b16 %v7660
  %v7789 = vunpack.c.l.b16 %v7661
  %v7790 = vunpack.c.l.b16 %v7662
  %v7791 = vunpack.c.l.b16 %v7663
  %v7792 = vunpack.c.l.b16 %v7664
  %v7793 = vunpack.c.l.b16 %v7665
  %v7794 = vunpack.c.l.b16 %v7666
  %v7795 = vunpack.c.l.b16 %v7667
  %v7796 = vunpack.c.l.b16 %v7668
  %v7797 = vunpack.c.l.b16 %v7669
  %v7798 = vunpack.c.l.b16 %v7670
  %v7799 = vunpack.c.l.b16 %v7671
  %v7800 = vunpack.c.l.b16 %v7672
  %v7801 = vunpack.c.l.b16 %v7673
  %v7802 = vunpack.c.l.b16 %v7674
  %v7803 = vunpack.c.l.b16 %v7675
  %v7804 = vunpack.c.l.b16 %v7676
  %v7805 = vunpack.c.l.b16 %v7677
  %v7806 = vunpack.c.l.b16 %v7678
  %v7807 = vunpack.c.l.b16 %v7679
  %v7808 = vunpack.c.l.b16 %v7680
  %v7809 = vunpack.c.l.b16 %v7681
  %v7810 = vunpack.c.l.b16 %v7682
  %v7811 = vunpack.c.l.b16 %v7683
  %v7812 = vunpack.c.l.b16 %v7684
  %v7813 = vunpack.c.l.b16 %v7685
  %v7814 = vunpack.c.l.b16 %v7686
  %v7815 = vunpack.c.l.b16 %v7687
  %v7816 = vunpack.c.l.b16 %v7688
  %v7817 = vunpack.c.l.b16 %v7689
  %v7818 = vunpack.c.l.b16 %v7690
  %v7819 = vunpack.c.l.b16 %v7691
  %v7820 = vunpack.c.l.b16 %v7692
  %v7821 = vunpack.c.l.b16 %v7693
  %v7822 = vunpack.c.l.b16 %v7694
  %v7823 = vunpack.c.l.b16 %v7695
  %v7824 = vunpack.c.l.b16 %v7696
  %v7825 = vunpack.c.l.b16 %v7697
  %v7826 = vunpack.c.l.b16 %v7698
  %v7827 = vunpack.c.l.b16 %v7699
  %v7828 = vunpack.c.l.b16 %v7700
  %v7829 = vunpack.c.l.b16 %v7701
  %v7830 = vpack.c.b16 %v7767, %v7766
  %v7831 = vpack.c.b16 %v7769, %v7768
  %v7832 = vpack.c.b16 %v7771, %v7770
  %v7833 = vpack.c.b16 %v7773, %v7772
  %v7834 = vpack.c.b16 %v7775, %v7774
  %v7835 = vpack.c.b16 %v7777, %v7776
  %v7836 = vpack.c.b16 %v7779, %v7778
  %v7837 = vpack.c.b16 %v7781, %v7780
  %v7838 = vpack.c.b16 %v7783, %v7782
  %v7839 = vpack.c.b16 %v7785, %v7784
  %v7840 = vpack.c.b16 %v7787, %v7786
  %v7841 = vpack.c.b16 %v7789, %v7788
  %v7842 = vpack.c.b16 %v7791, %v7790
  %v7843 = vpack.c.b16 %v7793, %v7792
  %v7844 = vpack.c.b16 %v7795, %v7794
  %v7845 = vpack.c.b16 %v7797, %v7796
  %v7846 = vpack.c.b16 %v7799, %v7798
  %v7847 = vpack.c.b16 %v7801, %v7800
  %v7848 = vpack.c.b16 %v7803, %v7802
  %v7849 = vpack.c.b16 %v7805, %v7804
  %v7850 = vpack.c.b16 %v7807, %v7806
  %v7851 = vpack.c.b16 %v7809, %v7808
  %v7852 = vpack.c.b16 %v7811, %v7810
  %v7853 = vpack.c.b16 %v7813, %v7812
  %v7854 = vpack.c.b16 %v7815, %v7814
  %v7855 = vpack.c.b16 %v7817, %v7816
  %v7856 = vpack.c.b16 %v7819, %v7818
  %v7857 = vpack.c.b16 %v7821, %v7820
  %v7858 = vpack.c.b16 %v7823, %v7822
  %v7859 = vpack.c.b16 %v7825, %v7824
  %v7860 = vpack.c.b16 %v7827, %v7826
  %v7861 = vpack.c.b16 %v7829, %v7828
  %7894 = vmatprep.subr.bf16.mxu0 0
  %7895 = vmatpush1.bf16.msra.mxu0 %v7837
  %7896 = vmatprep.subr.bf16.mxu0 0
  %7897 = vmatpush1.bf16.msra.mxu0 %v7836
  %7898 = vmatprep.subr.bf16.mxu0 0
  %7899 = vmatpush1.bf16.msra.mxu0 %v7835
  %7900 = vmatprep.subr.bf16.mxu0 0
  %7901 = vmatpush1.bf16.msra.mxu0 %v7834
  %7902 = vmatprep.subr.bf16.mxu0 0
  %7903 = vmatpush1.bf16.msra.mxu0 %v7833
  %7904 = vmatprep.subr.bf16.mxu0 0
  %7905 = vmatpush1.bf16.msra.mxu0 %v7832
  %7906 = vmatprep.subr.bf16.mxu0 0
  %7907 = vmatpush1.bf16.msra.mxu0 %v7831
  %7908 = vmatprep.subr.bf16.mxu0 0
  %7909 = vmatpush1.bf16.msra.mxu0 %v7830
  %7910 = vmatprep.subr.bf16.mxu0 0
  %7911 = vmatpush2.bf16.msra.mxu0 %v7845
  %7912 = vmatprep.subr.bf16.mxu0 0
  %7913 = vmatpush2.bf16.msra.mxu0 %v7844
  %7914 = vmatprep.subr.bf16.mxu0 0
  %7915 = vmatpush2.bf16.msra.mxu0 %v7843
  %7916 = vmatprep.subr.bf16.mxu0 0
  %7917 = vmatpush2.bf16.msra.mxu0 %v7842
  %7918 = vmatprep.subr.bf16.mxu0 0
  %7919 = vmatpush2.bf16.msra.mxu0 %v7841
  %7920 = vmatprep.subr.bf16.mxu0 0
  %7921 = vmatpush2.bf16.msra.mxu0 %v7840
  %7922 = vmatprep.subr.bf16.mxu0 0
  %7923 = vmatpush2.bf16.msra.mxu0 %v7839
  %7924 = vmatprep.subr.bf16.mxu0 0
  %7925 = vmatpush2.bf16.msra.mxu0 %v7838
  %7926 = vmatprep.mubr.bf16.mxu0 %v4727
  %7927 = vmatmul.mubr.bf16.gmra.mxu0 %v4726
  %v7928 = vpop.f32.mrf.mxu0
  %v7929 = vadd.f32 0.0, %v7928
  %v7930 = vpop.f32.mrf.mxu0
  %v7931 = vpop.f32.mrf.mxu0
  %v7932 = vadd.f32 0.0, %v7931
  %v7933 = vpop.f32.mrf.mxu0
  %7934 = vmatprep.mubr.bf16.mxu0 %v4731
  %7935 = vmatmul.mubr.bf16.gmra.mxu0 %v4730
  %v7936 = vpop.f32.mrf.mxu0
  %v7937 = vadd.f32 0.0, %v7936
  %v7938 = vpop.f32.mrf.mxu0
  %v7939 = vpop.f32.mrf.mxu0
  %v7940 = vadd.f32 0.0, %v7939
  %v7941 = vpop.f32.mrf.mxu0
  %7942 = vdwg.mxu0
  %7943 = vmatprep.subr.bf16.mxu0 0
  %7944 = vmatpush1.bf16.msra.mxu0 %v7853
  %7945 = vmatprep.subr.bf16.mxu0 0
  %7946 = vmatpush1.bf16.msra.mxu0 %v7852
  %7947 = vmatprep.subr.bf16.mxu0 0
  %7948 = vmatpush1.bf16.msra.mxu0 %v7851
  %7949 = vmatprep.subr.bf16.mxu0 0
  %7950 = vmatpush1.bf16.msra.mxu0 %v7850
  %7951 = vmatprep.subr.bf16.mxu0 0
  %7952 = vmatpush1.bf16.msra.mxu0 %v7849
  %7953 = vmatprep.subr.bf16.mxu0 0
  %7954 = vmatpush1.bf16.msra.mxu0 %v7848
  %7955 = vmatprep.subr.bf16.mxu0 0
  %7956 = vmatpush1.bf16.msra.mxu0 %v7847
  %7957 = vmatprep.subr.bf16.mxu0 0
  %7958 = vmatpush1.bf16.msra.mxu0 %v7846
  %7959 = vmatprep.subr.bf16.mxu0 0
  %7960 = vmatpush2.bf16.msra.mxu0 %v7861
  %7961 = vmatprep.subr.bf16.mxu0 0
  %7962 = vmatpush2.bf16.msra.mxu0 %v7860
  %7963 = vmatprep.subr.bf16.mxu0 0
  %7964 = vmatpush2.bf16.msra.mxu0 %v7859
  %7965 = vmatprep.subr.bf16.mxu0 0
  %7966 = vmatpush2.bf16.msra.mxu0 %v7858
  %7967 = vmatprep.subr.bf16.mxu0 0
  %7968 = vmatpush2.bf16.msra.mxu0 %v7857
  %7969 = vmatprep.subr.bf16.mxu0 0
  %7970 = vmatpush2.bf16.msra.mxu0 %v7856
  %7971 = vmatprep.subr.bf16.mxu0 0
  %7972 = vmatpush2.bf16.msra.mxu0 %v7855
  %7973 = vmatprep.subr.bf16.mxu0 0
  %7974 = vmatpush2.bf16.msra.mxu0 %v7854
  %7975 = vmatprep.mubr.bf16.mxu0 %v4729
  %7976 = vmatmul.mubr.bf16.gmra.mxu0 %v4728
  %v7977 = vpop.f32.mrf.mxu0
  %v7978 = vadd.f32 %v7929, %v7977
  %v7979 = vpop.f32.mrf.mxu0
  %v7980 = vpop.f32.mrf.mxu0
  %v7981 = vadd.f32 %v7932, %v7980
  %v7982 = vpop.f32.mrf.mxu0
  %7983 = vmatprep.mubr.bf16.mxu0 %v4733
  %7984 = vmatmul.mubr.bf16.gmra.mxu0 %v4732
  %v7985 = vpop.f32.mrf.mxu0
  %v7986 = vadd.f32 %v7937, %v7985
  %v7987 = vpop.f32.mrf.mxu0
  %v7988 = vpop.f32.mrf.mxu0
  %v7989 = vadd.f32 %v7940, %v7988
  %v7990 = vpop.f32.mrf.mxu0
  %7991 = vdwg.mxu0
  %v7992 = vadd.f32 %v7633, %v7978
  %v7993 = vadd.f32 %v7634, %v7981
  %v7994 = vadd.f32 %v7635, %v7986
  %v7995 = vadd.f32 %v7636, %v7989
  %s7996 = scalar_lea.vmem %s3, 2304
  %v7997 = vld [vmem:[%s7996] sm:$0xf]
  %v7998 = vld [vmem:[%s7996 + $0x4] sm:$0xf]
  %v7999 = vld [vmem:[%s7996 + $0x8] sm:$0xf]
  %v8000 = vld [vmem:[%s7996 + $0xc] sm:$0xf]
  %v8001 = vld [vmem:[%s7996 + $0x10] sm:$0xf]
  %v8002 = vld [vmem:[%s7996 + $0x14] sm:$0xf]
  %v8003 = vld [vmem:[%s7996 + $0x18] sm:$0xf]
  %v8004 = vld [vmem:[%s7996 + $0x1c] sm:$0xf]
  %v8005 = vld [vmem:[%s7996 + $0x20] sm:$0xf]
  %v8006 = vld [vmem:[%s7996 + $0x24] sm:$0xf]
  %v8007 = vld [vmem:[%s7996 + $0x28] sm:$0xf]
  %v8008 = vld [vmem:[%s7996 + $0x2c] sm:$0xf]
  %v8009 = vld [vmem:[%s7996 + $0x30] sm:$0xf]
  %v8010 = vld [vmem:[%s7996 + $0x34] sm:$0xf]
  %v8011 = vld [vmem:[%s7996 + $0x38] sm:$0xf]
  %v8012 = vld [vmem:[%s7996 + $0x3c] sm:$0xf]
  %v8013 = vld [vmem:[%s7996 + $0x40] sm:$0xf]
  %v8014 = vld [vmem:[%s7996 + $0x44] sm:$0xf]
  %v8015 = vld [vmem:[%s7996 + $0x48] sm:$0xf]
  %v8016 = vld [vmem:[%s7996 + $0x4c] sm:$0xf]
  %v8017 = vld [vmem:[%s7996 + $0x50] sm:$0xf]
  %v8018 = vld [vmem:[%s7996 + $0x54] sm:$0xf]
  %v8019 = vld [vmem:[%s7996 + $0x58] sm:$0xf]
  %v8020 = vld [vmem:[%s7996 + $0x5c] sm:$0xf]
  %v8021 = vld [vmem:[%s7996 + $0x60] sm:$0xf]
  %v8022 = vld [vmem:[%s7996 + $0x64] sm:$0xf]
  %v8023 = vld [vmem:[%s7996 + $0x68] sm:$0xf]
  %v8024 = vld [vmem:[%s7996 + $0x6c] sm:$0xf]
  %v8025 = vld [vmem:[%s7996 + $0x70] sm:$0xf]
  %v8026 = vld [vmem:[%s7996 + $0x74] sm:$0xf]
  %v8027 = vld [vmem:[%s7996 + $0x78] sm:$0xf]
  %v8028 = vld [vmem:[%s7996 + $0x7c] sm:$0xf]
  %v8029 = vld [vmem:[%s7996 + $0x80] sm:$0xf]
  %v8030 = vld [vmem:[%s7996 + $0x84] sm:$0xf]
  %v8031 = vld [vmem:[%s7996 + $0x88] sm:$0xf]
  %v8032 = vld [vmem:[%s7996 + $0x8c] sm:$0xf]
  %v8033 = vld [vmem:[%s7996 + $0x90] sm:$0xf]
  %v8034 = vld [vmem:[%s7996 + $0x94] sm:$0xf]
  %v8035 = vld [vmem:[%s7996 + $0x98] sm:$0xf]
  %v8036 = vld [vmem:[%s7996 + $0x9c] sm:$0xf]
  %v8037 = vld [vmem:[%s7996 + $0xa0] sm:$0xf]
  %v8038 = vld [vmem:[%s7996 + $0xa4] sm:$0xf]
  %v8039 = vld [vmem:[%s7996 + $0xa8] sm:$0xf]
  %v8040 = vld [vmem:[%s7996 + $0xac] sm:$0xf]
  %v8041 = vld [vmem:[%s7996 + $0xb0] sm:$0xf]
  %v8042 = vld [vmem:[%s7996 + $0xb4] sm:$0xf]
  %v8043 = vld [vmem:[%s7996 + $0xb8] sm:$0xf]
  %v8044 = vld [vmem:[%s7996 + $0xbc] sm:$0xf]
  %v8045 = vld [vmem:[%s7996 + $0xc0] sm:$0xf]
  %v8046 = vld [vmem:[%s7996 + $0xc4] sm:$0xf]
  %v8047 = vld [vmem:[%s7996 + $0xc8] sm:$0xf]
  %v8048 = vld [vmem:[%s7996 + $0xcc] sm:$0xf]
  %v8049 = vld [vmem:[%s7996 + $0xd0] sm:$0xf]
  %v8050 = vld [vmem:[%s7996 + $0xd4] sm:$0xf]
  %v8051 = vld [vmem:[%s7996 + $0xd8] sm:$0xf]
  %v8052 = vld [vmem:[%s7996 + $0xdc] sm:$0xf]
  %v8053 = vld [vmem:[%s7996 + $0xe0] sm:$0xf]
  %v8054 = vld [vmem:[%s7996 + $0xe4] sm:$0xf]
  %v8055 = vld [vmem:[%s7996 + $0xe8] sm:$0xf]
  %v8056 = vld [vmem:[%s7996 + $0xec] sm:$0xf]
  %v8057 = vld [vmem:[%s7996 + $0xf0] sm:$0xf]
  %v8058 = vld [vmem:[%s7996 + $0xf4] sm:$0xf]
  %v8059 = vld [vmem:[%s7996 + $0xf8] sm:$0xf]
  %v8060 = vld [vmem:[%s7996 + $0xfc] sm:$0xf]
  %v8125 = vunpack.c.l.b16 %v7997
  %v8126 = vunpack.c.l.b16 %v7998
  %v8127 = vunpack.c.l.b16 %v7999
  %v8128 = vunpack.c.l.b16 %v8000
  %v8129 = vunpack.c.l.b16 %v8001
  %v8130 = vunpack.c.l.b16 %v8002
  %v8131 = vunpack.c.l.b16 %v8003
  %v8132 = vunpack.c.l.b16 %v8004
  %v8133 = vunpack.c.l.b16 %v8005
  %v8134 = vunpack.c.l.b16 %v8006
  %v8135 = vunpack.c.l.b16 %v8007
  %v8136 = vunpack.c.l.b16 %v8008
  %v8137 = vunpack.c.l.b16 %v8009
  %v8138 = vunpack.c.l.b16 %v8010
  %v8139 = vunpack.c.l.b16 %v8011
  %v8140 = vunpack.c.l.b16 %v8012
  %v8141 = vunpack.c.l.b16 %v8013
  %v8142 = vunpack.c.l.b16 %v8014
  %v8143 = vunpack.c.l.b16 %v8015
  %v8144 = vunpack.c.l.b16 %v8016
  %v8145 = vunpack.c.l.b16 %v8017
  %v8146 = vunpack.c.l.b16 %v8018
  %v8147 = vunpack.c.l.b16 %v8019
  %v8148 = vunpack.c.l.b16 %v8020
  %v8149 = vunpack.c.l.b16 %v8021
  %v8150 = vunpack.c.l.b16 %v8022
  %v8151 = vunpack.c.l.b16 %v8023
  %v8152 = vunpack.c.l.b16 %v8024
  %v8153 = vunpack.c.l.b16 %v8025
  %v8154 = vunpack.c.l.b16 %v8026
  %v8155 = vunpack.c.l.b16 %v8027
  %v8156 = vunpack.c.l.b16 %v8028
  %v8157 = vunpack.c.l.b16 %v8029
  %v8158 = vunpack.c.l.b16 %v8030
  %v8159 = vunpack.c.l.b16 %v8031
  %v8160 = vunpack.c.l.b16 %v8032
  %v8161 = vunpack.c.l.b16 %v8033
  %v8162 = vunpack.c.l.b16 %v8034
  %v8163 = vunpack.c.l.b16 %v8035
  %v8164 = vunpack.c.l.b16 %v8036
  %v8165 = vunpack.c.l.b16 %v8037
  %v8166 = vunpack.c.l.b16 %v8038
  %v8167 = vunpack.c.l.b16 %v8039
  %v8168 = vunpack.c.l.b16 %v8040
  %v8169 = vunpack.c.l.b16 %v8041
  %v8170 = vunpack.c.l.b16 %v8042
  %v8171 = vunpack.c.l.b16 %v8043
  %v8172 = vunpack.c.l.b16 %v8044
  %v8173 = vunpack.c.l.b16 %v8045
  %v8174 = vunpack.c.l.b16 %v8046
  %v8175 = vunpack.c.l.b16 %v8047
  %v8176 = vunpack.c.l.b16 %v8048
  %v8177 = vunpack.c.l.b16 %v8049
  %v8178 = vunpack.c.l.b16 %v8050
  %v8179 = vunpack.c.l.b16 %v8051
  %v8180 = vunpack.c.l.b16 %v8052
  %v8181 = vunpack.c.l.b16 %v8053
  %v8182 = vunpack.c.l.b16 %v8054
  %v8183 = vunpack.c.l.b16 %v8055
  %v8184 = vunpack.c.l.b16 %v8056
  %v8185 = vunpack.c.l.b16 %v8057
  %v8186 = vunpack.c.l.b16 %v8058
  %v8187 = vunpack.c.l.b16 %v8059
  %v8188 = vunpack.c.l.b16 %v8060
  %v8189 = vpack.c.b16 %v8126, %v8125
  %v8190 = vpack.c.b16 %v8128, %v8127
  %v8191 = vpack.c.b16 %v8130, %v8129
  %v8192 = vpack.c.b16 %v8132, %v8131
  %v8193 = vpack.c.b16 %v8134, %v8133
  %v8194 = vpack.c.b16 %v8136, %v8135
  %v8195 = vpack.c.b16 %v8138, %v8137
  %v8196 = vpack.c.b16 %v8140, %v8139
  %v8197 = vpack.c.b16 %v8142, %v8141
  %v8198 = vpack.c.b16 %v8144, %v8143
  %v8199 = vpack.c.b16 %v8146, %v8145
  %v8200 = vpack.c.b16 %v8148, %v8147
  %v8201 = vpack.c.b16 %v8150, %v8149
  %v8202 = vpack.c.b16 %v8152, %v8151
  %v8203 = vpack.c.b16 %v8154, %v8153
  %v8204 = vpack.c.b16 %v8156, %v8155
  %v8205 = vpack.c.b16 %v8158, %v8157
  %v8206 = vpack.c.b16 %v8160, %v8159
  %v8207 = vpack.c.b16 %v8162, %v8161
  %v8208 = vpack.c.b16 %v8164, %v8163
  %v8209 = vpack.c.b16 %v8166, %v8165
  %v8210 = vpack.c.b16 %v8168, %v8167
  %v8211 = vpack.c.b16 %v8170, %v8169
  %v8212 = vpack.c.b16 %v8172, %v8171
  %v8213 = vpack.c.b16 %v8174, %v8173
  %v8214 = vpack.c.b16 %v8176, %v8175
  %v8215 = vpack.c.b16 %v8178, %v8177
  %v8216 = vpack.c.b16 %v8180, %v8179
  %v8217 = vpack.c.b16 %v8182, %v8181
  %v8218 = vpack.c.b16 %v8184, %v8183
  %v8219 = vpack.c.b16 %v8186, %v8185
  %v8220 = vpack.c.b16 %v8188, %v8187
  %8253 = vmatprep.subr.bf16.mxu0 0
  %8254 = vmatpush1.bf16.msra.mxu0 %v8196
  %8255 = vmatprep.subr.bf16.mxu0 0
  %8256 = vmatpush1.bf16.msra.mxu0 %v8195
  %8257 = vmatprep.subr.bf16.mxu0 0
  %8258 = vmatpush1.bf16.msra.mxu0 %v8194
  %8259 = vmatprep.subr.bf16.mxu0 0
  %8260 = vmatpush1.bf16.msra.mxu0 %v8193
  %8261 = vmatprep.subr.bf16.mxu0 0
  %8262 = vmatpush1.bf16.msra.mxu0 %v8192
  %8263 = vmatprep.subr.bf16.mxu0 0
  %8264 = vmatpush1.bf16.msra.mxu0 %v8191
  %8265 = vmatprep.subr.bf16.mxu0 0
  %8266 = vmatpush1.bf16.msra.mxu0 %v8190
  %8267 = vmatprep.subr.bf16.mxu0 0
  %8268 = vmatpush1.bf16.msra.mxu0 %v8189
  %8269 = vmatprep.subr.bf16.mxu0 0
  %8270 = vmatpush2.bf16.msra.mxu0 %v8204
  %8271 = vmatprep.subr.bf16.mxu0 0
  %8272 = vmatpush2.bf16.msra.mxu0 %v8203
  %8273 = vmatprep.subr.bf16.mxu0 0
  %8274 = vmatpush2.bf16.msra.mxu0 %v8202
  %8275 = vmatprep.subr.bf16.mxu0 0
  %8276 = vmatpush2.bf16.msra.mxu0 %v8201
  %8277 = vmatprep.subr.bf16.mxu0 0
  %8278 = vmatpush2.bf16.msra.mxu0 %v8200
  %8279 = vmatprep.subr.bf16.mxu0 0
  %8280 = vmatpush2.bf16.msra.mxu0 %v8199
  %8281 = vmatprep.subr.bf16.mxu0 0
  %8282 = vmatpush2.bf16.msra.mxu0 %v8198
  %8283 = vmatprep.subr.bf16.mxu0 0
  %8284 = vmatpush2.bf16.msra.mxu0 %v8197
  %8285 = vmatprep.mubr.bf16.mxu0 %v4735
  %8286 = vmatmul.mubr.bf16.gmra.mxu0 %v4734
  %v8287 = vpop.f32.mrf.mxu0
  %v8288 = vadd.f32 0.0, %v8287
  %v8289 = vpop.f32.mrf.mxu0
  %v8290 = vpop.f32.mrf.mxu0
  %v8291 = vadd.f32 0.0, %v8290
  %v8292 = vpop.f32.mrf.mxu0
  %8293 = vmatprep.mubr.bf16.mxu0 %v4739
  %8294 = vmatmul.mubr.bf16.gmra.mxu0 %v4738
  %v8295 = vpop.f32.mrf.mxu0
  %v8296 = vadd.f32 0.0, %v8295
  %v8297 = vpop.f32.mrf.mxu0
  %v8298 = vpop.f32.mrf.mxu0
  %v8299 = vadd.f32 0.0, %v8298
  %v8300 = vpop.f32.mrf.mxu0
  %8301 = vdwg.mxu0
  %8302 = vmatprep.subr.bf16.mxu0 0
  %8303 = vmatpush1.bf16.msra.mxu0 %v8212
  %8304 = vmatprep.subr.bf16.mxu0 0
  %8305 = vmatpush1.bf16.msra.mxu0 %v8211
  %8306 = vmatprep.subr.bf16.mxu0 0
  %8307 = vmatpush1.bf16.msra.mxu0 %v8210
  %8308 = vmatprep.subr.bf16.mxu0 0
  %8309 = vmatpush1.bf16.msra.mxu0 %v8209
  %8310 = vmatprep.subr.bf16.mxu0 0
  %8311 = vmatpush1.bf16.msra.mxu0 %v8208
  %8312 = vmatprep.subr.bf16.mxu0 0
  %8313 = vmatpush1.bf16.msra.mxu0 %v8207
  %8314 = vmatprep.subr.bf16.mxu0 0
  %8315 = vmatpush1.bf16.msra.mxu0 %v8206
  %8316 = vmatprep.subr.bf16.mxu0 0
  %8317 = vmatpush1.bf16.msra.mxu0 %v8205
  %8318 = vmatprep.subr.bf16.mxu0 0
  %8319 = vmatpush2.bf16.msra.mxu0 %v8220
  %8320 = vmatprep.subr.bf16.mxu0 0
  %8321 = vmatpush2.bf16.msra.mxu0 %v8219
  %8322 = vmatprep.subr.bf16.mxu0 0
  %8323 = vmatpush2.bf16.msra.mxu0 %v8218
  %8324 = vmatprep.subr.bf16.mxu0 0
  %8325 = vmatpush2.bf16.msra.mxu0 %v8217
  %8326 = vmatprep.subr.bf16.mxu0 0
  %8327 = vmatpush2.bf16.msra.mxu0 %v8216
  %8328 = vmatprep.subr.bf16.mxu0 0
  %8329 = vmatpush2.bf16.msra.mxu0 %v8215
  %8330 = vmatprep.subr.bf16.mxu0 0
  %8331 = vmatpush2.bf16.msra.mxu0 %v8214
  %8332 = vmatprep.subr.bf16.mxu0 0
  %8333 = vmatpush2.bf16.msra.mxu0 %v8213
  %8334 = vmatprep.mubr.bf16.mxu0 %v4737
  %8335 = vmatmul.mubr.bf16.gmra.mxu0 %v4736
  %v8336 = vpop.f32.mrf.mxu0
  %v8337 = vadd.f32 %v8288, %v8336
  %v8338 = vpop.f32.mrf.mxu0
  %v8339 = vpop.f32.mrf.mxu0
  %v8340 = vadd.f32 %v8291, %v8339
  %v8341 = vpop.f32.mrf.mxu0
  %8342 = vmatprep.mubr.bf16.mxu0 %v4741
  %8343 = vmatmul.mubr.bf16.gmra.mxu0 %v4740
  %v8344 = vpop.f32.mrf.mxu0
  %v8345 = vadd.f32 %v8296, %v8344
  %v8346 = vpop.f32.mrf.mxu0
  %v8347 = vpop.f32.mrf.mxu0
  %v8348 = vadd.f32 %v8299, %v8347
  %v8349 = vpop.f32.mrf.mxu0
  %8350 = vdwg.mxu0
  %v8351 = vadd.f32 %v7992, %v8337
  %v8352 = vadd.f32 %v7993, %v8340
  %v8353 = vadd.f32 %v7994, %v8345
  %v8354 = vadd.f32 %v7995, %v8348
  %s8355 = scalar_lea.vmem %s3, 2560
  %v8356 = vld [vmem:[%s8355] sm:$0xf]
  %v8357 = vld [vmem:[%s8355 + $0x4] sm:$0xf]
  %v8358 = vld [vmem:[%s8355 + $0x8] sm:$0xf]
  %v8359 = vld [vmem:[%s8355 + $0xc] sm:$0xf]
  %v8360 = vld [vmem:[%s8355 + $0x10] sm:$0xf]
  %v8361 = vld [vmem:[%s8355 + $0x14] sm:$0xf]
  %v8362 = vld [vmem:[%s8355 + $0x18] sm:$0xf]
  %v8363 = vld [vmem:[%s8355 + $0x1c] sm:$0xf]
  %v8364 = vld [vmem:[%s8355 + $0x20] sm:$0xf]
  %v8365 = vld [vmem:[%s8355 + $0x24] sm:$0xf]
  %v8366 = vld [vmem:[%s8355 + $0x28] sm:$0xf]
  %v8367 = vld [vmem:[%s8355 + $0x2c] sm:$0xf]
  %v8368 = vld [vmem:[%s8355 + $0x30] sm:$0xf]
  %v8369 = vld [vmem:[%s8355 + $0x34] sm:$0xf]
  %v8370 = vld [vmem:[%s8355 + $0x38] sm:$0xf]
  %v8371 = vld [vmem:[%s8355 + $0x3c] sm:$0xf]
  %v8372 = vld [vmem:[%s8355 + $0x40] sm:$0xf]
  %v8373 = vld [vmem:[%s8355 + $0x44] sm:$0xf]
  %v8374 = vld [vmem:[%s8355 + $0x48] sm:$0xf]
  %v8375 = vld [vmem:[%s8355 + $0x4c] sm:$0xf]
  %v8376 = vld [vmem:[%s8355 + $0x50] sm:$0xf]
  %v8377 = vld [vmem:[%s8355 + $0x54] sm:$0xf]
  %v8378 = vld [vmem:[%s8355 + $0x58] sm:$0xf]
  %v8379 = vld [vmem:[%s8355 + $0x5c] sm:$0xf]
  %v8380 = vld [vmem:[%s8355 + $0x60] sm:$0xf]
  %v8381 = vld [vmem:[%s8355 + $0x64] sm:$0xf]
  %v8382 = vld [vmem:[%s8355 + $0x68] sm:$0xf]
  %v8383 = vld [vmem:[%s8355 + $0x6c] sm:$0xf]
  %v8384 = vld [vmem:[%s8355 + $0x70] sm:$0xf]
  %v8385 = vld [vmem:[%s8355 + $0x74] sm:$0xf]
  %v8386 = vld [vmem:[%s8355 + $0x78] sm:$0xf]
  %v8387 = vld [vmem:[%s8355 + $0x7c] sm:$0xf]
  %v8388 = vld [vmem:[%s8355 + $0x80] sm:$0xf]
  %v8389 = vld [vmem:[%s8355 + $0x84] sm:$0xf]
  %v8390 = vld [vmem:[%s8355 + $0x88] sm:$0xf]
  %v8391 = vld [vmem:[%s8355 + $0x8c] sm:$0xf]
  %v8392 = vld [vmem:[%s8355 + $0x90] sm:$0xf]
  %v8393 = vld [vmem:[%s8355 + $0x94] sm:$0xf]
  %v8394 = vld [vmem:[%s8355 + $0x98] sm:$0xf]
  %v8395 = vld [vmem:[%s8355 + $0x9c] sm:$0xf]
  %v8396 = vld [vmem:[%s8355 + $0xa0] sm:$0xf]
  %v8397 = vld [vmem:[%s8355 + $0xa4] sm:$0xf]
  %v8398 = vld [vmem:[%s8355 + $0xa8] sm:$0xf]
  %v8399 = vld [vmem:[%s8355 + $0xac] sm:$0xf]
  %v8400 = vld [vmem:[%s8355 + $0xb0] sm:$0xf]
  %v8401 = vld [vmem:[%s8355 + $0xb4] sm:$0xf]
  %v8402 = vld [vmem:[%s8355 + $0xb8] sm:$0xf]
  %v8403 = vld [vmem:[%s8355 + $0xbc] sm:$0xf]
  %v8404 = vld [vmem:[%s8355 + $0xc0] sm:$0xf]
  %v8405 = vld [vmem:[%s8355 + $0xc4] sm:$0xf]
  %v8406 = vld [vmem:[%s8355 + $0xc8] sm:$0xf]
  %v8407 = vld [vmem:[%s8355 + $0xcc] sm:$0xf]
  %v8408 = vld [vmem:[%s8355 + $0xd0] sm:$0xf]
  %v8409 = vld [vmem:[%s8355 + $0xd4] sm:$0xf]
  %v8410 = vld [vmem:[%s8355 + $0xd8] sm:$0xf]
  %v8411 = vld [vmem:[%s8355 + $0xdc] sm:$0xf]
  %v8412 = vld [vmem:[%s8355 + $0xe0] sm:$0xf]
  %v8413 = vld [vmem:[%s8355 + $0xe4] sm:$0xf]
  %v8414 = vld [vmem:[%s8355 + $0xe8] sm:$0xf]
  %v8415 = vld [vmem:[%s8355 + $0xec] sm:$0xf]
  %v8416 = vld [vmem:[%s8355 + $0xf0] sm:$0xf]
  %v8417 = vld [vmem:[%s8355 + $0xf4] sm:$0xf]
  %v8418 = vld [vmem:[%s8355 + $0xf8] sm:$0xf]
  %v8419 = vld [vmem:[%s8355 + $0xfc] sm:$0xf]
  %v8484 = vunpack.c.l.b16 %v8356
  %v8485 = vunpack.c.l.b16 %v8357
  %v8486 = vunpack.c.l.b16 %v8358
  %v8487 = vunpack.c.l.b16 %v8359
  %v8488 = vunpack.c.l.b16 %v8360
  %v8489 = vunpack.c.l.b16 %v8361
  %v8490 = vunpack.c.l.b16 %v8362
  %v8491 = vunpack.c.l.b16 %v8363
  %v8492 = vunpack.c.l.b16 %v8364
  %v8493 = vunpack.c.l.b16 %v8365
  %v8494 = vunpack.c.l.b16 %v8366
  %v8495 = vunpack.c.l.b16 %v8367
  %v8496 = vunpack.c.l.b16 %v8368
  %v8497 = vunpack.c.l.b16 %v8369
  %v8498 = vunpack.c.l.b16 %v8370
  %v8499 = vunpack.c.l.b16 %v8371
  %v8500 = vunpack.c.l.b16 %v8372
  %v8501 = vunpack.c.l.b16 %v8373
  %v8502 = vunpack.c.l.b16 %v8374
  %v8503 = vunpack.c.l.b16 %v8375
  %v8504 = vunpack.c.l.b16 %v8376
  %v8505 = vunpack.c.l.b16 %v8377
  %v8506 = vunpack.c.l.b16 %v8378
  %v8507 = vunpack.c.l.b16 %v8379
  %v8508 = vunpack.c.l.b16 %v8380
  %v8509 = vunpack.c.l.b16 %v8381
  %v8510 = vunpack.c.l.b16 %v8382
  %v8511 = vunpack.c.l.b16 %v8383
  %v8512 = vunpack.c.l.b16 %v8384
  %v8513 = vunpack.c.l.b16 %v8385
  %v8514 = vunpack.c.l.b16 %v8386
  %v8515 = vunpack.c.l.b16 %v8387
  %v8516 = vunpack.c.l.b16 %v8388
  %v8517 = vunpack.c.l.b16 %v8389
  %v8518 = vunpack.c.l.b16 %v8390
  %v8519 = vunpack.c.l.b16 %v8391
  %v8520 = vunpack.c.l.b16 %v8392
  %v8521 = vunpack.c.l.b16 %v8393
  %v8522 = vunpack.c.l.b16 %v8394
  %v8523 = vunpack.c.l.b16 %v8395
  %v8524 = vunpack.c.l.b16 %v8396
  %v8525 = vunpack.c.l.b16 %v8397
  %v8526 = vunpack.c.l.b16 %v8398
  %v8527 = vunpack.c.l.b16 %v8399
  %v8528 = vunpack.c.l.b16 %v8400
  %v8529 = vunpack.c.l.b16 %v8401
  %v8530 = vunpack.c.l.b16 %v8402
  %v8531 = vunpack.c.l.b16 %v8403
  %v8532 = vunpack.c.l.b16 %v8404
  %v8533 = vunpack.c.l.b16 %v8405
  %v8534 = vunpack.c.l.b16 %v8406
  %v8535 = vunpack.c.l.b16 %v8407
  %v8536 = vunpack.c.l.b16 %v8408
  %v8537 = vunpack.c.l.b16 %v8409
  %v8538 = vunpack.c.l.b16 %v8410
  %v8539 = vunpack.c.l.b16 %v8411
  %v8540 = vunpack.c.l.b16 %v8412
  %v8541 = vunpack.c.l.b16 %v8413
  %v8542 = vunpack.c.l.b16 %v8414
  %v8543 = vunpack.c.l.b16 %v8415
  %v8544 = vunpack.c.l.b16 %v8416
  %v8545 = vunpack.c.l.b16 %v8417
  %v8546 = vunpack.c.l.b16 %v8418
  %v8547 = vunpack.c.l.b16 %v8419
  %v8548 = vpack.c.b16 %v8485, %v8484
  %v8549 = vpack.c.b16 %v8487, %v8486
  %v8550 = vpack.c.b16 %v8489, %v8488
  %v8551 = vpack.c.b16 %v8491, %v8490
  %v8552 = vpack.c.b16 %v8493, %v8492
  %v8553 = vpack.c.b16 %v8495, %v8494
  %v8554 = vpack.c.b16 %v8497, %v8496
  %v8555 = vpack.c.b16 %v8499, %v8498
  %v8556 = vpack.c.b16 %v8501, %v8500
  %v8557 = vpack.c.b16 %v8503, %v8502
  %v8558 = vpack.c.b16 %v8505, %v8504
  %v8559 = vpack.c.b16 %v8507, %v8506
  %v8560 = vpack.c.b16 %v8509, %v8508
  %v8561 = vpack.c.b16 %v8511, %v8510
  %v8562 = vpack.c.b16 %v8513, %v8512
  %v8563 = vpack.c.b16 %v8515, %v8514
  %v8564 = vpack.c.b16 %v8517, %v8516
  %v8565 = vpack.c.b16 %v8519, %v8518
  %v8566 = vpack.c.b16 %v8521, %v8520
  %v8567 = vpack.c.b16 %v8523, %v8522
  %v8568 = vpack.c.b16 %v8525, %v8524
  %v8569 = vpack.c.b16 %v8527, %v8526
  %v8570 = vpack.c.b16 %v8529, %v8528
  %v8571 = vpack.c.b16 %v8531, %v8530
  %v8572 = vpack.c.b16 %v8533, %v8532
  %v8573 = vpack.c.b16 %v8535, %v8534
  %v8574 = vpack.c.b16 %v8537, %v8536
  %v8575 = vpack.c.b16 %v8539, %v8538
  %v8576 = vpack.c.b16 %v8541, %v8540
  %v8577 = vpack.c.b16 %v8543, %v8542
  %v8578 = vpack.c.b16 %v8545, %v8544
  %v8579 = vpack.c.b16 %v8547, %v8546
  %8612 = vmatprep.subr.bf16.mxu0 0
  %8613 = vmatpush1.bf16.msra.mxu0 %v8555
  %8614 = vmatprep.subr.bf16.mxu0 0
  %8615 = vmatpush1.bf16.msra.mxu0 %v8554
  %8616 = vmatprep.subr.bf16.mxu0 0
  %8617 = vmatpush1.bf16.msra.mxu0 %v8553
  %8618 = vmatprep.subr.bf16.mxu0 0
  %8619 = vmatpush1.bf16.msra.mxu0 %v8552
  %8620 = vmatprep.subr.bf16.mxu0 0
  %8621 = vmatpush1.bf16.msra.mxu0 %v8551
  %8622 = vmatprep.subr.bf16.mxu0 0
  %8623 = vmatpush1.bf16.msra.mxu0 %v8550
  %8624 = vmatprep.subr.bf16.mxu0 0
  %8625 = vmatpush1.bf16.msra.mxu0 %v8549
  %8626 = vmatprep.subr.bf16.mxu0 0
  %8627 = vmatpush1.bf16.msra.mxu0 %v8548
  %8628 = vmatprep.subr.bf16.mxu0 0
  %8629 = vmatpush2.bf16.msra.mxu0 %v8563
  %8630 = vmatprep.subr.bf16.mxu0 0
  %8631 = vmatpush2.bf16.msra.mxu0 %v8562
  %8632 = vmatprep.subr.bf16.mxu0 0
  %8633 = vmatpush2.bf16.msra.mxu0 %v8561
  %8634 = vmatprep.subr.bf16.mxu0 0
  %8635 = vmatpush2.bf16.msra.mxu0 %v8560
  %8636 = vmatprep.subr.bf16.mxu0 0
  %8637 = vmatpush2.bf16.msra.mxu0 %v8559
  %8638 = vmatprep.subr.bf16.mxu0 0
  %8639 = vmatpush2.bf16.msra.mxu0 %v8558
  %8640 = vmatprep.subr.bf16.mxu0 0
  %8641 = vmatpush2.bf16.msra.mxu0 %v8557
  %8642 = vmatprep.subr.bf16.mxu0 0
  %8643 = vmatpush2.bf16.msra.mxu0 %v8556
  %8644 = vmatprep.mubr.bf16.mxu0 %v4743
  %8645 = vmatmul.mubr.bf16.gmra.mxu0 %v4742
  %v8646 = vpop.f32.mrf.mxu0
  %v8647 = vadd.f32 0.0, %v8646
  %v8648 = vpop.f32.mrf.mxu0
  %v8649 = vpop.f32.mrf.mxu0
  %v8650 = vadd.f32 0.0, %v8649
  %v8651 = vpop.f32.mrf.mxu0
  %8652 = vmatprep.mubr.bf16.mxu0 %v4747
  %8653 = vmatmul.mubr.bf16.gmra.mxu0 %v4746
  %v8654 = vpop.f32.mrf.mxu0
  %v8655 = vadd.f32 0.0, %v8654
  %v8656 = vpop.f32.mrf.mxu0
  %v8657 = vpop.f32.mrf.mxu0
  %v8658 = vadd.f32 0.0, %v8657
  %v8659 = vpop.f32.mrf.mxu0
  %8660 = vdwg.mxu0
  %8661 = vmatprep.subr.bf16.mxu0 0
  %8662 = vmatpush1.bf16.msra.mxu0 %v8571
  %8663 = vmatprep.subr.bf16.mxu0 0
  %8664 = vmatpush1.bf16.msra.mxu0 %v8570
  %8665 = vmatprep.subr.bf16.mxu0 0
  %8666 = vmatpush1.bf16.msra.mxu0 %v8569
  %8667 = vmatprep.subr.bf16.mxu0 0
  %8668 = vmatpush1.bf16.msra.mxu0 %v8568
  %8669 = vmatprep.subr.bf16.mxu0 0
  %8670 = vmatpush1.bf16.msra.mxu0 %v8567
  %8671 = vmatprep.subr.bf16.mxu0 0
  %8672 = vmatpush1.bf16.msra.mxu0 %v8566
  %8673 = vmatprep.subr.bf16.mxu0 0
  %8674 = vmatpush1.bf16.msra.mxu0 %v8565
  %8675 = vmatprep.subr.bf16.mxu0 0
  %8676 = vmatpush1.bf16.msra.mxu0 %v8564
  %8677 = vmatprep.subr.bf16.mxu0 0
  %8678 = vmatpush2.bf16.msra.mxu0 %v8579
  %8679 = vmatprep.subr.bf16.mxu0 0
  %8680 = vmatpush2.bf16.msra.mxu0 %v8578
  %8681 = vmatprep.subr.bf16.mxu0 0
  %8682 = vmatpush2.bf16.msra.mxu0 %v8577
  %8683 = vmatprep.subr.bf16.mxu0 0
  %8684 = vmatpush2.bf16.msra.mxu0 %v8576
  %8685 = vmatprep.subr.bf16.mxu0 0
  %8686 = vmatpush2.bf16.msra.mxu0 %v8575
  %8687 = vmatprep.subr.bf16.mxu0 0
  %8688 = vmatpush2.bf16.msra.mxu0 %v8574
  %8689 = vmatprep.subr.bf16.mxu0 0
  %8690 = vmatpush2.bf16.msra.mxu0 %v8573
  %8691 = vmatprep.subr.bf16.mxu0 0
  %8692 = vmatpush2.bf16.msra.mxu0 %v8572
  %8693 = vmatprep.mubr.bf16.mxu0 %v4745
  %8694 = vmatmul.mubr.bf16.gmra.mxu0 %v4744
  %v8695 = vpop.f32.mrf.mxu0
  %v8696 = vadd.f32 %v8647, %v8695
  %v8697 = vpop.f32.mrf.mxu0
  %v8698 = vpop.f32.mrf.mxu0
  %v8699 = vadd.f32 %v8650, %v8698
  %v8700 = vpop.f32.mrf.mxu0
  %8701 = vmatprep.mubr.bf16.mxu0 %v4749
  %8702 = vmatmul.mubr.bf16.gmra.mxu0 %v4748
  %v8703 = vpop.f32.mrf.mxu0
  %v8704 = vadd.f32 %v8655, %v8703
  %v8705 = vpop.f32.mrf.mxu0
  %v8706 = vpop.f32.mrf.mxu0
  %v8707 = vadd.f32 %v8658, %v8706
  %v8708 = vpop.f32.mrf.mxu0
  %8709 = vdwg.mxu0
  %v8710 = vadd.f32 %v8351, %v8696
  %v8711 = vadd.f32 %v8352, %v8699
  %v8712 = vadd.f32 %v8353, %v8704
  %v8713 = vadd.f32 %v8354, %v8707
  %s8714 = scalar_lea.vmem %s3, 2816
  %v8715 = vld [vmem:[%s8714] sm:$0xf]
  %v8716 = vld [vmem:[%s8714 + $0x4] sm:$0xf]
  %v8717 = vld [vmem:[%s8714 + $0x8] sm:$0xf]
  %v8718 = vld [vmem:[%s8714 + $0xc] sm:$0xf]
  %v8719 = vld [vmem:[%s8714 + $0x10] sm:$0xf]
  %v8720 = vld [vmem:[%s8714 + $0x14] sm:$0xf]
  %v8721 = vld [vmem:[%s8714 + $0x18] sm:$0xf]
  %v8722 = vld [vmem:[%s8714 + $0x1c] sm:$0xf]
  %v8723 = vld [vmem:[%s8714 + $0x20] sm:$0xf]
  %v8724 = vld [vmem:[%s8714 + $0x24] sm:$0xf]
  %v8725 = vld [vmem:[%s8714 + $0x28] sm:$0xf]
  %v8726 = vld [vmem:[%s8714 + $0x2c] sm:$0xf]
  %v8727 = vld [vmem:[%s8714 + $0x30] sm:$0xf]
  %v8728 = vld [vmem:[%s8714 + $0x34] sm:$0xf]
  %v8729 = vld [vmem:[%s8714 + $0x38] sm:$0xf]
  %v8730 = vld [vmem:[%s8714 + $0x3c] sm:$0xf]
  %v8731 = vld [vmem:[%s8714 + $0x40] sm:$0xf]
  %v8732 = vld [vmem:[%s8714 + $0x44] sm:$0xf]
  %v8733 = vld [vmem:[%s8714 + $0x48] sm:$0xf]
  %v8734 = vld [vmem:[%s8714 + $0x4c] sm:$0xf]
  %v8735 = vld [vmem:[%s8714 + $0x50] sm:$0xf]
  %v8736 = vld [vmem:[%s8714 + $0x54] sm:$0xf]
  %v8737 = vld [vmem:[%s8714 + $0x58] sm:$0xf]
  %v8738 = vld [vmem:[%s8714 + $0x5c] sm:$0xf]
  %v8739 = vld [vmem:[%s8714 + $0x60] sm:$0xf]
  %v8740 = vld [vmem:[%s8714 + $0x64] sm:$0xf]
  %v8741 = vld [vmem:[%s8714 + $0x68] sm:$0xf]
  %v8742 = vld [vmem:[%s8714 + $0x6c] sm:$0xf]
  %v8743 = vld [vmem:[%s8714 + $0x70] sm:$0xf]
  %v8744 = vld [vmem:[%s8714 + $0x74] sm:$0xf]
  %v8745 = vld [vmem:[%s8714 + $0x78] sm:$0xf]
  %v8746 = vld [vmem:[%s8714 + $0x7c] sm:$0xf]
  %v8747 = vld [vmem:[%s8714 + $0x80] sm:$0xf]
  %v8748 = vld [vmem:[%s8714 + $0x84] sm:$0xf]
  %v8749 = vld [vmem:[%s8714 + $0x88] sm:$0xf]
  %v8750 = vld [vmem:[%s8714 + $0x8c] sm:$0xf]
  %v8751 = vld [vmem:[%s8714 + $0x90] sm:$0xf]
  %v8752 = vld [vmem:[%s8714 + $0x94] sm:$0xf]
  %v8753 = vld [vmem:[%s8714 + $0x98] sm:$0xf]
  %v8754 = vld [vmem:[%s8714 + $0x9c] sm:$0xf]
  %v8755 = vld [vmem:[%s8714 + $0xa0] sm:$0xf]
  %v8756 = vld [vmem:[%s8714 + $0xa4] sm:$0xf]
  %v8757 = vld [vmem:[%s8714 + $0xa8] sm:$0xf]
  %v8758 = vld [vmem:[%s8714 + $0xac] sm:$0xf]
  %v8759 = vld [vmem:[%s8714 + $0xb0] sm:$0xf]
  %v8760 = vld [vmem:[%s8714 + $0xb4] sm:$0xf]
  %v8761 = vld [vmem:[%s8714 + $0xb8] sm:$0xf]
  %v8762 = vld [vmem:[%s8714 + $0xbc] sm:$0xf]
  %v8763 = vld [vmem:[%s8714 + $0xc0] sm:$0xf]
  %v8764 = vld [vmem:[%s8714 + $0xc4] sm:$0xf]
  %v8765 = vld [vmem:[%s8714 + $0xc8] sm:$0xf]
  %v8766 = vld [vmem:[%s8714 + $0xcc] sm:$0xf]
  %v8767 = vld [vmem:[%s8714 + $0xd0] sm:$0xf]
  %v8768 = vld [vmem:[%s8714 + $0xd4] sm:$0xf]
  %v8769 = vld [vmem:[%s8714 + $0xd8] sm:$0xf]
  %v8770 = vld [vmem:[%s8714 + $0xdc] sm:$0xf]
  %v8771 = vld [vmem:[%s8714 + $0xe0] sm:$0xf]
  %v8772 = vld [vmem:[%s8714 + $0xe4] sm:$0xf]
  %v8773 = vld [vmem:[%s8714 + $0xe8] sm:$0xf]
  %v8774 = vld [vmem:[%s8714 + $0xec] sm:$0xf]
  %v8775 = vld [vmem:[%s8714 + $0xf0] sm:$0xf]
  %v8776 = vld [vmem:[%s8714 + $0xf4] sm:$0xf]
  %v8777 = vld [vmem:[%s8714 + $0xf8] sm:$0xf]
  %v8778 = vld [vmem:[%s8714 + $0xfc] sm:$0xf]
  %v8843 = vunpack.c.l.b16 %v8715
  %v8844 = vunpack.c.l.b16 %v8716
  %v8845 = vunpack.c.l.b16 %v8717
  %v8846 = vunpack.c.l.b16 %v8718
  %v8847 = vunpack.c.l.b16 %v8719
  %v8848 = vunpack.c.l.b16 %v8720
  %v8849 = vunpack.c.l.b16 %v8721
  %v8850 = vunpack.c.l.b16 %v8722
  %v8851 = vunpack.c.l.b16 %v8723
  %v8852 = vunpack.c.l.b16 %v8724
  %v8853 = vunpack.c.l.b16 %v8725
  %v8854 = vunpack.c.l.b16 %v8726
  %v8855 = vunpack.c.l.b16 %v8727
  %v8856 = vunpack.c.l.b16 %v8728
  %v8857 = vunpack.c.l.b16 %v8729
  %v8858 = vunpack.c.l.b16 %v8730
  %v8859 = vunpack.c.l.b16 %v8731
  %v8860 = vunpack.c.l.b16 %v8732
  %v8861 = vunpack.c.l.b16 %v8733
  %v8862 = vunpack.c.l.b16 %v8734
  %v8863 = vunpack.c.l.b16 %v8735
  %v8864 = vunpack.c.l.b16 %v8736
  %v8865 = vunpack.c.l.b16 %v8737
  %v8866 = vunpack.c.l.b16 %v8738
  %v8867 = vunpack.c.l.b16 %v8739
  %v8868 = vunpack.c.l.b16 %v8740
  %v8869 = vunpack.c.l.b16 %v8741
  %v8870 = vunpack.c.l.b16 %v8742
  %v8871 = vunpack.c.l.b16 %v8743
  %v8872 = vunpack.c.l.b16 %v8744
  %v8873 = vunpack.c.l.b16 %v8745
  %v8874 = vunpack.c.l.b16 %v8746
  %v8875 = vunpack.c.l.b16 %v8747
  %v8876 = vunpack.c.l.b16 %v8748
  %v8877 = vunpack.c.l.b16 %v8749
  %v8878 = vunpack.c.l.b16 %v8750
  %v8879 = vunpack.c.l.b16 %v8751
  %v8880 = vunpack.c.l.b16 %v8752
  %v8881 = vunpack.c.l.b16 %v8753
  %v8882 = vunpack.c.l.b16 %v8754
  %v8883 = vunpack.c.l.b16 %v8755
  %v8884 = vunpack.c.l.b16 %v8756
  %v8885 = vunpack.c.l.b16 %v8757
  %v8886 = vunpack.c.l.b16 %v8758
  %v8887 = vunpack.c.l.b16 %v8759
  %v8888 = vunpack.c.l.b16 %v8760
  %v8889 = vunpack.c.l.b16 %v8761
  %v8890 = vunpack.c.l.b16 %v8762
  %v8891 = vunpack.c.l.b16 %v8763
  %v8892 = vunpack.c.l.b16 %v8764
  %v8893 = vunpack.c.l.b16 %v8765
  %v8894 = vunpack.c.l.b16 %v8766
  %v8895 = vunpack.c.l.b16 %v8767
  %v8896 = vunpack.c.l.b16 %v8768
  %v8897 = vunpack.c.l.b16 %v8769
  %v8898 = vunpack.c.l.b16 %v8770
  %v8899 = vunpack.c.l.b16 %v8771
  %v8900 = vunpack.c.l.b16 %v8772
  %v8901 = vunpack.c.l.b16 %v8773
  %v8902 = vunpack.c.l.b16 %v8774
  %v8903 = vunpack.c.l.b16 %v8775
  %v8904 = vunpack.c.l.b16 %v8776
  %v8905 = vunpack.c.l.b16 %v8777
  %v8906 = vunpack.c.l.b16 %v8778
  %v8907 = vpack.c.b16 %v8844, %v8843
  %v8908 = vpack.c.b16 %v8846, %v8845
  %v8909 = vpack.c.b16 %v8848, %v8847
  %v8910 = vpack.c.b16 %v8850, %v8849
  %v8911 = vpack.c.b16 %v8852, %v8851
  %v8912 = vpack.c.b16 %v8854, %v8853
  %v8913 = vpack.c.b16 %v8856, %v8855
  %v8914 = vpack.c.b16 %v8858, %v8857
  %v8915 = vpack.c.b16 %v8860, %v8859
  %v8916 = vpack.c.b16 %v8862, %v8861
  %v8917 = vpack.c.b16 %v8864, %v8863
  %v8918 = vpack.c.b16 %v8866, %v8865
  %v8919 = vpack.c.b16 %v8868, %v8867
  %v8920 = vpack.c.b16 %v8870, %v8869
  %v8921 = vpack.c.b16 %v8872, %v8871
  %v8922 = vpack.c.b16 %v8874, %v8873
  %v8923 = vpack.c.b16 %v8876, %v8875
  %v8924 = vpack.c.b16 %v8878, %v8877
  %v8925 = vpack.c.b16 %v8880, %v8879
  %v8926 = vpack.c.b16 %v8882, %v8881
  %v8927 = vpack.c.b16 %v8884, %v8883
  %v8928 = vpack.c.b16 %v8886, %v8885
  %v8929 = vpack.c.b16 %v8888, %v8887
  %v8930 = vpack.c.b16 %v8890, %v8889
  %v8931 = vpack.c.b16 %v8892, %v8891
  %v8932 = vpack.c.b16 %v8894, %v8893
  %v8933 = vpack.c.b16 %v8896, %v8895
  %v8934 = vpack.c.b16 %v8898, %v8897
  %v8935 = vpack.c.b16 %v8900, %v8899
  %v8936 = vpack.c.b16 %v8902, %v8901
  %v8937 = vpack.c.b16 %v8904, %v8903
  %v8938 = vpack.c.b16 %v8906, %v8905
  %8971 = vmatprep.subr.bf16.mxu0 0
  %8972 = vmatpush1.bf16.msra.mxu0 %v8914
  %8973 = vmatprep.subr.bf16.mxu0 0
  %8974 = vmatpush1.bf16.msra.mxu0 %v8913
  %8975 = vmatprep.subr.bf16.mxu0 0
  %8976 = vmatpush1.bf16.msra.mxu0 %v8912
  %8977 = vmatprep.subr.bf16.mxu0 0
  %8978 = vmatpush1.bf16.msra.mxu0 %v8911
  %8979 = vmatprep.subr.bf16.mxu0 0
  %8980 = vmatpush1.bf16.msra.mxu0 %v8910
  %8981 = vmatprep.subr.bf16.mxu0 0
  %8982 = vmatpush1.bf16.msra.mxu0 %v8909
  %8983 = vmatprep.subr.bf16.mxu0 0
  %8984 = vmatpush1.bf16.msra.mxu0 %v8908
  %8985 = vmatprep.subr.bf16.mxu0 0
  %8986 = vmatpush1.bf16.msra.mxu0 %v8907
  %8987 = vmatprep.subr.bf16.mxu0 0
  %8988 = vmatpush2.bf16.msra.mxu0 %v8922
  %8989 = vmatprep.subr.bf16.mxu0 0
  %8990 = vmatpush2.bf16.msra.mxu0 %v8921
  %8991 = vmatprep.subr.bf16.mxu0 0
  %8992 = vmatpush2.bf16.msra.mxu0 %v8920
  %8993 = vmatprep.subr.bf16.mxu0 0
  %8994 = vmatpush2.bf16.msra.mxu0 %v8919
  %8995 = vmatprep.subr.bf16.mxu0 0
  %8996 = vmatpush2.bf16.msra.mxu0 %v8918
  %8997 = vmatprep.subr.bf16.mxu0 0
  %8998 = vmatpush2.bf16.msra.mxu0 %v8917
  %8999 = vmatprep.subr.bf16.mxu0 0
  %9000 = vmatpush2.bf16.msra.mxu0 %v8916
  %9001 = vmatprep.subr.bf16.mxu0 0
  %9002 = vmatpush2.bf16.msra.mxu0 %v8915
  %9003 = vmatprep.mubr.bf16.mxu0 %v4751
  %9004 = vmatmul.mubr.bf16.gmra.mxu0 %v4750
  %v9005 = vpop.f32.mrf.mxu0
  %v9006 = vadd.f32 0.0, %v9005
  %v9007 = vpop.f32.mrf.mxu0
  %v9008 = vpop.f32.mrf.mxu0
  %v9009 = vadd.f32 0.0, %v9008
  %v9010 = vpop.f32.mrf.mxu0
  %9011 = vmatprep.mubr.bf16.mxu0 %v4755
  %9012 = vmatmul.mubr.bf16.gmra.mxu0 %v4754
  %v9013 = vpop.f32.mrf.mxu0
  %v9014 = vadd.f32 0.0, %v9013
  %v9015 = vpop.f32.mrf.mxu0
  %v9016 = vpop.f32.mrf.mxu0
  %v9017 = vadd.f32 0.0, %v9016
  %v9018 = vpop.f32.mrf.mxu0
  %9019 = vdwg.mxu0
  %9020 = vmatprep.subr.bf16.mxu0 0
  %9021 = vmatpush1.bf16.msra.mxu0 %v8930
  %9022 = vmatprep.subr.bf16.mxu0 0
  %9023 = vmatpush1.bf16.msra.mxu0 %v8929
  %9024 = vmatprep.subr.bf16.mxu0 0
  %9025 = vmatpush1.bf16.msra.mxu0 %v8928
  %9026 = vmatprep.subr.bf16.mxu0 0
  %9027 = vmatpush1.bf16.msra.mxu0 %v8927
  %9028 = vmatprep.subr.bf16.mxu0 0
  %9029 = vmatpush1.bf16.msra.mxu0 %v8926
  %9030 = vmatprep.subr.bf16.mxu0 0
  %9031 = vmatpush1.bf16.msra.mxu0 %v8925
  %9032 = vmatprep.subr.bf16.mxu0 0
  %9033 = vmatpush1.bf16.msra.mxu0 %v8924
  %9034 = vmatprep.subr.bf16.mxu0 0
  %9035 = vmatpush1.bf16.msra.mxu0 %v8923
  %9036 = vmatprep.subr.bf16.mxu0 0
  %9037 = vmatpush2.bf16.msra.mxu0 %v8938
  %9038 = vmatprep.subr.bf16.mxu0 0
  %9039 = vmatpush2.bf16.msra.mxu0 %v8937
  %9040 = vmatprep.subr.bf16.mxu0 0
  %9041 = vmatpush2.bf16.msra.mxu0 %v8936
  %9042 = vmatprep.subr.bf16.mxu0 0
  %9043 = vmatpush2.bf16.msra.mxu0 %v8935
  %9044 = vmatprep.subr.bf16.mxu0 0
  %9045 = vmatpush2.bf16.msra.mxu0 %v8934
  %9046 = vmatprep.subr.bf16.mxu0 0
  %9047 = vmatpush2.bf16.msra.mxu0 %v8933
  %9048 = vmatprep.subr.bf16.mxu0 0
  %9049 = vmatpush2.bf16.msra.mxu0 %v8932
  %9050 = vmatprep.subr.bf16.mxu0 0
  %9051 = vmatpush2.bf16.msra.mxu0 %v8931
  %9052 = vmatprep.mubr.bf16.mxu0 %v4753
  %9053 = vmatmul.mubr.bf16.gmra.mxu0 %v4752
  %v9054 = vpop.f32.mrf.mxu0
  %v9055 = vadd.f32 %v9006, %v9054
  %v9056 = vpop.f32.mrf.mxu0
  %v9057 = vpop.f32.mrf.mxu0
  %v9058 = vadd.f32 %v9009, %v9057
  %v9059 = vpop.f32.mrf.mxu0
  %9060 = vmatprep.mubr.bf16.mxu0 %v4757
  %9061 = vmatmul.mubr.bf16.gmra.mxu0 %v4756
  %v9062 = vpop.f32.mrf.mxu0
  %v9063 = vadd.f32 %v9014, %v9062
  %v9064 = vpop.f32.mrf.mxu0
  %v9065 = vpop.f32.mrf.mxu0
  %v9066 = vadd.f32 %v9017, %v9065
  %v9067 = vpop.f32.mrf.mxu0
  %9068 = vdwg.mxu0
  %v9069 = vadd.f32 %v8710, %v9055
  %v9070 = vadd.f32 %v8711, %v9058
  %v9071 = vadd.f32 %v8712, %v9063
  %v9072 = vadd.f32 %v8713, %v9066
  %s9073 = scalar_lea.vmem %s3, 3072
  %v9074 = vld [vmem:[%s9073] sm:$0xf]
  %v9075 = vld [vmem:[%s9073 + $0x4] sm:$0xf]
  %v9076 = vld [vmem:[%s9073 + $0x8] sm:$0xf]
  %v9077 = vld [vmem:[%s9073 + $0xc] sm:$0xf]
  %v9078 = vld [vmem:[%s9073 + $0x10] sm:$0xf]
  %v9079 = vld [vmem:[%s9073 + $0x14] sm:$0xf]
  %v9080 = vld [vmem:[%s9073 + $0x18] sm:$0xf]
  %v9081 = vld [vmem:[%s9073 + $0x1c] sm:$0xf]
  %v9082 = vld [vmem:[%s9073 + $0x20] sm:$0xf]
  %v9083 = vld [vmem:[%s9073 + $0x24] sm:$0xf]
  %v9084 = vld [vmem:[%s9073 + $0x28] sm:$0xf]
  %v9085 = vld [vmem:[%s9073 + $0x2c] sm:$0xf]
  %v9086 = vld [vmem:[%s9073 + $0x30] sm:$0xf]
  %v9087 = vld [vmem:[%s9073 + $0x34] sm:$0xf]
  %v9088 = vld [vmem:[%s9073 + $0x38] sm:$0xf]
  %v9089 = vld [vmem:[%s9073 + $0x3c] sm:$0xf]
  %v9090 = vld [vmem:[%s9073 + $0x40] sm:$0xf]
  %v9091 = vld [vmem:[%s9073 + $0x44] sm:$0xf]
  %v9092 = vld [vmem:[%s9073 + $0x48] sm:$0xf]
  %v9093 = vld [vmem:[%s9073 + $0x4c] sm:$0xf]
  %v9094 = vld [vmem:[%s9073 + $0x50] sm:$0xf]
  %v9095 = vld [vmem:[%s9073 + $0x54] sm:$0xf]
  %v9096 = vld [vmem:[%s9073 + $0x58] sm:$0xf]
  %v9097 = vld [vmem:[%s9073 + $0x5c] sm:$0xf]
  %v9098 = vld [vmem:[%s9073 + $0x60] sm:$0xf]
  %v9099 = vld [vmem:[%s9073 + $0x64] sm:$0xf]
  %v9100 = vld [vmem:[%s9073 + $0x68] sm:$0xf]
  %v9101 = vld [vmem:[%s9073 + $0x6c] sm:$0xf]
  %v9102 = vld [vmem:[%s9073 + $0x70] sm:$0xf]
  %v9103 = vld [vmem:[%s9073 + $0x74] sm:$0xf]
  %v9104 = vld [vmem:[%s9073 + $0x78] sm:$0xf]
  %v9105 = vld [vmem:[%s9073 + $0x7c] sm:$0xf]
  %v9106 = vld [vmem:[%s9073 + $0x80] sm:$0xf]
  %v9107 = vld [vmem:[%s9073 + $0x84] sm:$0xf]
  %v9108 = vld [vmem:[%s9073 + $0x88] sm:$0xf]
  %v9109 = vld [vmem:[%s9073 + $0x8c] sm:$0xf]
  %v9110 = vld [vmem:[%s9073 + $0x90] sm:$0xf]
  %v9111 = vld [vmem:[%s9073 + $0x94] sm:$0xf]
  %v9112 = vld [vmem:[%s9073 + $0x98] sm:$0xf]
  %v9113 = vld [vmem:[%s9073 + $0x9c] sm:$0xf]
  %v9114 = vld [vmem:[%s9073 + $0xa0] sm:$0xf]
  %v9115 = vld [vmem:[%s9073 + $0xa4] sm:$0xf]
  %v9116 = vld [vmem:[%s9073 + $0xa8] sm:$0xf]
  %v9117 = vld [vmem:[%s9073 + $0xac] sm:$0xf]
  %v9118 = vld [vmem:[%s9073 + $0xb0] sm:$0xf]
  %v9119 = vld [vmem:[%s9073 + $0xb4] sm:$0xf]
  %v9120 = vld [vmem:[%s9073 + $0xb8] sm:$0xf]
  %v9121 = vld [vmem:[%s9073 + $0xbc] sm:$0xf]
  %v9122 = vld [vmem:[%s9073 + $0xc0] sm:$0xf]
  %v9123 = vld [vmem:[%s9073 + $0xc4] sm:$0xf]
  %v9124 = vld [vmem:[%s9073 + $0xc8] sm:$0xf]
  %v9125 = vld [vmem:[%s9073 + $0xcc] sm:$0xf]
  %v9126 = vld [vmem:[%s9073 + $0xd0] sm:$0xf]
  %v9127 = vld [vmem:[%s9073 + $0xd4] sm:$0xf]
  %v9128 = vld [vmem:[%s9073 + $0xd8] sm:$0xf]
  %v9129 = vld [vmem:[%s9073 + $0xdc] sm:$0xf]
  %v9130 = vld [vmem:[%s9073 + $0xe0] sm:$0xf]
  %v9131 = vld [vmem:[%s9073 + $0xe4] sm:$0xf]
  %v9132 = vld [vmem:[%s9073 + $0xe8] sm:$0xf]
  %v9133 = vld [vmem:[%s9073 + $0xec] sm:$0xf]
  %v9134 = vld [vmem:[%s9073 + $0xf0] sm:$0xf]
  %v9135 = vld [vmem:[%s9073 + $0xf4] sm:$0xf]
  %v9136 = vld [vmem:[%s9073 + $0xf8] sm:$0xf]
  %v9137 = vld [vmem:[%s9073 + $0xfc] sm:$0xf]
  %v9202 = vunpack.c.l.b16 %v9074
  %v9203 = vunpack.c.l.b16 %v9075
  %v9204 = vunpack.c.l.b16 %v9076
  %v9205 = vunpack.c.l.b16 %v9077
  %v9206 = vunpack.c.l.b16 %v9078
  %v9207 = vunpack.c.l.b16 %v9079
  %v9208 = vunpack.c.l.b16 %v9080
  %v9209 = vunpack.c.l.b16 %v9081
  %v9210 = vunpack.c.l.b16 %v9082
  %v9211 = vunpack.c.l.b16 %v9083
  %v9212 = vunpack.c.l.b16 %v9084
  %v9213 = vunpack.c.l.b16 %v9085
  %v9214 = vunpack.c.l.b16 %v9086
  %v9215 = vunpack.c.l.b16 %v9087
  %v9216 = vunpack.c.l.b16 %v9088
  %v9217 = vunpack.c.l.b16 %v9089
  %v9218 = vunpack.c.l.b16 %v9090
  %v9219 = vunpack.c.l.b16 %v9091
  %v9220 = vunpack.c.l.b16 %v9092
  %v9221 = vunpack.c.l.b16 %v9093
  %v9222 = vunpack.c.l.b16 %v9094
  %v9223 = vunpack.c.l.b16 %v9095
  %v9224 = vunpack.c.l.b16 %v9096
  %v9225 = vunpack.c.l.b16 %v9097
  %v9226 = vunpack.c.l.b16 %v9098
  %v9227 = vunpack.c.l.b16 %v9099
  %v9228 = vunpack.c.l.b16 %v9100
  %v9229 = vunpack.c.l.b16 %v9101
  %v9230 = vunpack.c.l.b16 %v9102
  %v9231 = vunpack.c.l.b16 %v9103
  %v9232 = vunpack.c.l.b16 %v9104
  %v9233 = vunpack.c.l.b16 %v9105
  %v9234 = vunpack.c.l.b16 %v9106
  %v9235 = vunpack.c.l.b16 %v9107
  %v9236 = vunpack.c.l.b16 %v9108
  %v9237 = vunpack.c.l.b16 %v9109
  %v9238 = vunpack.c.l.b16 %v9110
  %v9239 = vunpack.c.l.b16 %v9111
  %v9240 = vunpack.c.l.b16 %v9112
  %v9241 = vunpack.c.l.b16 %v9113
  %v9242 = vunpack.c.l.b16 %v9114
  %v9243 = vunpack.c.l.b16 %v9115
  %v9244 = vunpack.c.l.b16 %v9116
  %v9245 = vunpack.c.l.b16 %v9117
  %v9246 = vunpack.c.l.b16 %v9118
  %v9247 = vunpack.c.l.b16 %v9119
  %v9248 = vunpack.c.l.b16 %v9120
  %v9249 = vunpack.c.l.b16 %v9121
  %v9250 = vunpack.c.l.b16 %v9122
  %v9251 = vunpack.c.l.b16 %v9123
  %v9252 = vunpack.c.l.b16 %v9124
  %v9253 = vunpack.c.l.b16 %v9125
  %v9254 = vunpack.c.l.b16 %v9126
  %v9255 = vunpack.c.l.b16 %v9127
  %v9256 = vunpack.c.l.b16 %v9128
  %v9257 = vunpack.c.l.b16 %v9129
  %v9258 = vunpack.c.l.b16 %v9130
  %v9259 = vunpack.c.l.b16 %v9131
  %v9260 = vunpack.c.l.b16 %v9132
  %v9261 = vunpack.c.l.b16 %v9133
  %v9262 = vunpack.c.l.b16 %v9134
  %v9263 = vunpack.c.l.b16 %v9135
  %v9264 = vunpack.c.l.b16 %v9136
  %v9265 = vunpack.c.l.b16 %v9137
  %v9266 = vpack.c.b16 %v9203, %v9202
  %v9267 = vpack.c.b16 %v9205, %v9204
  %v9268 = vpack.c.b16 %v9207, %v9206
  %v9269 = vpack.c.b16 %v9209, %v9208
  %v9270 = vpack.c.b16 %v9211, %v9210
  %v9271 = vpack.c.b16 %v9213, %v9212
  %v9272 = vpack.c.b16 %v9215, %v9214
  %v9273 = vpack.c.b16 %v9217, %v9216
  %v9274 = vpack.c.b16 %v9219, %v9218
  %v9275 = vpack.c.b16 %v9221, %v9220
  %v9276 = vpack.c.b16 %v9223, %v9222
  %v9277 = vpack.c.b16 %v9225, %v9224
  %v9278 = vpack.c.b16 %v9227, %v9226
  %v9279 = vpack.c.b16 %v9229, %v9228
  %v9280 = vpack.c.b16 %v9231, %v9230
  %v9281 = vpack.c.b16 %v9233, %v9232
  %v9282 = vpack.c.b16 %v9235, %v9234
  %v9283 = vpack.c.b16 %v9237, %v9236
  %v9284 = vpack.c.b16 %v9239, %v9238
  %v9285 = vpack.c.b16 %v9241, %v9240
  %v9286 = vpack.c.b16 %v9243, %v9242
  %v9287 = vpack.c.b16 %v9245, %v9244
  %v9288 = vpack.c.b16 %v9247, %v9246
  %v9289 = vpack.c.b16 %v9249, %v9248
  %v9290 = vpack.c.b16 %v9251, %v9250
  %v9291 = vpack.c.b16 %v9253, %v9252
  %v9292 = vpack.c.b16 %v9255, %v9254
  %v9293 = vpack.c.b16 %v9257, %v9256
  %v9294 = vpack.c.b16 %v9259, %v9258
  %v9295 = vpack.c.b16 %v9261, %v9260
  %v9296 = vpack.c.b16 %v9263, %v9262
  %v9297 = vpack.c.b16 %v9265, %v9264
  %9330 = vmatprep.subr.bf16.mxu0 0
  %9331 = vmatpush1.bf16.msra.mxu0 %v9273
  %9332 = vmatprep.subr.bf16.mxu0 0
  %9333 = vmatpush1.bf16.msra.mxu0 %v9272
  %9334 = vmatprep.subr.bf16.mxu0 0
  %9335 = vmatpush1.bf16.msra.mxu0 %v9271
  %9336 = vmatprep.subr.bf16.mxu0 0
  %9337 = vmatpush1.bf16.msra.mxu0 %v9270
  %9338 = vmatprep.subr.bf16.mxu0 0
  %9339 = vmatpush1.bf16.msra.mxu0 %v9269
  %9340 = vmatprep.subr.bf16.mxu0 0
  %9341 = vmatpush1.bf16.msra.mxu0 %v9268
  %9342 = vmatprep.subr.bf16.mxu0 0
  %9343 = vmatpush1.bf16.msra.mxu0 %v9267
  %9344 = vmatprep.subr.bf16.mxu0 0
  %9345 = vmatpush1.bf16.msra.mxu0 %v9266
  %9346 = vmatprep.subr.bf16.mxu0 0
  %9347 = vmatpush2.bf16.msra.mxu0 %v9281
  %9348 = vmatprep.subr.bf16.mxu0 0
  %9349 = vmatpush2.bf16.msra.mxu0 %v9280
  %9350 = vmatprep.subr.bf16.mxu0 0
  %9351 = vmatpush2.bf16.msra.mxu0 %v9279
  %9352 = vmatprep.subr.bf16.mxu0 0
  %9353 = vmatpush2.bf16.msra.mxu0 %v9278
  %9354 = vmatprep.subr.bf16.mxu0 0
  %9355 = vmatpush2.bf16.msra.mxu0 %v9277
  %9356 = vmatprep.subr.bf16.mxu0 0
  %9357 = vmatpush2.bf16.msra.mxu0 %v9276
  %9358 = vmatprep.subr.bf16.mxu0 0
  %9359 = vmatpush2.bf16.msra.mxu0 %v9275
  %9360 = vmatprep.subr.bf16.mxu0 0
  %9361 = vmatpush2.bf16.msra.mxu0 %v9274
  %9362 = vmatprep.mubr.bf16.mxu0 %v4759
  %9363 = vmatmul.mubr.bf16.gmra.mxu0 %v4758
  %v9364 = vpop.f32.mrf.mxu0
  %v9365 = vadd.f32 0.0, %v9364
  %v9366 = vpop.f32.mrf.mxu0
  %v9367 = vpop.f32.mrf.mxu0
  %v9368 = vadd.f32 0.0, %v9367
  %v9369 = vpop.f32.mrf.mxu0
  %9370 = vmatprep.mubr.bf16.mxu0 %v4763
  %9371 = vmatmul.mubr.bf16.gmra.mxu0 %v4762
  %v9372 = vpop.f32.mrf.mxu0
  %v9373 = vadd.f32 0.0, %v9372
  %v9374 = vpop.f32.mrf.mxu0
  %v9375 = vpop.f32.mrf.mxu0
  %v9376 = vadd.f32 0.0, %v9375
  %v9377 = vpop.f32.mrf.mxu0
  %9378 = vdwg.mxu0
  %9379 = vmatprep.subr.bf16.mxu0 0
  %9380 = vmatpush1.bf16.msra.mxu0 %v9289
  %9381 = vmatprep.subr.bf16.mxu0 0
  %9382 = vmatpush1.bf16.msra.mxu0 %v9288
  %9383 = vmatprep.subr.bf16.mxu0 0
  %9384 = vmatpush1.bf16.msra.mxu0 %v9287
  %9385 = vmatprep.subr.bf16.mxu0 0
  %9386 = vmatpush1.bf16.msra.mxu0 %v9286
  %9387 = vmatprep.subr.bf16.mxu0 0
  %9388 = vmatpush1.bf16.msra.mxu0 %v9285
  %9389 = vmatprep.subr.bf16.mxu0 0
  %9390 = vmatpush1.bf16.msra.mxu0 %v9284
  %9391 = vmatprep.subr.bf16.mxu0 0
  %9392 = vmatpush1.bf16.msra.mxu0 %v9283
  %9393 = vmatprep.subr.bf16.mxu0 0
  %9394 = vmatpush1.bf16.msra.mxu0 %v9282
  %9395 = vmatprep.subr.bf16.mxu0 0
  %9396 = vmatpush2.bf16.msra.mxu0 %v9297
  %9397 = vmatprep.subr.bf16.mxu0 0
  %9398 = vmatpush2.bf16.msra.mxu0 %v9296
  %9399 = vmatprep.subr.bf16.mxu0 0
  %9400 = vmatpush2.bf16.msra.mxu0 %v9295
  %9401 = vmatprep.subr.bf16.mxu0 0
  %9402 = vmatpush2.bf16.msra.mxu0 %v9294
  %9403 = vmatprep.subr.bf16.mxu0 0
  %9404 = vmatpush2.bf16.msra.mxu0 %v9293
  %9405 = vmatprep.subr.bf16.mxu0 0
  %9406 = vmatpush2.bf16.msra.mxu0 %v9292
  %9407 = vmatprep.subr.bf16.mxu0 0
  %9408 = vmatpush2.bf16.msra.mxu0 %v9291
  %9409 = vmatprep.subr.bf16.mxu0 0
  %9410 = vmatpush2.bf16.msra.mxu0 %v9290
  %9411 = vmatprep.mubr.bf16.mxu0 %v4761
  %9412 = vmatmul.mubr.bf16.gmra.mxu0 %v4760
  %v9413 = vpop.f32.mrf.mxu0
  %v9414 = vadd.f32 %v9365, %v9413
  %v9415 = vpop.f32.mrf.mxu0
  %v9416 = vpop.f32.mrf.mxu0
  %v9417 = vadd.f32 %v9368, %v9416
  %v9418 = vpop.f32.mrf.mxu0
  %9419 = vmatprep.mubr.bf16.mxu0 %v4765
  %9420 = vmatmul.mubr.bf16.gmra.mxu0 %v4764
  %v9421 = vpop.f32.mrf.mxu0
  %v9422 = vadd.f32 %v9373, %v9421
  %v9423 = vpop.f32.mrf.mxu0
  %v9424 = vpop.f32.mrf.mxu0
  %v9425 = vadd.f32 %v9376, %v9424
  %v9426 = vpop.f32.mrf.mxu0
  %9427 = vdwg.mxu0
  %v9428 = vadd.f32 %v9069, %v9414
  %v9429 = vadd.f32 %v9070, %v9417
  %v9430 = vadd.f32 %v9071, %v9422
  %v9431 = vadd.f32 %v9072, %v9425
  %s9432 = scalar_lea.vmem %s3, 3328
  %v9433 = vld [vmem:[%s9432] sm:$0xf]
  %v9434 = vld [vmem:[%s9432 + $0x4] sm:$0xf]
  %v9435 = vld [vmem:[%s9432 + $0x8] sm:$0xf]
  %v9436 = vld [vmem:[%s9432 + $0xc] sm:$0xf]
  %v9437 = vld [vmem:[%s9432 + $0x10] sm:$0xf]
  %v9438 = vld [vmem:[%s9432 + $0x14] sm:$0xf]
  %v9439 = vld [vmem:[%s9432 + $0x18] sm:$0xf]
  %v9440 = vld [vmem:[%s9432 + $0x1c] sm:$0xf]
  %v9441 = vld [vmem:[%s9432 + $0x20] sm:$0xf]
  %v9442 = vld [vmem:[%s9432 + $0x24] sm:$0xf]
  %v9443 = vld [vmem:[%s9432 + $0x28] sm:$0xf]
  %v9444 = vld [vmem:[%s9432 + $0x2c] sm:$0xf]
  %v9445 = vld [vmem:[%s9432 + $0x30] sm:$0xf]
  %v9446 = vld [vmem:[%s9432 + $0x34] sm:$0xf]
  %v9447 = vld [vmem:[%s9432 + $0x38] sm:$0xf]
  %v9448 = vld [vmem:[%s9432 + $0x3c] sm:$0xf]
  %v9449 = vld [vmem:[%s9432 + $0x40] sm:$0xf]
  %v9450 = vld [vmem:[%s9432 + $0x44] sm:$0xf]
  %v9451 = vld [vmem:[%s9432 + $0x48] sm:$0xf]
  %v9452 = vld [vmem:[%s9432 + $0x4c] sm:$0xf]
  %v9453 = vld [vmem:[%s9432 + $0x50] sm:$0xf]
  %v9454 = vld [vmem:[%s9432 + $0x54] sm:$0xf]
  %v9455 = vld [vmem:[%s9432 + $0x58] sm:$0xf]
  %v9456 = vld [vmem:[%s9432 + $0x5c] sm:$0xf]
  %v9457 = vld [vmem:[%s9432 + $0x60] sm:$0xf]
  %v9458 = vld [vmem:[%s9432 + $0x64] sm:$0xf]
  %v9459 = vld [vmem:[%s9432 + $0x68] sm:$0xf]
  %v9460 = vld [vmem:[%s9432 + $0x6c] sm:$0xf]
  %v9461 = vld [vmem:[%s9432 + $0x70] sm:$0xf]
  %v9462 = vld [vmem:[%s9432 + $0x74] sm:$0xf]
  %v9463 = vld [vmem:[%s9432 + $0x78] sm:$0xf]
  %v9464 = vld [vmem:[%s9432 + $0x7c] sm:$0xf]
  %v9465 = vld [vmem:[%s9432 + $0x80] sm:$0xf]
  %v9466 = vld [vmem:[%s9432 + $0x84] sm:$0xf]
  %v9467 = vld [vmem:[%s9432 + $0x88] sm:$0xf]
  %v9468 = vld [vmem:[%s9432 + $0x8c] sm:$0xf]
  %v9469 = vld [vmem:[%s9432 + $0x90] sm:$0xf]
  %v9470 = vld [vmem:[%s9432 + $0x94] sm:$0xf]
  %v9471 = vld [vmem:[%s9432 + $0x98] sm:$0xf]
  %v9472 = vld [vmem:[%s9432 + $0x9c] sm:$0xf]
  %v9473 = vld [vmem:[%s9432 + $0xa0] sm:$0xf]
  %v9474 = vld [vmem:[%s9432 + $0xa4] sm:$0xf]
  %v9475 = vld [vmem:[%s9432 + $0xa8] sm:$0xf]
  %v9476 = vld [vmem:[%s9432 + $0xac] sm:$0xf]
  %v9477 = vld [vmem:[%s9432 + $0xb0] sm:$0xf]
  %v9478 = vld [vmem:[%s9432 + $0xb4] sm:$0xf]
  %v9479 = vld [vmem:[%s9432 + $0xb8] sm:$0xf]
  %v9480 = vld [vmem:[%s9432 + $0xbc] sm:$0xf]
  %v9481 = vld [vmem:[%s9432 + $0xc0] sm:$0xf]
  %v9482 = vld [vmem:[%s9432 + $0xc4] sm:$0xf]
  %v9483 = vld [vmem:[%s9432 + $0xc8] sm:$0xf]
  %v9484 = vld [vmem:[%s9432 + $0xcc] sm:$0xf]
  %v9485 = vld [vmem:[%s9432 + $0xd0] sm:$0xf]
  %v9486 = vld [vmem:[%s9432 + $0xd4] sm:$0xf]
  %v9487 = vld [vmem:[%s9432 + $0xd8] sm:$0xf]
  %v9488 = vld [vmem:[%s9432 + $0xdc] sm:$0xf]
  %v9489 = vld [vmem:[%s9432 + $0xe0] sm:$0xf]
  %v9490 = vld [vmem:[%s9432 + $0xe4] sm:$0xf]
  %v9491 = vld [vmem:[%s9432 + $0xe8] sm:$0xf]
  %v9492 = vld [vmem:[%s9432 + $0xec] sm:$0xf]
  %v9493 = vld [vmem:[%s9432 + $0xf0] sm:$0xf]
  %v9494 = vld [vmem:[%s9432 + $0xf4] sm:$0xf]
  %v9495 = vld [vmem:[%s9432 + $0xf8] sm:$0xf]
  %v9496 = vld [vmem:[%s9432 + $0xfc] sm:$0xf]
  %v9561 = vunpack.c.l.b16 %v9433
  %v9562 = vunpack.c.l.b16 %v9434
  %v9563 = vunpack.c.l.b16 %v9435
  %v9564 = vunpack.c.l.b16 %v9436
  %v9565 = vunpack.c.l.b16 %v9437
  %v9566 = vunpack.c.l.b16 %v9438
  %v9567 = vunpack.c.l.b16 %v9439
  %v9568 = vunpack.c.l.b16 %v9440
  %v9569 = vunpack.c.l.b16 %v9441
  %v9570 = vunpack.c.l.b16 %v9442
  %v9571 = vunpack.c.l.b16 %v9443
  %v9572 = vunpack.c.l.b16 %v9444
  %v9573 = vunpack.c.l.b16 %v9445
  %v9574 = vunpack.c.l.b16 %v9446
  %v9575 = vunpack.c.l.b16 %v9447
  %v9576 = vunpack.c.l.b16 %v9448
  %v9577 = vunpack.c.l.b16 %v9449
  %v9578 = vunpack.c.l.b16 %v9450
  %v9579 = vunpack.c.l.b16 %v9451
  %v9580 = vunpack.c.l.b16 %v9452
  %v9581 = vunpack.c.l.b16 %v9453
  %v9582 = vunpack.c.l.b16 %v9454
  %v9583 = vunpack.c.l.b16 %v9455
  %v9584 = vunpack.c.l.b16 %v9456
  %v9585 = vunpack.c.l.b16 %v9457
  %v9586 = vunpack.c.l.b16 %v9458
  %v9587 = vunpack.c.l.b16 %v9459
  %v9588 = vunpack.c.l.b16 %v9460
  %v9589 = vunpack.c.l.b16 %v9461
  %v9590 = vunpack.c.l.b16 %v9462
  %v9591 = vunpack.c.l.b16 %v9463
  %v9592 = vunpack.c.l.b16 %v9464
  %v9593 = vunpack.c.l.b16 %v9465
  %v9594 = vunpack.c.l.b16 %v9466
  %v9595 = vunpack.c.l.b16 %v9467
  %v9596 = vunpack.c.l.b16 %v9468
  %v9597 = vunpack.c.l.b16 %v9469
  %v9598 = vunpack.c.l.b16 %v9470
  %v9599 = vunpack.c.l.b16 %v9471
  %v9600 = vunpack.c.l.b16 %v9472
  %v9601 = vunpack.c.l.b16 %v9473
  %v9602 = vunpack.c.l.b16 %v9474
  %v9603 = vunpack.c.l.b16 %v9475
  %v9604 = vunpack.c.l.b16 %v9476
  %v9605 = vunpack.c.l.b16 %v9477
  %v9606 = vunpack.c.l.b16 %v9478
  %v9607 = vunpack.c.l.b16 %v9479
  %v9608 = vunpack.c.l.b16 %v9480
  %v9609 = vunpack.c.l.b16 %v9481
  %v9610 = vunpack.c.l.b16 %v9482
  %v9611 = vunpack.c.l.b16 %v9483
  %v9612 = vunpack.c.l.b16 %v9484
  %v9613 = vunpack.c.l.b16 %v9485
  %v9614 = vunpack.c.l.b16 %v9486
  %v9615 = vunpack.c.l.b16 %v9487
  %v9616 = vunpack.c.l.b16 %v9488
  %v9617 = vunpack.c.l.b16 %v9489
  %v9618 = vunpack.c.l.b16 %v9490
  %v9619 = vunpack.c.l.b16 %v9491
  %v9620 = vunpack.c.l.b16 %v9492
  %v9621 = vunpack.c.l.b16 %v9493
  %v9622 = vunpack.c.l.b16 %v9494
  %v9623 = vunpack.c.l.b16 %v9495
  %v9624 = vunpack.c.l.b16 %v9496
  %v9625 = vpack.c.b16 %v9562, %v9561
  %v9626 = vpack.c.b16 %v9564, %v9563
  %v9627 = vpack.c.b16 %v9566, %v9565
  %v9628 = vpack.c.b16 %v9568, %v9567
  %v9629 = vpack.c.b16 %v9570, %v9569
  %v9630 = vpack.c.b16 %v9572, %v9571
  %v9631 = vpack.c.b16 %v9574, %v9573
  %v9632 = vpack.c.b16 %v9576, %v9575
  %v9633 = vpack.c.b16 %v9578, %v9577
  %v9634 = vpack.c.b16 %v9580, %v9579
  %v9635 = vpack.c.b16 %v9582, %v9581
  %v9636 = vpack.c.b16 %v9584, %v9583
  %v9637 = vpack.c.b16 %v9586, %v9585
  %v9638 = vpack.c.b16 %v9588, %v9587
  %v9639 = vpack.c.b16 %v9590, %v9589
  %v9640 = vpack.c.b16 %v9592, %v9591
  %v9641 = vpack.c.b16 %v9594, %v9593
  %v9642 = vpack.c.b16 %v9596, %v9595
  %v9643 = vpack.c.b16 %v9598, %v9597
  %v9644 = vpack.c.b16 %v9600, %v9599
  %v9645 = vpack.c.b16 %v9602, %v9601
  %v9646 = vpack.c.b16 %v9604, %v9603
  %v9647 = vpack.c.b16 %v9606, %v9605
  %v9648 = vpack.c.b16 %v9608, %v9607
  %v9649 = vpack.c.b16 %v9610, %v9609
  %v9650 = vpack.c.b16 %v9612, %v9611
  %v9651 = vpack.c.b16 %v9614, %v9613
  %v9652 = vpack.c.b16 %v9616, %v9615
  %v9653 = vpack.c.b16 %v9618, %v9617
  %v9654 = vpack.c.b16 %v9620, %v9619
  %v9655 = vpack.c.b16 %v9622, %v9621
  %v9656 = vpack.c.b16 %v9624, %v9623
  %9689 = vmatprep.subr.bf16.mxu0 0
  %9690 = vmatpush1.bf16.msra.mxu0 %v9632
  %9691 = vmatprep.subr.bf16.mxu0 0
  %9692 = vmatpush1.bf16.msra.mxu0 %v9631
  %9693 = vmatprep.subr.bf16.mxu0 0
  %9694 = vmatpush1.bf16.msra.mxu0 %v9630
  %9695 = vmatprep.subr.bf16.mxu0 0
  %9696 = vmatpush1.bf16.msra.mxu0 %v9629
  %9697 = vmatprep.subr.bf16.mxu0 0
  %9698 = vmatpush1.bf16.msra.mxu0 %v9628
  %9699 = vmatprep.subr.bf16.mxu0 0
  %9700 = vmatpush1.bf16.msra.mxu0 %v9627
  %9701 = vmatprep.subr.bf16.mxu0 0
  %9702 = vmatpush1.bf16.msra.mxu0 %v9626
  %9703 = vmatprep.subr.bf16.mxu0 0
  %9704 = vmatpush1.bf16.msra.mxu0 %v9625
  %9705 = vmatprep.subr.bf16.mxu0 0
  %9706 = vmatpush2.bf16.msra.mxu0 %v9640
  %9707 = vmatprep.subr.bf16.mxu0 0
  %9708 = vmatpush2.bf16.msra.mxu0 %v9639
  %9709 = vmatprep.subr.bf16.mxu0 0
  %9710 = vmatpush2.bf16.msra.mxu0 %v9638
  %9711 = vmatprep.subr.bf16.mxu0 0
  %9712 = vmatpush2.bf16.msra.mxu0 %v9637
  %9713 = vmatprep.subr.bf16.mxu0 0
  %9714 = vmatpush2.bf16.msra.mxu0 %v9636
  %9715 = vmatprep.subr.bf16.mxu0 0
  %9716 = vmatpush2.bf16.msra.mxu0 %v9635
  %9717 = vmatprep.subr.bf16.mxu0 0
  %9718 = vmatpush2.bf16.msra.mxu0 %v9634
  %9719 = vmatprep.subr.bf16.mxu0 0
  %9720 = vmatpush2.bf16.msra.mxu0 %v9633
  %9721 = vmatprep.mubr.bf16.mxu0 %v4767
  %9722 = vmatmul.mubr.bf16.gmra.mxu0 %v4766
  %v9723 = vpop.f32.mrf.mxu0
  %v9724 = vadd.f32 0.0, %v9723
  %v9725 = vpop.f32.mrf.mxu0
  %v9726 = vpop.f32.mrf.mxu0
  %v9727 = vadd.f32 0.0, %v9726
  %v9728 = vpop.f32.mrf.mxu0
  %9729 = vmatprep.mubr.bf16.mxu0 %v4771
  %9730 = vmatmul.mubr.bf16.gmra.mxu0 %v4770
  %v9731 = vpop.f32.mrf.mxu0
  %v9732 = vadd.f32 0.0, %v9731
  %v9733 = vpop.f32.mrf.mxu0
  %v9734 = vpop.f32.mrf.mxu0
  %v9735 = vadd.f32 0.0, %v9734
  %v9736 = vpop.f32.mrf.mxu0
  %9737 = vdwg.mxu0
  %9738 = vmatprep.subr.bf16.mxu0 0
  %9739 = vmatpush1.bf16.msra.mxu0 %v9648
  %9740 = vmatprep.subr.bf16.mxu0 0
  %9741 = vmatpush1.bf16.msra.mxu0 %v9647
  %9742 = vmatprep.subr.bf16.mxu0 0
  %9743 = vmatpush1.bf16.msra.mxu0 %v9646
  %9744 = vmatprep.subr.bf16.mxu0 0
  %9745 = vmatpush1.bf16.msra.mxu0 %v9645
  %9746 = vmatprep.subr.bf16.mxu0 0
  %9747 = vmatpush1.bf16.msra.mxu0 %v9644
  %9748 = vmatprep.subr.bf16.mxu0 0
  %9749 = vmatpush1.bf16.msra.mxu0 %v9643
  %9750 = vmatprep.subr.bf16.mxu0 0
  %9751 = vmatpush1.bf16.msra.mxu0 %v9642
  %9752 = vmatprep.subr.bf16.mxu0 0
  %9753 = vmatpush1.bf16.msra.mxu0 %v9641
  %9754 = vmatprep.subr.bf16.mxu0 0
  %9755 = vmatpush2.bf16.msra.mxu0 %v9656
  %9756 = vmatprep.subr.bf16.mxu0 0
  %9757 = vmatpush2.bf16.msra.mxu0 %v9655
  %9758 = vmatprep.subr.bf16.mxu0 0
  %9759 = vmatpush2.bf16.msra.mxu0 %v9654
  %9760 = vmatprep.subr.bf16.mxu0 0
  %9761 = vmatpush2.bf16.msra.mxu0 %v9653
  %9762 = vmatprep.subr.bf16.mxu0 0
  %9763 = vmatpush2.bf16.msra.mxu0 %v9652
  %9764 = vmatprep.subr.bf16.mxu0 0
  %9765 = vmatpush2.bf16.msra.mxu0 %v9651
  %9766 = vmatprep.subr.bf16.mxu0 0
  %9767 = vmatpush2.bf16.msra.mxu0 %v9650
  %9768 = vmatprep.subr.bf16.mxu0 0
  %9769 = vmatpush2.bf16.msra.mxu0 %v9649
  %9770 = vmatprep.mubr.bf16.mxu0 %v4769
  %9771 = vmatmul.mubr.bf16.gmra.mxu0 %v4768
  %v9772 = vpop.f32.mrf.mxu0
  %v9773 = vadd.f32 %v9724, %v9772
  %v9774 = vpop.f32.mrf.mxu0
  %v9775 = vpop.f32.mrf.mxu0
  %v9776 = vadd.f32 %v9727, %v9775
  %v9777 = vpop.f32.mrf.mxu0
  %9778 = vmatprep.mubr.bf16.mxu0 %v4773
  %9779 = vmatmul.mubr.bf16.gmra.mxu0 %v4772
  %v9780 = vpop.f32.mrf.mxu0
  %v9781 = vadd.f32 %v9732, %v9780
  %v9782 = vpop.f32.mrf.mxu0
  %v9783 = vpop.f32.mrf.mxu0
  %v9784 = vadd.f32 %v9735, %v9783
  %v9785 = vpop.f32.mrf.mxu0
  %9786 = vdwg.mxu0
  %v9787 = vadd.f32 %v9428, %v9773
  %v9788 = vadd.f32 %v9429, %v9776
  %v9789 = vadd.f32 %v9430, %v9781
  %v9790 = vadd.f32 %v9431, %v9784
  %v9791 = vld [vmem:[%s4] sm:$0x1]
  %v9793 = vlaneseq
  %v9794 = vshrl.u32 %v9793, 7
  %v9795 = vsub.s32 0, %v9794
  %v9796 = vrot.slane %v9791, %v9795
  %v9798 = vadd.f32 %v9787, %v9796
  %v9799 = vadd.f32 %v9788, %v9796
  %v9800 = vadd.f32 %v9789, %v9796
  %v9801 = vadd.f32 %v9790, %v9796
  %v9802 = vmax.f32 %v9798, 0.0
  %v9803 = vmax.f32 %v9799, 0.0
  %v9804 = vmax.f32 %v9800, 0.0
  %v9805 = vmax.f32 %v9801, 0.0
  %v9806 = vpack.c.bf16 %v9803, %v9802
  %v9807 = vpack.c.bf16 %v9805, %v9804
  %v9808 = vld [vmem:[%s5] sm:$0xf]
  %v9809 = vld [vmem:[%s5 + $0x4] sm:$0xf]
  %v9810 = vld [vmem:[%s5 + $0x8] sm:$0xf]
  %v9811 = vld [vmem:[%s5 + $0xc] sm:$0xf]
  %v9812 = vld [vmem:[%s5 + $0x10] sm:$0xf]
  %v9813 = vld [vmem:[%s5 + $0x14] sm:$0xf]
  %v9814 = vld [vmem:[%s5 + $0x18] sm:$0xf]
  %v9815 = vld [vmem:[%s5 + $0x1c] sm:$0xf]
  %v9816 = vld [vmem:[%s5 + $0x20] sm:$0xf]
  %v9817 = vld [vmem:[%s5 + $0x24] sm:$0xf]
  %v9818 = vld [vmem:[%s5 + $0x28] sm:$0xf]
  %v9819 = vld [vmem:[%s5 + $0x2c] sm:$0xf]
  %v9820 = vld [vmem:[%s5 + $0x30] sm:$0xf]
  %v9821 = vld [vmem:[%s5 + $0x34] sm:$0xf]
  %v9822 = vld [vmem:[%s5 + $0x38] sm:$0xf]
  %v9823 = vld [vmem:[%s5 + $0x3c] sm:$0xf]
  %v9824 = vld [vmem:[%s6] sm:$0x1]
  %v9826 = vlaneseq
  %v9827 = vshrl.u32 %v9826, 7
  %v9828 = vsub.s32 0, %v9827
  %v9829 = vrot.slane %v9824, %v9828
  %v9847 = vunpack.c.l.b16 %v9808
  %v9848 = vunpack.c.l.b16 %v9809
  %v9849 = vunpack.c.l.b16 %v9810
  %v9850 = vunpack.c.l.b16 %v9811
  %v9851 = vunpack.c.l.b16 %v9812
  %v9852 = vunpack.c.l.b16 %v9813
  %v9853 = vunpack.c.l.b16 %v9814
  %v9854 = vunpack.c.l.b16 %v9815
  %v9855 = vunpack.c.l.b16 %v9816
  %v9856 = vunpack.c.l.b16 %v9817
  %v9857 = vunpack.c.l.b16 %v9818
  %v9858 = vunpack.c.l.b16 %v9819
  %v9859 = vunpack.c.l.b16 %v9820
  %v9860 = vunpack.c.l.b16 %v9821
  %v9861 = vunpack.c.l.b16 %v9822
  %v9862 = vunpack.c.l.b16 %v9823
  %v9863 = vpack.c.b16 %v9848, %v9847
  %v9864 = vpack.c.b16 %v9850, %v9849
  %v9865 = vpack.c.b16 %v9852, %v9851
  %v9866 = vpack.c.b16 %v9854, %v9853
  %v9867 = vpack.c.b16 %v9856, %v9855
  %v9868 = vpack.c.b16 %v9858, %v9857
  %v9869 = vpack.c.b16 %v9860, %v9859
  %v9870 = vpack.c.b16 %v9862, %v9861
  %9879 = vmatprep.subr.bf16.mxu0 0
  %9880 = vmatpush1.bf16.msra.mxu0 %v9870
  %9881 = vmatprep.subr.bf16.mxu0 0
  %9882 = vmatpush1.bf16.msra.mxu0 %v9869
  %9883 = vmatprep.subr.bf16.mxu0 0
  %9884 = vmatpush1.bf16.msra.mxu0 %v9868
  %9885 = vmatprep.subr.bf16.mxu0 0
  %9886 = vmatpush1.bf16.msra.mxu0 %v9867
  %9887 = vmatprep.subr.bf16.mxu0 0
  %9888 = vmatpush1.bf16.msra.mxu0 %v9866
  %9889 = vmatprep.subr.bf16.mxu0 0
  %9890 = vmatpush1.bf16.msra.mxu0 %v9865
  %9891 = vmatprep.subr.bf16.mxu0 0
  %9892 = vmatpush1.bf16.msra.mxu0 %v9864
  %9893 = vmatprep.subr.bf16.mxu0 0
  %9894 = vmatpush1.bf16.msra.mxu0 %v9863
  %9895 = vmatprep.subr.bf16.mxu0 0
  %9896 = vmatpush2.bf16.msra.mxu0 0
  %9897 = vmatprep.subr.bf16.mxu0 0
  %9898 = vmatpush2.bf16.msra.mxu0 0
  %9899 = vmatprep.subr.bf16.mxu0 0
  %9900 = vmatpush2.bf16.msra.mxu0 0
  %9901 = vmatprep.subr.bf16.mxu0 0
  %9902 = vmatpush2.bf16.msra.mxu0 0
  %9903 = vmatprep.subr.bf16.mxu0 0
  %9904 = vmatpush2.bf16.msra.mxu0 0
  %9905 = vmatprep.subr.bf16.mxu0 0
  %9906 = vmatpush2.bf16.msra.mxu0 0
  %9907 = vmatprep.subr.bf16.mxu0 0
  %9908 = vmatpush2.bf16.msra.mxu0 0
  %9909 = vmatprep.subr.bf16.mxu0 0
  %9910 = vmatpush2.bf16.msra.mxu0 0
  %9911 = vmatprep.mubr.bf16.mxu0 0
  %9912 = vmatmul.mubr.bf16.gmra.mxu0 %v9806
  %v9913 = vpop.f32.mrf.mxu0
  %v9914 = vadd.f32 %v9829, %v9913
  %v9915 = vpop.f32.mrf.mxu0
  %v9916 = vpop.f32.mrf.mxu0
  %v9917 = vadd.f32 %v9829, %v9916
  %v9918 = vpop.f32.mrf.mxu0
  %9919 = vmatprep.mubr.bf16.mxu0 0
  %9920 = vmatmul.mubr.bf16.gmra.mxu0 %v9807
  %v9921 = vpop.f32.mrf.mxu0
  %v9922 = vadd.f32 %v9829, %v9921
  %v9923 = vpop.f32.mrf.mxu0
  %v9924 = vpop.f32.mrf.mxu0
  %v9925 = vadd.f32 %v9829, %v9924
  %v9926 = vpop.f32.mrf.mxu0
  %9927 = vdwg.mxu0
  %9928 = vst [vmem:[%s7] sm:$0xff] %v9914
  %9929 = vst [vmem:[%s7 + $0x8] sm:$0xff] %v9917
  %9930 = vst [vmem:[%s7 + $0x10] sm:$0xff] %v9922
  %9931 = vst [vmem:[%s7 + $0x18] sm:$0xff] %v9925
  // Predicated region
  $region30: #{cnn_forward.1} parent=0 // pred_check
    _
  $region31: #{cnn_forward.1} parent=0 // pred_check_branch
    %9933 = sbr.rel (0) target = $region33
  $region32: #{cnn_forward.1} parent=0 // pred_region
    _
  $region33: #{cnn_forward.1} parent=0 // pred_fallthru
    _
  // Predicated region
  $region34: #{cnn_forward.1} parent=0 // pred_check
    _
  $region35: #{cnn_forward.1} parent=0 // pred_check_branch
    %9935 = sbr.rel (0) target = $region37
  $region36: #{cnn_forward.1} parent=0 // pred_region
    _
  $region37: #{cnn_forward.1} parent=0 // pred_fallthru
    _

</llo_original>
